<compile_context>
chip_gen: v6e
topology: v6e:2x2x1
jax: 0.10.0
libtpu: 0.0.40
codegen_flags: <defaults>
</compile_context>

<pallas_src>
from math import log2

import jax
import jax.numpy as jnp
from jax.experimental import pallas as pl
from jax.experimental.pallas import tpu as pltpu

FACTORS = [1, 1, 1, 1, 0.5, 0.25, 0.125, 0.0625, 0.03125]
LEAK = 0.2
EPS = 1e-8


# ----------------------------- in-kernel helpers -----------------------------

def _leaky(x):
    return jnp.where(x >= 0, x, LEAK * x)


def _pixel_norm(x):
    # PixelNorm over the channel (last) axis, f32 math.
    ms = jnp.mean(x * x, axis=-1, keepdims=True)
    return x * jax.lax.rsqrt(ms + EPS)


def _mxu_dot(a, b):
    # bf16 operands (native MXU format on v6e/v7x, halves weight VMEM), f32 acc.
    return jnp.dot(a.astype(jnp.bfloat16), b.astype(jnp.bfloat16),
                   preferred_element_type=jnp.float32)


def _pad_hw(x):
    """Zero-pad (N, H, W, C) by 1 on both spatial dims -> (N, H+2, W+2, C)."""
    N, H, W, C = x.shape
    zr = jnp.zeros((N, 1, W, C), x.dtype)
    x = jnp.concatenate([zr, x, zr], axis=1)
    zc = jnp.zeros((N, H + 2, 1, C), x.dtype)
    return jnp.concatenate([zc, x, zc], axis=2)


def _upsample2x(x):
    """Nearest-neighbour 2x upsample (N,H,W,C) -> (N,2H,2W,C), broadcast+reshape."""
    N, H, W, C = x.shape
    # rows: broadcast a leading dim then merge (nearly free)
    xr = jnp.broadcast_to(x[:, :, None, :, :], (N, H, 2, W, C)
                          ).reshape(N, 2 * H, W, C)
    # cols: sublane broadcast then merge into the sublane dim (one relayout)
    xc = jnp.broadcast_to(xr[:, :, :, None, :], (N, 2 * H, W, 2, C)
                          ).reshape(N, 2 * H, 2 * W, C)
    return xc


def _conv3x3_lrelu_pn(x, w, b):
    """'Same' 3x3 WSConv (scale folded into w) + LeakyReLU + PixelNorm.

    x: (N, H, W, Cin) value; w: (9*Cin, Cout) value with row layout
    (dy*3+dx)*Cin + ci; b: (1, Cout).  Per-dy accumulation: 3 matmuls, the live
    patch never exceeds 3x the input plane.
    """
    N, H, W, Cin = x.shape
    Cout = w.shape[-1]
    xp = _pad_hw(x)
    acc = None
    for dy in range(3):
        taps = [xp[:, dy:dy + H, dx:dx + W, :] for dx in range(3)]
        patch = jnp.concatenate(taps, axis=-1).reshape(N * H * W, 3 * Cin)
        d = _mxu_dot(patch, w[dy * 3 * Cin:(dy + 1) * 3 * Cin, :])
        acc = d if acc is None else acc + d
    acc = _pixel_norm(_leaky(acc + b))
    return acc.reshape(N, H, W, Cout)


def _conv_block(x, w1_ref, b1_ref, w2_ref, b2_ref):
    h = _conv3x3_lrelu_pn(x, w1_ref[...], b1_ref[...])
    return _conv3x3_lrelu_pn(h, w2_ref[...], b2_ref[...])


def _to_rgb_flat(x, w_ref, b_ref):
    """1x1 WSConv (to-RGB): (N,H,W,Cin) -> (N*H*W, Cimg) f32."""
    N, H, W, Cin = x.shape
    return _mxu_dot(x.reshape(N * H * W, Cin), w_ref[...]) + b_ref[...]


def _nchw_store(o_ref, y_flat, N, H, W):
    """Write (N*H*W, Cimg) as (N, Cimg, H*W) so the HW axis is lane-dense."""
    Cimg = y_flat.shape[-1]
    y3 = y_flat.reshape(N, H * W, Cimg)
    o_ref[...] = jnp.swapaxes(y3, 1, 2).astype(o_ref.dtype)


# ----------------------------- fused forward kernel -----------------------------

def _make_generator_kernel(steps):
    """Whole-forward kernel for a static number of progressive `steps`."""
    n_blocks = steps + 1

    def kernel(*refs):
        alpha_ref, z_ref, wi_ref, bi_ref = refs[:4]
        blk_refs = refs[4:4 + 4 * n_blocks]
        rgb_refs = refs[4 + 4 * n_blocks:-1]
        o_ref = refs[-1]

        N = z_ref.shape[0]
        C = wi_ref.shape[1] // 16

        # initial: ConvTranspose2d(z, C, 4, 1, 0) on a 1x1 input == ONE matmul
        # column p*C + c of wi  <->  weight[z, c, p // 4, p % 4]
        y = _mxu_dot(z_ref[...], wi_ref[...]) + bi_ref[...]      # (N, 16*C)
        y = _leaky(y)
        # (N, 16*C) -> (N, 4, 4, C) via 16 lane slices (avoids a minor-dim split
        # reshape); done once for the whole batch.
        rows = []
        for py in range(4):
            taps = [y[:, (4 * py + px) * C:(4 * py + px + 1) * C][:, None, None, :]
                    for px in range(4)]
            rows.append(jnp.concatenate(taps, axis=2))           # (N, 1, 4, C)
        x = _pixel_norm(jnp.concatenate(rows, axis=1))           # (N, 4, 4, C)

        # prog block 0
        x = _conv_block(x, *blk_refs[0:4])

        if steps == 0:
            _, H, W, _ = x.shape
            rgb = _to_rgb_flat(x, rgb_refs[0], rgb_refs[1])      # no tanh / fade
            _nchw_store(o_ref, rgb, N, H, W)
            return

        up = x
        for s in range(1, steps + 1):
            up = _upsample2x(x)                                  # "upscaled"
            x = _conv_block(up, *blk_refs[4 * s:4 * s + 4])      # "out"

        _, H, W, _ = x.shape
        u = _to_rgb_flat(up, rgb_refs[0], rgb_refs[1])           # rgb[steps-1]
        g = _to_rgb_flat(x, rgb_refs[2], rgb_refs[3])            # rgb[steps]
        a = alpha_ref[0]
        _nchw_store(o_ref, jnp.tanh(a * g + (1.0 - a) * u), N, H, W)

    return kernel


# ----------------------------- wrapper -----------------------------

def generator_forward(params, x_nchw, alpha, steps):
    """x_nchw: [N, z_dim, 1, 1] (NCHW). Returns NCHW [N, img_channels, H, W]."""
    if isinstance(alpha, (int, float)):
        assert 0.0 <= alpha <= 1.0, "Alpha not between 0 and 1"
    assert 0 <= steps < len(params["blocks"])

    N = x_nchw.shape[0]
    z = x_nchw.reshape(N, -1)                                    # (N, z_dim)
    a = jnp.asarray(alpha, jnp.float32).reshape(1)

    blocks = params["blocks"][:steps + 1]
    if steps == 0:
        rgbs = [params["rgbs"][0]]
    else:
        rgbs = [params["rgbs"][steps - 1], params["rgbs"][steps]]

    img_ch = rgbs[-1][0].shape[-1]
    side = 4 * (2 ** steps)

    inputs = [a, z, params["init_w"], params["init_b"]]
    for blk in blocks:
        inputs.extend(blk)
    for r in rgbs:
        inputs.extend(r)

    in_specs = ([pl.BlockSpec(memory_space=pltpu.MemorySpace.SMEM)] +
                [pl.BlockSpec(memory_space=pltpu.MemorySpace.VMEM)] *
                (len(inputs) - 1))

    out = pl.pallas_call(
        _make_generator_kernel(steps),
        out_shape=jax.ShapeDtypeStruct((N, img_ch, side * side), z.dtype),
        in_specs=in_specs,
        out_specs=pl.BlockSpec(memory_space=pltpu.MemorySpace.VMEM),
        # Raise the scoped-VMEM limit (v5e defaults to 16 MiB); 32 MiB is safe
        # on every chip incl. v7x (64 MiB physical).
        compiler_params=pltpu.CompilerParams(vmem_limit_bytes=32 * 1024 * 1024),
    )(*inputs)
    # (N, Cimg, H*W) -> (N, Cimg, H, W): identical row-major layout, free.
    return out.reshape(N, img_ch, side, side)


# ----------------------------- params -----------------------------

def init_generator_params(key, z_dim, in_channels, img_size, img_channels):
    n_blocks = int(log2(img_size / 4)) + 1
    keys = list(jax.random.split(key, 1 + 3 * n_blocks))
    ki = iter(keys)

    params = {
        # ConvTranspose2d(z_dim, C, 4, 1, 0) weight reorganised as (z_dim, 16*C):
        # column p*C + c  <->  weight[z, c, p // 4, p % 4].  Bias tiled over p.
        "init_w": 0.05 * jax.random.normal(next(ki), (z_dim, 16 * in_channels),
                                           jnp.float32),
        "init_b": jnp.zeros((1, 16 * in_channels), jnp.float32),
        "blocks": [],
        "rgbs": [],
    }
    ch = in_channels
    for idx in range(n_blocks):
        cin = ch
        cout = int(in_channels * FACTORS[idx])
        # WSConv2d: weight ~ N(0,1), scale = sqrt(gain/(Cin*k*k)); conv(x*scale)
        # folded as (scale*W).  Row layout of 3x3 weights: (dy*3+dx)*Cin + ci.
        s1 = (2.0 / (cin * 9)) ** 0.5
        w1 = s1 * jax.random.normal(next(ki), (9 * cin, cout), jnp.float32)
        b1 = jnp.zeros((1, cout), jnp.float32)
        s2 = (2.0 / (cout * 9)) ** 0.5
        w2 = s2 * jax.random.normal(next(ki), (9 * cout, cout), jnp.float32)
        b2 = jnp.zeros((1, cout), jnp.float32)
        params["blocks"].append((w1, b1, w2, b2))

        sr = (2.0 / cout) ** 0.5
        wr = sr * jax.random.normal(next(ki), (cout, img_channels), jnp.float32)
        br = jnp.zeros((1, img_channels), jnp.float32)
        params["rgbs"].append((wr, br))
        ch = cout
    return params


# ----------------------------- pure-JAX reference -----------------------------

def _ref_leaky(x):
    return jnp.where(x >= 0, x, LEAK * x)


def _ref_pn(x):
    return x / jnp.sqrt(jnp.mean(x * x, axis=-1, keepdims=True) + EPS)


def ref_forward(params, x_nchw, alpha, steps):
    N = x_nchw.shape[0]
    z = x_nchw.reshape(N, -1)
    C = params["init_w"].shape[1] // 16
    y = z @ params["init_w"] + params["init_b"]                  # (N, 16*C)
    y = _ref_leaky(y).reshape(N, 16, C)
    ups = _ref_pn(y).reshape(N, 4, 4, C)

    def conv3(x, w, b):
        cin, cout = x.shape[-1], w.shape[-1]
        wk = w.reshape(3, 3, cin, cout)
        y = jax.lax.conv_general_dilated(
            x, wk, (1, 1), "SAME",
            dimension_numbers=("NHWC", "HWIO", "NHWC")) + b
        return _ref_pn(_ref_leaky(y))

    def block(x, w1, b1, w2, b2):
        return conv3(conv3(x, w1, b1), w2, b2)

    def rgb(x, w, b):
        return jnp.einsum("nhwi,io->nhwo", x, w) + b

    out = block(ups, *params["blocks"][0])
    if steps == 0:
        return jnp.transpose(rgb(out, *params["rgbs"][0]), (0, 3, 1, 2))
    for step in range(1, steps + 1):
        ups = jnp.repeat(jnp.repeat(out, 2, axis=1), 2, axis=2)
        out = block(ups, *params["blocks"][step])
    fu = rgb(ups, *params["rgbs"][steps - 1])
    fo = rgb(out, *params["rgbs"][steps])
    y = jnp.tanh(alpha * fo + (1 - alpha) * fu)
    return jnp.transpose(y, (0, 3, 1, 2))


def _rel_err(a, b):
    return float(jnp.max(jnp.abs(a - b) / (1.0 + jnp.abs(b))))


# ----------------------------- main -----------------------------

if __name__ == "__main__":
    # Small shapes consistent with the module: z_dim=32, in_channels=32,
    # img_size=16 (-> 3 progressive blocks), img_channels=3, batch=2.
    N, Z_DIM, IN_CH, IMG_SIZE, IMG_CH = 2, 32, 32, 16, 3
    key = jax.random.PRNGKey(0)
    k_param, k_x = jax.random.split(key)

    params = init_generator_params(k_param, Z_DIM, IN_CH, IMG_SIZE, IMG_CH)
    x = jax.random.normal(k_x, (N, Z_DIM, 1, 1), jnp.float32)

    # Full-resolution path (steps=2 -> 16x16) with fade-in.
    alpha, steps = 0.7, 2
    out = jax.block_until_ready(generator_forward(params, x, alpha, steps))
    ref = jax.block_until_ready(ref_forward(params, x, alpha, steps))
    assert out.shape == (N, IMG_CH, IMG_SIZE, IMG_SIZE), out.shape
    assert bool(jnp.all(jnp.isfinite(out)))
    # bf16 MXU operands (f32 accumulate) -> bf16-level tolerance.
    err = _rel_err(out, ref)
    assert err < 3e-2, err

    # steps == 0 path (4x4 RGB output, no fade-in / tanh).
    out0 = jax.block_until_ready(generator_forward(params, x, 1.0, 0))
    ref0 = ref_forward(params, x, 1.0, 0)
    assert out0.shape == (N, IMG_CH, 4, 4), out0.shape
    assert _rel_err(out0, ref0) < 3e-2

    # alpha as a traced scalar under jit (steps stays static).
    jit_fwd = jax.jit(generator_forward, static_argnums=(3,))
    out_j = jax.block_until_ready(
        jit_fwd(params, x, jnp.asarray(alpha, jnp.float32), steps))
    assert float(jnp.max(jnp.abs(out_j - out))) < 1e-4

    print("KERNEL_OK")
</pallas_src>

<mosaic_0001>
module attributes {stable_mosaic.version = 11 : i64} {
  func.func @kernel(%arg0: memref<1xf32, #tpu.memory_space<smem>>, %arg1: memref<2x32xf32, #tpu.memory_space<vmem>>, %arg2: memref<32x512xf32, #tpu.memory_space<vmem>>, %arg3: memref<1x512xf32, #tpu.memory_space<vmem>>, %arg4: memref<288x32xf32, #tpu.memory_space<vmem>>, %arg5: memref<1x32xf32, #tpu.memory_space<vmem>>, %arg6: memref<288x32xf32, #tpu.memory_space<vmem>>, %arg7: memref<1x32xf32, #tpu.memory_space<vmem>>, %arg8: memref<288x32xf32, #tpu.memory_space<vmem>>, %arg9: memref<1x32xf32, #tpu.memory_space<vmem>>, %arg10: memref<288x32xf32, #tpu.memory_space<vmem>>, %arg11: memref<1x32xf32, #tpu.memory_space<vmem>>, %arg12: memref<288x32xf32, #tpu.memory_space<vmem>>, %arg13: memref<1x32xf32, #tpu.memory_space<vmem>>, %arg14: memref<288x32xf32, #tpu.memory_space<vmem>>, %arg15: memref<1x32xf32, #tpu.memory_space<vmem>>, %arg16: memref<32x3xf32, #tpu.memory_space<vmem>>, %arg17: memref<1x3xf32, #tpu.memory_space<vmem>>, %arg18: memref<32x3xf32, #tpu.memory_space<vmem>>, %arg19: memref<1x3xf32, #tpu.memory_space<vmem>>, %arg20: memref<2x3x256xf32, #tpu.memory_space<vmem>>) attributes {dimension_semantics = [], scalar_prefetch = 0 : i64, scratch_operands = 0 : i64, tpu.core_type = #tpu.core_type<tc>} {
    %c0 = arith.constant 0 : index
    %c0_0 = arith.constant 0 : index
    %0 = vector.load %arg1[%c0, %c0_0] : memref<2x32xf32, #tpu.memory_space<vmem>>, vector<2x32xf32>
    %c0_1 = arith.constant 0 : index
    %c0_2 = arith.constant 0 : index
    %1 = vector.load %arg2[%c0_1, %c0_2] : memref<32x512xf32, #tpu.memory_space<vmem>>, vector<32x512xf32>
    %2 = arith.truncf %0 : vector<2x32xf32> to vector<2x32xbf16>
    %3 = arith.truncf %1 : vector<32x512xf32> to vector<32x512xbf16>
    %cst = arith.constant dense<0.000000e+00> : vector<2x512xf32>
    %4 = tpu.matmul %2, %3, %cst {dimension_numbers = #tpu.dot_dimension_numbers<[1], [0], [0], [1], [0, 0, 1, 1], [], []>} : vector<2x32xbf16>, vector<32x512xbf16>, vector<2x512xf32> -> vector<2x512xf32>
    %c0_3 = arith.constant 0 : index
    %c0_4 = arith.constant 0 : index
    %5 = vector.load %arg3[%c0_3, %c0_4] : memref<1x512xf32, #tpu.memory_space<vmem>>, vector<1x512xf32>
    %6 = vector.broadcast %5 : vector<1x512xf32> to vector<2x512xf32>
    %7 = arith.addf %4, %6 : vector<2x512xf32>
    %cst_5 = arith.constant 0.000000e+00 : f32
    %8 = vector.broadcast %cst_5 : f32 to vector<2x512xf32>
    %9 = arith.cmpf oge, %7, %8 : vector<2x512xf32>
    %cst_6 = arith.constant 2.000000e-01 : f32
    %10 = vector.broadcast %cst_6 : f32 to vector<2x512xf32>
    %11 = arith.mulf %10, %7 : vector<2x512xf32>
    %12 = arith.select %9, %7, %11 : vector<2x512xi1>, vector<2x512xf32>
    %13 = vector.extract_strided_slice %12 {offsets = [0, 0], sizes = [2, 32], strides = [1, 1]} : vector<2x512xf32> to vector<2x32xf32>
    %14 = vector.shape_cast %13 : vector<2x32xf32> to vector<2x1x1x32xf32>
    %15 = vector.extract_strided_slice %12 {offsets = [0, 32], sizes = [2, 32], strides = [1, 1]} : vector<2x512xf32> to vector<2x32xf32>
    %16 = vector.shape_cast %15 : vector<2x32xf32> to vector<2x1x1x32xf32>
    %17 = vector.extract_strided_slice %12 {offsets = [0, 64], sizes = [2, 32], strides = [1, 1]} : vector<2x512xf32> to vector<2x32xf32>
    %18 = vector.shape_cast %17 : vector<2x32xf32> to vector<2x1x1x32xf32>
    %19 = vector.extract_strided_slice %12 {offsets = [0, 96], sizes = [2, 32], strides = [1, 1]} : vector<2x512xf32> to vector<2x32xf32>
    %20 = vector.shape_cast %19 : vector<2x32xf32> to vector<2x1x1x32xf32>
    %21 = tpu.concatenate %14, %16, %18, %20 in 2 : vector<2x1x1x32xf32>, vector<2x1x1x32xf32>, vector<2x1x1x32xf32>, vector<2x1x1x32xf32> -> vector<2x1x4x32xf32>
    %22 = vector.extract_strided_slice %12 {offsets = [0, 128], sizes = [2, 32], strides = [1, 1]} : vector<2x512xf32> to vector<2x32xf32>
    %23 = vector.shape_cast %22 : vector<2x32xf32> to vector<2x1x1x32xf32>
    %24 = vector.extract_strided_slice %12 {offsets = [0, 160], sizes = [2, 32], strides = [1, 1]} : vector<2x512xf32> to vector<2x32xf32>
    %25 = vector.shape_cast %24 : vector<2x32xf32> to vector<2x1x1x32xf32>
    %26 = vector.extract_strided_slice %12 {offsets = [0, 192], sizes = [2, 32], strides = [1, 1]} : vector<2x512xf32> to vector<2x32xf32>
    %27 = vector.shape_cast %26 : vector<2x32xf32> to vector<2x1x1x32xf32>
    %28 = vector.extract_strided_slice %12 {offsets = [0, 224], sizes = [2, 32], strides = [1, 1]} : vector<2x512xf32> to vector<2x32xf32>
    %29 = vector.shape_cast %28 : vector<2x32xf32> to vector<2x1x1x32xf32>
    %30 = tpu.concatenate %23, %25, %27, %29 in 2 : vector<2x1x1x32xf32>, vector<2x1x1x32xf32>, vector<2x1x1x32xf32>, vector<2x1x1x32xf32> -> vector<2x1x4x32xf32>
    %31 = vector.extract_strided_slice %12 {offsets = [0, 256], sizes = [2, 32], strides = [1, 1]} : vector<2x512xf32> to vector<2x32xf32>
    %32 = vector.shape_cast %31 : vector<2x32xf32> to vector<2x1x1x32xf32>
    %33 = vector.extract_strided_slice %12 {offsets = [0, 288], sizes = [2, 32], strides = [1, 1]} : vector<2x512xf32> to vector<2x32xf32>
    %34 = vector.shape_cast %33 : vector<2x32xf32> to vector<2x1x1x32xf32>
    %35 = vector.extract_strided_slice %12 {offsets = [0, 320], sizes = [2, 32], strides = [1, 1]} : vector<2x512xf32> to vector<2x32xf32>
    %36 = vector.shape_cast %35 : vector<2x32xf32> to vector<2x1x1x32xf32>
    %37 = vector.extract_strided_slice %12 {offsets = [0, 352], sizes = [2, 32], strides = [1, 1]} : vector<2x512xf32> to vector<2x32xf32>
    %38 = vector.shape_cast %37 : vector<2x32xf32> to vector<2x1x1x32xf32>
    %39 = tpu.concatenate %32, %34, %36, %38 in 2 : vector<2x1x1x32xf32>, vector<2x1x1x32xf32>, vector<2x1x1x32xf32>, vector<2x1x1x32xf32> -> vector<2x1x4x32xf32>
    %40 = vector.extract_strided_slice %12 {offsets = [0, 384], sizes = [2, 32], strides = [1, 1]} : vector<2x512xf32> to vector<2x32xf32>
    %41 = vector.shape_cast %40 : vector<2x32xf32> to vector<2x1x1x32xf32>
    %42 = vector.extract_strided_slice %12 {offsets = [0, 416], sizes = [2, 32], strides = [1, 1]} : vector<2x512xf32> to vector<2x32xf32>
    %43 = vector.shape_cast %42 : vector<2x32xf32> to vector<2x1x1x32xf32>
    %44 = vector.extract_strided_slice %12 {offsets = [0, 448], sizes = [2, 32], strides = [1, 1]} : vector<2x512xf32> to vector<2x32xf32>
    %45 = vector.shape_cast %44 : vector<2x32xf32> to vector<2x1x1x32xf32>
    %46 = vector.extract_strided_slice %12 {offsets = [0, 480], sizes = [2, 32], strides = [1, 1]} : vector<2x512xf32> to vector<2x32xf32>
    %47 = vector.shape_cast %46 : vector<2x32xf32> to vector<2x1x1x32xf32>
    %48 = tpu.concatenate %41, %43, %45, %47 in 2 : vector<2x1x1x32xf32>, vector<2x1x1x32xf32>, vector<2x1x1x32xf32>, vector<2x1x1x32xf32> -> vector<2x1x4x32xf32>
    %49 = tpu.concatenate %21, %30, %39, %48 in 1 : vector<2x1x4x32xf32>, vector<2x1x4x32xf32>, vector<2x1x4x32xf32>, vector<2x1x4x32xf32> -> vector<2x4x4x32xf32>
    %50 = arith.mulf %49, %49 : vector<2x4x4x32xf32>
    %cst_7 = arith.constant dense<0.000000e+00> : vector<2x4x4xf32>
    %51 = vector.multi_reduction <add>, %50, %cst_7 [3] : vector<2x4x4x32xf32> to vector<2x4x4xf32>
    %52 = vector.shape_cast %51 : vector<2x4x4xf32> to vector<2x4x4x1xf32>
    %cst_8 = arith.constant 3.200000e+01 : f32
    %53 = vector.broadcast %cst_8 : f32 to vector<2x4x4x1xf32>
    %54 = arith.divf %52, %53 : vector<2x4x4x1xf32>
    %cst_9 = arith.constant 9.99999993E-9 : f32
    %55 = vector.broadcast %cst_9 : f32 to vector<2x4x4x1xf32>
    %56 = arith.addf %54, %55 : vector<2x4x4x1xf32>
    %57 = math.rsqrt %56 : vector<2x4x4x1xf32>
    %58 = vector.broadcast %57 : vector<2x4x4x1xf32> to vector<2x4x4x32xf32>
    %59 = arith.mulf %49, %58 : vector<2x4x4x32xf32>
    %c0_10 = arith.constant 0 : index
    %c0_11 = arith.constant 0 : index
    %60 = vector.load %arg4[%c0_10, %c0_11] : memref<288x32xf32, #tpu.memory_space<vmem>>, vector<288x32xf32>
    %c0_12 = arith.constant 0 : index
    %c0_13 = arith.constant 0 : index
    %61 = vector.load %arg5[%c0_12, %c0_13] : memref<1x32xf32, #tpu.memory_space<vmem>>, vector<1x32xf32>
    %cst_14 = arith.constant 0.000000e+00 : f32
    %62 = vector.broadcast %cst_14 : f32 to vector<2x1x4x32xf32>
    %63 = tpu.concatenate %62, %59, %62 in 1 : vector<2x1x4x32xf32>, vector<2x4x4x32xf32>, vector<2x1x4x32xf32> -> vector<2x6x4x32xf32>
    %cst_15 = arith.constant 0.000000e+00 : f32
    %64 = vector.broadcast %cst_15 : f32 to vector<2x6x1x32xf32>
    %65 = tpu.concatenate %64, %63, %64 in 2 : vector<2x6x1x32xf32>, vector<2x6x4x32xf32>, vector<2x6x1x32xf32> -> vector<2x6x6x32xf32>
    %66 = vector.extract_strided_slice %65 {offsets = [0, 0, 0, 0], sizes = [2, 4, 4, 32], strides = [1, 1, 1, 1]} : vector<2x6x6x32xf32> to vector<2x4x4x32xf32>
    %67 = vector.extract_strided_slice %65 {offsets = [0, 0, 1, 0], sizes = [2, 4, 4, 32], strides = [1, 1, 1, 1]} : vector<2x6x6x32xf32> to vector<2x4x4x32xf32>
    %68 = vector.extract_strided_slice %65 {offsets = [0, 0, 2, 0], sizes = [2, 4, 4, 32], strides = [1, 1, 1, 1]} : vector<2x6x6x32xf32> to vector<2x4x4x32xf32>
    %69 = tpu.concatenate %66, %67, %68 in 3 : vector<2x4x4x32xf32>, vector<2x4x4x32xf32>, vector<2x4x4x32xf32> -> vector<2x4x4x96xf32>
    %70 = vector.shape_cast %69 : vector<2x4x4x96xf32> to vector<32x96xf32>
    %71 = vector.extract_strided_slice %60 {offsets = [0, 0], sizes = [96, 32], strides = [1, 1]} : vector<288x32xf32> to vector<96x32xf32>
    %72 = arith.truncf %70 : vector<32x96xf32> to vector<32x96xbf16>
    %73 = arith.truncf %71 : vector<96x32xf32> to vector<96x32xbf16>
    %cst_16 = arith.constant dense<0.000000e+00> : vector<32x32xf32>
    %74 = tpu.matmul %72, %73, %cst_16 {dimension_numbers = #tpu.dot_dimension_numbers<[1], [0], [0], [1], [0, 0, 1, 1], [], []>} : vector<32x96xbf16>, vector<96x32xbf16>, vector<32x32xf32> -> vector<32x32xf32>
    %75 = vector.extract_strided_slice %65 {offsets = [0, 1, 0, 0], sizes = [2, 4, 4, 32], strides = [1, 1, 1, 1]} : vector<2x6x6x32xf32> to vector<2x4x4x32xf32>
    %76 = vector.extract_strided_slice %65 {offsets = [0, 1, 1, 0], sizes = [2, 4, 4, 32], strides = [1, 1, 1, 1]} : vector<2x6x6x32xf32> to vector<2x4x4x32xf32>
    %77 = vector.extract_strided_slice %65 {offsets = [0, 1, 2, 0], sizes = [2, 4, 4, 32], strides = [1, 1, 1, 1]} : vector<2x6x6x32xf32> to vector<2x4x4x32xf32>
    %78 = tpu.concatenate %75, %76, %77 in 3 : vector<2x4x4x32xf32>, vector<2x4x4x32xf32>, vector<2x4x4x32xf32> -> vector<2x4x4x96xf32>
    %79 = vector.shape_cast %78 : vector<2x4x4x96xf32> to vector<32x96xf32>
    %80 = vector.extract_strided_slice %60 {offsets = [96, 0], sizes = [96, 32], strides = [1, 1]} : vector<288x32xf32> to vector<96x32xf32>
    %81 = arith.truncf %79 : vector<32x96xf32> to vector<32x96xbf16>
    %82 = arith.truncf %80 : vector<96x32xf32> to vector<96x32xbf16>
    %cst_17 = arith.constant dense<0.000000e+00> : vector<32x32xf32>
    %83 = tpu.matmul %81, %82, %cst_17 {dimension_numbers = #tpu.dot_dimension_numbers<[1], [0], [0], [1], [0, 0, 1, 1], [], []>} : vector<32x96xbf16>, vector<96x32xbf16>, vector<32x32xf32> -> vector<32x32xf32>
    %84 = arith.addf %74, %83 : vector<32x32xf32>
    %85 = vector.extract_strided_slice %65 {offsets = [0, 2, 0, 0], sizes = [2, 4, 4, 32], strides = [1, 1, 1, 1]} : vector<2x6x6x32xf32> to vector<2x4x4x32xf32>
    %86 = vector.extract_strided_slice %65 {offsets = [0, 2, 1, 0], sizes = [2, 4, 4, 32], strides = [1, 1, 1, 1]} : vector<2x6x6x32xf32> to vector<2x4x4x32xf32>
    %87 = vector.extract_strided_slice %65 {offsets = [0, 2, 2, 0], sizes = [2, 4, 4, 32], strides = [1, 1, 1, 1]} : vector<2x6x6x32xf32> to vector<2x4x4x32xf32>
    %88 = tpu.concatenate %85, %86, %87 in 3 : vector<2x4x4x32xf32>, vector<2x4x4x32xf32>, vector<2x4x4x32xf32> -> vector<2x4x4x96xf32>
    %89 = vector.shape_cast %88 : vector<2x4x4x96xf32> to vector<32x96xf32>
    %90 = vector.extract_strided_slice %60 {offsets = [192, 0], sizes = [96, 32], strides = [1, 1]} : vector<288x32xf32> to vector<96x32xf32>
    %91 = arith.truncf %89 : vector<32x96xf32> to vector<32x96xbf16>
    %92 = arith.truncf %90 : vector<96x32xf32> to vector<96x32xbf16>
    %cst_18 = arith.constant dense<0.000000e+00> : vector<32x32xf32>
    %93 = tpu.matmul %91, %92, %cst_18 {dimension_numbers = #tpu.dot_dimension_numbers<[1], [0], [0], [1], [0, 0, 1, 1], [], []>} : vector<32x96xbf16>, vector<96x32xbf16>, vector<32x32xf32> -> vector<32x32xf32>
    %94 = arith.addf %84, %93 : vector<32x32xf32>
    %95 = vector.broadcast %61 : vector<1x32xf32> to vector<32x32xf32>
    %96 = arith.addf %94, %95 : vector<32x32xf32>
    %cst_19 = arith.constant 0.000000e+00 : f32
    %97 = vector.broadcast %cst_19 : f32 to vector<32x32xf32>
    %98 = arith.cmpf oge, %96, %97 : vector<32x32xf32>
    %cst_20 = arith.constant 2.000000e-01 : f32
    %99 = vector.broadcast %cst_20 : f32 to vector<32x32xf32>
    %100 = arith.mulf %99, %96 : vector<32x32xf32>
    %101 = arith.select %98, %96, %100 : vector<32x32xi1>, vector<32x32xf32>
    %102 = arith.mulf %101, %101 : vector<32x32xf32>
    %cst_21 = arith.constant dense<0.000000e+00> : vector<32xf32>
    %103 = vector.multi_reduction <add>, %102, %cst_21 [1] : vector<32x32xf32> to vector<32xf32>
    %104 = vector.shape_cast %103 : vector<32xf32> to vector<32x1xf32>
    %cst_22 = arith.constant 3.200000e+01 : f32
    %105 = vector.broadcast %cst_22 : f32 to vector<32x1xf32>
    %106 = arith.divf %104, %105 : vector<32x1xf32>
    %cst_23 = arith.constant 9.99999993E-9 : f32
    %107 = vector.broadcast %cst_23 : f32 to vector<32x1xf32>
    %108 = arith.addf %106, %107 : vector<32x1xf32>
    %109 = math.rsqrt %108 : vector<32x1xf32>
    %110 = vector.broadcast %109 : vector<32x1xf32> to vector<32x32xf32>
    %111 = arith.mulf %101, %110 : vector<32x32xf32>
    %112 = vector.shape_cast %111 : vector<32x32xf32> to vector<2x4x4x32xf32>
    %c0_24 = arith.constant 0 : index
    %c0_25 = arith.constant 0 : index
    %113 = vector.load %arg6[%c0_24, %c0_25] : memref<288x32xf32, #tpu.memory_space<vmem>>, vector<288x32xf32>
    %c0_26 = arith.constant 0 : index
    %c0_27 = arith.constant 0 : index
    %114 = vector.load %arg7[%c0_26, %c0_27] : memref<1x32xf32, #tpu.memory_space<vmem>>, vector<1x32xf32>
    %cst_28 = arith.constant 0.000000e+00 : f32
    %115 = vector.broadcast %cst_28 : f32 to vector<2x1x4x32xf32>
    %116 = tpu.concatenate %115, %112, %115 in 1 : vector<2x1x4x32xf32>, vector<2x4x4x32xf32>, vector<2x1x4x32xf32> -> vector<2x6x4x32xf32>
    %cst_29 = arith.constant 0.000000e+00 : f32
    %117 = vector.broadcast %cst_29 : f32 to vector<2x6x1x32xf32>
    %118 = tpu.concatenate %117, %116, %117 in 2 : vector<2x6x1x32xf32>, vector<2x6x4x32xf32>, vector<2x6x1x32xf32> -> vector<2x6x6x32xf32>
    %119 = vector.extract_strided_slice %118 {offsets = [0, 0, 0, 0], sizes = [2, 4, 4, 32], strides = [1, 1, 1, 1]} : vector<2x6x6x32xf32> to vector<2x4x4x32xf32>
    %120 = vector.extract_strided_slice %118 {offsets = [0, 0, 1, 0], sizes = [2, 4, 4, 32], strides = [1, 1, 1, 1]} : vector<2x6x6x32xf32> to vector<2x4x4x32xf32>
    %121 = vector.extract_strided_slice %118 {offsets = [0, 0, 2, 0], sizes = [2, 4, 4, 32], strides = [1, 1, 1, 1]} : vector<2x6x6x32xf32> to vector<2x4x4x32xf32>
    %122 = tpu.concatenate %119, %120, %121 in 3 : vector<2x4x4x32xf32>, vector<2x4x4x32xf32>, vector<2x4x4x32xf32> -> vector<2x4x4x96xf32>
    %123 = vector.shape_cast %122 : vector<2x4x4x96xf32> to vector<32x96xf32>
    %124 = vector.extract_strided_slice %113 {offsets = [0, 0], sizes = [96, 32], strides = [1, 1]} : vector<288x32xf32> to vector<96x32xf32>
    %125 = arith.truncf %123 : vector<32x96xf32> to vector<32x96xbf16>
    %126 = arith.truncf %124 : vector<96x32xf32> to vector<96x32xbf16>
    %cst_30 = arith.constant dense<0.000000e+00> : vector<32x32xf32>
    %127 = tpu.matmul %125, %126, %cst_30 {dimension_numbers = #tpu.dot_dimension_numbers<[1], [0], [0], [1], [0, 0, 1, 1], [], []>} : vector<32x96xbf16>, vector<96x32xbf16>, vector<32x32xf32> -> vector<32x32xf32>
    %128 = vector.extract_strided_slice %118 {offsets = [0, 1, 0, 0], sizes = [2, 4, 4, 32], strides = [1, 1, 1, 1]} : vector<2x6x6x32xf32> to vector<2x4x4x32xf32>
    %129 = vector.extract_strided_slice %118 {offsets = [0, 1, 1, 0], sizes = [2, 4, 4, 32], strides = [1, 1, 1, 1]} : vector<2x6x6x32xf32> to vector<2x4x4x32xf32>
    %130 = vector.extract_strided_slice %118 {offsets = [0, 1, 2, 0], sizes = [2, 4, 4, 32], strides = [1, 1, 1, 1]} : vector<2x6x6x32xf32> to vector<2x4x4x32xf32>
    %131 = tpu.concatenate %128, %129, %130 in 3 : vector<2x4x4x32xf32>, vector<2x4x4x32xf32>, vector<2x4x4x32xf32> -> vector<2x4x4x96xf32>
    %132 = vector.shape_cast %131 : vector<2x4x4x96xf32> to vector<32x96xf32>
    %133 = vector.extract_strided_slice %113 {offsets = [96, 0], sizes = [96, 32], strides = [1, 1]} : vector<288x32xf32> to vector<96x32xf32>
    %134 = arith.truncf %132 : vector<32x96xf32> to vector<32x96xbf16>
    %135 = arith.truncf %133 : vector<96x32xf32> to vector<96x32xbf16>
    %cst_31 = arith.constant dense<0.000000e+00> : vector<32x32xf32>
    %136 = tpu.matmul %134, %135, %cst_31 {dimension_numbers = #tpu.dot_dimension_numbers<[1], [0], [0], [1], [0, 0, 1, 1], [], []>} : vector<32x96xbf16>, vector<96x32xbf16>, vector<32x32xf32> -> vector<32x32xf32>
    %137 = arith.addf %127, %136 : vector<32x32xf32>
    %138 = vector.extract_strided_slice %118 {offsets = [0, 2, 0, 0], sizes = [2, 4, 4, 32], strides = [1, 1, 1, 1]} : vector<2x6x6x32xf32> to vector<2x4x4x32xf32>
    %139 = vector.extract_strided_slice %118 {offsets = [0, 2, 1, 0], sizes = [2, 4, 4, 32], strides = [1, 1, 1, 1]} : vector<2x6x6x32xf32> to vector<2x4x4x32xf32>
    %140 = vector.extract_strided_slice %118 {offsets = [0, 2, 2, 0], sizes = [2, 4, 4, 32], strides = [1, 1, 1, 1]} : vector<2x6x6x32xf32> to vector<2x4x4x32xf32>
    %141 = tpu.concatenate %138, %139, %140 in 3 : vector<2x4x4x32xf32>, vector<2x4x4x32xf32>, vector<2x4x4x32xf32> -> vector<2x4x4x96xf32>
    %142 = vector.shape_cast %141 : vector<2x4x4x96xf32> to vector<32x96xf32>
    %143 = vector.extract_strided_slice %113 {offsets = [192, 0], sizes = [96, 32], strides = [1, 1]} : vector<288x32xf32> to vector<96x32xf32>
    %144 = arith.truncf %142 : vector<32x96xf32> to vector<32x96xbf16>
    %145 = arith.truncf %143 : vector<96x32xf32> to vector<96x32xbf16>
    %cst_32 = arith.constant dense<0.000000e+00> : vector<32x32xf32>
    %146 = tpu.matmul %144, %145, %cst_32 {dimension_numbers = #tpu.dot_dimension_numbers<[1], [0], [0], [1], [0, 0, 1, 1], [], []>} : vector<32x96xbf16>, vector<96x32xbf16>, vector<32x32xf32> -> vector<32x32xf32>
    %147 = arith.addf %137, %146 : vector<32x32xf32>
    %148 = vector.broadcast %114 : vector<1x32xf32> to vector<32x32xf32>
    %149 = arith.addf %147, %148 : vector<32x32xf32>
    %cst_33 = arith.constant 0.000000e+00 : f32
    %150 = vector.broadcast %cst_33 : f32 to vector<32x32xf32>
    %151 = arith.cmpf oge, %149, %150 : vector<32x32xf32>
    %cst_34 = arith.constant 2.000000e-01 : f32
    %152 = vector.broadcast %cst_34 : f32 to vector<32x32xf32>
    %153 = arith.mulf %152, %149 : vector<32x32xf32>
    %154 = arith.select %151, %149, %153 : vector<32x32xi1>, vector<32x32xf32>
    %155 = arith.mulf %154, %154 : vector<32x32xf32>
    %cst_35 = arith.constant dense<0.000000e+00> : vector<32xf32>
    %156 = vector.multi_reduction <add>, %155, %cst_35 [1] : vector<32x32xf32> to vector<32xf32>
    %157 = vector.shape_cast %156 : vector<32xf32> to vector<32x1xf32>
    %cst_36 = arith.constant 3.200000e+01 : f32
    %158 = vector.broadcast %cst_36 : f32 to vector<32x1xf32>
    %159 = arith.divf %157, %158 : vector<32x1xf32>
    %cst_37 = arith.constant 9.99999993E-9 : f32
    %160 = vector.broadcast %cst_37 : f32 to vector<32x1xf32>
    %161 = arith.addf %159, %160 : vector<32x1xf32>
    %162 = math.rsqrt %161 : vector<32x1xf32>
    %163 = vector.broadcast %162 : vector<32x1xf32> to vector<32x32xf32>
    %164 = arith.mulf %154, %163 : vector<32x32xf32>
    %165 = vector.shape_cast %164 : vector<32x32xf32> to vector<2x4x4x32xf32>
    %166 = vector.shape_cast %165 : vector<2x4x4x32xf32> to vector<2x4x1x4x32xf32>
    %167 = vector.shape_cast %166 : vector<2x4x1x4x32xf32> to vector<2x4x1x4x32xf32>
    %168 = vector.broadcast %167 : vector<2x4x1x4x32xf32> to vector<2x4x2x4x32xf32>
    %169 = vector.shape_cast %168 : vector<2x4x2x4x32xf32> to vector<2x8x4x32xf32>
    %170 = vector.shape_cast %169 : vector<2x8x4x32xf32> to vector<2x8x4x1x32xf32>
    %171 = vector.shape_cast %170 : vector<2x8x4x1x32xf32> to vector<2x8x4x1x32xf32>
    %172 = vector.broadcast %171 : vector<2x8x4x1x32xf32> to vector<2x8x4x2x32xf32>
    %173 = vector.shape_cast %172 : vector<2x8x4x2x32xf32> to vector<2x8x8x32xf32>
    %c0_38 = arith.constant 0 : index
    %c0_39 = arith.constant 0 : index
    %174 = vector.load %arg8[%c0_38, %c0_39] : memref<288x32xf32, #tpu.memory_space<vmem>>, vector<288x32xf32>
    %c0_40 = arith.constant 0 : index
    %c0_41 = arith.constant 0 : index
    %175 = vector.load %arg9[%c0_40, %c0_41] : memref<1x32xf32, #tpu.memory_space<vmem>>, vector<1x32xf32>
    %cst_42 = arith.constant 0.000000e+00 : f32
    %176 = vector.broadcast %cst_42 : f32 to vector<2x1x8x32xf32>
    %177 = tpu.concatenate %176, %173, %176 in 1 : vector<2x1x8x32xf32>, vector<2x8x8x32xf32>, vector<2x1x8x32xf32> -> vector<2x10x8x32xf32>
    %cst_43 = arith.constant 0.000000e+00 : f32
    %178 = vector.broadcast %cst_43 : f32 to vector<2x10x1x32xf32>
    %179 = tpu.concatenate %178, %177, %178 in 2 : vector<2x10x1x32xf32>, vector<2x10x8x32xf32>, vector<2x10x1x32xf32> -> vector<2x10x10x32xf32>
    %180 = vector.extract_strided_slice %179 {offsets = [0, 0, 0, 0], sizes = [2, 8, 8, 32], strides = [1, 1, 1, 1]} : vector<2x10x10x32xf32> to vector<2x8x8x32xf32>
    %181 = vector.extract_strided_slice %179 {offsets = [0, 0, 1, 0], sizes = [2, 8, 8, 32], strides = [1, 1, 1, 1]} : vector<2x10x10x32xf32> to vector<2x8x8x32xf32>
    %182 = vector.extract_strided_slice %179 {offsets = [0, 0, 2, 0], sizes = [2, 8, 8, 32], strides = [1, 1, 1, 1]} : vector<2x10x10x32xf32> to vector<2x8x8x32xf32>
    %183 = tpu.concatenate %180, %181, %182 in 3 : vector<2x8x8x32xf32>, vector<2x8x8x32xf32>, vector<2x8x8x32xf32> -> vector<2x8x8x96xf32>
    %184 = vector.shape_cast %183 : vector<2x8x8x96xf32> to vector<128x96xf32>
    %185 = vector.extract_strided_slice %174 {offsets = [0, 0], sizes = [96, 32], strides = [1, 1]} : vector<288x32xf32> to vector<96x32xf32>
    %186 = arith.truncf %184 : vector<128x96xf32> to vector<128x96xbf16>
    %187 = arith.truncf %185 : vector<96x32xf32> to vector<96x32xbf16>
    %cst_44 = arith.constant dense<0.000000e+00> : vector<128x32xf32>
    %188 = tpu.matmul %186, %187, %cst_44 {dimension_numbers = #tpu.dot_dimension_numbers<[1], [0], [0], [1], [0, 0, 1, 1], [], []>} : vector<128x96xbf16>, vector<96x32xbf16>, vector<128x32xf32> -> vector<128x32xf32>
    %189 = vector.extract_strided_slice %179 {offsets = [0, 1, 0, 0], sizes = [2, 8, 8, 32], strides = [1, 1, 1, 1]} : vector<2x10x10x32xf32> to vector<2x8x8x32xf32>
    %190 = vector.extract_strided_slice %179 {offsets = [0, 1, 1, 0], sizes = [2, 8, 8, 32], strides = [1, 1, 1, 1]} : vector<2x10x10x32xf32> to vector<2x8x8x32xf32>
    %191 = vector.extract_strided_slice %179 {offsets = [0, 1, 2, 0], sizes = [2, 8, 8, 32], strides = [1, 1, 1, 1]} : vector<2x10x10x32xf32> to vector<2x8x8x32xf32>
    %192 = tpu.concatenate %189, %190, %191 in 3 : vector<2x8x8x32xf32>, vector<2x8x8x32xf32>, vector<2x8x8x32xf32> -> vector<2x8x8x96xf32>
    %193 = vector.shape_cast %192 : vector<2x8x8x96xf32> to vector<128x96xf32>
    %194 = vector.extract_strided_slice %174 {offsets = [96, 0], sizes = [96, 32], strides = [1, 1]} : vector<288x32xf32> to vector<96x32xf32>
    %195 = arith.truncf %193 : vector<128x96xf32> to vector<128x96xbf16>
    %196 = arith.truncf %194 : vector<96x32xf32> to vector<96x32xbf16>
    %cst_45 = arith.constant dense<0.000000e+00> : vector<128x32xf32>
    %197 = tpu.matmul %195, %196, %cst_45 {dimension_numbers = #tpu.dot_dimension_numbers<[1], [0], [0], [1], [0, 0, 1, 1], [], []>} : vector<128x96xbf16>, vector<96x32xbf16>, vector<128x32xf32> -> vector<128x32xf32>
    %198 = arith.addf %188, %197 : vector<128x32xf32>
    %199 = vector.extract_strided_slice %179 {offsets = [0, 2, 0, 0], sizes = [2, 8, 8, 32], strides = [1, 1, 1, 1]} : vector<2x10x10x32xf32> to vector<2x8x8x32xf32>
    %200 = vector.extract_strided_slice %179 {offsets = [0, 2, 1, 0], sizes = [2, 8, 8, 32], strides = [1, 1, 1, 1]} : vector<2x10x10x32xf32> to vector<2x8x8x32xf32>
    %201 = vector.extract_strided_slice %179 {offsets = [0, 2, 2, 0], sizes = [2, 8, 8, 32], strides = [1, 1, 1, 1]} : vector<2x10x10x32xf32> to vector<2x8x8x32xf32>
    %202 = tpu.concatenate %199, %200, %201 in 3 : vector<2x8x8x32xf32>, vector<2x8x8x32xf32>, vector<2x8x8x32xf32> -> vector<2x8x8x96xf32>
    %203 = vector.shape_cast %202 : vector<2x8x8x96xf32> to vector<128x96xf32>
    %204 = vector.extract_strided_slice %174 {offsets = [192, 0], sizes = [96, 32], strides = [1, 1]} : vector<288x32xf32> to vector<96x32xf32>
    %205 = arith.truncf %203 : vector<128x96xf32> to vector<128x96xbf16>
    %206 = arith.truncf %204 : vector<96x32xf32> to vector<96x32xbf16>
    %cst_46 = arith.constant dense<0.000000e+00> : vector<128x32xf32>
    %207 = tpu.matmul %205, %206, %cst_46 {dimension_numbers = #tpu.dot_dimension_numbers<[1], [0], [0], [1], [0, 0, 1, 1], [], []>} : vector<128x96xbf16>, vector<96x32xbf16>, vector<128x32xf32> -> vector<128x32xf32>
    %208 = arith.addf %198, %207 : vector<128x32xf32>
    %209 = vector.broadcast %175 : vector<1x32xf32> to vector<128x32xf32>
    %210 = arith.addf %208, %209 : vector<128x32xf32>
    %cst_47 = arith.constant 0.000000e+00 : f32
    %211 = vector.broadcast %cst_47 : f32 to vector<128x32xf32>
    %212 = arith.cmpf oge, %210, %211 : vector<128x32xf32>
    %cst_48 = arith.constant 2.000000e-01 : f32
    %213 = vector.broadcast %cst_48 : f32 to vector<128x32xf32>
    %214 = arith.mulf %213, %210 : vector<128x32xf32>
    %215 = arith.select %212, %210, %214 : vector<128x32xi1>, vector<128x32xf32>
    %216 = arith.mulf %215, %215 : vector<128x32xf32>
    %cst_49 = arith.constant dense<0.000000e+00> : vector<128xf32>
    %217 = vector.multi_reduction <add>, %216, %cst_49 [1] : vector<128x32xf32> to vector<128xf32>
    %218 = vector.shape_cast %217 : vector<128xf32> to vector<128x1xf32>
    %cst_50 = arith.constant 3.200000e+01 : f32
    %219 = vector.broadcast %cst_50 : f32 to vector<128x1xf32>
    %220 = arith.divf %218, %219 : vector<128x1xf32>
    %cst_51 = arith.constant 9.99999993E-9 : f32
    %221 = vector.broadcast %cst_51 : f32 to vector<128x1xf32>
    %222 = arith.addf %220, %221 : vector<128x1xf32>
    %223 = math.rsqrt %222 : vector<128x1xf32>
    %224 = vector.broadcast %223 : vector<128x1xf32> to vector<128x32xf32>
    %225 = arith.mulf %215, %224 : vector<128x32xf32>
    %226 = vector.shape_cast %225 : vector<128x32xf32> to vector<2x8x8x32xf32>
    %c0_52 = arith.constant 0 : index
    %c0_53 = arith.constant 0 : index
    %227 = vector.load %arg10[%c0_52, %c0_53] : memref<288x32xf32, #tpu.memory_space<vmem>>, vector<288x32xf32>
    %c0_54 = arith.constant 0 : index
    %c0_55 = arith.constant 0 : index
    %228 = vector.load %arg11[%c0_54, %c0_55] : memref<1x32xf32, #tpu.memory_space<vmem>>, vector<1x32xf32>
    %cst_56 = arith.constant 0.000000e+00 : f32
    %229 = vector.broadcast %cst_56 : f32 to vector<2x1x8x32xf32>
    %230 = tpu.concatenate %229, %226, %229 in 1 : vector<2x1x8x32xf32>, vector<2x8x8x32xf32>, vector<2x1x8x32xf32> -> vector<2x10x8x32xf32>
    %cst_57 = arith.constant 0.000000e+00 : f32
    %231 = vector.broadcast %cst_57 : f32 to vector<2x10x1x32xf32>
    %232 = tpu.concatenate %231, %230, %231 in 2 : vector<2x10x1x32xf32>, vector<2x10x8x32xf32>, vector<2x10x1x32xf32> -> vector<2x10x10x32xf32>
    %233 = vector.extract_strided_slice %232 {offsets = [0, 0, 0, 0], sizes = [2, 8, 8, 32], strides = [1, 1, 1, 1]} : vector<2x10x10x32xf32> to vector<2x8x8x32xf32>
    %234 = vector.extract_strided_slice %232 {offsets = [0, 0, 1, 0], sizes = [2, 8, 8, 32], strides = [1, 1, 1, 1]} : vector<2x10x10x32xf32> to vector<2x8x8x32xf32>
    %235 = vector.extract_strided_slice %232 {offsets = [0, 0, 2, 0], sizes = [2, 8, 8, 32], strides = [1, 1, 1, 1]} : vector<2x10x10x32xf32> to vector<2x8x8x32xf32>
    %236 = tpu.concatenate %233, %234, %235 in 3 : vector<2x8x8x32xf32>, vector<2x8x8x32xf32>, vector<2x8x8x32xf32> -> vector<2x8x8x96xf32>
    %237 = vector.shape_cast %236 : vector<2x8x8x96xf32> to vector<128x96xf32>
    %238 = vector.extract_strided_slice %227 {offsets = [0, 0], sizes = [96, 32], strides = [1, 1]} : vector<288x32xf32> to vector<96x32xf32>
    %239 = arith.truncf %237 : vector<128x96xf32> to vector<128x96xbf16>
    %240 = arith.truncf %238 : vector<96x32xf32> to vector<96x32xbf16>
    %cst_58 = arith.constant dense<0.000000e+00> : vector<128x32xf32>
    %241 = tpu.matmul %239, %240, %cst_58 {dimension_numbers = #tpu.dot_dimension_numbers<[1], [0], [0], [1], [0, 0, 1, 1], [], []>} : vector<128x96xbf16>, vector<96x32xbf16>, vector<128x32xf32> -> vector<128x32xf32>
    %242 = vector.extract_strided_slice %232 {offsets = [0, 1, 0, 0], sizes = [2, 8, 8, 32], strides = [1, 1, 1, 1]} : vector<2x10x10x32xf32> to vector<2x8x8x32xf32>
    %243 = vector.extract_strided_slice %232 {offsets = [0, 1, 1, 0], sizes = [2, 8, 8, 32], strides = [1, 1, 1, 1]} : vector<2x10x10x32xf32> to vector<2x8x8x32xf32>
    %244 = vector.extract_strided_slice %232 {offsets = [0, 1, 2, 0], sizes = [2, 8, 8, 32], strides = [1, 1, 1, 1]} : vector<2x10x10x32xf32> to vector<2x8x8x32xf32>
    %245 = tpu.concatenate %242, %243, %244 in 3 : vector<2x8x8x32xf32>, vector<2x8x8x32xf32>, vector<2x8x8x32xf32> -> vector<2x8x8x96xf32>
    %246 = vector.shape_cast %245 : vector<2x8x8x96xf32> to vector<128x96xf32>
    %247 = vector.extract_strided_slice %227 {offsets = [96, 0], sizes = [96, 32], strides = [1, 1]} : vector<288x32xf32> to vector<96x32xf32>
    %248 = arith.truncf %246 : vector<128x96xf32> to vector<128x96xbf16>
    %249 = arith.truncf %247 : vector<96x32xf32> to vector<96x32xbf16>
    %cst_59 = arith.constant dense<0.000000e+00> : vector<128x32xf32>
    %250 = tpu.matmul %248, %249, %cst_59 {dimension_numbers = #tpu.dot_dimension_numbers<[1], [0], [0], [1], [0, 0, 1, 1], [], []>} : vector<128x96xbf16>, vector<96x32xbf16>, vector<128x32xf32> -> vector<128x32xf32>
    %251 = arith.addf %241, %250 : vector<128x32xf32>
    %252 = vector.extract_strided_slice %232 {offsets = [0, 2, 0, 0], sizes = [2, 8, 8, 32], strides = [1, 1, 1, 1]} : vector<2x10x10x32xf32> to vector<2x8x8x32xf32>
    %253 = vector.extract_strided_slice %232 {offsets = [0, 2, 1, 0], sizes = [2, 8, 8, 32], strides = [1, 1, 1, 1]} : vector<2x10x10x32xf32> to vector<2x8x8x32xf32>
    %254 = vector.extract_strided_slice %232 {offsets = [0, 2, 2, 0], sizes = [2, 8, 8, 32], strides = [1, 1, 1, 1]} : vector<2x10x10x32xf32> to vector<2x8x8x32xf32>
    %255 = tpu.concatenate %252, %253, %254 in 3 : vector<2x8x8x32xf32>, vector<2x8x8x32xf32>, vector<2x8x8x32xf32> -> vector<2x8x8x96xf32>
    %256 = vector.shape_cast %255 : vector<2x8x8x96xf32> to vector<128x96xf32>
    %257 = vector.extract_strided_slice %227 {offsets = [192, 0], sizes = [96, 32], strides = [1, 1]} : vector<288x32xf32> to vector<96x32xf32>
    %258 = arith.truncf %256 : vector<128x96xf32> to vector<128x96xbf16>
    %259 = arith.truncf %257 : vector<96x32xf32> to vector<96x32xbf16>
    %cst_60 = arith.constant dense<0.000000e+00> : vector<128x32xf32>
    %260 = tpu.matmul %258, %259, %cst_60 {dimension_numbers = #tpu.dot_dimension_numbers<[1], [0], [0], [1], [0, 0, 1, 1], [], []>} : vector<128x96xbf16>, vector<96x32xbf16>, vector<128x32xf32> -> vector<128x32xf32>
    %261 = arith.addf %251, %260 : vector<128x32xf32>
    %262 = vector.broadcast %228 : vector<1x32xf32> to vector<128x32xf32>
    %263 = arith.addf %261, %262 : vector<128x32xf32>
    %cst_61 = arith.constant 0.000000e+00 : f32
    %264 = vector.broadcast %cst_61 : f32 to vector<128x32xf32>
    %265 = arith.cmpf oge, %263, %264 : vector<128x32xf32>
    %cst_62 = arith.constant 2.000000e-01 : f32
    %266 = vector.broadcast %cst_62 : f32 to vector<128x32xf32>
    %267 = arith.mulf %266, %263 : vector<128x32xf32>
    %268 = arith.select %265, %263, %267 : vector<128x32xi1>, vector<128x32xf32>
    %269 = arith.mulf %268, %268 : vector<128x32xf32>
    %cst_63 = arith.constant dense<0.000000e+00> : vector<128xf32>
    %270 = vector.multi_reduction <add>, %269, %cst_63 [1] : vector<128x32xf32> to vector<128xf32>
    %271 = vector.shape_cast %270 : vector<128xf32> to vector<128x1xf32>
    %cst_64 = arith.constant 3.200000e+01 : f32
    %272 = vector.broadcast %cst_64 : f32 to vector<128x1xf32>
    %273 = arith.divf %271, %272 : vector<128x1xf32>
    %cst_65 = arith.constant 9.99999993E-9 : f32
    %274 = vector.broadcast %cst_65 : f32 to vector<128x1xf32>
    %275 = arith.addf %273, %274 : vector<128x1xf32>
    %276 = math.rsqrt %275 : vector<128x1xf32>
    %277 = vector.broadcast %276 : vector<128x1xf32> to vector<128x32xf32>
    %278 = arith.mulf %268, %277 : vector<128x32xf32>
    %279 = vector.shape_cast %278 : vector<128x32xf32> to vector<2x8x8x32xf32>
    %280 = vector.shape_cast %279 : vector<2x8x8x32xf32> to vector<2x8x1x8x32xf32>
    %281 = vector.shape_cast %280 : vector<2x8x1x8x32xf32> to vector<2x8x1x8x32xf32>
    %282 = vector.broadcast %281 : vector<2x8x1x8x32xf32> to vector<2x8x2x8x32xf32>
    %283 = vector.shape_cast %282 : vector<2x8x2x8x32xf32> to vector<2x16x8x32xf32>
    %284 = vector.shape_cast %283 : vector<2x16x8x32xf32> to vector<2x16x8x1x32xf32>
    %285 = vector.shape_cast %284 : vector<2x16x8x1x32xf32> to vector<2x16x8x1x32xf32>
    %286 = vector.broadcast %285 : vector<2x16x8x1x32xf32> to vector<2x16x8x2x32xf32>
    %287 = vector.shape_cast %286 : vector<2x16x8x2x32xf32> to vector<2x16x16x32xf32>
    %c0_66 = arith.constant 0 : index
    %c0_67 = arith.constant 0 : index
    %288 = vector.load %arg12[%c0_66, %c0_67] : memref<288x32xf32, #tpu.memory_space<vmem>>, vector<288x32xf32>
    %c0_68 = arith.constant 0 : index
    %c0_69 = arith.constant 0 : index
    %289 = vector.load %arg13[%c0_68, %c0_69] : memref<1x32xf32, #tpu.memory_space<vmem>>, vector<1x32xf32>
    %cst_70 = arith.constant 0.000000e+00 : f32
    %290 = vector.broadcast %cst_70 : f32 to vector<2x1x16x32xf32>
    %291 = tpu.concatenate %290, %287, %290 in 1 : vector<2x1x16x32xf32>, vector<2x16x16x32xf32>, vector<2x1x16x32xf32> -> vector<2x18x16x32xf32>
    %cst_71 = arith.constant 0.000000e+00 : f32
    %292 = vector.broadcast %cst_71 : f32 to vector<2x18x1x32xf32>
    %293 = tpu.concatenate %292, %291, %292 in 2 : vector<2x18x1x32xf32>, vector<2x18x16x32xf32>, vector<2x18x1x32xf32> -> vector<2x18x18x32xf32>
    %294 = vector.extract_strided_slice %293 {offsets = [0, 0, 0, 0], sizes = [2, 16, 16, 32], strides = [1, 1, 1, 1]} : vector<2x18x18x32xf32> to vector<2x16x16x32xf32>
    %295 = vector.extract_strided_slice %293 {offsets = [0, 0, 1, 0], sizes = [2, 16, 16, 32], strides = [1, 1, 1, 1]} : vector<2x18x18x32xf32> to vector<2x16x16x32xf32>
    %296 = vector.extract_strided_slice %293 {offsets = [0, 0, 2, 0], sizes = [2, 16, 16, 32], strides = [1, 1, 1, 1]} : vector<2x18x18x32xf32> to vector<2x16x16x32xf32>
    %297 = tpu.concatenate %294, %295, %296 in 3 : vector<2x16x16x32xf32>, vector<2x16x16x32xf32>, vector<2x16x16x32xf32> -> vector<2x16x16x96xf32>
    %298 = vector.shape_cast %297 : vector<2x16x16x96xf32> to vector<512x96xf32>
    %299 = vector.extract_strided_slice %288 {offsets = [0, 0], sizes = [96, 32], strides = [1, 1]} : vector<288x32xf32> to vector<96x32xf32>
    %300 = arith.truncf %298 : vector<512x96xf32> to vector<512x96xbf16>
    %301 = arith.truncf %299 : vector<96x32xf32> to vector<96x32xbf16>
    %cst_72 = arith.constant dense<0.000000e+00> : vector<512x32xf32>
    %302 = tpu.matmul %300, %301, %cst_72 {dimension_numbers = #tpu.dot_dimension_numbers<[1], [0], [0], [1], [0, 0, 1, 1], [], []>} : vector<512x96xbf16>, vector<96x32xbf16>, vector<512x32xf32> -> vector<512x32xf32>
    %303 = vector.extract_strided_slice %293 {offsets = [0, 1, 0, 0], sizes = [2, 16, 16, 32], strides = [1, 1, 1, 1]} : vector<2x18x18x32xf32> to vector<2x16x16x32xf32>
    %304 = vector.extract_strided_slice %293 {offsets = [0, 1, 1, 0], sizes = [2, 16, 16, 32], strides = [1, 1, 1, 1]} : vector<2x18x18x32xf32> to vector<2x16x16x32xf32>
    %305 = vector.extract_strided_slice %293 {offsets = [0, 1, 2, 0], sizes = [2, 16, 16, 32], strides = [1, 1, 1, 1]} : vector<2x18x18x32xf32> to vector<2x16x16x32xf32>
    %306 = tpu.concatenate %303, %304, %305 in 3 : vector<2x16x16x32xf32>, vector<2x16x16x32xf32>, vector<2x16x16x32xf32> -> vector<2x16x16x96xf32>
    %307 = vector.shape_cast %306 : vector<2x16x16x96xf32> to vector<512x96xf32>
    %308 = vector.extract_strided_slice %288 {offsets = [96, 0], sizes = [96, 32], strides = [1, 1]} : vector<288x32xf32> to vector<96x32xf32>
    %309 = arith.truncf %307 : vector<512x96xf32> to vector<512x96xbf16>
    %310 = arith.truncf %308 : vector<96x32xf32> to vector<96x32xbf16>
    %cst_73 = arith.constant dense<0.000000e+00> : vector<512x32xf32>
    %311 = tpu.matmul %309, %310, %cst_73 {dimension_numbers = #tpu.dot_dimension_numbers<[1], [0], [0], [1], [0, 0, 1, 1], [], []>} : vector<512x96xbf16>, vector<96x32xbf16>, vector<512x32xf32> -> vector<512x32xf32>
    %312 = arith.addf %302, %311 : vector<512x32xf32>
    %313 = vector.extract_strided_slice %293 {offsets = [0, 2, 0, 0], sizes = [2, 16, 16, 32], strides = [1, 1, 1, 1]} : vector<2x18x18x32xf32> to vector<2x16x16x32xf32>
    %314 = vector.extract_strided_slice %293 {offsets = [0, 2, 1, 0], sizes = [2, 16, 16, 32], strides = [1, 1, 1, 1]} : vector<2x18x18x32xf32> to vector<2x16x16x32xf32>
    %315 = vector.extract_strided_slice %293 {offsets = [0, 2, 2, 0], sizes = [2, 16, 16, 32], strides = [1, 1, 1, 1]} : vector<2x18x18x32xf32> to vector<2x16x16x32xf32>
    %316 = tpu.concatenate %313, %314, %315 in 3 : vector<2x16x16x32xf32>, vector<2x16x16x32xf32>, vector<2x16x16x32xf32> -> vector<2x16x16x96xf32>
    %317 = vector.shape_cast %316 : vector<2x16x16x96xf32> to vector<512x96xf32>
    %318 = vector.extract_strided_slice %288 {offsets = [192, 0], sizes = [96, 32], strides = [1, 1]} : vector<288x32xf32> to vector<96x32xf32>
    %319 = arith.truncf %317 : vector<512x96xf32> to vector<512x96xbf16>
    %320 = arith.truncf %318 : vector<96x32xf32> to vector<96x32xbf16>
    %cst_74 = arith.constant dense<0.000000e+00> : vector<512x32xf32>
    %321 = tpu.matmul %319, %320, %cst_74 {dimension_numbers = #tpu.dot_dimension_numbers<[1], [0], [0], [1], [0, 0, 1, 1], [], []>} : vector<512x96xbf16>, vector<96x32xbf16>, vector<512x32xf32> -> vector<512x32xf32>
    %322 = arith.addf %312, %321 : vector<512x32xf32>
    %323 = vector.broadcast %289 : vector<1x32xf32> to vector<512x32xf32>
    %324 = arith.addf %322, %323 : vector<512x32xf32>
    %cst_75 = arith.constant 0.000000e+00 : f32
    %325 = vector.broadcast %cst_75 : f32 to vector<512x32xf32>
    %326 = arith.cmpf oge, %324, %325 : vector<512x32xf32>
    %cst_76 = arith.constant 2.000000e-01 : f32
    %327 = vector.broadcast %cst_76 : f32 to vector<512x32xf32>
    %328 = arith.mulf %327, %324 : vector<512x32xf32>
    %329 = arith.select %326, %324, %328 : vector<512x32xi1>, vector<512x32xf32>
    %330 = arith.mulf %329, %329 : vector<512x32xf32>
    %cst_77 = arith.constant dense<0.000000e+00> : vector<512xf32>
    %331 = vector.multi_reduction <add>, %330, %cst_77 [1] : vector<512x32xf32> to vector<512xf32>
    %332 = vector.shape_cast %331 : vector<512xf32> to vector<512x1xf32>
    %cst_78 = arith.constant 3.200000e+01 : f32
    %333 = vector.broadcast %cst_78 : f32 to vector<512x1xf32>
    %334 = arith.divf %332, %333 : vector<512x1xf32>
    %cst_79 = arith.constant 9.99999993E-9 : f32
    %335 = vector.broadcast %cst_79 : f32 to vector<512x1xf32>
    %336 = arith.addf %334, %335 : vector<512x1xf32>
    %337 = math.rsqrt %336 : vector<512x1xf32>
    %338 = vector.broadcast %337 : vector<512x1xf32> to vector<512x32xf32>
    %339 = arith.mulf %329, %338 : vector<512x32xf32>
    %340 = vector.shape_cast %339 : vector<512x32xf32> to vector<2x16x16x32xf32>
    %c0_80 = arith.constant 0 : index
    %c0_81 = arith.constant 0 : index
    %341 = vector.load %arg14[%c0_80, %c0_81] : memref<288x32xf32, #tpu.memory_space<vmem>>, vector<288x32xf32>
    %c0_82 = arith.constant 0 : index
    %c0_83 = arith.constant 0 : index
    %342 = vector.load %arg15[%c0_82, %c0_83] : memref<1x32xf32, #tpu.memory_space<vmem>>, vector<1x32xf32>
    %cst_84 = arith.constant 0.000000e+00 : f32
    %343 = vector.broadcast %cst_84 : f32 to vector<2x1x16x32xf32>
    %344 = tpu.concatenate %343, %340, %343 in 1 : vector<2x1x16x32xf32>, vector<2x16x16x32xf32>, vector<2x1x16x32xf32> -> vector<2x18x16x32xf32>
    %cst_85 = arith.constant 0.000000e+00 : f32
    %345 = vector.broadcast %cst_85 : f32 to vector<2x18x1x32xf32>
    %346 = tpu.concatenate %345, %344, %345 in 2 : vector<2x18x1x32xf32>, vector<2x18x16x32xf32>, vector<2x18x1x32xf32> -> vector<2x18x18x32xf32>
    %347 = vector.extract_strided_slice %346 {offsets = [0, 0, 0, 0], sizes = [2, 16, 16, 32], strides = [1, 1, 1, 1]} : vector<2x18x18x32xf32> to vector<2x16x16x32xf32>
    %348 = vector.extract_strided_slice %346 {offsets = [0, 0, 1, 0], sizes = [2, 16, 16, 32], strides = [1, 1, 1, 1]} : vector<2x18x18x32xf32> to vector<2x16x16x32xf32>
    %349 = vector.extract_strided_slice %346 {offsets = [0, 0, 2, 0], sizes = [2, 16, 16, 32], strides = [1, 1, 1, 1]} : vector<2x18x18x32xf32> to vector<2x16x16x32xf32>
    %350 = tpu.concatenate %347, %348, %349 in 3 : vector<2x16x16x32xf32>, vector<2x16x16x32xf32>, vector<2x16x16x32xf32> -> vector<2x16x16x96xf32>
    %351 = vector.shape_cast %350 : vector<2x16x16x96xf32> to vector<512x96xf32>
    %352 = vector.extract_strided_slice %341 {offsets = [0, 0], sizes = [96, 32], strides = [1, 1]} : vector<288x32xf32> to vector<96x32xf32>
    %353 = arith.truncf %351 : vector<512x96xf32> to vector<512x96xbf16>
    %354 = arith.truncf %352 : vector<96x32xf32> to vector<96x32xbf16>
    %cst_86 = arith.constant dense<0.000000e+00> : vector<512x32xf32>
    %355 = tpu.matmul %353, %354, %cst_86 {dimension_numbers = #tpu.dot_dimension_numbers<[1], [0], [0], [1], [0, 0, 1, 1], [], []>} : vector<512x96xbf16>, vector<96x32xbf16>, vector<512x32xf32> -> vector<512x32xf32>
    %356 = vector.extract_strided_slice %346 {offsets = [0, 1, 0, 0], sizes = [2, 16, 16, 32], strides = [1, 1, 1, 1]} : vector<2x18x18x32xf32> to vector<2x16x16x32xf32>
    %357 = vector.extract_strided_slice %346 {offsets = [0, 1, 1, 0], sizes = [2, 16, 16, 32], strides = [1, 1, 1, 1]} : vector<2x18x18x32xf32> to vector<2x16x16x32xf32>
    %358 = vector.extract_strided_slice %346 {offsets = [0, 1, 2, 0], sizes = [2, 16, 16, 32], strides = [1, 1, 1, 1]} : vector<2x18x18x32xf32> to vector<2x16x16x32xf32>
    %359 = tpu.concatenate %356, %357, %358 in 3 : vector<2x16x16x32xf32>, vector<2x16x16x32xf32>, vector<2x16x16x32xf32> -> vector<2x16x16x96xf32>
    %360 = vector.shape_cast %359 : vector<2x16x16x96xf32> to vector<512x96xf32>
    %361 = vector.extract_strided_slice %341 {offsets = [96, 0], sizes = [96, 32], strides = [1, 1]} : vector<288x32xf32> to vector<96x32xf32>
    %362 = arith.truncf %360 : vector<512x96xf32> to vector<512x96xbf16>
    %363 = arith.truncf %361 : vector<96x32xf32> to vector<96x32xbf16>
    %cst_87 = arith.constant dense<0.000000e+00> : vector<512x32xf32>
    %364 = tpu.matmul %362, %363, %cst_87 {dimension_numbers = #tpu.dot_dimension_numbers<[1], [0], [0], [1], [0, 0, 1, 1], [], []>} : vector<512x96xbf16>, vector<96x32xbf16>, vector<512x32xf32> -> vector<512x32xf32>
    %365 = arith.addf %355, %364 : vector<512x32xf32>
    %366 = vector.extract_strided_slice %346 {offsets = [0, 2, 0, 0], sizes = [2, 16, 16, 32], strides = [1, 1, 1, 1]} : vector<2x18x18x32xf32> to vector<2x16x16x32xf32>
    %367 = vector.extract_strided_slice %346 {offsets = [0, 2, 1, 0], sizes = [2, 16, 16, 32], strides = [1, 1, 1, 1]} : vector<2x18x18x32xf32> to vector<2x16x16x32xf32>
    %368 = vector.extract_strided_slice %346 {offsets = [0, 2, 2, 0], sizes = [2, 16, 16, 32], strides = [1, 1, 1, 1]} : vector<2x18x18x32xf32> to vector<2x16x16x32xf32>
    %369 = tpu.concatenate %366, %367, %368 in 3 : vector<2x16x16x32xf32>, vector<2x16x16x32xf32>, vector<2x16x16x32xf32> -> vector<2x16x16x96xf32>
    %370 = vector.shape_cast %369 : vector<2x16x16x96xf32> to vector<512x96xf32>
    %371 = vector.extract_strided_slice %341 {offsets = [192, 0], sizes = [96, 32], strides = [1, 1]} : vector<288x32xf32> to vector<96x32xf32>
    %372 = arith.truncf %370 : vector<512x96xf32> to vector<512x96xbf16>
    %373 = arith.truncf %371 : vector<96x32xf32> to vector<96x32xbf16>
    %cst_88 = arith.constant dense<0.000000e+00> : vector<512x32xf32>
    %374 = tpu.matmul %372, %373, %cst_88 {dimension_numbers = #tpu.dot_dimension_numbers<[1], [0], [0], [1], [0, 0, 1, 1], [], []>} : vector<512x96xbf16>, vector<96x32xbf16>, vector<512x32xf32> -> vector<512x32xf32>
    %375 = arith.addf %365, %374 : vector<512x32xf32>
    %376 = vector.broadcast %342 : vector<1x32xf32> to vector<512x32xf32>
    %377 = arith.addf %375, %376 : vector<512x32xf32>
    %cst_89 = arith.constant 0.000000e+00 : f32
    %378 = vector.broadcast %cst_89 : f32 to vector<512x32xf32>
    %379 = arith.cmpf oge, %377, %378 : vector<512x32xf32>
    %cst_90 = arith.constant 2.000000e-01 : f32
    %380 = vector.broadcast %cst_90 : f32 to vector<512x32xf32>
    %381 = arith.mulf %380, %377 : vector<512x32xf32>
    %382 = arith.select %379, %377, %381 : vector<512x32xi1>, vector<512x32xf32>
    %383 = arith.mulf %382, %382 : vector<512x32xf32>
    %cst_91 = arith.constant dense<0.000000e+00> : vector<512xf32>
    %384 = vector.multi_reduction <add>, %383, %cst_91 [1] : vector<512x32xf32> to vector<512xf32>
    %385 = vector.shape_cast %384 : vector<512xf32> to vector<512x1xf32>
    %cst_92 = arith.constant 3.200000e+01 : f32
    %386 = vector.broadcast %cst_92 : f32 to vector<512x1xf32>
    %387 = arith.divf %385, %386 : vector<512x1xf32>
    %cst_93 = arith.constant 9.99999993E-9 : f32
    %388 = vector.broadcast %cst_93 : f32 to vector<512x1xf32>
    %389 = arith.addf %387, %388 : vector<512x1xf32>
    %390 = math.rsqrt %389 : vector<512x1xf32>
    %391 = vector.broadcast %390 : vector<512x1xf32> to vector<512x32xf32>
    %392 = arith.mulf %382, %391 : vector<512x32xf32>
    %393 = vector.shape_cast %392 : vector<512x32xf32> to vector<2x16x16x32xf32>
    %394 = vector.shape_cast %287 : vector<2x16x16x32xf32> to vector<512x32xf32>
    %c0_94 = arith.constant 0 : index
    %c0_95 = arith.constant 0 : index
    %395 = vector.load %arg16[%c0_94, %c0_95] : memref<32x3xf32, #tpu.memory_space<vmem>>, vector<32x3xf32>
    %396 = arith.truncf %394 : vector<512x32xf32> to vector<512x32xbf16>
    %397 = arith.truncf %395 : vector<32x3xf32> to vector<32x3xbf16>
    %cst_96 = arith.constant dense<0.000000e+00> : vector<512x3xf32>
    %398 = tpu.matmul %396, %397, %cst_96 {dimension_numbers = #tpu.dot_dimension_numbers<[1], [0], [0], [1], [0, 0, 1, 1], [], []>} : vector<512x32xbf16>, vector<32x3xbf16>, vector<512x3xf32> -> vector<512x3xf32>
    %c0_97 = arith.constant 0 : index
    %c0_98 = arith.constant 0 : index
    %399 = vector.load %arg17[%c0_97, %c0_98] : memref<1x3xf32, #tpu.memory_space<vmem>>, vector<1x3xf32>
    %400 = vector.broadcast %399 : vector<1x3xf32> to vector<512x3xf32>
    %401 = arith.addf %398, %400 : vector<512x3xf32>
    %402 = vector.shape_cast %393 : vector<2x16x16x32xf32> to vector<512x32xf32>
    %c0_99 = arith.constant 0 : index
    %c0_100 = arith.constant 0 : index
    %403 = vector.load %arg18[%c0_99, %c0_100] : memref<32x3xf32, #tpu.memory_space<vmem>>, vector<32x3xf32>
    %404 = arith.truncf %402 : vector<512x32xf32> to vector<512x32xbf16>
    %405 = arith.truncf %403 : vector<32x3xf32> to vector<32x3xbf16>
    %cst_101 = arith.constant dense<0.000000e+00> : vector<512x3xf32>
    %406 = tpu.matmul %404, %405, %cst_101 {dimension_numbers = #tpu.dot_dimension_numbers<[1], [0], [0], [1], [0, 0, 1, 1], [], []>} : vector<512x32xbf16>, vector<32x3xbf16>, vector<512x3xf32> -> vector<512x3xf32>
    %c0_102 = arith.constant 0 : index
    %c0_103 = arith.constant 0 : index
    %407 = vector.load %arg19[%c0_102, %c0_103] : memref<1x3xf32, #tpu.memory_space<vmem>>, vector<1x3xf32>
    %408 = vector.broadcast %407 : vector<1x3xf32> to vector<512x3xf32>
    %409 = arith.addf %406, %408 : vector<512x3xf32>
    %c0_104 = arith.constant 0 : index
    %410 = memref.load %arg0[%c0_104] : memref<1xf32, #tpu.memory_space<smem>>
    %411 = vector.broadcast %410 : f32 to vector<512x3xf32>
    %412 = arith.mulf %411, %409 : vector<512x3xf32>
    %cst_105 = arith.constant 1.000000e+00 : f32
    %413 = arith.subf %cst_105, %410 : f32
    %414 = vector.broadcast %413 : f32 to vector<512x3xf32>
    %415 = arith.mulf %414, %401 : vector<512x3xf32>
    %416 = arith.addf %412, %415 : vector<512x3xf32>
    %417 = math.tanh %416 : vector<512x3xf32>
    %418 = vector.shape_cast %417 : vector<512x3xf32> to vector<2x256x3xf32>
    %419 = tpu.transpose %418, [0, 2, 1] : vector<2x256x3xf32> -> vector<2x3x256xf32>
    %c0_106 = arith.constant 0 : index
    %c0_107 = arith.constant 0 : index
    %c0_108 = arith.constant 0 : index
    %420 = vector.load %arg20[%c0_106, %c0_107, %c0_108] : memref<2x3x256xf32, #tpu.memory_space<vmem>>, vector<2x3x256xf32>
    tpu.vector_store %arg20[%c0_106, %c0_107, %c0_108], %419 {strides = array<i32>} : memref<2x3x256xf32, #tpu.memory_space<vmem>>, vector<2x3x256xf32>,
    return
  }
}

</mosaic_0001>

<llo_original>
// kernel: tpu_custom_call.1
$region0: #{tpu_custom_call.1}
  #allocation0 [shape = 'u32[]', space=smem, size = 0x4, offset = 0x4, fixed_abs, tag = 'smem constant byte address 0x4 - core index']
  #allocation1 [shape = 'u32[144,128]{1,0:T(1,128)}', space=vmem, size = 0x12000, scoped, tag = 'internal scratch']
  #allocation2 [shape = 'f32[1]{0:T(128)S(6)}', space=smem, size = 0x200, scoped, tag = 'scoped memory for tpu_custom_call.1']
  %s0 = inlined_call_operand.<no memory space> [shape: f32[1], index: 0, kind: input, shape index: {}]
  %s1 = inlined_call_operand.vmem [shape: f32[2,32], index: 1, kind: input, shape index: {}]
  %s2 = inlined_call_operand.vmem [shape: f32[32,512], index: 2, kind: input, shape index: {}]
  %s3 = inlined_call_operand.vmem [shape: f32[1,512], index: 3, kind: input, shape index: {}]
  %s4 = inlined_call_operand.vmem [shape: f32[288,32], index: 4, kind: input, shape index: {}]
  %s5 = inlined_call_operand.vmem [shape: f32[1,32], index: 5, kind: input, shape index: {}]
  %s6 = inlined_call_operand.vmem [shape: f32[288,32], index: 6, kind: input, shape index: {}]
  %s7 = inlined_call_operand.vmem [shape: f32[1,32], index: 7, kind: input, shape index: {}]
  %s8 = inlined_call_operand.vmem [shape: f32[288,32], index: 8, kind: input, shape index: {}]
  %s9 = inlined_call_operand.vmem [shape: f32[1,32], index: 9, kind: input, shape index: {}]
  %s10 = inlined_call_operand.vmem [shape: f32[288,32], index: 10, kind: input, shape index: {}]
  %s11 = inlined_call_operand.vmem [shape: f32[1,32], index: 11, kind: input, shape index: {}]
  %s12 = inlined_call_operand.vmem [shape: f32[288,32], index: 12, kind: input, shape index: {}]
  %s13 = inlined_call_operand.vmem [shape: f32[1,32], index: 13, kind: input, shape index: {}]
  %s14 = inlined_call_operand.vmem [shape: f32[288,32], index: 14, kind: input, shape index: {}]
  %s15 = inlined_call_operand.vmem [shape: f32[1,32], index: 15, kind: input, shape index: {}]
  %s16 = inlined_call_operand.vmem [shape: f32[32,3], index: 16, kind: input, shape index: {}]
  %s17 = inlined_call_operand.vmem [shape: f32[1,3], index: 17, kind: input, shape index: {}]
  %s18 = inlined_call_operand.vmem [shape: f32[32,3], index: 18, kind: input, shape index: {}]
  %s19 = inlined_call_operand.vmem [shape: f32[1,3], index: 19, kind: input, shape index: {}]
  %s20 = inlined_call_operand.vmem [shape: f32[2,3,256], index: 20, kind: output, shape index: {}]
  %s21 = sld [smem:[#allocation0]]
  $region90: #{tpu_custom_call.1} parent=0
    _
  %s23 = ssub.s32 1, %s21
  %s24 = scalar_select 0, %s23, %s21
  %25 = sst [smem:[#allocation2]] %s0
  // Predicated region
  $region2: #{tpu_custom_call.1} parent=0 // pred_check
    _
  $region3: #{tpu_custom_call.1} parent=0 // pred_check_branch
    %27 = sbr.rel (0) target = $region5
  $region4: #{tpu_custom_call.1} parent=0 // pred_region
    _
  $region5: #{tpu_custom_call.1} parent=0 // pred_fallthru
    _
  // Predicated region
  $region6: #{tpu_custom_call.1} parent=0 // pred_check
    _
  $region7: #{tpu_custom_call.1} parent=0 // pred_check_branch
    %29 = sbr.rel (0) target = $region9
  $region8: #{tpu_custom_call.1} parent=0 // pred_region
    _
  $region9: #{tpu_custom_call.1} parent=0 // pred_fallthru
    _
  // Predicated region
  $region10: #{tpu_custom_call.1} parent=0 // pred_check
    _
  $region11: #{tpu_custom_call.1} parent=0 // pred_check_branch
    %31 = sbr.rel (0) target = $region13
  $region12: #{tpu_custom_call.1} parent=0 // pred_region
    _
  $region13: #{tpu_custom_call.1} parent=0 // pred_fallthru
    _
  // Predicated region
  $region14: #{tpu_custom_call.1} parent=0 // pred_check
    _
  $region15: #{tpu_custom_call.1} parent=0 // pred_check_branch
    %33 = sbr.rel (0) target = $region17
  $region16: #{tpu_custom_call.1} parent=0 // pred_region
    _
  $region17: #{tpu_custom_call.1} parent=0 // pred_fallthru
    _
  // Predicated region
  $region18: #{tpu_custom_call.1} parent=0 // pred_check
    _
  $region19: #{tpu_custom_call.1} parent=0 // pred_check_branch
    %35 = sbr.rel (0) target = $region21
  $region20: #{tpu_custom_call.1} parent=0 // pred_region
    _
  $region21: #{tpu_custom_call.1} parent=0 // pred_fallthru
    _
  // Predicated region
  $region22: #{tpu_custom_call.1} parent=0 // pred_check
    _
  $region23: #{tpu_custom_call.1} parent=0 // pred_check_branch
    %37 = sbr.rel (0) target = $region25
  $region24: #{tpu_custom_call.1} parent=0 // pred_region
    _
  $region25: #{tpu_custom_call.1} parent=0 // pred_fallthru
    _
  // Predicated region
  $region26: #{tpu_custom_call.1} parent=0 // pred_check
    _
  $region27: #{tpu_custom_call.1} parent=0 // pred_check_branch
    %39 = sbr.rel (0) target = $region29
  $region28: #{tpu_custom_call.1} parent=0 // pred_region
    _
  $region29: #{tpu_custom_call.1} parent=0 // pred_fallthru
    _
  // Predicated region
  $region30: #{tpu_custom_call.1} parent=0 // pred_check
    _
  $region31: #{tpu_custom_call.1} parent=0 // pred_check_branch
    %41 = sbr.rel (0) target = $region33
  $region32: #{tpu_custom_call.1} parent=0 // pred_region
    _
  $region33: #{tpu_custom_call.1} parent=0 // pred_fallthru
    _
  // Predicated region
  $region34: #{tpu_custom_call.1} parent=0 // pred_check
    _
  $region35: #{tpu_custom_call.1} parent=0 // pred_check_branch
    %43 = sbr.rel (0) target = $region37
  $region36: #{tpu_custom_call.1} parent=0 // pred_region
    _
  $region37: #{tpu_custom_call.1} parent=0 // pred_fallthru
    _
  // Predicated region
  $region38: #{tpu_custom_call.1} parent=0 // pred_check
    _
  $region39: #{tpu_custom_call.1} parent=0 // pred_check_branch
    %45 = sbr.rel (0) target = $region41
  $region40: #{tpu_custom_call.1} parent=0 // pred_region
    _
  $region41: #{tpu_custom_call.1} parent=0 // pred_fallthru
    _
  // Predicated region
  $region42: #{tpu_custom_call.1} parent=0 // pred_check
    _
  $region43: #{tpu_custom_call.1} parent=0 // pred_check_branch
    %47 = sbr.rel (0) target = $region45
  $region44: #{tpu_custom_call.1} parent=0 // pred_region
    _
  $region45: #{tpu_custom_call.1} parent=0 // pred_fallthru
    _
  // Predicated region
  $region46: #{tpu_custom_call.1} parent=0 // pred_check
    _
  $region47: #{tpu_custom_call.1} parent=0 // pred_check_branch
    %49 = sbr.rel (0) target = $region49
  $region48: #{tpu_custom_call.1} parent=0 // pred_region
    _
  $region49: #{tpu_custom_call.1} parent=0 // pred_fallthru
    _
  // Predicated region
  $region50: #{tpu_custom_call.1} parent=0 // pred_check
    _
  $region51: #{tpu_custom_call.1} parent=0 // pred_check_branch
    %51 = sbr.rel (0) target = $region53
  $region52: #{tpu_custom_call.1} parent=0 // pred_region
    _
  $region53: #{tpu_custom_call.1} parent=0 // pred_fallthru
    _
  // Predicated region
  $region54: #{tpu_custom_call.1} parent=0 // pred_check
    _
  $region55: #{tpu_custom_call.1} parent=0 // pred_check_branch
    %53 = sbr.rel (0) target = $region57
  $region56: #{tpu_custom_call.1} parent=0 // pred_region
    _
  $region57: #{tpu_custom_call.1} parent=0 // pred_fallthru
    _
  // Predicated region
  $region58: #{tpu_custom_call.1} parent=0 // pred_check
    _
  $region59: #{tpu_custom_call.1} parent=0 // pred_check_branch
    %55 = sbr.rel (0) target = $region61
  $region60: #{tpu_custom_call.1} parent=0 // pred_region
    _
  $region61: #{tpu_custom_call.1} parent=0 // pred_fallthru
    _
  // Predicated region
  $region62: #{tpu_custom_call.1} parent=0 // pred_check
    _
  $region63: #{tpu_custom_call.1} parent=0 // pred_check_branch
    %57 = sbr.rel (0) target = $region65
  $region64: #{tpu_custom_call.1} parent=0 // pred_region
    _
  $region65: #{tpu_custom_call.1} parent=0 // pred_fallthru
    _
  // Predicated region
  $region66: #{tpu_custom_call.1} parent=0 // pred_check
    _
  $region67: #{tpu_custom_call.1} parent=0 // pred_check_branch
    %59 = sbr.rel (0) target = $region69
  $region68: #{tpu_custom_call.1} parent=0 // pred_region
    _
  $region69: #{tpu_custom_call.1} parent=0 // pred_fallthru
    _
  // Predicated region
  $region70: #{tpu_custom_call.1} parent=0 // pred_check
    _
  $region71: #{tpu_custom_call.1} parent=0 // pred_check_branch
    %61 = sbr.rel (0) target = $region73
  $region72: #{tpu_custom_call.1} parent=0 // pred_region
    _
  $region73: #{tpu_custom_call.1} parent=0 // pred_fallthru
    _
  // Predicated region
  $region74: #{tpu_custom_call.1} parent=0 // pred_check
    _
  $region75: #{tpu_custom_call.1} parent=0 // pred_check_branch
    %63 = sbr.rel (0) target = $region77
  $region76: #{tpu_custom_call.1} parent=0 // pred_region
    _
  $region77: #{tpu_custom_call.1} parent=0 // pred_fallthru
    _
  // Predicated region
  $region78: #{tpu_custom_call.1} parent=0 // pred_check
    _
  $region79: #{tpu_custom_call.1} parent=0 // pred_check_branch
    %65 = sbr.rel (0) target = $region81
  $region80: #{tpu_custom_call.1} parent=0 // pred_region
    _
  $region81: #{tpu_custom_call.1} parent=0 // pred_fallthru
    _
  %v67 = vld [vmem:[%s1] sm:$0x3]
  %v68 = vld [vmem:[%s2] sm:$0xff]
  %v69 = vld [vmem:[%s2 + $0x8] sm:$0xff]
  %v70 = vld [vmem:[%s2 + $0x10] sm:$0xff]
  %v71 = vld [vmem:[%s2 + $0x18] sm:$0xff]
  %v72 = vld [vmem:[%s2 + $0x20] sm:$0xff]
  %v73 = vld [vmem:[%s2 + $0x28] sm:$0xff]
  %v74 = vld [vmem:[%s2 + $0x30] sm:$0xff]
  %v75 = vld [vmem:[%s2 + $0x38] sm:$0xff]
  %v76 = vld [vmem:[%s2 + $0x40] sm:$0xff]
  %v77 = vld [vmem:[%s2 + $0x48] sm:$0xff]
  %v78 = vld [vmem:[%s2 + $0x50] sm:$0xff]
  %v79 = vld [vmem:[%s2 + $0x58] sm:$0xff]
  %v80 = vld [vmem:[%s2 + $0x60] sm:$0xff]
  %v81 = vld [vmem:[%s2 + $0x68] sm:$0xff]
  %v82 = vld [vmem:[%s2 + $0x70] sm:$0xff]
  %v83 = vld [vmem:[%s2 + $0x78] sm:$0xff]
  %v84 = vpack.c.bf16 %v67, %v67
  %v85 = vpack.c.bf16 %v72, %v68
  %v86 = vpack.c.bf16 %v73, %v69
  %v87 = vpack.c.bf16 %v74, %v70
  %v88 = vpack.c.bf16 %v75, %v71
  %v89 = vpack.c.bf16 %v80, %v76
  %v90 = vpack.c.bf16 %v81, %v77
  %v91 = vpack.c.bf16 %v82, %v78
  %v92 = vpack.c.bf16 %v83, %v79
  %v93 = vld [vmem:[%s3] sm:$0xf]
  %v95 = vlaneseq
  %v96 = vshrl.u32 %v95, 7
  %v97 = vsub.s32 0, %v96
  %v98 = vrot.slane %v93, %v97
  %v99 = vlaneseq
  %v100 = vshrl.u32 %v99, 7
  %v101 = vsub.s32 1, %v100
  %v102 = vrot.slane %v93, %v101
  %v103 = vlaneseq
  %v104 = vshrl.u32 %v103, 7
  %v105 = vsub.s32 2, %v104
  %v106 = vrot.slane %v93, %v105
  %v107 = vlaneseq
  %v108 = vshrl.u32 %v107, 7
  %v109 = vsub.s32 3, %v108
  %v110 = vrot.slane %v93, %v109
  %vm115 = vcmask 261120
  %v117 = vsel %vm115, %v84, 0
  %119 = vmatprep.subr.bf16.mxu0 0
  %120 = vmatpush1.bf16.msra.mxu0 0
  %121 = vmatprep.subr.bf16.mxu0 0
  %122 = vmatpush1.bf16.msra.mxu0 0
  %123 = vmatprep.subr.bf16.mxu0 0
  %124 = vmatpush1.bf16.msra.mxu0 0
  %125 = vmatprep.subr.bf16.mxu0 0
  %126 = vmatpush1.bf16.msra.mxu0 0
  %127 = vmatprep.subr.bf16.mxu0 0
  %128 = vmatpush1.bf16.msra.mxu0 0
  %129 = vmatprep.subr.bf16.mxu0 0
  %130 = vmatpush1.bf16.msra.mxu0 0
  %131 = vmatprep.subr.bf16.mxu0 %v90
  %132 = vmatpush1.bf16.msra.mxu0 %v89
  %133 = vmatprep.subr.bf16.mxu0 %v86
  %134 = vmatpush1.bf16.msra.mxu0 %v85
  %135 = vmatprep.subr.bf16.mxu0 0
  %136 = vmatpush2.bf16.msra.mxu0 0
  %137 = vmatprep.subr.bf16.mxu0 0
  %138 = vmatpush2.bf16.msra.mxu0 0
  %139 = vmatprep.subr.bf16.mxu0 0
  %140 = vmatpush2.bf16.msra.mxu0 0
  %141 = vmatprep.subr.bf16.mxu0 0
  %142 = vmatpush2.bf16.msra.mxu0 0
  %143 = vmatprep.subr.bf16.mxu0 0
  %144 = vmatpush2.bf16.msra.mxu0 0
  %145 = vmatprep.subr.bf16.mxu0 0
  %146 = vmatpush2.bf16.msra.mxu0 0
  %147 = vmatprep.subr.bf16.mxu0 0
  %148 = vmatpush2.bf16.msra.mxu0 0
  %149 = vmatprep.subr.bf16.mxu0 0
  %150 = vmatpush2.bf16.msra.mxu0 0
  %151 = vmatprep.mubr.bf16.mxu0 0
  %152 = vmatmul.mubr.bf16.gmra.mxu0 %v117
  %v153 = vpop.f32.mrf.mxu0
  %v154 = vadd.f32 %v98, %v153
  %v155 = vpop.f32.mrf.mxu0
  %v156 = vadd.f32 %v102, %v155
  %v157 = vpop.f32.mrf.mxu0
  %v158 = vpop.f32.mrf.mxu0
  %159 = vdwg.mxu0
  %160 = vmatprep.subr.bf16.mxu0 0
  %161 = vmatpush1.bf16.msra.mxu0 0
  %162 = vmatprep.subr.bf16.mxu0 0
  %163 = vmatpush1.bf16.msra.mxu0 0
  %164 = vmatprep.subr.bf16.mxu0 0
  %165 = vmatpush1.bf16.msra.mxu0 0
  %166 = vmatprep.subr.bf16.mxu0 0
  %167 = vmatpush1.bf16.msra.mxu0 0
  %168 = vmatprep.subr.bf16.mxu0 0
  %169 = vmatpush1.bf16.msra.mxu0 0
  %170 = vmatprep.subr.bf16.mxu0 0
  %171 = vmatpush1.bf16.msra.mxu0 0
  %172 = vmatprep.subr.bf16.mxu0 %v92
  %173 = vmatpush1.bf16.msra.mxu0 %v91
  %174 = vmatprep.subr.bf16.mxu0 %v88
  %175 = vmatpush1.bf16.msra.mxu0 %v87
  %176 = vmatprep.subr.bf16.mxu0 0
  %177 = vmatpush2.bf16.msra.mxu0 0
  %178 = vmatprep.subr.bf16.mxu0 0
  %179 = vmatpush2.bf16.msra.mxu0 0
  %180 = vmatprep.subr.bf16.mxu0 0
  %181 = vmatpush2.bf16.msra.mxu0 0
  %182 = vmatprep.subr.bf16.mxu0 0
  %183 = vmatpush2.bf16.msra.mxu0 0
  %184 = vmatprep.subr.bf16.mxu0 0
  %185 = vmatpush2.bf16.msra.mxu0 0
  %186 = vmatprep.subr.bf16.mxu0 0
  %187 = vmatpush2.bf16.msra.mxu0 0
  %188 = vmatprep.subr.bf16.mxu0 0
  %189 = vmatpush2.bf16.msra.mxu0 0
  %190 = vmatprep.subr.bf16.mxu0 0
  %191 = vmatpush2.bf16.msra.mxu0 0
  %192 = vmatprep.mubr.bf16.mxu0 0
  %193 = vmatmul.mubr.bf16.gmra.mxu0 %v117
  %v194 = vpop.f32.mrf.mxu0
  %v195 = vadd.f32 %v106, %v194
  %v196 = vpop.f32.mrf.mxu0
  %v197 = vadd.f32 %v110, %v196
  %v198 = vpop.f32.mrf.mxu0
  %v199 = vpop.f32.mrf.mxu0
  %200 = vdwg.mxu0
  %vm201 = vcmp.ge.f32.partialorder %v154, 0.0
  %vm202 = vcmp.ge.f32.partialorder %v156, 0.0
  %vm203 = vcmp.ge.f32.partialorder %v195, 0.0
  %vm204 = vcmp.ge.f32.partialorder %v197, 0.0
  %v205 = vmul.f32 %v154, 0.2
  %v206 = vmul.f32 %v156, 0.2
  %v207 = vmul.f32 %v195, 0.2
  %v208 = vmul.f32 %v197, 0.2
  %v209 = vsel %vm201, %v154, %v205
  %v210 = vsel %vm202, %v156, %v206
  %v211 = vsel %vm203, %v195, %v207
  %v212 = vsel %vm204, %v197, %v208
  %v215 = vunpack.c.l.s4 1966171168
  %v216 = vunpack.c.0.s8 %v215
  %v217 = vlaneseq
  %v218 = vshrl.u32 %v217, 7
  %v219 = vsub.s32 %v216, %v218
  %v220 = vrot.slane %v209, %v219
  %v221 = vcombine.high %v220, %v220
  %v223 = vunpack.c.l.s4 1966171168
  %v224 = vunpack.c.0.s8 %v223
  %v225 = vlaneseq
  %v226 = vshrl.u32 %v225, 7
  %v227 = vsub.s32 %v224, %v226
  %v228 = vrot.slane %v220, %v227
  %v230 = vunpack.c.l.s4 1966171168
  %v231 = vunpack.c.0.s8 %v230
  %v232 = vlaneseq
  %v233 = vshrl.u32 %v232, 7
  %v234 = vsub.s32 %v231, %v233
  %v235 = vrot.slane %v221, %v234
  %v238 = vlaneseq
  %v239 = vshrl.u32 %v238, 7
  %v240 = vsub.s32 0, %v239
  %v241 = vrot.slane %v228, %v240
  %v242 = vlaneseq
  %v243 = vshrl.u32 %v242, 7
  %v244 = vsub.s32 0, %v243
  %v245 = vrot.slane %v235, %v244
  %246 = vrot.lane.b32.xlu0 %v241, 96
  %v247 = vpop.permute.xlu0 %246
  %248 = vrot.lane.b32.xlu0 %v245, 96
  %v249 = vpop.permute.xlu0 %248
  %252 = vrot.lane.b32.xlu0 %v241, 64
  %v253 = vpop.permute.xlu0 %252
  %254 = vrot.lane.b32.xlu0 %v245, 64
  %v255 = vpop.permute.xlu0 %254
  %258 = vrot.lane.b32.xlu0 %v241, 32
  %v259 = vpop.permute.xlu0 %258
  %260 = vrot.lane.b32.xlu0 %v245, 32
  %v261 = vpop.permute.xlu0 %260
  %vm264 = vcmask 1040384
  %v265 = vsel %vm264, %v228, %v247
  %v266 = vsel %vm264, %v235, %v249
  %vm267 = vcmask 1041408
  %v268 = vsel %vm267, %v265, %v253
  %v269 = vsel %vm267, %v266, %v255
  %vm270 = vcmask 1042432
  %v271 = vsel %vm270, %v268, %v259
  %v272 = vsel %vm270, %v269, %v261
  %v275 = vunpack.c.l.s4 1966171168
  %v276 = vunpack.c.0.s8 %v275
  %v277 = vlaneseq
  %v278 = vshrl.u32 %v277, 7
  %v279 = vsub.s32 %v276, %v278
  %v280 = vrot.slane %v210, %v279
  %v281 = vcombine.high %v280, %v280
  %v283 = vunpack.c.l.s4 1966171168
  %v284 = vunpack.c.0.s8 %v283
  %v285 = vlaneseq
  %v286 = vshrl.u32 %v285, 7
  %v287 = vsub.s32 %v284, %v286
  %v288 = vrot.slane %v280, %v287
  %v290 = vunpack.c.l.s4 1966171168
  %v291 = vunpack.c.0.s8 %v290
  %v292 = vlaneseq
  %v293 = vshrl.u32 %v292, 7
  %v294 = vsub.s32 %v291, %v293
  %v295 = vrot.slane %v281, %v294
  %v298 = vlaneseq
  %v299 = vshrl.u32 %v298, 7
  %v300 = vsub.s32 0, %v299
  %v301 = vrot.slane %v288, %v300
  %v302 = vlaneseq
  %v303 = vshrl.u32 %v302, 7
  %v304 = vsub.s32 0, %v303
  %v305 = vrot.slane %v295, %v304
  %306 = vrot.lane.b32.xlu0 %v301, 96
  %v307 = vpop.permute.xlu0 %306
  %308 = vrot.lane.b32.xlu0 %v305, 96
  %v309 = vpop.permute.xlu0 %308
  %312 = vrot.lane.b32.xlu0 %v301, 64
  %v313 = vpop.permute.xlu0 %312
  %314 = vrot.lane.b32.xlu0 %v305, 64
  %v315 = vpop.permute.xlu0 %314
  %318 = vrot.lane.b32.xlu0 %v301, 32
  %v319 = vpop.permute.xlu0 %318
  %320 = vrot.lane.b32.xlu0 %v305, 32
  %v321 = vpop.permute.xlu0 %320
  %v324 = vsel %vm264, %v288, %v307
  %v325 = vsel %vm264, %v295, %v309
  %v326 = vsel %vm267, %v324, %v313
  %v327 = vsel %vm267, %v325, %v315
  %v328 = vsel %vm270, %v326, %v319
  %v329 = vsel %vm270, %v327, %v321
  %v332 = vunpack.c.l.s4 1966171168
  %v333 = vunpack.c.0.s8 %v332
  %v334 = vlaneseq
  %v335 = vshrl.u32 %v334, 7
  %v336 = vsub.s32 %v333, %v335
  %v337 = vrot.slane %v211, %v336
  %v338 = vcombine.high %v337, %v337
  %v340 = vunpack.c.l.s4 1966171168
  %v341 = vunpack.c.0.s8 %v340
  %v342 = vlaneseq
  %v343 = vshrl.u32 %v342, 7
  %v344 = vsub.s32 %v341, %v343
  %v345 = vrot.slane %v337, %v344
  %v347 = vunpack.c.l.s4 1966171168
  %v348 = vunpack.c.0.s8 %v347
  %v349 = vlaneseq
  %v350 = vshrl.u32 %v349, 7
  %v351 = vsub.s32 %v348, %v350
  %v352 = vrot.slane %v338, %v351
  %v355 = vlaneseq
  %v356 = vshrl.u32 %v355, 7
  %v357 = vsub.s32 0, %v356
  %v358 = vrot.slane %v345, %v357
  %v359 = vlaneseq
  %v360 = vshrl.u32 %v359, 7
  %v361 = vsub.s32 0, %v360
  %v362 = vrot.slane %v352, %v361
  %363 = vrot.lane.b32.xlu0 %v358, 96
  %v364 = vpop.permute.xlu0 %363
  %365 = vrot.lane.b32.xlu0 %v362, 96
  %v366 = vpop.permute.xlu0 %365
  %369 = vrot.lane.b32.xlu0 %v358, 64
  %v370 = vpop.permute.xlu0 %369
  %371 = vrot.lane.b32.xlu0 %v362, 64
  %v372 = vpop.permute.xlu0 %371
  %375 = vrot.lane.b32.xlu0 %v358, 32
  %v376 = vpop.permute.xlu0 %375
  %377 = vrot.lane.b32.xlu0 %v362, 32
  %v378 = vpop.permute.xlu0 %377
  %v381 = vsel %vm264, %v345, %v364
  %v382 = vsel %vm264, %v352, %v366
  %v383 = vsel %vm267, %v381, %v370
  %v384 = vsel %vm267, %v382, %v372
  %v385 = vsel %vm270, %v383, %v376
  %v386 = vsel %vm270, %v384, %v378
  %v389 = vunpack.c.l.s4 1966171168
  %v390 = vunpack.c.0.s8 %v389
  %v391 = vlaneseq
  %v392 = vshrl.u32 %v391, 7
  %v393 = vsub.s32 %v390, %v392
  %v394 = vrot.slane %v212, %v393
  %v395 = vcombine.high %v394, %v394
  %v397 = vunpack.c.l.s4 1966171168
  %v398 = vunpack.c.0.s8 %v397
  %v399 = vlaneseq
  %v400 = vshrl.u32 %v399, 7
  %v401 = vsub.s32 %v398, %v400
  %v402 = vrot.slane %v394, %v401
  %v404 = vunpack.c.l.s4 1966171168
  %v405 = vunpack.c.0.s8 %v404
  %v406 = vlaneseq
  %v407 = vshrl.u32 %v406, 7
  %v408 = vsub.s32 %v405, %v407
  %v409 = vrot.slane %v395, %v408
  %v412 = vlaneseq
  %v413 = vshrl.u32 %v412, 7
  %v414 = vsub.s32 0, %v413
  %v415 = vrot.slane %v402, %v414
  %v416 = vlaneseq
  %v417 = vshrl.u32 %v416, 7
  %v418 = vsub.s32 0, %v417
  %v419 = vrot.slane %v409, %v418
  %420 = vrot.lane.b32.xlu0 %v415, 96
  %v421 = vpop.permute.xlu0 %420
  %422 = vrot.lane.b32.xlu0 %v419, 96
  %v423 = vpop.permute.xlu0 %422
  %426 = vrot.lane.b32.xlu0 %v415, 64
  %v427 = vpop.permute.xlu0 %426
  %428 = vrot.lane.b32.xlu0 %v419, 64
  %v429 = vpop.permute.xlu0 %428
  %432 = vrot.lane.b32.xlu0 %v415, 32
  %v433 = vpop.permute.xlu0 %432
  %434 = vrot.lane.b32.xlu0 %v419, 32
  %v435 = vpop.permute.xlu0 %434
  %v438 = vsel %vm264, %v402, %v421
  %v439 = vsel %vm264, %v409, %v423
  %v440 = vsel %vm267, %v438, %v427
  %v441 = vsel %vm267, %v439, %v429
  %v442 = vsel %vm270, %v440, %v433
  %v443 = vsel %vm270, %v441, %v435
  %v444 = vmul.f32 %v271, %v271
  %v445 = vmul.f32 %v328, %v328
  %v446 = vmul.f32 %v385, %v385
  %v447 = vmul.f32 %v442, %v442
  %v448 = vmul.f32 %v272, %v272
  %v449 = vmul.f32 %v329, %v329
  %v450 = vmul.f32 %v386, %v386
  %v451 = vmul.f32 %v443, %v443
  %vm452 = vcmask 257024
  %v453 = vsel %vm452, %v444, 0.0
  %454 = vadd.xlane.f32.xlu0 %v453
  %v455 = vpop.xlane.xlu0 %454
  %v456 = vsel %vm452, %v445, 0.0
  %457 = vadd.xlane.f32.xlu0 %v456
  %v458 = vpop.xlane.xlu0 %457
  %v459 = vsel %vm452, %v446, 0.0
  %460 = vadd.xlane.f32.xlu0 %v459
  %v461 = vpop.xlane.xlu0 %460
  %v462 = vsel %vm452, %v447, 0.0
  %463 = vadd.xlane.f32.xlu0 %v462
  %v464 = vpop.xlane.xlu0 %463
  %v465 = vsel %vm452, %v448, 0.0
  %466 = vadd.xlane.f32.xlu0 %v465
  %v467 = vpop.xlane.xlu0 %466
  %v468 = vsel %vm452, %v449, 0.0
  %469 = vadd.xlane.f32.xlu0 %v468
  %v470 = vpop.xlane.xlu0 %469
  %v471 = vsel %vm452, %v450, 0.0
  %472 = vadd.xlane.f32.xlu0 %v471
  %v473 = vpop.xlane.xlu0 %472
  %v474 = vsel %vm452, %v451, 0.0
  %475 = vadd.xlane.f32.xlu0 %v474
  %v476 = vpop.xlane.xlu0 %475
  %v477 = vrcp.pop 32.0
  %v478 = vmul.f32 %v455, %v477
  %v479 = vmul.f32 %v458, %v477
  %v480 = vmul.f32 %v461, %v477
  %v481 = vmul.f32 %v464, %v477
  %v482 = vmul.f32 %v467, %v477
  %v483 = vmul.f32 %v470, %v477
  %v484 = vmul.f32 %v473, %v477
  %v485 = vmul.f32 %v476, %v477
  %v486 = vadd.f32 %v478, 1e-08
  %v487 = vadd.f32 %v479, 1e-08
  %v488 = vadd.f32 %v480, 1e-08
  %v489 = vadd.f32 %v481, 1e-08
  %v490 = vadd.f32 %v482, 1e-08
  %v491 = vadd.f32 %v483, 1e-08
  %v492 = vadd.f32 %v484, 1e-08
  %v493 = vadd.f32 %v485, 1e-08
  %v494 = vrsqrt.pop %v486
  %v495 = vrsqrt.pop %v487
  %v496 = vrsqrt.pop %v488
  %v497 = vrsqrt.pop %v489
  %v498 = vrsqrt.pop %v490
  %v499 = vrsqrt.pop %v491
  %v500 = vrsqrt.pop %v492
  %v501 = vrsqrt.pop %v493
  %v502 = vmul.f32 %v271, %v494
  %v503 = vmul.f32 %v328, %v495
  %v504 = vmul.f32 %v385, %v496
  %v505 = vmul.f32 %v442, %v497
  %v506 = vmul.f32 %v272, %v498
  %v507 = vmul.f32 %v329, %v499
  %v508 = vmul.f32 %v386, %v500
  %v509 = vmul.f32 %v443, %v501
  %v510 = vld [vmem:[%s4] sm:$0xff]
  %v511 = vld [vmem:[%s4 + $0x8] sm:$0xff]
  %v512 = vld [vmem:[%s4 + $0x10] sm:$0xff]
  %v513 = vld [vmem:[%s4 + $0x18] sm:$0xff]
  %v514 = vld [vmem:[%s4 + $0x20] sm:$0xff]
  %v515 = vld [vmem:[%s4 + $0x28] sm:$0xff]
  %v516 = vld [vmem:[%s4 + $0x30] sm:$0xff]
  %v517 = vld [vmem:[%s4 + $0x38] sm:$0xff]
  %v518 = vld [vmem:[%s4 + $0x40] sm:$0xff]
  %v519 = vld [vmem:[%s4 + $0x48] sm:$0xff]
  %v520 = vld [vmem:[%s4 + $0x50] sm:$0xff]
  %v521 = vld [vmem:[%s4 + $0x58] sm:$0xff]
  %v522 = vld [vmem:[%s4 + $0x60] sm:$0xff]
  %v523 = vld [vmem:[%s4 + $0x68] sm:$0xff]
  %v524 = vld [vmem:[%s4 + $0x70] sm:$0xff]
  %v525 = vld [vmem:[%s4 + $0x78] sm:$0xff]
  %v526 = vld [vmem:[%s4 + $0x80] sm:$0xff]
  %v527 = vld [vmem:[%s4 + $0x88] sm:$0xff]
  %v528 = vld [vmem:[%s4 + $0x90] sm:$0xff]
  %v529 = vld [vmem:[%s4 + $0x98] sm:$0xff]
  %v530 = vld [vmem:[%s4 + $0xa0] sm:$0xff]
  %v531 = vld [vmem:[%s4 + $0xa8] sm:$0xff]
  %v532 = vld [vmem:[%s4 + $0xb0] sm:$0xff]
  %v533 = vld [vmem:[%s4 + $0xb8] sm:$0xff]
  %v534 = vld [vmem:[%s4 + $0xc0] sm:$0xff]
  %v535 = vld [vmem:[%s4 + $0xc8] sm:$0xff]
  %v536 = vld [vmem:[%s4 + $0xd0] sm:$0xff]
  %v537 = vld [vmem:[%s4 + $0xd8] sm:$0xff]
  %v538 = vld [vmem:[%s4 + $0xe0] sm:$0xff]
  %v539 = vld [vmem:[%s4 + $0xe8] sm:$0xff]
  %v540 = vld [vmem:[%s4 + $0xf0] sm:$0xff]
  %v541 = vld [vmem:[%s4 + $0xf8] sm:$0xff]
  %v542 = vld [vmem:[%s4 + $0x100] sm:$0xff]
  %v543 = vld [vmem:[%s4 + $0x108] sm:$0xff]
  %v544 = vld [vmem:[%s4 + $0x110] sm:$0xff]
  %v545 = vld [vmem:[%s4 + $0x118] sm:$0xff]
  %v546 = vld [vmem:[%s5] sm:$0x1]
  %v556 = vrot.slane 0.0, 7
  %v557 = vrot.slane %v502, 7
  %v558 = vrot.slane %v503, 7
  %v559 = vrot.slane %v504, 7
  %v560 = vrot.slane %v505, 7
  %v561 = vrot.slane %v506, 7
  %v562 = vrot.slane %v507, 7
  %v563 = vrot.slane %v508, 7
  %v564 = vrot.slane %v509, 7
  %v574 = vsel %vm264, 0.0, %v556
  %v575 = vsel %vm264, 0.0, %v557
  %v576 = vsel %vm264, 0.0, %v558
  %v577 = vsel %vm264, 0.0, %v559
  %v578 = vsel %vm264, 0.0, %v560
  %v579 = vsel %vm264, 0.0, %v561
  %v580 = vsel %vm264, 0.0, %v562
  %v581 = vsel %vm264, 0.0, %v563
  %v582 = vsel %vm264, 0.0, %v564
  %vm583 = vcmask 1044480
  %v584 = vsel %vm583, %v574, 0.0
  %v585 = vsel %vm583, %v575, 0.0
  %v586 = vsel %vm583, %v576, 0.0
  %v587 = vsel %vm583, %v577, 0.0
  %v588 = vsel %vm583, %v578, 0.0
  %v589 = vsel %vm583, %v579, 0.0
  %v590 = vsel %vm583, %v580, 0.0
  %v591 = vsel %vm583, %v581, 0.0
  %v592 = vsel %vm583, %v582, 0.0
  %v600 = vrot.slane %v584, 1
  %v601 = vrot.slane %v585, 1
  %v602 = vrot.slane %v586, 1
  %v603 = vrot.slane %v587, 1
  %v604 = vrot.slane %v589, 1
  %v605 = vrot.slane %v590, 1
  %v606 = vrot.slane %v591, 1
  %607 = vrot.lane.b32.xlu0 %v600, 32
  %v608 = vpop.permute.xlu0 %607
  %609 = vrot.lane.b32.xlu0 %v601, 32
  %v610 = vpop.permute.xlu0 %609
  %611 = vrot.lane.b32.xlu0 %v602, 32
  %v612 = vpop.permute.xlu0 %611
  %613 = vrot.lane.b32.xlu0 %v603, 32
  %v614 = vpop.permute.xlu0 %613
  %615 = vrot.lane.b32.xlu0 %v604, 32
  %v616 = vpop.permute.xlu0 %615
  %617 = vrot.lane.b32.xlu0 %v605, 32
  %v618 = vpop.permute.xlu0 %617
  %619 = vrot.lane.b32.xlu0 %v606, 32
  %v620 = vpop.permute.xlu0 %619
  %v628 = vrot.slane %v584, 2
  %v629 = vrot.slane %v585, 2
  %v630 = vrot.slane %v586, 2
  %v631 = vrot.slane %v587, 2
  %v632 = vrot.slane %v589, 2
  %v633 = vrot.slane %v590, 2
  %v634 = vrot.slane %v591, 2
  %635 = vrot.lane.b32.xlu0 %v628, 64
  %v636 = vpop.permute.xlu0 %635
  %637 = vrot.lane.b32.xlu0 %v629, 64
  %v638 = vpop.permute.xlu0 %637
  %639 = vrot.lane.b32.xlu0 %v630, 64
  %v640 = vpop.permute.xlu0 %639
  %641 = vrot.lane.b32.xlu0 %v631, 64
  %v642 = vpop.permute.xlu0 %641
  %643 = vrot.lane.b32.xlu0 %v632, 64
  %v644 = vpop.permute.xlu0 %643
  %645 = vrot.lane.b32.xlu0 %v633, 64
  %v646 = vpop.permute.xlu0 %645
  %647 = vrot.lane.b32.xlu0 %v634, 64
  %v648 = vpop.permute.xlu0 %647
  %v656 = vsel %vm115, %v584, %v608
  %v657 = vsel %vm115, %v585, %v610
  %v658 = vsel %vm115, %v586, %v612
  %v659 = vsel %vm115, %v587, %v614
  %v660 = vsel %vm115, %v589, %v616
  %v661 = vsel %vm115, %v590, %v618
  %v662 = vsel %vm115, %v591, %v620
  %vm663 = vcmask 523264
  %v664 = vsel %vm663, %v656, %v636
  %v665 = vsel %vm663, %v657, %v638
  %v666 = vsel %vm663, %v658, %v640
  %v667 = vsel %vm663, %v659, %v642
  %v668 = vsel %vm663, %v660, %v644
  %v669 = vsel %vm663, %v661, %v646
  %v670 = vsel %vm663, %v662, %v648
  %v678 = vcombine.low %v664, %v665
  %v679 = vcombine.low %v666, %v667
  %v680 = vcombine.low %v664, %v668
  %v681 = vcombine.low %v669, %v670
  %v686 = vpack.c.bf16 %v679, %v678
  %v687 = vpack.c.bf16 %v681, %v680
  %v688 = vpack.c.bf16 %v511, %v510
  %v689 = vpack.c.bf16 %v513, %v512
  %v690 = vpack.c.bf16 %v515, %v514
  %v691 = vpack.c.bf16 %v517, %v516
  %v692 = vpack.c.bf16 %v519, %v518
  %v693 = vpack.c.bf16 %v521, %v520
  %v696 = vrot.slane %v588, 1
  %v697 = vrot.slane %v592, 1
  %698 = vrot.lane.b32.xlu0 %v696, 32
  %v699 = vpop.permute.xlu0 %698
  %700 = vrot.lane.b32.xlu0 %v697, 32
  %v701 = vpop.permute.xlu0 %700
  %v704 = vrot.slane %v588, 2
  %v705 = vrot.slane %v592, 2
  %706 = vrot.lane.b32.xlu0 %v704, 64
  %v707 = vpop.permute.xlu0 %706
  %708 = vrot.lane.b32.xlu0 %v705, 64
  %v709 = vpop.permute.xlu0 %708
  %v712 = vsel %vm115, %v588, %v699
  %v713 = vsel %vm115, %v592, %v701
  %v714 = vsel %vm663, %v712, %v707
  %v715 = vsel %vm663, %v713, %v709
  %v718 = vcombine.low %v665, %v666
  %v719 = vcombine.low %v667, %v714
  %v720 = vcombine.low %v668, %v669
  %v721 = vcombine.low %v670, %v715
  %v726 = vpack.c.bf16 %v719, %v718
  %v727 = vpack.c.bf16 %v721, %v720
  %v728 = vpack.c.bf16 %v523, %v522
  %v729 = vpack.c.bf16 %v525, %v524
  %v730 = vpack.c.bf16 %v527, %v526
  %v731 = vpack.c.bf16 %v529, %v528
  %v732 = vpack.c.bf16 %v531, %v530
  %v733 = vpack.c.bf16 %v533, %v532
  %vm734 = vcmask 785408
  %v736 = vsel %vm734, %v726, 0
  %v739 = vsel %vm734, %v727, 0
  %741 = vmatprep.subr.bf16.mxu0 0
  %742 = vmatpush1.bf16.msra.mxu0 0
  %743 = vmatprep.subr.bf16.mxu0 0
  %744 = vmatpush1.bf16.msra.mxu0 0
  %745 = vmatprep.subr.bf16.mxu0 0
  %746 = vmatpush1.bf16.msra.mxu0 %v733
  %747 = vmatprep.subr.bf16.mxu0 0
  %748 = vmatpush1.bf16.msra.mxu0 %v732
  %749 = vmatprep.subr.bf16.mxu0 0
  %750 = vmatpush1.bf16.msra.mxu0 %v731
  %751 = vmatprep.subr.bf16.mxu0 0
  %752 = vmatpush1.bf16.msra.mxu0 %v730
  %753 = vmatprep.subr.bf16.mxu0 0
  %754 = vmatpush1.bf16.msra.mxu0 %v729
  %755 = vmatprep.subr.bf16.mxu0 0
  %756 = vmatpush1.bf16.msra.mxu0 %v728
  %757 = vmatprep.subr.bf16.mxu0 0
  %758 = vmatpush2.bf16.msra.mxu0 0
  %759 = vmatprep.subr.bf16.mxu0 0
  %760 = vmatpush2.bf16.msra.mxu0 0
  %761 = vmatprep.subr.bf16.mxu0 0
  %762 = vmatpush2.bf16.msra.mxu0 0
  %763 = vmatprep.subr.bf16.mxu0 0
  %764 = vmatpush2.bf16.msra.mxu0 0
  %765 = vmatprep.subr.bf16.mxu0 0
  %766 = vmatpush2.bf16.msra.mxu0 0
  %767 = vmatprep.subr.bf16.mxu0 0
  %768 = vmatpush2.bf16.msra.mxu0 0
  %769 = vmatprep.subr.bf16.mxu0 0
  %770 = vmatpush2.bf16.msra.mxu0 0
  %771 = vmatprep.subr.bf16.mxu0 0
  %772 = vmatpush2.bf16.msra.mxu0 0
  %773 = vmatprep.mubr.bf16.mxu0 0
  %774 = vmatmul.mubr.bf16.gmra.mxu0 %v736
  %v775 = vpop.f32.mrf.mxu0
  %v776 = vadd.f32 0.0, %v775
  %v777 = vpop.f32.mrf.mxu0
  %v778 = vpop.f32.mrf.mxu0
  %v779 = vadd.f32 0.0, %v778
  %v780 = vpop.f32.mrf.mxu0
  %781 = vmatprep.mubr.bf16.mxu0 0
  %782 = vmatmul.mubr.bf16.gmra.mxu0 %v739
  %v783 = vpop.f32.mrf.mxu0
  %v784 = vadd.f32 0.0, %v783
  %v785 = vpop.f32.mrf.mxu0
  %v786 = vpop.f32.mrf.mxu0
  %v787 = vadd.f32 0.0, %v786
  %v788 = vpop.f32.mrf.mxu0
  %789 = vdwg.mxu0
  %v791 = vsel %vm734, %v686, 0
  %v794 = vsel %vm734, %v687, 0
  %796 = vmatprep.subr.bf16.mxu0 0
  %797 = vmatpush1.bf16.msra.mxu0 0
  %798 = vmatprep.subr.bf16.mxu0 0
  %799 = vmatpush1.bf16.msra.mxu0 0
  %800 = vmatprep.subr.bf16.mxu0 0
  %801 = vmatpush1.bf16.msra.mxu0 %v693
  %802 = vmatprep.subr.bf16.mxu0 0
  %803 = vmatpush1.bf16.msra.mxu0 %v692
  %804 = vmatprep.subr.bf16.mxu0 0
  %805 = vmatpush1.bf16.msra.mxu0 %v691
  %806 = vmatprep.subr.bf16.mxu0 0
  %807 = vmatpush1.bf16.msra.mxu0 %v690
  %808 = vmatprep.subr.bf16.mxu0 0
  %809 = vmatpush1.bf16.msra.mxu0 %v689
  %810 = vmatprep.subr.bf16.mxu0 0
  %811 = vmatpush1.bf16.msra.mxu0 %v688
  %812 = vmatprep.subr.bf16.mxu0 0
  %813 = vmatpush2.bf16.msra.mxu0 0
  %814 = vmatprep.subr.bf16.mxu0 0
  %815 = vmatpush2.bf16.msra.mxu0 0
  %816 = vmatprep.subr.bf16.mxu0 0
  %817 = vmatpush2.bf16.msra.mxu0 0
  %818 = vmatprep.subr.bf16.mxu0 0
  %819 = vmatpush2.bf16.msra.mxu0 0
  %820 = vmatprep.subr.bf16.mxu0 0
  %821 = vmatpush2.bf16.msra.mxu0 0
  %822 = vmatprep.subr.bf16.mxu0 0
  %823 = vmatpush2.bf16.msra.mxu0 0
  %824 = vmatprep.subr.bf16.mxu0 0
  %825 = vmatpush2.bf16.msra.mxu0 0
  %826 = vmatprep.subr.bf16.mxu0 0
  %827 = vmatpush2.bf16.msra.mxu0 0
  %828 = vmatprep.mubr.bf16.mxu0 0
  %829 = vmatmul.mubr.bf16.gmra.mxu0 %v791
  %v830 = vpop.f32.mrf.mxu0
  %v831 = vadd.f32 %v776, %v830
  %v832 = vpop.f32.mrf.mxu0
  %v833 = vpop.f32.mrf.mxu0
  %v834 = vadd.f32 %v779, %v833
  %v835 = vpop.f32.mrf.mxu0
  %836 = vmatprep.mubr.bf16.mxu0 0
  %837 = vmatmul.mubr.bf16.gmra.mxu0 %v794
  %v838 = vpop.f32.mrf.mxu0
  %v839 = vadd.f32 %v784, %v838
  %v840 = vpop.f32.mrf.mxu0
  %v841 = vpop.f32.mrf.mxu0
  %v842 = vadd.f32 %v787, %v841
  %v843 = vpop.f32.mrf.mxu0
  %844 = vdwg.mxu0
  %v845 = vcombine.low %v714, %v664
  %v846 = vcombine.low %v715, %v664
  %v849 = vpack.c.bf16 %v845, %v679
  %v850 = vpack.c.bf16 %v846, %v681
  %v851 = vpack.c.bf16 %v535, %v534
  %v852 = vpack.c.bf16 %v537, %v536
  %v853 = vpack.c.bf16 %v539, %v538
  %v854 = vpack.c.bf16 %v541, %v540
  %v855 = vpack.c.bf16 %v543, %v542
  %v856 = vpack.c.bf16 %v545, %v544
  %v858 = vsel %vm734, %v849, 0
  %v861 = vsel %vm734, %v850, 0
  %863 = vmatprep.subr.bf16.mxu0 0
  %864 = vmatpush1.bf16.msra.mxu0 0
  %865 = vmatprep.subr.bf16.mxu0 0
  %866 = vmatpush1.bf16.msra.mxu0 0
  %867 = vmatprep.subr.bf16.mxu0 0
  %868 = vmatpush1.bf16.msra.mxu0 %v856
  %869 = vmatprep.subr.bf16.mxu0 0
  %870 = vmatpush1.bf16.msra.mxu0 %v855
  %871 = vmatprep.subr.bf16.mxu0 0
  %872 = vmatpush1.bf16.msra.mxu0 %v854
  %873 = vmatprep.subr.bf16.mxu0 0
  %874 = vmatpush1.bf16.msra.mxu0 %v853
  %875 = vmatprep.subr.bf16.mxu0 0
  %876 = vmatpush1.bf16.msra.mxu0 %v852
  %877 = vmatprep.subr.bf16.mxu0 0
  %878 = vmatpush1.bf16.msra.mxu0 %v851
  %879 = vmatprep.subr.bf16.mxu0 0
  %880 = vmatpush2.bf16.msra.mxu0 0
  %881 = vmatprep.subr.bf16.mxu0 0
  %882 = vmatpush2.bf16.msra.mxu0 0
  %883 = vmatprep.subr.bf16.mxu0 0
  %884 = vmatpush2.bf16.msra.mxu0 0
  %885 = vmatprep.subr.bf16.mxu0 0
  %886 = vmatpush2.bf16.msra.mxu0 0
  %887 = vmatprep.subr.bf16.mxu0 0
  %888 = vmatpush2.bf16.msra.mxu0 0
  %889 = vmatprep.subr.bf16.mxu0 0
  %890 = vmatpush2.bf16.msra.mxu0 0
  %891 = vmatprep.subr.bf16.mxu0 0
  %892 = vmatpush2.bf16.msra.mxu0 0
  %893 = vmatprep.subr.bf16.mxu0 0
  %894 = vmatpush2.bf16.msra.mxu0 0
  %895 = vmatprep.mubr.bf16.mxu0 0
  %896 = vmatmul.mubr.bf16.gmra.mxu0 %v858
  %v897 = vpop.f32.mrf.mxu0
  %v898 = vadd.f32 0.0, %v897
  %v899 = vpop.f32.mrf.mxu0
  %v900 = vpop.f32.mrf.mxu0
  %v901 = vadd.f32 0.0, %v900
  %v902 = vpop.f32.mrf.mxu0
  %903 = vmatprep.mubr.bf16.mxu0 0
  %904 = vmatmul.mubr.bf16.gmra.mxu0 %v861
  %v905 = vpop.f32.mrf.mxu0
  %v906 = vadd.f32 0.0, %v905
  %v907 = vpop.f32.mrf.mxu0
  %v908 = vpop.f32.mrf.mxu0
  %v909 = vadd.f32 0.0, %v908
  %v910 = vpop.f32.mrf.mxu0
  %911 = vdwg.mxu0
  %v912 = vadd.f32 %v831, %v898
  %v913 = vadd.f32 %v834, %v901
  %v914 = vadd.f32 %v839, %v906
  %v915 = vadd.f32 %v842, %v909
  %v917 = vlaneseq
  %v918 = vshrl.u32 %v917, 7
  %v919 = vsub.s32 0, %v918
  %v920 = vrot.slane %v546, %v919
  %v922 = vadd.f32 %v912, %v920
  %v923 = vadd.f32 %v913, %v920
  %v924 = vadd.f32 %v914, %v920
  %v925 = vadd.f32 %v915, %v920
  %vm926 = vcmp.ge.f32.partialorder %v922, 0.0
  %vm927 = vcmp.ge.f32.partialorder %v923, 0.0
  %vm928 = vcmp.ge.f32.partialorder %v924, 0.0
  %vm929 = vcmp.ge.f32.partialorder %v925, 0.0
  %v930 = vmul.f32 %v922, 0.2
  %v931 = vmul.f32 %v923, 0.2
  %v932 = vmul.f32 %v924, 0.2
  %v933 = vmul.f32 %v925, 0.2
  %v934 = vsel %vm926, %v922, %v930
  %v935 = vsel %vm927, %v923, %v931
  %v936 = vsel %vm928, %v924, %v932
  %v937 = vsel %vm929, %v925, %v933
  %v938 = vmul.f32 %v934, %v934
  %v939 = vmul.f32 %v935, %v935
  %v940 = vmul.f32 %v936, %v936
  %v941 = vmul.f32 %v937, %v937
  %v942 = vsel %vm115, %v938, 0.0
  %943 = vadd.xlane.f32.xlu0 %v942
  %v944 = vpop.xlane.xlu0 %943
  %v945 = vsel %vm115, %v939, 0.0
  %946 = vadd.xlane.f32.xlu0 %v945
  %v947 = vpop.xlane.xlu0 %946
  %v948 = vsel %vm115, %v940, 0.0
  %949 = vadd.xlane.f32.xlu0 %v948
  %v950 = vpop.xlane.xlu0 %949
  %v951 = vsel %vm115, %v941, 0.0
  %952 = vadd.xlane.f32.xlu0 %v951
  %v953 = vpop.xlane.xlu0 %952
  %v954 = vmul.f32 %v944, %v477
  %v955 = vmul.f32 %v947, %v477
  %v956 = vmul.f32 %v950, %v477
  %v957 = vmul.f32 %v953, %v477
  %v958 = vadd.f32 %v954, 1e-08
  %v959 = vadd.f32 %v955, 1e-08
  %v960 = vadd.f32 %v956, 1e-08
  %v961 = vadd.f32 %v957, 1e-08
  %v962 = vrsqrt.pop %v958
  %v963 = vrsqrt.pop %v959
  %v964 = vrsqrt.pop %v960
  %v965 = vrsqrt.pop %v961
  %v966 = vmul.f32 %v934, %v962
  %v967 = vmul.f32 %v935, %v963
  %v968 = vmul.f32 %v936, %v964
  %v969 = vmul.f32 %v937, %v965
  %v974 = vcombine.high %v966, %v966
  %v975 = vcombine.high %v967, %v967
  %v976 = vcombine.high %v968, %v968
  %v977 = vcombine.high %v969, %v969
  %v978 = vld [vmem:[%s6] sm:$0xff]
  %v979 = vld [vmem:[%s6 + $0x8] sm:$0xff]
  %v980 = vld [vmem:[%s6 + $0x10] sm:$0xff]
  %v981 = vld [vmem:[%s6 + $0x18] sm:$0xff]
  %v982 = vld [vmem:[%s6 + $0x20] sm:$0xff]
  %v983 = vld [vmem:[%s6 + $0x28] sm:$0xff]
  %v984 = vld [vmem:[%s6 + $0x30] sm:$0xff]
  %v985 = vld [vmem:[%s6 + $0x38] sm:$0xff]
  %v986 = vld [vmem:[%s6 + $0x40] sm:$0xff]
  %v987 = vld [vmem:[%s6 + $0x48] sm:$0xff]
  %v988 = vld [vmem:[%s6 + $0x50] sm:$0xff]
  %v989 = vld [vmem:[%s6 + $0x58] sm:$0xff]
  %v990 = vld [vmem:[%s6 + $0x60] sm:$0xff]
  %v991 = vld [vmem:[%s6 + $0x68] sm:$0xff]
  %v992 = vld [vmem:[%s6 + $0x70] sm:$0xff]
  %v993 = vld [vmem:[%s6 + $0x78] sm:$0xff]
  %v994 = vld [vmem:[%s6 + $0x80] sm:$0xff]
  %v995 = vld [vmem:[%s6 + $0x88] sm:$0xff]
  %v996 = vld [vmem:[%s6 + $0x90] sm:$0xff]
  %v997 = vld [vmem:[%s6 + $0x98] sm:$0xff]
  %v998 = vld [vmem:[%s6 + $0xa0] sm:$0xff]
  %v999 = vld [vmem:[%s6 + $0xa8] sm:$0xff]
  %v1000 = vld [vmem:[%s6 + $0xb0] sm:$0xff]
  %v1001 = vld [vmem:[%s6 + $0xb8] sm:$0xff]
  %v1002 = vld [vmem:[%s6 + $0xc0] sm:$0xff]
  %v1003 = vld [vmem:[%s6 + $0xc8] sm:$0xff]
  %v1004 = vld [vmem:[%s6 + $0xd0] sm:$0xff]
  %v1005 = vld [vmem:[%s6 + $0xd8] sm:$0xff]
  %v1006 = vld [vmem:[%s6 + $0xe0] sm:$0xff]
  %v1007 = vld [vmem:[%s6 + $0xe8] sm:$0xff]
  %v1008 = vld [vmem:[%s6 + $0xf0] sm:$0xff]
  %v1009 = vld [vmem:[%s6 + $0xf8] sm:$0xff]
  %v1010 = vld [vmem:[%s6 + $0x100] sm:$0xff]
  %v1011 = vld [vmem:[%s6 + $0x108] sm:$0xff]
  %v1012 = vld [vmem:[%s6 + $0x110] sm:$0xff]
  %v1013 = vld [vmem:[%s6 + $0x118] sm:$0xff]
  %v1014 = vld [vmem:[%s7] sm:$0x1]
  %v1015 = vrot.slane %v966, 7
  %v1016 = vrot.slane %v974, 7
  %v1017 = vrot.slane %v967, 7
  %v1018 = vrot.slane %v975, 7
  %v1019 = vrot.slane %v968, 7
  %v1020 = vrot.slane %v976, 7
  %v1021 = vrot.slane %v969, 7
  %v1022 = vrot.slane %v977, 7
  %v1031 = vsel %vm264, 0.0, %v1015
  %v1032 = vsel %vm264, 0.0, %v1016
  %v1033 = vsel %vm264, 0.0, %v1017
  %v1034 = vsel %vm264, 0.0, %v1018
  %v1035 = vsel %vm264, 0.0, %v1019
  %v1036 = vsel %vm264, 0.0, %v1020
  %v1037 = vsel %vm264, 0.0, %v1021
  %v1038 = vsel %vm264, 0.0, %v1022
  %v1039 = vsel %vm583, %v1031, 0.0
  %v1040 = vsel %vm583, %v1032, 0.0
  %v1041 = vsel %vm583, %v1033, 0.0
  %v1042 = vsel %vm583, %v1034, 0.0
  %v1043 = vsel %vm583, %v1035, 0.0
  %v1044 = vsel %vm583, %v1036, 0.0
  %v1045 = vsel %vm583, %v1037, 0.0
  %v1046 = vsel %vm583, %v1038, 0.0
  %v1053 = vrot.slane %v1039, 1
  %v1054 = vrot.slane %v1040, 1
  %v1055 = vrot.slane %v1041, 1
  %v1056 = vrot.slane %v1043, 1
  %v1057 = vrot.slane %v1044, 1
  %v1058 = vrot.slane %v1045, 1
  %1059 = vrot.lane.b32.xlu0 %v1053, 32
  %v1060 = vpop.permute.xlu0 %1059
  %1061 = vrot.lane.b32.xlu0 %v1054, 32
  %v1062 = vpop.permute.xlu0 %1061
  %1063 = vrot.lane.b32.xlu0 %v1055, 32
  %v1064 = vpop.permute.xlu0 %1063
  %1065 = vrot.lane.b32.xlu0 %v1056, 32
  %v1066 = vpop.permute.xlu0 %1065
  %1067 = vrot.lane.b32.xlu0 %v1057, 32
  %v1068 = vpop.permute.xlu0 %1067
  %1069 = vrot.lane.b32.xlu0 %v1058, 32
  %v1070 = vpop.permute.xlu0 %1069
  %v1077 = vrot.slane %v1039, 2
  %v1078 = vrot.slane %v1040, 2
  %v1079 = vrot.slane %v1041, 2
  %v1080 = vrot.slane %v1043, 2
  %v1081 = vrot.slane %v1044, 2
  %v1082 = vrot.slane %v1045, 2
  %1083 = vrot.lane.b32.xlu0 %v1077, 64
  %v1084 = vpop.permute.xlu0 %1083
  %1085 = vrot.lane.b32.xlu0 %v1078, 64
  %v1086 = vpop.permute.xlu0 %1085
  %1087 = vrot.lane.b32.xlu0 %v1079, 64
  %v1088 = vpop.permute.xlu0 %1087
  %1089 = vrot.lane.b32.xlu0 %v1080, 64
  %v1090 = vpop.permute.xlu0 %1089
  %1091 = vrot.lane.b32.xlu0 %v1081, 64
  %v1092 = vpop.permute.xlu0 %1091
  %1093 = vrot.lane.b32.xlu0 %v1082, 64
  %v1094 = vpop.permute.xlu0 %1093
  %v1101 = vsel %vm115, %v1039, %v1060
  %v1102 = vsel %vm115, %v1040, %v1062
  %v1103 = vsel %vm115, %v1041, %v1064
  %v1104 = vsel %vm115, %v1043, %v1066
  %v1105 = vsel %vm115, %v1044, %v1068
  %v1106 = vsel %vm115, %v1045, %v1070
  %v1107 = vsel %vm663, %v1101, %v1084
  %v1108 = vsel %vm663, %v1102, %v1086
  %v1109 = vsel %vm663, %v1103, %v1088
  %v1110 = vsel %vm663, %v1104, %v1090
  %v1111 = vsel %vm663, %v1105, %v1092
  %v1112 = vsel %vm663, %v1106, %v1094
  %v1119 = vcombine.low %v664, %v1107
  %v1120 = vcombine.low %v1108, %v1109
  %v1121 = vcombine.low %v664, %v1110
  %v1122 = vcombine.low %v1111, %v1112
  %v1127 = vpack.c.bf16 %v1120, %v1119
  %v1128 = vpack.c.bf16 %v1122, %v1121
  %v1129 = vpack.c.bf16 %v979, %v978
  %v1130 = vpack.c.bf16 %v981, %v980
  %v1131 = vpack.c.bf16 %v983, %v982
  %v1132 = vpack.c.bf16 %v985, %v984
  %v1133 = vpack.c.bf16 %v987, %v986
  %v1134 = vpack.c.bf16 %v989, %v988
  %v1137 = vrot.slane %v1042, 1
  %v1138 = vrot.slane %v1046, 1
  %1139 = vrot.lane.b32.xlu0 %v1137, 32
  %v1140 = vpop.permute.xlu0 %1139
  %1141 = vrot.lane.b32.xlu0 %v1138, 32
  %v1142 = vpop.permute.xlu0 %1141
  %v1145 = vrot.slane %v1042, 2
  %v1146 = vrot.slane %v1046, 2
  %1147 = vrot.lane.b32.xlu0 %v1145, 64
  %v1148 = vpop.permute.xlu0 %1147
  %1149 = vrot.lane.b32.xlu0 %v1146, 64
  %v1150 = vpop.permute.xlu0 %1149
  %v1153 = vsel %vm115, %v1042, %v1140
  %v1154 = vsel %vm115, %v1046, %v1142
  %v1155 = vsel %vm663, %v1153, %v1148
  %v1156 = vsel %vm663, %v1154, %v1150
  %v1159 = vcombine.low %v1107, %v1108
  %v1160 = vcombine.low %v1109, %v1155
  %v1161 = vcombine.low %v1110, %v1111
  %v1162 = vcombine.low %v1112, %v1156
  %v1167 = vpack.c.bf16 %v1160, %v1159
  %v1168 = vpack.c.bf16 %v1162, %v1161
  %v1169 = vpack.c.bf16 %v991, %v990
  %v1170 = vpack.c.bf16 %v993, %v992
  %v1171 = vpack.c.bf16 %v995, %v994
  %v1172 = vpack.c.bf16 %v997, %v996
  %v1173 = vpack.c.bf16 %v999, %v998
  %v1174 = vpack.c.bf16 %v1001, %v1000
  %v1176 = vsel %vm734, %v1167, 0
  %v1179 = vsel %vm734, %v1168, 0
  %1181 = vmatprep.subr.bf16.mxu0 0
  %1182 = vmatpush1.bf16.msra.mxu0 0
  %1183 = vmatprep.subr.bf16.mxu0 0
  %1184 = vmatpush1.bf16.msra.mxu0 0
  %1185 = vmatprep.subr.bf16.mxu0 0
  %1186 = vmatpush1.bf16.msra.mxu0 %v1174
  %1187 = vmatprep.subr.bf16.mxu0 0
  %1188 = vmatpush1.bf16.msra.mxu0 %v1173
  %1189 = vmatprep.subr.bf16.mxu0 0
  %1190 = vmatpush1.bf16.msra.mxu0 %v1172
  %1191 = vmatprep.subr.bf16.mxu0 0
  %1192 = vmatpush1.bf16.msra.mxu0 %v1171
  %1193 = vmatprep.subr.bf16.mxu0 0
  %1194 = vmatpush1.bf16.msra.mxu0 %v1170
  %1195 = vmatprep.subr.bf16.mxu0 0
  %1196 = vmatpush1.bf16.msra.mxu0 %v1169
  %1197 = vmatprep.subr.bf16.mxu0 0
  %1198 = vmatpush2.bf16.msra.mxu0 0
  %1199 = vmatprep.subr.bf16.mxu0 0
  %1200 = vmatpush2.bf16.msra.mxu0 0
  %1201 = vmatprep.subr.bf16.mxu0 0
  %1202 = vmatpush2.bf16.msra.mxu0 0
  %1203 = vmatprep.subr.bf16.mxu0 0
  %1204 = vmatpush2.bf16.msra.mxu0 0
  %1205 = vmatprep.subr.bf16.mxu0 0
  %1206 = vmatpush2.bf16.msra.mxu0 0
  %1207 = vmatprep.subr.bf16.mxu0 0
  %1208 = vmatpush2.bf16.msra.mxu0 0
  %1209 = vmatprep.subr.bf16.mxu0 0
  %1210 = vmatpush2.bf16.msra.mxu0 0
  %1211 = vmatprep.subr.bf16.mxu0 0
  %1212 = vmatpush2.bf16.msra.mxu0 0
  %1213 = vmatprep.mubr.bf16.mxu0 0
  %1214 = vmatmul.mubr.bf16.gmra.mxu0 %v1176
  %v1215 = vpop.f32.mrf.mxu0
  %v1216 = vadd.f32 0.0, %v1215
  %v1217 = vpop.f32.mrf.mxu0
  %v1218 = vpop.f32.mrf.mxu0
  %v1219 = vadd.f32 0.0, %v1218
  %v1220 = vpop.f32.mrf.mxu0
  %1221 = vmatprep.mubr.bf16.mxu0 0
  %1222 = vmatmul.mubr.bf16.gmra.mxu0 %v1179
  %v1223 = vpop.f32.mrf.mxu0
  %v1224 = vadd.f32 0.0, %v1223
  %v1225 = vpop.f32.mrf.mxu0
  %v1226 = vpop.f32.mrf.mxu0
  %v1227 = vadd.f32 0.0, %v1226
  %v1228 = vpop.f32.mrf.mxu0
  %1229 = vdwg.mxu0
  %v1231 = vsel %vm734, %v1127, 0
  %v1234 = vsel %vm734, %v1128, 0
  %1236 = vmatprep.subr.bf16.mxu0 0
  %1237 = vmatpush1.bf16.msra.mxu0 0
  %1238 = vmatprep.subr.bf16.mxu0 0
  %1239 = vmatpush1.bf16.msra.mxu0 0
  %1240 = vmatprep.subr.bf16.mxu0 0
  %1241 = vmatpush1.bf16.msra.mxu0 %v1134
  %1242 = vmatprep.subr.bf16.mxu0 0
  %1243 = vmatpush1.bf16.msra.mxu0 %v1133
  %1244 = vmatprep.subr.bf16.mxu0 0
  %1245 = vmatpush1.bf16.msra.mxu0 %v1132
  %1246 = vmatprep.subr.bf16.mxu0 0
  %1247 = vmatpush1.bf16.msra.mxu0 %v1131
  %1248 = vmatprep.subr.bf16.mxu0 0
  %1249 = vmatpush1.bf16.msra.mxu0 %v1130
  %1250 = vmatprep.subr.bf16.mxu0 0
  %1251 = vmatpush1.bf16.msra.mxu0 %v1129
  %1252 = vmatprep.subr.bf16.mxu0 0
  %1253 = vmatpush2.bf16.msra.mxu0 0
  %1254 = vmatprep.subr.bf16.mxu0 0
  %1255 = vmatpush2.bf16.msra.mxu0 0
  %1256 = vmatprep.subr.bf16.mxu0 0
  %1257 = vmatpush2.bf16.msra.mxu0 0
  %1258 = vmatprep.subr.bf16.mxu0 0
  %1259 = vmatpush2.bf16.msra.mxu0 0
  %1260 = vmatprep.subr.bf16.mxu0 0
  %1261 = vmatpush2.bf16.msra.mxu0 0
  %1262 = vmatprep.subr.bf16.mxu0 0
  %1263 = vmatpush2.bf16.msra.mxu0 0
  %1264 = vmatprep.subr.bf16.mxu0 0
  %1265 = vmatpush2.bf16.msra.mxu0 0
  %1266 = vmatprep.subr.bf16.mxu0 0
  %1267 = vmatpush2.bf16.msra.mxu0 0
  %1268 = vmatprep.mubr.bf16.mxu0 0
  %1269 = vmatmul.mubr.bf16.gmra.mxu0 %v1231
  %v1270 = vpop.f32.mrf.mxu0
  %v1271 = vadd.f32 %v1216, %v1270
  %v1272 = vpop.f32.mrf.mxu0
  %v1273 = vpop.f32.mrf.mxu0
  %v1274 = vadd.f32 %v1219, %v1273
  %v1275 = vpop.f32.mrf.mxu0
  %1276 = vmatprep.mubr.bf16.mxu0 0
  %1277 = vmatmul.mubr.bf16.gmra.mxu0 %v1234
  %v1278 = vpop.f32.mrf.mxu0
  %v1279 = vadd.f32 %v1224, %v1278
  %v1280 = vpop.f32.mrf.mxu0
  %v1281 = vpop.f32.mrf.mxu0
  %v1282 = vadd.f32 %v1227, %v1281
  %v1283 = vpop.f32.mrf.mxu0
  %1284 = vdwg.mxu0
  %v1285 = vcombine.low %v1155, %v664
  %v1286 = vcombine.low %v1156, %v664
  %v1289 = vpack.c.bf16 %v1285, %v1120
  %v1290 = vpack.c.bf16 %v1286, %v1122
  %v1291 = vpack.c.bf16 %v1003, %v1002
  %v1292 = vpack.c.bf16 %v1005, %v1004
  %v1293 = vpack.c.bf16 %v1007, %v1006
  %v1294 = vpack.c.bf16 %v1009, %v1008
  %v1295 = vpack.c.bf16 %v1011, %v1010
  %v1296 = vpack.c.bf16 %v1013, %v1012
  %v1298 = vsel %vm734, %v1289, 0
  %v1301 = vsel %vm734, %v1290, 0
  %1303 = vmatprep.subr.bf16.mxu0 0
  %1304 = vmatpush1.bf16.msra.mxu0 0
  %1305 = vmatprep.subr.bf16.mxu0 0
  %1306 = vmatpush1.bf16.msra.mxu0 0
  %1307 = vmatprep.subr.bf16.mxu0 0
  %1308 = vmatpush1.bf16.msra.mxu0 %v1296
  %1309 = vmatprep.subr.bf16.mxu0 0
  %1310 = vmatpush1.bf16.msra.mxu0 %v1295
  %1311 = vmatprep.subr.bf16.mxu0 0
  %1312 = vmatpush1.bf16.msra.mxu0 %v1294
  %1313 = vmatprep.subr.bf16.mxu0 0
  %1314 = vmatpush1.bf16.msra.mxu0 %v1293
  %1315 = vmatprep.subr.bf16.mxu0 0
  %1316 = vmatpush1.bf16.msra.mxu0 %v1292
  %1317 = vmatprep.subr.bf16.mxu0 0
  %1318 = vmatpush1.bf16.msra.mxu0 %v1291
  %1319 = vmatprep.subr.bf16.mxu0 0
  %1320 = vmatpush2.bf16.msra.mxu0 0
  %1321 = vmatprep.subr.bf16.mxu0 0
  %1322 = vmatpush2.bf16.msra.mxu0 0
  %1323 = vmatprep.subr.bf16.mxu0 0
  %1324 = vmatpush2.bf16.msra.mxu0 0
  %1325 = vmatprep.subr.bf16.mxu0 0
  %1326 = vmatpush2.bf16.msra.mxu0 0
  %1327 = vmatprep.subr.bf16.mxu0 0
  %1328 = vmatpush2.bf16.msra.mxu0 0
  %1329 = vmatprep.subr.bf16.mxu0 0
  %1330 = vmatpush2.bf16.msra.mxu0 0
  %1331 = vmatprep.subr.bf16.mxu0 0
  %1332 = vmatpush2.bf16.msra.mxu0 0
  %1333 = vmatprep.subr.bf16.mxu0 0
  %1334 = vmatpush2.bf16.msra.mxu0 0
  %1335 = vmatprep.mubr.bf16.mxu0 0
  %1336 = vmatmul.mubr.bf16.gmra.mxu0 %v1298
  %v1337 = vpop.f32.mrf.mxu0
  %v1338 = vadd.f32 0.0, %v1337
  %v1339 = vpop.f32.mrf.mxu0
  %v1340 = vpop.f32.mrf.mxu0
  %v1341 = vadd.f32 0.0, %v1340
  %v1342 = vpop.f32.mrf.mxu0
  %1343 = vmatprep.mubr.bf16.mxu0 0
  %1344 = vmatmul.mubr.bf16.gmra.mxu0 %v1301
  %v1345 = vpop.f32.mrf.mxu0
  %v1346 = vadd.f32 0.0, %v1345
  %v1347 = vpop.f32.mrf.mxu0
  %v1348 = vpop.f32.mrf.mxu0
  %v1349 = vadd.f32 0.0, %v1348
  %v1350 = vpop.f32.mrf.mxu0
  %1351 = vdwg.mxu0
  %v1352 = vadd.f32 %v1271, %v1338
  %v1353 = vadd.f32 %v1274, %v1341
  %v1354 = vadd.f32 %v1279, %v1346
  %v1355 = vadd.f32 %v1282, %v1349
  %v1357 = vlaneseq
  %v1358 = vshrl.u32 %v1357, 7
  %v1359 = vsub.s32 0, %v1358
  %v1360 = vrot.slane %v1014, %v1359
  %v1362 = vadd.f32 %v1352, %v1360
  %v1363 = vadd.f32 %v1353, %v1360
  %v1364 = vadd.f32 %v1354, %v1360
  %v1365 = vadd.f32 %v1355, %v1360
  %vm1366 = vcmp.ge.f32.partialorder %v1362, 0.0
  %vm1367 = vcmp.ge.f32.partialorder %v1363, 0.0
  %vm1368 = vcmp.ge.f32.partialorder %v1364, 0.0
  %vm1369 = vcmp.ge.f32.partialorder %v1365, 0.0
  %v1370 = vmul.f32 %v1362, 0.2
  %v1371 = vmul.f32 %v1363, 0.2
  %v1372 = vmul.f32 %v1364, 0.2
  %v1373 = vmul.f32 %v1365, 0.2
  %v1374 = vsel %vm1366, %v1362, %v1370
  %v1375 = vsel %vm1367, %v1363, %v1371
  %v1376 = vsel %vm1368, %v1364, %v1372
  %v1377 = vsel %vm1369, %v1365, %v1373
  %v1378 = vmul.f32 %v1374, %v1374
  %v1379 = vmul.f32 %v1375, %v1375
  %v1380 = vmul.f32 %v1376, %v1376
  %v1381 = vmul.f32 %v1377, %v1377
  %v1382 = vsel %vm115, %v1378, 0.0
  %1383 = vadd.xlane.f32.xlu0 %v1382
  %v1384 = vpop.xlane.xlu0 %1383
  %v1385 = vsel %vm115, %v1379, 0.0
  %1386 = vadd.xlane.f32.xlu0 %v1385
  %v1387 = vpop.xlane.xlu0 %1386
  %v1388 = vsel %vm115, %v1380, 0.0
  %1389 = vadd.xlane.f32.xlu0 %v1388
  %v1390 = vpop.xlane.xlu0 %1389
  %v1391 = vsel %vm115, %v1381, 0.0
  %1392 = vadd.xlane.f32.xlu0 %v1391
  %v1393 = vpop.xlane.xlu0 %1392
  %v1394 = vmul.f32 %v1384, %v477
  %v1395 = vmul.f32 %v1387, %v477
  %v1396 = vmul.f32 %v1390, %v477
  %v1397 = vmul.f32 %v1393, %v477
  %v1398 = vadd.f32 %v1394, 1e-08
  %v1399 = vadd.f32 %v1395, 1e-08
  %v1400 = vadd.f32 %v1396, 1e-08
  %v1401 = vadd.f32 %v1397, 1e-08
  %v1402 = vrsqrt.pop %v1398
  %v1403 = vrsqrt.pop %v1399
  %v1404 = vrsqrt.pop %v1400
  %v1405 = vrsqrt.pop %v1401
  %v1406 = vmul.f32 %v1374, %v1402
  %v1407 = vmul.f32 %v1375, %v1403
  %v1408 = vmul.f32 %v1376, %v1404
  %v1409 = vmul.f32 %v1377, %v1405
  %v1414 = vcombine.high %v1406, %v1406
  %v1415 = vcombine.high %v1407, %v1407
  %v1416 = vcombine.high %v1408, %v1408
  %v1417 = vcombine.high %v1409, %v1409
  %v1419 = vunpack.c.l.s4 1966171168
  %v1420 = vunpack.c.0.s8 %v1419
  %v1421 = vlaneseq
  %v1422 = vshrl.u32 %v1421, 7
  %v1423 = vsub.s32 %v1420, %v1422
  %v1424 = vrot.slane %v1406, %v1423
  %v1425 = vcombine.high %v1424, %v1424
  %v1427 = vunpack.c.l.s4 1966171168
  %v1428 = vunpack.c.0.s8 %v1427
  %v1429 = vlaneseq
  %v1430 = vshrl.u32 %v1429, 7
  %v1431 = vsub.s32 %v1428, %v1430
  %v1432 = vrot.slane %v1424, %v1431
  %v1434 = vunpack.c.l.s4 1966171168
  %v1435 = vunpack.c.0.s8 %v1434
  %v1436 = vlaneseq
  %v1437 = vshrl.u32 %v1436, 7
  %v1438 = vsub.s32 %v1435, %v1437
  %v1439 = vrot.slane %v1425, %v1438
  %v1440 = vcombine.high %v1432, %v1432
  %v1441 = vcombine.high %v1439, %v1439
  %v1443 = vunpack.c.l.s4 1966171168
  %v1444 = vunpack.c.0.s8 %v1443
  %v1445 = vlaneseq
  %v1446 = vshrl.u32 %v1445, 7
  %v1447 = vsub.s32 %v1444, %v1446
  %v1448 = vrot.slane %v1414, %v1447
  %v1449 = vcombine.high %v1448, %v1448
  %v1451 = vunpack.c.l.s4 1966171168
  %v1452 = vunpack.c.0.s8 %v1451
  %v1453 = vlaneseq
  %v1454 = vshrl.u32 %v1453, 7
  %v1455 = vsub.s32 %v1452, %v1454
  %v1456 = vrot.slane %v1448, %v1455
  %v1458 = vunpack.c.l.s4 1966171168
  %v1459 = vunpack.c.0.s8 %v1458
  %v1460 = vlaneseq
  %v1461 = vshrl.u32 %v1460, 7
  %v1462 = vsub.s32 %v1459, %v1461
  %v1463 = vrot.slane %v1449, %v1462
  %v1464 = vcombine.high %v1456, %v1456
  %v1465 = vcombine.high %v1463, %v1463
  %v1467 = vunpack.c.l.s4 1966171168
  %v1468 = vunpack.c.0.s8 %v1467
  %v1469 = vlaneseq
  %v1470 = vshrl.u32 %v1469, 7
  %v1471 = vsub.s32 %v1468, %v1470
  %v1472 = vrot.slane %v1407, %v1471
  %v1473 = vcombine.high %v1472, %v1472
  %v1475 = vunpack.c.l.s4 1966171168
  %v1476 = vunpack.c.0.s8 %v1475
  %v1477 = vlaneseq
  %v1478 = vshrl.u32 %v1477, 7
  %v1479 = vsub.s32 %v1476, %v1478
  %v1480 = vrot.slane %v1472, %v1479
  %v1482 = vunpack.c.l.s4 1966171168
  %v1483 = vunpack.c.0.s8 %v1482
  %v1484 = vlaneseq
  %v1485 = vshrl.u32 %v1484, 7
  %v1486 = vsub.s32 %v1483, %v1485
  %v1487 = vrot.slane %v1473, %v1486
  %v1488 = vcombine.high %v1480, %v1480
  %v1489 = vcombine.high %v1487, %v1487
  %v1491 = vunpack.c.l.s4 1966171168
  %v1492 = vunpack.c.0.s8 %v1491
  %v1493 = vlaneseq
  %v1494 = vshrl.u32 %v1493, 7
  %v1495 = vsub.s32 %v1492, %v1494
  %v1496 = vrot.slane %v1415, %v1495
  %v1497 = vcombine.high %v1496, %v1496
  %v1499 = vunpack.c.l.s4 1966171168
  %v1500 = vunpack.c.0.s8 %v1499
  %v1501 = vlaneseq
  %v1502 = vshrl.u32 %v1501, 7
  %v1503 = vsub.s32 %v1500, %v1502
  %v1504 = vrot.slane %v1496, %v1503
  %v1506 = vunpack.c.l.s4 1966171168
  %v1507 = vunpack.c.0.s8 %v1506
  %v1508 = vlaneseq
  %v1509 = vshrl.u32 %v1508, 7
  %v1510 = vsub.s32 %v1507, %v1509
  %v1511 = vrot.slane %v1497, %v1510
  %v1512 = vcombine.high %v1504, %v1504
  %v1513 = vcombine.high %v1511, %v1511
  %v1515 = vunpack.c.l.s4 1966171168
  %v1516 = vunpack.c.0.s8 %v1515
  %v1517 = vlaneseq
  %v1518 = vshrl.u32 %v1517, 7
  %v1519 = vsub.s32 %v1516, %v1518
  %v1520 = vrot.slane %v1408, %v1519
  %v1521 = vcombine.high %v1520, %v1520
  %v1523 = vunpack.c.l.s4 1966171168
  %v1524 = vunpack.c.0.s8 %v1523
  %v1525 = vlaneseq
  %v1526 = vshrl.u32 %v1525, 7
  %v1527 = vsub.s32 %v1524, %v1526
  %v1528 = vrot.slane %v1520, %v1527
  %v1530 = vunpack.c.l.s4 1966171168
  %v1531 = vunpack.c.0.s8 %v1530
  %v1532 = vlaneseq
  %v1533 = vshrl.u32 %v1532, 7
  %v1534 = vsub.s32 %v1531, %v1533
  %v1535 = vrot.slane %v1521, %v1534
  %v1536 = vcombine.high %v1528, %v1528
  %v1537 = vcombine.high %v1535, %v1535
  %v1539 = vunpack.c.l.s4 1966171168
  %v1540 = vunpack.c.0.s8 %v1539
  %v1541 = vlaneseq
  %v1542 = vshrl.u32 %v1541, 7
  %v1543 = vsub.s32 %v1540, %v1542
  %v1544 = vrot.slane %v1416, %v1543
  %v1545 = vcombine.high %v1544, %v1544
  %v1547 = vunpack.c.l.s4 1966171168
  %v1548 = vunpack.c.0.s8 %v1547
  %v1549 = vlaneseq
  %v1550 = vshrl.u32 %v1549, 7
  %v1551 = vsub.s32 %v1548, %v1550
  %v1552 = vrot.slane %v1544, %v1551
  %v1554 = vunpack.c.l.s4 1966171168
  %v1555 = vunpack.c.0.s8 %v1554
  %v1556 = vlaneseq
  %v1557 = vshrl.u32 %v1556, 7
  %v1558 = vsub.s32 %v1555, %v1557
  %v1559 = vrot.slane %v1545, %v1558
  %v1560 = vcombine.high %v1552, %v1552
  %v1561 = vcombine.high %v1559, %v1559
  %v1563 = vunpack.c.l.s4 1966171168
  %v1564 = vunpack.c.0.s8 %v1563
  %v1565 = vlaneseq
  %v1566 = vshrl.u32 %v1565, 7
  %v1567 = vsub.s32 %v1564, %v1566
  %v1568 = vrot.slane %v1409, %v1567
  %v1569 = vcombine.high %v1568, %v1568
  %v1571 = vunpack.c.l.s4 1966171168
  %v1572 = vunpack.c.0.s8 %v1571
  %v1573 = vlaneseq
  %v1574 = vshrl.u32 %v1573, 7
  %v1575 = vsub.s32 %v1572, %v1574
  %v1576 = vrot.slane %v1568, %v1575
  %v1578 = vunpack.c.l.s4 1966171168
  %v1579 = vunpack.c.0.s8 %v1578
  %v1580 = vlaneseq
  %v1581 = vshrl.u32 %v1580, 7
  %v1582 = vsub.s32 %v1579, %v1581
  %v1583 = vrot.slane %v1569, %v1582
  %v1584 = vcombine.high %v1576, %v1576
  %v1585 = vcombine.high %v1583, %v1583
  %v1587 = vunpack.c.l.s4 1966171168
  %v1588 = vunpack.c.0.s8 %v1587
  %v1589 = vlaneseq
  %v1590 = vshrl.u32 %v1589, 7
  %v1591 = vsub.s32 %v1588, %v1590
  %v1592 = vrot.slane %v1417, %v1591
  %v1593 = vcombine.high %v1592, %v1592
  %v1595 = vunpack.c.l.s4 1966171168
  %v1596 = vunpack.c.0.s8 %v1595
  %v1597 = vlaneseq
  %v1598 = vshrl.u32 %v1597, 7
  %v1599 = vsub.s32 %v1596, %v1598
  %v1600 = vrot.slane %v1592, %v1599
  %v1602 = vunpack.c.l.s4 1966171168
  %v1603 = vunpack.c.0.s8 %v1602
  %v1604 = vlaneseq
  %v1605 = vshrl.u32 %v1604, 7
  %v1606 = vsub.s32 %v1603, %v1605
  %v1607 = vrot.slane %v1593, %v1606
  %v1608 = vcombine.high %v1600, %v1600
  %v1609 = vcombine.high %v1607, %v1607
  %v1610 = vlaneseq
  %v1611 = vshrl.u32 %v1610, 7
  %v1612 = vsub.s32 0, %v1611
  %v1613 = vrot.slane %v1432, %v1612
  %v1614 = vlaneseq
  %v1615 = vshrl.u32 %v1614, 7
  %v1616 = vsub.s32 0, %v1615
  %v1617 = vrot.slane %v1439, %v1616
  %v1618 = vlaneseq
  %v1619 = vshrl.u32 %v1618, 7
  %v1620 = vsub.s32 0, %v1619
  %v1621 = vrot.slane %v1440, %v1620
  %v1622 = vlaneseq
  %v1623 = vshrl.u32 %v1622, 7
  %v1624 = vsub.s32 0, %v1623
  %v1625 = vrot.slane %v1441, %v1624
  %v1626 = vlaneseq
  %v1627 = vshrl.u32 %v1626, 7
  %v1628 = vsub.s32 0, %v1627
  %v1629 = vrot.slane %v1456, %v1628
  %v1630 = vlaneseq
  %v1631 = vshrl.u32 %v1630, 7
  %v1632 = vsub.s32 0, %v1631
  %v1633 = vrot.slane %v1463, %v1632
  %v1634 = vlaneseq
  %v1635 = vshrl.u32 %v1634, 7
  %v1636 = vsub.s32 0, %v1635
  %v1637 = vrot.slane %v1464, %v1636
  %v1638 = vlaneseq
  %v1639 = vshrl.u32 %v1638, 7
  %v1640 = vsub.s32 0, %v1639
  %v1641 = vrot.slane %v1465, %v1640
  %v1642 = vlaneseq
  %v1643 = vshrl.u32 %v1642, 7
  %v1644 = vsub.s32 0, %v1643
  %v1645 = vrot.slane %v1480, %v1644
  %v1646 = vlaneseq
  %v1647 = vshrl.u32 %v1646, 7
  %v1648 = vsub.s32 0, %v1647
  %v1649 = vrot.slane %v1487, %v1648
  %v1650 = vlaneseq
  %v1651 = vshrl.u32 %v1650, 7
  %v1652 = vsub.s32 0, %v1651
  %v1653 = vrot.slane %v1488, %v1652
  %v1654 = vlaneseq
  %v1655 = vshrl.u32 %v1654, 7
  %v1656 = vsub.s32 0, %v1655
  %v1657 = vrot.slane %v1489, %v1656
  %v1658 = vlaneseq
  %v1659 = vshrl.u32 %v1658, 7
  %v1660 = vsub.s32 0, %v1659
  %v1661 = vrot.slane %v1504, %v1660
  %v1662 = vlaneseq
  %v1663 = vshrl.u32 %v1662, 7
  %v1664 = vsub.s32 0, %v1663
  %v1665 = vrot.slane %v1511, %v1664
  %v1666 = vlaneseq
  %v1667 = vshrl.u32 %v1666, 7
  %v1668 = vsub.s32 0, %v1667
  %v1669 = vrot.slane %v1512, %v1668
  %v1670 = vlaneseq
  %v1671 = vshrl.u32 %v1670, 7
  %v1672 = vsub.s32 0, %v1671
  %v1673 = vrot.slane %v1513, %v1672
  %v1674 = vlaneseq
  %v1675 = vshrl.u32 %v1674, 7
  %v1676 = vsub.s32 0, %v1675
  %v1677 = vrot.slane %v1528, %v1676
  %v1678 = vlaneseq
  %v1679 = vshrl.u32 %v1678, 7
  %v1680 = vsub.s32 0, %v1679
  %v1681 = vrot.slane %v1535, %v1680
  %v1682 = vlaneseq
  %v1683 = vshrl.u32 %v1682, 7
  %v1684 = vsub.s32 0, %v1683
  %v1685 = vrot.slane %v1536, %v1684
  %v1686 = vlaneseq
  %v1687 = vshrl.u32 %v1686, 7
  %v1688 = vsub.s32 0, %v1687
  %v1689 = vrot.slane %v1537, %v1688
  %v1690 = vlaneseq
  %v1691 = vshrl.u32 %v1690, 7
  %v1692 = vsub.s32 0, %v1691
  %v1693 = vrot.slane %v1552, %v1692
  %v1694 = vlaneseq
  %v1695 = vshrl.u32 %v1694, 7
  %v1696 = vsub.s32 0, %v1695
  %v1697 = vrot.slane %v1559, %v1696
  %v1698 = vlaneseq
  %v1699 = vshrl.u32 %v1698, 7
  %v1700 = vsub.s32 0, %v1699
  %v1701 = vrot.slane %v1560, %v1700
  %v1702 = vlaneseq
  %v1703 = vshrl.u32 %v1702, 7
  %v1704 = vsub.s32 0, %v1703
  %v1705 = vrot.slane %v1561, %v1704
  %v1706 = vlaneseq
  %v1707 = vshrl.u32 %v1706, 7
  %v1708 = vsub.s32 0, %v1707
  %v1709 = vrot.slane %v1576, %v1708
  %v1710 = vlaneseq
  %v1711 = vshrl.u32 %v1710, 7
  %v1712 = vsub.s32 0, %v1711
  %v1713 = vrot.slane %v1583, %v1712
  %v1714 = vlaneseq
  %v1715 = vshrl.u32 %v1714, 7
  %v1716 = vsub.s32 0, %v1715
  %v1717 = vrot.slane %v1584, %v1716
  %v1718 = vlaneseq
  %v1719 = vshrl.u32 %v1718, 7
  %v1720 = vsub.s32 0, %v1719
  %v1721 = vrot.slane %v1585, %v1720
  %v1722 = vlaneseq
  %v1723 = vshrl.u32 %v1722, 7
  %v1724 = vsub.s32 0, %v1723
  %v1725 = vrot.slane %v1600, %v1724
  %v1726 = vlaneseq
  %v1727 = vshrl.u32 %v1726, 7
  %v1728 = vsub.s32 0, %v1727
  %v1729 = vrot.slane %v1607, %v1728
  %v1730 = vlaneseq
  %v1731 = vshrl.u32 %v1730, 7
  %v1732 = vsub.s32 0, %v1731
  %v1733 = vrot.slane %v1608, %v1732
  %v1734 = vlaneseq
  %v1735 = vshrl.u32 %v1734, 7
  %v1736 = vsub.s32 0, %v1735
  %v1737 = vrot.slane %v1609, %v1736
  %v1738 = vld [vmem:[%s8] sm:$0xff]
  %v1739 = vld [vmem:[%s8 + $0x8] sm:$0xff]
  %v1740 = vld [vmem:[%s8 + $0x10] sm:$0xff]
  %v1741 = vld [vmem:[%s8 + $0x18] sm:$0xff]
  %v1742 = vld [vmem:[%s8 + $0x20] sm:$0xff]
  %v1743 = vld [vmem:[%s8 + $0x28] sm:$0xff]
  %v1744 = vld [vmem:[%s8 + $0x30] sm:$0xff]
  %v1745 = vld [vmem:[%s8 + $0x38] sm:$0xff]
  %v1746 = vld [vmem:[%s8 + $0x40] sm:$0xff]
  %v1747 = vld [vmem:[%s8 + $0x48] sm:$0xff]
  %v1748 = vld [vmem:[%s8 + $0x50] sm:$0xff]
  %v1749 = vld [vmem:[%s8 + $0x58] sm:$0xff]
  %v1750 = vld [vmem:[%s8 + $0x60] sm:$0xff]
  %v1751 = vld [vmem:[%s8 + $0x68] sm:$0xff]
  %v1752 = vld [vmem:[%s8 + $0x70] sm:$0xff]
  %v1753 = vld [vmem:[%s8 + $0x78] sm:$0xff]
  %v1754 = vld [vmem:[%s8 + $0x80] sm:$0xff]
  %v1755 = vld [vmem:[%s8 + $0x88] sm:$0xff]
  %v1756 = vld [vmem:[%s8 + $0x90] sm:$0xff]
  %v1757 = vld [vmem:[%s8 + $0x98] sm:$0xff]
  %v1758 = vld [vmem:[%s8 + $0xa0] sm:$0xff]
  %v1759 = vld [vmem:[%s8 + $0xa8] sm:$0xff]
  %v1760 = vld [vmem:[%s8 + $0xb0] sm:$0xff]
  %v1761 = vld [vmem:[%s8 + $0xb8] sm:$0xff]
  %v1762 = vld [vmem:[%s8 + $0xc0] sm:$0xff]
  %v1763 = vld [vmem:[%s8 + $0xc8] sm:$0xff]
  %v1764 = vld [vmem:[%s8 + $0xd0] sm:$0xff]
  %v1765 = vld [vmem:[%s8 + $0xd8] sm:$0xff]
  %v1766 = vld [vmem:[%s8 + $0xe0] sm:$0xff]
  %v1767 = vld [vmem:[%s8 + $0xe8] sm:$0xff]
  %v1768 = vld [vmem:[%s8 + $0xf0] sm:$0xff]
  %v1769 = vld [vmem:[%s8 + $0xf8] sm:$0xff]
  %v1770 = vld [vmem:[%s8 + $0x100] sm:$0xff]
  %v1771 = vld [vmem:[%s8 + $0x108] sm:$0xff]
  %v1772 = vld [vmem:[%s8 + $0x110] sm:$0xff]
  %v1773 = vld [vmem:[%s8 + $0x118] sm:$0xff]
  %v1774 = vld [vmem:[%s9] sm:$0x1]
  %v1775 = vcombine.low %v1613, %v1617
  %v1776 = vcombine.low %v1621, %v1625
  %v1778 = vunpack.c.l.s4 1983009808
  %v1779 = vunpack.c.0.s8 %v1778
  %v1780 = vlaneseq
  %v1781 = vshrl.u32 %v1780, 7
  %v1782 = vsub.s32 %v1779, %v1781
  %v1783 = vrot.slane %v1775, %v1782
  %v1785 = vunpack.c.l.s4 1983009808
  %v1786 = vunpack.c.0.s8 %v1785
  %v1787 = vlaneseq
  %v1788 = vshrl.u32 %v1787, 7
  %v1789 = vsub.s32 %v1786, %v1788
  %v1790 = vrot.slane %v1776, %v1789
  %v1791 = vcombine.low %v1783, %v1790
  %v1792 = vcombine.low %v1629, %v1633
  %v1793 = vcombine.low %v1637, %v1641
  %v1795 = vunpack.c.l.s4 1983009808
  %v1796 = vunpack.c.0.s8 %v1795
  %v1797 = vlaneseq
  %v1798 = vshrl.u32 %v1797, 7
  %v1799 = vsub.s32 %v1796, %v1798
  %v1800 = vrot.slane %v1792, %v1799
  %v1802 = vunpack.c.l.s4 1983009808
  %v1803 = vunpack.c.0.s8 %v1802
  %v1804 = vlaneseq
  %v1805 = vshrl.u32 %v1804, 7
  %v1806 = vsub.s32 %v1803, %v1805
  %v1807 = vrot.slane %v1793, %v1806
  %v1808 = vcombine.low %v1800, %v1807
  %v1809 = vcombine.low %v1645, %v1649
  %v1810 = vcombine.low %v1653, %v1657
  %v1812 = vunpack.c.l.s4 1983009808
  %v1813 = vunpack.c.0.s8 %v1812
  %v1814 = vlaneseq
  %v1815 = vshrl.u32 %v1814, 7
  %v1816 = vsub.s32 %v1813, %v1815
  %v1817 = vrot.slane %v1809, %v1816
  %v1819 = vunpack.c.l.s4 1983009808
  %v1820 = vunpack.c.0.s8 %v1819
  %v1821 = vlaneseq
  %v1822 = vshrl.u32 %v1821, 7
  %v1823 = vsub.s32 %v1820, %v1822
  %v1824 = vrot.slane %v1810, %v1823
  %v1825 = vcombine.low %v1817, %v1824
  %v1826 = vcombine.low %v1661, %v1665
  %v1827 = vcombine.low %v1669, %v1673
  %v1829 = vunpack.c.l.s4 1983009808
  %v1830 = vunpack.c.0.s8 %v1829
  %v1831 = vlaneseq
  %v1832 = vshrl.u32 %v1831, 7
  %v1833 = vsub.s32 %v1830, %v1832
  %v1834 = vrot.slane %v1826, %v1833
  %v1836 = vunpack.c.l.s4 1983009808
  %v1837 = vunpack.c.0.s8 %v1836
  %v1838 = vlaneseq
  %v1839 = vshrl.u32 %v1838, 7
  %v1840 = vsub.s32 %v1837, %v1839
  %v1841 = vrot.slane %v1827, %v1840
  %v1842 = vcombine.low %v1834, %v1841
  %v1843 = vcombine.low %v1677, %v1681
  %v1844 = vcombine.low %v1685, %v1689
  %v1846 = vunpack.c.l.s4 1983009808
  %v1847 = vunpack.c.0.s8 %v1846
  %v1848 = vlaneseq
  %v1849 = vshrl.u32 %v1848, 7
  %v1850 = vsub.s32 %v1847, %v1849
  %v1851 = vrot.slane %v1843, %v1850
  %v1853 = vunpack.c.l.s4 1983009808
  %v1854 = vunpack.c.0.s8 %v1853
  %v1855 = vlaneseq
  %v1856 = vshrl.u32 %v1855, 7
  %v1857 = vsub.s32 %v1854, %v1856
  %v1858 = vrot.slane %v1844, %v1857
  %v1859 = vcombine.low %v1851, %v1858
  %v1860 = vcombine.low %v1693, %v1697
  %v1861 = vcombine.low %v1701, %v1705
  %v1863 = vunpack.c.l.s4 1983009808
  %v1864 = vunpack.c.0.s8 %v1863
  %v1865 = vlaneseq
  %v1866 = vshrl.u32 %v1865, 7
  %v1867 = vsub.s32 %v1864, %v1866
  %v1868 = vrot.slane %v1860, %v1867
  %v1870 = vunpack.c.l.s4 1983009808
  %v1871 = vunpack.c.0.s8 %v1870
  %v1872 = vlaneseq
  %v1873 = vshrl.u32 %v1872, 7
  %v1874 = vsub.s32 %v1871, %v1873
  %v1875 = vrot.slane %v1861, %v1874
  %v1876 = vcombine.low %v1868, %v1875
  %v1877 = vcombine.low %v1709, %v1713
  %v1878 = vcombine.low %v1717, %v1721
  %v1880 = vunpack.c.l.s4 1983009808
  %v1881 = vunpack.c.0.s8 %v1880
  %v1882 = vlaneseq
  %v1883 = vshrl.u32 %v1882, 7
  %v1884 = vsub.s32 %v1881, %v1883
  %v1885 = vrot.slane %v1877, %v1884
  %v1887 = vunpack.c.l.s4 1983009808
  %v1888 = vunpack.c.0.s8 %v1887
  %v1889 = vlaneseq
  %v1890 = vshrl.u32 %v1889, 7
  %v1891 = vsub.s32 %v1888, %v1890
  %v1892 = vrot.slane %v1878, %v1891
  %v1893 = vcombine.low %v1885, %v1892
  %v1894 = vcombine.low %v1725, %v1729
  %v1895 = vcombine.low %v1733, %v1737
  %v1897 = vunpack.c.l.s4 1983009808
  %v1898 = vunpack.c.0.s8 %v1897
  %v1899 = vlaneseq
  %v1900 = vshrl.u32 %v1899, 7
  %v1901 = vsub.s32 %v1898, %v1900
  %v1902 = vrot.slane %v1894, %v1901
  %v1904 = vunpack.c.l.s4 1983009808
  %v1905 = vunpack.c.0.s8 %v1904
  %v1906 = vlaneseq
  %v1907 = vshrl.u32 %v1906, 7
  %v1908 = vsub.s32 %v1905, %v1907
  %v1909 = vrot.slane %v1895, %v1908
  %v1910 = vcombine.low %v1902, %v1909
  %v1911 = vrot.slane %v1791, 7
  %v1912 = vrot.slane %v1808, 7
  %v1913 = vrot.slane %v1825, 7
  %v1914 = vrot.slane %v1842, 7
  %v1915 = vrot.slane %v1859, 7
  %v1916 = vrot.slane %v1876, 7
  %v1917 = vrot.slane %v1893, 7
  %v1918 = vrot.slane %v1910, 7
  %v1927 = vsel %vm264, 0.0, %v1911
  %v1928 = vsel %vm264, 0.0, %v1912
  %v1929 = vsel %vm264, 0.0, %v1913
  %v1930 = vsel %vm264, 0.0, %v1914
  %v1931 = vsel %vm264, 0.0, %v1915
  %v1932 = vsel %vm264, 0.0, %v1916
  %v1933 = vsel %vm264, 0.0, %v1917
  %v1934 = vsel %vm264, 0.0, %v1918
  %v1935 = vsel %vm264, %v556, 0.0
  %v1936 = vsel %vm264, %v1911, 0.0
  %v1937 = vsel %vm264, %v1912, 0.0
  %v1938 = vsel %vm264, %v1913, 0.0
  %v1939 = vsel %vm264, %v1914, 0.0
  %v1940 = vsel %vm264, %v1915, 0.0
  %v1941 = vsel %vm264, %v1916, 0.0
  %v1942 = vsel %vm264, %v1917, 0.0
  %v1943 = vsel %vm264, %v1918, 0.0
  %vm1962 = vcmask 1046528
  %v1963 = vrot.slane %v574, 1
  %v1964 = vrot.slane %v1935, 1
  %v1965 = vsel %vm1962, %v1963, %v1964
  %v1966 = vrot.slane %v1927, 1
  %v1967 = vrot.slane %v1936, 1
  %v1968 = vsel %vm1962, %v1966, %v1967
  %v1969 = vrot.slane %v1928, 1
  %v1970 = vrot.slane %v1937, 1
  %v1971 = vsel %vm1962, %v1969, %v1970
  %v1972 = vrot.slane %v1929, 1
  %v1973 = vrot.slane %v1938, 1
  %v1974 = vsel %vm1962, %v1972, %v1973
  %v1975 = vrot.slane %v1930, 1
  %v1976 = vrot.slane %v1939, 1
  %v1977 = vsel %vm1962, %v1975, %v1976
  %v1978 = vrot.slane %v1931, 1
  %v1979 = vrot.slane %v1940, 1
  %v1980 = vsel %vm1962, %v1978, %v1979
  %v1981 = vrot.slane %v1932, 1
  %v1982 = vrot.slane %v1941, 1
  %v1983 = vsel %vm1962, %v1981, %v1982
  %v1984 = vrot.slane %v1933, 1
  %v1985 = vrot.slane %v1942, 1
  %v1986 = vsel %vm1962, %v1984, %v1985
  %v1987 = vrot.slane %v1934, 1
  %v1988 = vrot.slane %v1943, 1
  %v1989 = vsel %vm1962, %v1987, %v1988
  %1990 = vrot.lane.b32.xlu0 %v1965, 32
  %v1991 = vpop.permute.xlu0 %1990
  %1992 = vrot.lane.b32.xlu0 %v1968, 32
  %v1993 = vpop.permute.xlu0 %1992
  %1994 = vrot.lane.b32.xlu0 %v1971, 32
  %v1995 = vpop.permute.xlu0 %1994
  %1996 = vrot.lane.b32.xlu0 %v1974, 32
  %v1997 = vpop.permute.xlu0 %1996
  %1998 = vrot.lane.b32.xlu0 %v1977, 32
  %v1999 = vpop.permute.xlu0 %1998
  %2000 = vrot.lane.b32.xlu0 %v1980, 32
  %v2001 = vpop.permute.xlu0 %2000
  %2002 = vrot.lane.b32.xlu0 %v1983, 32
  %v2003 = vpop.permute.xlu0 %2002
  %2004 = vrot.lane.b32.xlu0 %v1986, 32
  %v2005 = vpop.permute.xlu0 %2004
  %2006 = vrot.lane.b32.xlu0 %v1989, 32
  %v2007 = vpop.permute.xlu0 %2006
  %vm2017 = vcmask 1045504
  %v2018 = vrot.slane %v574, 2
  %v2019 = vrot.slane %v1935, 2
  %v2020 = vsel %vm2017, %v2018, %v2019
  %v2021 = vrot.slane %v1927, 2
  %v2022 = vrot.slane %v1936, 2
  %v2023 = vsel %vm2017, %v2021, %v2022
  %v2024 = vrot.slane %v1928, 2
  %v2025 = vrot.slane %v1937, 2
  %v2026 = vsel %vm2017, %v2024, %v2025
  %v2027 = vrot.slane %v1929, 2
  %v2028 = vrot.slane %v1938, 2
  %v2029 = vsel %vm2017, %v2027, %v2028
  %v2030 = vrot.slane %v1930, 2
  %v2031 = vrot.slane %v1939, 2
  %v2032 = vsel %vm2017, %v2030, %v2031
  %v2033 = vrot.slane %v1931, 2
  %v2034 = vrot.slane %v1940, 2
  %v2035 = vsel %vm2017, %v2033, %v2034
  %v2036 = vrot.slane %v1932, 2
  %v2037 = vrot.slane %v1941, 2
  %v2038 = vsel %vm2017, %v2036, %v2037
  %v2039 = vrot.slane %v1933, 2
  %v2040 = vrot.slane %v1942, 2
  %v2041 = vsel %vm2017, %v2039, %v2040
  %v2042 = vrot.slane %v1934, 2
  %v2043 = vrot.slane %v1943, 2
  %v2044 = vsel %vm2017, %v2042, %v2043
  %2045 = vrot.lane.b32.xlu0 %v2020, 64
  %v2046 = vpop.permute.xlu0 %2045
  %2047 = vrot.lane.b32.xlu0 %v2023, 64
  %v2048 = vpop.permute.xlu0 %2047
  %2049 = vrot.lane.b32.xlu0 %v2026, 64
  %v2050 = vpop.permute.xlu0 %2049
  %2051 = vrot.lane.b32.xlu0 %v2029, 64
  %v2052 = vpop.permute.xlu0 %2051
  %2053 = vrot.lane.b32.xlu0 %v2032, 64
  %v2054 = vpop.permute.xlu0 %2053
  %2055 = vrot.lane.b32.xlu0 %v2035, 64
  %v2056 = vpop.permute.xlu0 %2055
  %2057 = vrot.lane.b32.xlu0 %v2038, 64
  %v2058 = vpop.permute.xlu0 %2057
  %2059 = vrot.lane.b32.xlu0 %v2041, 64
  %v2060 = vpop.permute.xlu0 %2059
  %2061 = vrot.lane.b32.xlu0 %v2044, 64
  %v2062 = vpop.permute.xlu0 %2061
  %v2072 = vsel %vm115, %v574, %v1991
  %v2073 = vsel %vm115, %v1927, %v1993
  %v2074 = vsel %vm115, %v1928, %v1995
  %v2075 = vsel %vm115, %v1929, %v1997
  %v2076 = vsel %vm115, %v1930, %v1999
  %v2077 = vsel %vm115, %v1931, %v2001
  %v2078 = vsel %vm115, %v1932, %v2003
  %v2079 = vsel %vm115, %v1933, %v2005
  %v2080 = vsel %vm115, %v1934, %v2007
  %v2081 = vsel %vm663, %v2072, %v2046
  %v2082 = vsel %vm663, %v2073, %v2048
  %v2083 = vsel %vm663, %v2074, %v2050
  %v2084 = vsel %vm663, %v2075, %v2052
  %v2085 = vsel %vm663, %v2076, %v2054
  %v2086 = vsel %vm663, %v2077, %v2056
  %v2087 = vsel %vm663, %v2078, %v2058
  %v2088 = vsel %vm663, %v2079, %v2060
  %v2089 = vsel %vm663, %v2080, %v2062
  %v2090 = vpack.c.bf16 %v2082, %v2081
  %v2091 = vpack.c.bf16 %v2083, %v2082
  %v2092 = vpack.c.bf16 %v2084, %v2083
  %v2093 = vpack.c.bf16 %v2085, %v2084
  %v2094 = vpack.c.bf16 %v2086, %v2081
  %v2095 = vpack.c.bf16 %v2087, %v2086
  %v2096 = vpack.c.bf16 %v2088, %v2087
  %v2097 = vpack.c.bf16 %v2089, %v2088
  %v2098 = vpack.c.bf16 %v1739, %v1738
  %v2099 = vpack.c.bf16 %v1741, %v1740
  %v2100 = vpack.c.bf16 %v1743, %v1742
  %v2101 = vpack.c.bf16 %v1745, %v1744
  %v2102 = vpack.c.bf16 %v1747, %v1746
  %v2103 = vpack.c.bf16 %v1749, %v1748
  %v2104 = vpack.c.bf16 %v2082, %v2082
  %v2105 = vpack.c.bf16 %v2083, %v2083
  %v2106 = vpack.c.bf16 %v2084, %v2084
  %v2107 = vpack.c.bf16 %v2085, %v2085
  %v2108 = vpack.c.bf16 %v2086, %v2086
  %v2109 = vpack.c.bf16 %v2087, %v2087
  %v2110 = vpack.c.bf16 %v2088, %v2088
  %v2111 = vpack.c.bf16 %v2089, %v2089
  %v2112 = vpack.c.bf16 %v1751, %v1750
  %v2113 = vpack.c.bf16 %v1753, %v1752
  %v2114 = vpack.c.bf16 %v1755, %v1754
  %v2115 = vpack.c.bf16 %v1757, %v1756
  %v2116 = vpack.c.bf16 %v1759, %v1758
  %v2117 = vpack.c.bf16 %v1761, %v1760
  %v2119 = vsel %vm734, %v2104, 0
  %v2122 = vsel %vm734, %v2105, 0
  %v2125 = vsel %vm734, %v2106, 0
  %v2128 = vsel %vm734, %v2107, 0
  %v2131 = vsel %vm734, %v2108, 0
  %v2134 = vsel %vm734, %v2109, 0
  %v2137 = vsel %vm734, %v2110, 0
  %v2140 = vsel %vm734, %v2111, 0
  %2142 = vmatprep.subr.bf16.mxu0 0
  %2143 = vmatpush1.bf16.msra.mxu0 0
  %2144 = vmatprep.subr.bf16.mxu0 0
  %2145 = vmatpush1.bf16.msra.mxu0 0
  %2146 = vmatprep.subr.bf16.mxu0 0
  %2147 = vmatpush1.bf16.msra.mxu0 %v2117
  %2148 = vmatprep.subr.bf16.mxu0 0
  %2149 = vmatpush1.bf16.msra.mxu0 %v2116
  %2150 = vmatprep.subr.bf16.mxu0 0
  %2151 = vmatpush1.bf16.msra.mxu0 %v2115
  %2152 = vmatprep.subr.bf16.mxu0 0
  %2153 = vmatpush1.bf16.msra.mxu0 %v2114
  %2154 = vmatprep.subr.bf16.mxu0 0
  %2155 = vmatpush1.bf16.msra.mxu0 %v2113
  %2156 = vmatprep.subr.bf16.mxu0 0
  %2157 = vmatpush1.bf16.msra.mxu0 %v2112
  %2158 = vmatprep.subr.bf16.mxu0 0
  %2159 = vmatpush2.bf16.msra.mxu0 0
  %2160 = vmatprep.subr.bf16.mxu0 0
  %2161 = vmatpush2.bf16.msra.mxu0 0
  %2162 = vmatprep.subr.bf16.mxu0 0
  %2163 = vmatpush2.bf16.msra.mxu0 0
  %2164 = vmatprep.subr.bf16.mxu0 0
  %2165 = vmatpush2.bf16.msra.mxu0 0
  %2166 = vmatprep.subr.bf16.mxu0 0
  %2167 = vmatpush2.bf16.msra.mxu0 0
  %2168 = vmatprep.subr.bf16.mxu0 0
  %2169 = vmatpush2.bf16.msra.mxu0 0
  %2170 = vmatprep.subr.bf16.mxu0 0
  %2171 = vmatpush2.bf16.msra.mxu0 0
  %2172 = vmatprep.subr.bf16.mxu0 0
  %2173 = vmatpush2.bf16.msra.mxu0 0
  %2174 = vmatprep.mubr.bf16.mxu0 0
  %2175 = vmatmul.mubr.bf16.gmra.mxu0 %v2119
  %v2176 = vpop.f32.mrf.mxu0
  %v2177 = vadd.f32 0.0, %v2176
  %v2178 = vpop.f32.mrf.mxu0
  %v2179 = vpop.f32.mrf.mxu0
  %v2180 = vadd.f32 0.0, %v2179
  %v2181 = vpop.f32.mrf.mxu0
  %2182 = vmatprep.mubr.bf16.mxu0 0
  %2183 = vmatmul.mubr.bf16.gmra.mxu0 %v2122
  %v2184 = vpop.f32.mrf.mxu0
  %v2185 = vadd.f32 0.0, %v2184
  %v2186 = vpop.f32.mrf.mxu0
  %v2187 = vpop.f32.mrf.mxu0
  %v2188 = vadd.f32 0.0, %v2187
  %v2189 = vpop.f32.mrf.mxu0
  %2190 = vmatprep.mubr.bf16.mxu0 0
  %2191 = vmatmul.mubr.bf16.gmra.mxu0 %v2125
  %v2192 = vpop.f32.mrf.mxu0
  %v2193 = vadd.f32 0.0, %v2192
  %v2194 = vpop.f32.mrf.mxu0
  %v2195 = vpop.f32.mrf.mxu0
  %v2196 = vadd.f32 0.0, %v2195
  %v2197 = vpop.f32.mrf.mxu0
  %2198 = vmatprep.mubr.bf16.mxu0 0
  %2199 = vmatmul.mubr.bf16.gmra.mxu0 %v2128
  %v2200 = vpop.f32.mrf.mxu0
  %v2201 = vadd.f32 0.0, %v2200
  %v2202 = vpop.f32.mrf.mxu0
  %v2203 = vpop.f32.mrf.mxu0
  %v2204 = vadd.f32 0.0, %v2203
  %v2205 = vpop.f32.mrf.mxu0
  %2206 = vmatprep.mubr.bf16.mxu0 0
  %2207 = vmatmul.mubr.bf16.gmra.mxu0 %v2131
  %v2208 = vpop.f32.mrf.mxu0
  %v2209 = vadd.f32 0.0, %v2208
  %v2210 = vpop.f32.mrf.mxu0
  %v2211 = vpop.f32.mrf.mxu0
  %v2212 = vadd.f32 0.0, %v2211
  %v2213 = vpop.f32.mrf.mxu0
  %2214 = vmatprep.mubr.bf16.mxu0 0
  %2215 = vmatmul.mubr.bf16.gmra.mxu0 %v2134
  %v2216 = vpop.f32.mrf.mxu0
  %v2217 = vadd.f32 0.0, %v2216
  %v2218 = vpop.f32.mrf.mxu0
  %v2219 = vpop.f32.mrf.mxu0
  %v2220 = vadd.f32 0.0, %v2219
  %v2221 = vpop.f32.mrf.mxu0
  %2222 = vmatprep.mubr.bf16.mxu0 0
  %2223 = vmatmul.mubr.bf16.gmra.mxu0 %v2137
  %v2224 = vpop.f32.mrf.mxu0
  %v2225 = vadd.f32 0.0, %v2224
  %v2226 = vpop.f32.mrf.mxu0
  %v2227 = vpop.f32.mrf.mxu0
  %v2228 = vadd.f32 0.0, %v2227
  %v2229 = vpop.f32.mrf.mxu0
  %2230 = vmatprep.mubr.bf16.mxu0 0
  %2231 = vmatmul.mubr.bf16.gmra.mxu0 %v2140
  %v2232 = vpop.f32.mrf.mxu0
  %v2233 = vadd.f32 0.0, %v2232
  %v2234 = vpop.f32.mrf.mxu0
  %v2235 = vpop.f32.mrf.mxu0
  %v2236 = vadd.f32 0.0, %v2235
  %v2237 = vpop.f32.mrf.mxu0
  %2238 = vdwg.mxu0
  %v2240 = vsel %vm734, %v2090, 0
  %v2243 = vsel %vm734, %v2091, 0
  %v2246 = vsel %vm734, %v2092, 0
  %v2249 = vsel %vm734, %v2093, 0
  %v2252 = vsel %vm734, %v2094, 0
  %v2255 = vsel %vm734, %v2095, 0
  %v2258 = vsel %vm734, %v2096, 0
  %v2261 = vsel %vm734, %v2097, 0
  %2263 = vmatprep.subr.bf16.mxu0 0
  %2264 = vmatpush1.bf16.msra.mxu0 0
  %2265 = vmatprep.subr.bf16.mxu0 0
  %2266 = vmatpush1.bf16.msra.mxu0 0
  %2267 = vmatprep.subr.bf16.mxu0 0
  %2268 = vmatpush1.bf16.msra.mxu0 %v2103
  %2269 = vmatprep.subr.bf16.mxu0 0
  %2270 = vmatpush1.bf16.msra.mxu0 %v2102
  %2271 = vmatprep.subr.bf16.mxu0 0
  %2272 = vmatpush1.bf16.msra.mxu0 %v2101
  %2273 = vmatprep.subr.bf16.mxu0 0
  %2274 = vmatpush1.bf16.msra.mxu0 %v2100
  %2275 = vmatprep.subr.bf16.mxu0 0
  %2276 = vmatpush1.bf16.msra.mxu0 %v2099
  %2277 = vmatprep.subr.bf16.mxu0 0
  %2278 = vmatpush1.bf16.msra.mxu0 %v2098
  %2279 = vmatprep.subr.bf16.mxu0 0
  %2280 = vmatpush2.bf16.msra.mxu0 0
  %2281 = vmatprep.subr.bf16.mxu0 0
  %2282 = vmatpush2.bf16.msra.mxu0 0
  %2283 = vmatprep.subr.bf16.mxu0 0
  %2284 = vmatpush2.bf16.msra.mxu0 0
  %2285 = vmatprep.subr.bf16.mxu0 0
  %2286 = vmatpush2.bf16.msra.mxu0 0
  %2287 = vmatprep.subr.bf16.mxu0 0
  %2288 = vmatpush2.bf16.msra.mxu0 0
  %2289 = vmatprep.subr.bf16.mxu0 0
  %2290 = vmatpush2.bf16.msra.mxu0 0
  %2291 = vmatprep.subr.bf16.mxu0 0
  %2292 = vmatpush2.bf16.msra.mxu0 0
  %2293 = vmatprep.subr.bf16.mxu0 0
  %2294 = vmatpush2.bf16.msra.mxu0 0
  %2295 = vmatprep.mubr.bf16.mxu0 0
  %2296 = vmatmul.mubr.bf16.gmra.mxu0 %v2240
  %v2297 = vpop.f32.mrf.mxu0
  %v2298 = vadd.f32 %v2177, %v2297
  %v2299 = vpop.f32.mrf.mxu0
  %v2300 = vpop.f32.mrf.mxu0
  %v2301 = vadd.f32 %v2180, %v2300
  %v2302 = vpop.f32.mrf.mxu0
  %2303 = vmatprep.mubr.bf16.mxu0 0
  %2304 = vmatmul.mubr.bf16.gmra.mxu0 %v2243
  %v2305 = vpop.f32.mrf.mxu0
  %v2306 = vadd.f32 %v2185, %v2305
  %v2307 = vpop.f32.mrf.mxu0
  %v2308 = vpop.f32.mrf.mxu0
  %v2309 = vadd.f32 %v2188, %v2308
  %v2310 = vpop.f32.mrf.mxu0
  %2311 = vmatprep.mubr.bf16.mxu0 0
  %2312 = vmatmul.mubr.bf16.gmra.mxu0 %v2246
  %v2313 = vpop.f32.mrf.mxu0
  %v2314 = vadd.f32 %v2193, %v2313
  %v2315 = vpop.f32.mrf.mxu0
  %v2316 = vpop.f32.mrf.mxu0
  %v2317 = vadd.f32 %v2196, %v2316
  %v2318 = vpop.f32.mrf.mxu0
  %2319 = vmatprep.mubr.bf16.mxu0 0
  %2320 = vmatmul.mubr.bf16.gmra.mxu0 %v2249
  %v2321 = vpop.f32.mrf.mxu0
  %v2322 = vadd.f32 %v2201, %v2321
  %v2323 = vpop.f32.mrf.mxu0
  %v2324 = vpop.f32.mrf.mxu0
  %v2325 = vadd.f32 %v2204, %v2324
  %v2326 = vpop.f32.mrf.mxu0
  %2327 = vmatprep.mubr.bf16.mxu0 0
  %2328 = vmatmul.mubr.bf16.gmra.mxu0 %v2252
  %v2329 = vpop.f32.mrf.mxu0
  %v2330 = vadd.f32 %v2209, %v2329
  %v2331 = vpop.f32.mrf.mxu0
  %v2332 = vpop.f32.mrf.mxu0
  %v2333 = vadd.f32 %v2212, %v2332
  %v2334 = vpop.f32.mrf.mxu0
  %2335 = vmatprep.mubr.bf16.mxu0 0
  %2336 = vmatmul.mubr.bf16.gmra.mxu0 %v2255
  %v2337 = vpop.f32.mrf.mxu0
  %v2338 = vadd.f32 %v2217, %v2337
  %v2339 = vpop.f32.mrf.mxu0
  %v2340 = vpop.f32.mrf.mxu0
  %v2341 = vadd.f32 %v2220, %v2340
  %v2342 = vpop.f32.mrf.mxu0
  %2343 = vmatprep.mubr.bf16.mxu0 0
  %2344 = vmatmul.mubr.bf16.gmra.mxu0 %v2258
  %v2345 = vpop.f32.mrf.mxu0
  %v2346 = vadd.f32 %v2225, %v2345
  %v2347 = vpop.f32.mrf.mxu0
  %v2348 = vpop.f32.mrf.mxu0
  %v2349 = vadd.f32 %v2228, %v2348
  %v2350 = vpop.f32.mrf.mxu0
  %2351 = vmatprep.mubr.bf16.mxu0 0
  %2352 = vmatmul.mubr.bf16.gmra.mxu0 %v2261
  %v2353 = vpop.f32.mrf.mxu0
  %v2354 = vadd.f32 %v2233, %v2353
  %v2355 = vpop.f32.mrf.mxu0
  %v2356 = vpop.f32.mrf.mxu0
  %v2357 = vadd.f32 %v2236, %v2356
  %v2358 = vpop.f32.mrf.mxu0
  %2359 = vdwg.mxu0
  %v2360 = vpack.c.bf16 %v2081, %v2085
  %v2361 = vpack.c.bf16 %v2081, %v2089
  %v2362 = vpack.c.bf16 %v1763, %v1762
  %v2363 = vpack.c.bf16 %v1765, %v1764
  %v2364 = vpack.c.bf16 %v1767, %v1766
  %v2365 = vpack.c.bf16 %v1769, %v1768
  %v2366 = vpack.c.bf16 %v1771, %v1770
  %v2367 = vpack.c.bf16 %v1773, %v1772
  %v2369 = vsel %vm734, %v2360, 0
  %v2372 = vsel %vm734, %v2361, 0
  %2374 = vmatprep.subr.bf16.mxu0 0
  %2375 = vmatpush1.bf16.msra.mxu0 0
  %2376 = vmatprep.subr.bf16.mxu0 0
  %2377 = vmatpush1.bf16.msra.mxu0 0
  %2378 = vmatprep.subr.bf16.mxu0 0
  %2379 = vmatpush1.bf16.msra.mxu0 %v2367
  %2380 = vmatprep.subr.bf16.mxu0 0
  %2381 = vmatpush1.bf16.msra.mxu0 %v2366
  %2382 = vmatprep.subr.bf16.mxu0 0
  %2383 = vmatpush1.bf16.msra.mxu0 %v2365
  %2384 = vmatprep.subr.bf16.mxu0 0
  %2385 = vmatpush1.bf16.msra.mxu0 %v2364
  %2386 = vmatprep.subr.bf16.mxu0 0
  %2387 = vmatpush1.bf16.msra.mxu0 %v2363
  %2388 = vmatprep.subr.bf16.mxu0 0
  %2389 = vmatpush1.bf16.msra.mxu0 %v2362
  %2390 = vmatprep.subr.bf16.mxu0 0
  %2391 = vmatpush2.bf16.msra.mxu0 0
  %2392 = vmatprep.subr.bf16.mxu0 0
  %2393 = vmatpush2.bf16.msra.mxu0 0
  %2394 = vmatprep.subr.bf16.mxu0 0
  %2395 = vmatpush2.bf16.msra.mxu0 0
  %2396 = vmatprep.subr.bf16.mxu0 0
  %2397 = vmatpush2.bf16.msra.mxu0 0
  %2398 = vmatprep.subr.bf16.mxu0 0
  %2399 = vmatpush2.bf16.msra.mxu0 0
  %2400 = vmatprep.subr.bf16.mxu0 0
  %2401 = vmatpush2.bf16.msra.mxu0 0
  %2402 = vmatprep.subr.bf16.mxu0 0
  %2403 = vmatpush2.bf16.msra.mxu0 0
  %2404 = vmatprep.subr.bf16.mxu0 0
  %2405 = vmatpush2.bf16.msra.mxu0 0
  %2406 = vmatprep.mubr.bf16.mxu0 0
  %2407 = vmatmul.mubr.bf16.gmra.mxu0 %v2243
  %v2408 = vpop.f32.mrf.mxu0
  %v2409 = vadd.f32 0.0, %v2408
  %v2410 = vpop.f32.mrf.mxu0
  %v2411 = vpop.f32.mrf.mxu0
  %v2412 = vadd.f32 0.0, %v2411
  %v2413 = vpop.f32.mrf.mxu0
  %2414 = vmatprep.mubr.bf16.mxu0 0
  %2415 = vmatmul.mubr.bf16.gmra.mxu0 %v2246
  %v2416 = vpop.f32.mrf.mxu0
  %v2417 = vadd.f32 0.0, %v2416
  %v2418 = vpop.f32.mrf.mxu0
  %v2419 = vpop.f32.mrf.mxu0
  %v2420 = vadd.f32 0.0, %v2419
  %v2421 = vpop.f32.mrf.mxu0
  %2422 = vmatprep.mubr.bf16.mxu0 0
  %2423 = vmatmul.mubr.bf16.gmra.mxu0 %v2249
  %v2424 = vpop.f32.mrf.mxu0
  %v2425 = vadd.f32 0.0, %v2424
  %v2426 = vpop.f32.mrf.mxu0
  %v2427 = vpop.f32.mrf.mxu0
  %v2428 = vadd.f32 0.0, %v2427
  %v2429 = vpop.f32.mrf.mxu0
  %2430 = vmatprep.mubr.bf16.mxu0 0
  %2431 = vmatmul.mubr.bf16.gmra.mxu0 %v2369
  %v2432 = vpop.f32.mrf.mxu0
  %v2433 = vadd.f32 0.0, %v2432
  %v2434 = vpop.f32.mrf.mxu0
  %v2435 = vpop.f32.mrf.mxu0
  %v2436 = vadd.f32 0.0, %v2435
  %v2437 = vpop.f32.mrf.mxu0
  %2438 = vmatprep.mubr.bf16.mxu0 0
  %2439 = vmatmul.mubr.bf16.gmra.mxu0 %v2255
  %v2440 = vpop.f32.mrf.mxu0
  %v2441 = vadd.f32 0.0, %v2440
  %v2442 = vpop.f32.mrf.mxu0
  %v2443 = vpop.f32.mrf.mxu0
  %v2444 = vadd.f32 0.0, %v2443
  %v2445 = vpop.f32.mrf.mxu0
  %2446 = vmatprep.mubr.bf16.mxu0 0
  %2447 = vmatmul.mubr.bf16.gmra.mxu0 %v2258
  %v2448 = vpop.f32.mrf.mxu0
  %v2449 = vadd.f32 0.0, %v2448
  %v2450 = vpop.f32.mrf.mxu0
  %v2451 = vpop.f32.mrf.mxu0
  %v2452 = vadd.f32 0.0, %v2451
  %v2453 = vpop.f32.mrf.mxu0
  %2454 = vmatprep.mubr.bf16.mxu0 0
  %2455 = vmatmul.mubr.bf16.gmra.mxu0 %v2261
  %v2456 = vpop.f32.mrf.mxu0
  %v2457 = vadd.f32 0.0, %v2456
  %v2458 = vpop.f32.mrf.mxu0
  %v2459 = vpop.f32.mrf.mxu0
  %v2460 = vadd.f32 0.0, %v2459
  %v2461 = vpop.f32.mrf.mxu0
  %2462 = vmatprep.mubr.bf16.mxu0 0
  %2463 = vmatmul.mubr.bf16.gmra.mxu0 %v2372
  %v2464 = vpop.f32.mrf.mxu0
  %v2465 = vadd.f32 0.0, %v2464
  %v2466 = vpop.f32.mrf.mxu0
  %v2467 = vpop.f32.mrf.mxu0
  %v2468 = vadd.f32 0.0, %v2467
  %v2469 = vpop.f32.mrf.mxu0
  %2470 = vdwg.mxu0
  %v2471 = vadd.f32 %v2298, %v2409
  %v2472 = vadd.f32 %v2301, %v2412
  %v2473 = vadd.f32 %v2306, %v2417
  %v2474 = vadd.f32 %v2309, %v2420
  %v2475 = vadd.f32 %v2314, %v2425
  %v2476 = vadd.f32 %v2317, %v2428
  %v2477 = vadd.f32 %v2322, %v2433
  %v2478 = vadd.f32 %v2325, %v2436
  %v2479 = vadd.f32 %v2330, %v2441
  %v2480 = vadd.f32 %v2333, %v2444
  %v2481 = vadd.f32 %v2338, %v2449
  %v2482 = vadd.f32 %v2341, %v2452
  %v2483 = vadd.f32 %v2346, %v2457
  %v2484 = vadd.f32 %v2349, %v2460
  %v2485 = vadd.f32 %v2354, %v2465
  %v2486 = vadd.f32 %v2357, %v2468
  %v2488 = vlaneseq
  %v2489 = vshrl.u32 %v2488, 7
  %v2490 = vsub.s32 0, %v2489
  %v2491 = vrot.slane %v1774, %v2490
  %v2493 = vadd.f32 %v2471, %v2491
  %v2494 = vadd.f32 %v2472, %v2491
  %v2495 = vadd.f32 %v2473, %v2491
  %v2496 = vadd.f32 %v2474, %v2491
  %v2497 = vadd.f32 %v2475, %v2491
  %v2498 = vadd.f32 %v2476, %v2491
  %v2499 = vadd.f32 %v2477, %v2491
  %v2500 = vadd.f32 %v2478, %v2491
  %v2501 = vadd.f32 %v2479, %v2491
  %v2502 = vadd.f32 %v2480, %v2491
  %v2503 = vadd.f32 %v2481, %v2491
  %v2504 = vadd.f32 %v2482, %v2491
  %v2505 = vadd.f32 %v2483, %v2491
  %v2506 = vadd.f32 %v2484, %v2491
  %v2507 = vadd.f32 %v2485, %v2491
  %v2508 = vadd.f32 %v2486, %v2491
  %vm2509 = vcmp.ge.f32.partialorder %v2493, 0.0
  %vm2510 = vcmp.ge.f32.partialorder %v2494, 0.0
  %vm2511 = vcmp.ge.f32.partialorder %v2495, 0.0
  %vm2512 = vcmp.ge.f32.partialorder %v2496, 0.0
  %vm2513 = vcmp.ge.f32.partialorder %v2497, 0.0
  %vm2514 = vcmp.ge.f32.partialorder %v2498, 0.0
  %vm2515 = vcmp.ge.f32.partialorder %v2499, 0.0
  %vm2516 = vcmp.ge.f32.partialorder %v2500, 0.0
  %vm2517 = vcmp.ge.f32.partialorder %v2501, 0.0
  %vm2518 = vcmp.ge.f32.partialorder %v2502, 0.0
  %vm2519 = vcmp.ge.f32.partialorder %v2503, 0.0
  %vm2520 = vcmp.ge.f32.partialorder %v2504, 0.0
  %vm2521 = vcmp.ge.f32.partialorder %v2505, 0.0
  %vm2522 = vcmp.ge.f32.partialorder %v2506, 0.0
  %vm2523 = vcmp.ge.f32.partialorder %v2507, 0.0
  %vm2524 = vcmp.ge.f32.partialorder %v2508, 0.0
  %v2525 = vmul.f32 %v2493, 0.2
  %v2526 = vmul.f32 %v2494, 0.2
  %v2527 = vmul.f32 %v2495, 0.2
  %v2528 = vmul.f32 %v2496, 0.2
  %v2529 = vmul.f32 %v2497, 0.2
  %v2530 = vmul.f32 %v2498, 0.2
  %v2531 = vmul.f32 %v2499, 0.2
  %v2532 = vmul.f32 %v2500, 0.2
  %v2533 = vmul.f32 %v2501, 0.2
  %v2534 = vmul.f32 %v2502, 0.2
  %v2535 = vmul.f32 %v2503, 0.2
  %v2536 = vmul.f32 %v2504, 0.2
  %v2537 = vmul.f32 %v2505, 0.2
  %v2538 = vmul.f32 %v2506, 0.2
  %v2539 = vmul.f32 %v2507, 0.2
  %v2540 = vmul.f32 %v2508, 0.2
  %v2541 = vsel %vm2509, %v2493, %v2525
  %v2542 = vsel %vm2510, %v2494, %v2526
  %v2543 = vsel %vm2511, %v2495, %v2527
  %v2544 = vsel %vm2512, %v2496, %v2528
  %v2545 = vsel %vm2513, %v2497, %v2529
  %v2546 = vsel %vm2514, %v2498, %v2530
  %v2547 = vsel %vm2515, %v2499, %v2531
  %v2548 = vsel %vm2516, %v2500, %v2532
  %v2549 = vsel %vm2517, %v2501, %v2533
  %v2550 = vsel %vm2518, %v2502, %v2534
  %v2551 = vsel %vm2519, %v2503, %v2535
  %v2552 = vsel %vm2520, %v2504, %v2536
  %v2553 = vsel %vm2521, %v2505, %v2537
  %v2554 = vsel %vm2522, %v2506, %v2538
  %v2555 = vsel %vm2523, %v2507, %v2539
  %v2556 = vsel %vm2524, %v2508, %v2540
  %v2557 = vmul.f32 %v2541, %v2541
  %v2558 = vmul.f32 %v2542, %v2542
  %v2559 = vmul.f32 %v2543, %v2543
  %v2560 = vmul.f32 %v2544, %v2544
  %v2561 = vmul.f32 %v2545, %v2545
  %v2562 = vmul.f32 %v2546, %v2546
  %v2563 = vmul.f32 %v2547, %v2547
  %v2564 = vmul.f32 %v2548, %v2548
  %v2565 = vmul.f32 %v2549, %v2549
  %v2566 = vmul.f32 %v2550, %v2550
  %v2567 = vmul.f32 %v2551, %v2551
  %v2568 = vmul.f32 %v2552, %v2552
  %v2569 = vmul.f32 %v2553, %v2553
  %v2570 = vmul.f32 %v2554, %v2554
  %v2571 = vmul.f32 %v2555, %v2555
  %v2572 = vmul.f32 %v2556, %v2556
  %v2573 = vsel %vm115, %v2557, 0.0
  %2574 = vadd.xlane.f32.xlu0 %v2573
  %v2575 = vpop.xlane.xlu0 %2574
  %v2576 = vsel %vm115, %v2558, 0.0
  %2577 = vadd.xlane.f32.xlu0 %v2576
  %v2578 = vpop.xlane.xlu0 %2577
  %v2579 = vsel %vm115, %v2559, 0.0
  %2580 = vadd.xlane.f32.xlu0 %v2579
  %v2581 = vpop.xlane.xlu0 %2580
  %v2582 = vsel %vm115, %v2560, 0.0
  %2583 = vadd.xlane.f32.xlu0 %v2582
  %v2584 = vpop.xlane.xlu0 %2583
  %v2585 = vsel %vm115, %v2561, 0.0
  %2586 = vadd.xlane.f32.xlu0 %v2585
  %v2587 = vpop.xlane.xlu0 %2586
  %v2588 = vsel %vm115, %v2562, 0.0
  %2589 = vadd.xlane.f32.xlu0 %v2588
  %v2590 = vpop.xlane.xlu0 %2589
  %v2591 = vsel %vm115, %v2563, 0.0
  %2592 = vadd.xlane.f32.xlu0 %v2591
  %v2593 = vpop.xlane.xlu0 %2592
  %v2594 = vsel %vm115, %v2564, 0.0
  %2595 = vadd.xlane.f32.xlu0 %v2594
  %v2596 = vpop.xlane.xlu0 %2595
  %v2597 = vsel %vm115, %v2565, 0.0
  %2598 = vadd.xlane.f32.xlu0 %v2597
  %v2599 = vpop.xlane.xlu0 %2598
  %v2600 = vsel %vm115, %v2566, 0.0
  %2601 = vadd.xlane.f32.xlu0 %v2600
  %v2602 = vpop.xlane.xlu0 %2601
  %v2603 = vsel %vm115, %v2567, 0.0
  %2604 = vadd.xlane.f32.xlu0 %v2603
  %v2605 = vpop.xlane.xlu0 %2604
  %v2606 = vsel %vm115, %v2568, 0.0
  %2607 = vadd.xlane.f32.xlu0 %v2606
  %v2608 = vpop.xlane.xlu0 %2607
  %v2609 = vsel %vm115, %v2569, 0.0
  %2610 = vadd.xlane.f32.xlu0 %v2609
  %v2611 = vpop.xlane.xlu0 %2610
  %v2612 = vsel %vm115, %v2570, 0.0
  %2613 = vadd.xlane.f32.xlu0 %v2612
  %v2614 = vpop.xlane.xlu0 %2613
  %v2615 = vsel %vm115, %v2571, 0.0
  %2616 = vadd.xlane.f32.xlu0 %v2615
  %v2617 = vpop.xlane.xlu0 %2616
  %v2618 = vsel %vm115, %v2572, 0.0
  %2619 = vadd.xlane.f32.xlu0 %v2618
  %v2620 = vpop.xlane.xlu0 %2619
  %v2621 = vmul.f32 %v2575, %v477
  %v2622 = vmul.f32 %v2578, %v477
  %v2623 = vmul.f32 %v2581, %v477
  %v2624 = vmul.f32 %v2584, %v477
  %v2625 = vmul.f32 %v2587, %v477
  %v2626 = vmul.f32 %v2590, %v477
  %v2627 = vmul.f32 %v2593, %v477
  %v2628 = vmul.f32 %v2596, %v477
  %v2629 = vmul.f32 %v2599, %v477
  %v2630 = vmul.f32 %v2602, %v477
  %v2631 = vmul.f32 %v2605, %v477
  %v2632 = vmul.f32 %v2608, %v477
  %v2633 = vmul.f32 %v2611, %v477
  %v2634 = vmul.f32 %v2614, %v477
  %v2635 = vmul.f32 %v2617, %v477
  %v2636 = vmul.f32 %v2620, %v477
  %v2637 = vadd.f32 %v2621, 1e-08
  %v2638 = vadd.f32 %v2622, 1e-08
  %v2639 = vadd.f32 %v2623, 1e-08
  %v2640 = vadd.f32 %v2624, 1e-08
  %v2641 = vadd.f32 %v2625, 1e-08
  %v2642 = vadd.f32 %v2626, 1e-08
  %v2643 = vadd.f32 %v2627, 1e-08
  %v2644 = vadd.f32 %v2628, 1e-08
  %v2645 = vadd.f32 %v2629, 1e-08
  %v2646 = vadd.f32 %v2630, 1e-08
  %v2647 = vadd.f32 %v2631, 1e-08
  %v2648 = vadd.f32 %v2632, 1e-08
  %v2649 = vadd.f32 %v2633, 1e-08
  %v2650 = vadd.f32 %v2634, 1e-08
  %v2651 = vadd.f32 %v2635, 1e-08
  %v2652 = vadd.f32 %v2636, 1e-08
  %v2653 = vrsqrt.pop %v2637
  %v2654 = vrsqrt.pop %v2638
  %v2655 = vrsqrt.pop %v2639
  %v2656 = vrsqrt.pop %v2640
  %v2657 = vrsqrt.pop %v2641
  %v2658 = vrsqrt.pop %v2642
  %v2659 = vrsqrt.pop %v2643
  %v2660 = vrsqrt.pop %v2644
  %v2661 = vrsqrt.pop %v2645
  %v2662 = vrsqrt.pop %v2646
  %v2663 = vrsqrt.pop %v2647
  %v2664 = vrsqrt.pop %v2648
  %v2665 = vrsqrt.pop %v2649
  %v2666 = vrsqrt.pop %v2650
  %v2667 = vrsqrt.pop %v2651
  %v2668 = vrsqrt.pop %v2652
  %v2669 = vmul.f32 %v2541, %v2653
  %v2670 = vmul.f32 %v2542, %v2654
  %v2671 = vmul.f32 %v2543, %v2655
  %v2672 = vmul.f32 %v2544, %v2656
  %v2673 = vmul.f32 %v2545, %v2657
  %v2674 = vmul.f32 %v2546, %v2658
  %v2675 = vmul.f32 %v2547, %v2659
  %v2676 = vmul.f32 %v2548, %v2660
  %v2677 = vmul.f32 %v2549, %v2661
  %v2678 = vmul.f32 %v2550, %v2662
  %v2679 = vmul.f32 %v2551, %v2663
  %v2680 = vmul.f32 %v2552, %v2664
  %v2681 = vmul.f32 %v2553, %v2665
  %v2682 = vmul.f32 %v2554, %v2666
  %v2683 = vmul.f32 %v2555, %v2667
  %v2684 = vmul.f32 %v2556, %v2668
  %v2685 = vld [vmem:[%s10] sm:$0xff]
  %v2686 = vld [vmem:[%s10 + $0x8] sm:$0xff]
  %v2687 = vld [vmem:[%s10 + $0x10] sm:$0xff]
  %v2688 = vld [vmem:[%s10 + $0x18] sm:$0xff]
  %v2689 = vld [vmem:[%s10 + $0x20] sm:$0xff]
  %v2690 = vld [vmem:[%s10 + $0x28] sm:$0xff]
  %v2691 = vld [vmem:[%s10 + $0x30] sm:$0xff]
  %v2692 = vld [vmem:[%s10 + $0x38] sm:$0xff]
  %v2693 = vld [vmem:[%s10 + $0x40] sm:$0xff]
  %v2694 = vld [vmem:[%s10 + $0x48] sm:$0xff]
  %v2695 = vld [vmem:[%s10 + $0x50] sm:$0xff]
  %v2696 = vld [vmem:[%s10 + $0x58] sm:$0xff]
  %v2697 = vld [vmem:[%s10 + $0x60] sm:$0xff]
  %v2698 = vld [vmem:[%s10 + $0x68] sm:$0xff]
  %v2699 = vld [vmem:[%s10 + $0x70] sm:$0xff]
  %v2700 = vld [vmem:[%s10 + $0x78] sm:$0xff]
  %v2701 = vld [vmem:[%s10 + $0x80] sm:$0xff]
  %v2702 = vld [vmem:[%s10 + $0x88] sm:$0xff]
  %v2703 = vld [vmem:[%s10 + $0x90] sm:$0xff]
  %v2704 = vld [vmem:[%s10 + $0x98] sm:$0xff]
  %v2705 = vld [vmem:[%s10 + $0xa0] sm:$0xff]
  %v2706 = vld [vmem:[%s10 + $0xa8] sm:$0xff]
  %v2707 = vld [vmem:[%s10 + $0xb0] sm:$0xff]
  %v2708 = vld [vmem:[%s10 + $0xb8] sm:$0xff]
  %v2709 = vld [vmem:[%s10 + $0xc0] sm:$0xff]
  %v2710 = vld [vmem:[%s10 + $0xc8] sm:$0xff]
  %v2711 = vld [vmem:[%s10 + $0xd0] sm:$0xff]
  %v2712 = vld [vmem:[%s10 + $0xd8] sm:$0xff]
  %v2713 = vld [vmem:[%s10 + $0xe0] sm:$0xff]
  %v2714 = vld [vmem:[%s10 + $0xe8] sm:$0xff]
  %v2715 = vld [vmem:[%s10 + $0xf0] sm:$0xff]
  %v2716 = vld [vmem:[%s10 + $0xf8] sm:$0xff]
  %v2717 = vld [vmem:[%s10 + $0x100] sm:$0xff]
  %v2718 = vld [vmem:[%s10 + $0x108] sm:$0xff]
  %v2719 = vld [vmem:[%s10 + $0x110] sm:$0xff]
  %v2720 = vld [vmem:[%s10 + $0x118] sm:$0xff]
  %v2721 = vld [vmem:[%s11] sm:$0x1]
  %v2738 = vrot.slane %v2669, 7
  %v2739 = vrot.slane %v2670, 7
  %v2740 = vrot.slane %v2671, 7
  %v2741 = vrot.slane %v2672, 7
  %v2742 = vrot.slane %v2673, 7
  %v2743 = vrot.slane %v2674, 7
  %v2744 = vrot.slane %v2675, 7
  %v2745 = vrot.slane %v2676, 7
  %v2746 = vrot.slane %v2677, 7
  %v2747 = vrot.slane %v2678, 7
  %v2748 = vrot.slane %v2679, 7
  %v2749 = vrot.slane %v2680, 7
  %v2750 = vrot.slane %v2681, 7
  %v2751 = vrot.slane %v2682, 7
  %v2752 = vrot.slane %v2683, 7
  %v2753 = vrot.slane %v2684, 7
  %v2770 = vsel %vm264, 0.0, %v2738
  %v2771 = vsel %vm264, 0.0, %v2739
  %v2772 = vsel %vm264, 0.0, %v2740
  %v2773 = vsel %vm264, 0.0, %v2741
  %v2774 = vsel %vm264, 0.0, %v2742
  %v2775 = vsel %vm264, 0.0, %v2743
  %v2776 = vsel %vm264, 0.0, %v2744
  %v2777 = vsel %vm264, 0.0, %v2745
  %v2778 = vsel %vm264, 0.0, %v2746
  %v2779 = vsel %vm264, 0.0, %v2747
  %v2780 = vsel %vm264, 0.0, %v2748
  %v2781 = vsel %vm264, 0.0, %v2749
  %v2782 = vsel %vm264, 0.0, %v2750
  %v2783 = vsel %vm264, 0.0, %v2751
  %v2784 = vsel %vm264, 0.0, %v2752
  %v2785 = vsel %vm264, 0.0, %v2753
  %v2786 = vsel %vm264, %v2738, 0.0
  %v2787 = vsel %vm264, %v2739, 0.0
  %v2788 = vsel %vm264, %v2740, 0.0
  %v2789 = vsel %vm264, %v2741, 0.0
  %v2790 = vsel %vm264, %v2742, 0.0
  %v2791 = vsel %vm264, %v2743, 0.0
  %v2792 = vsel %vm264, %v2744, 0.0
  %v2793 = vsel %vm264, %v2745, 0.0
  %v2794 = vsel %vm264, %v2746, 0.0
  %v2795 = vsel %vm264, %v2747, 0.0
  %v2796 = vsel %vm264, %v2748, 0.0
  %v2797 = vsel %vm264, %v2749, 0.0
  %v2798 = vsel %vm264, %v2750, 0.0
  %v2799 = vsel %vm264, %v2751, 0.0
  %v2800 = vsel %vm264, %v2752, 0.0
  %v2801 = vsel %vm264, %v2753, 0.0
  %v2830 = vrot.slane %v2770, 1
  %v2831 = vrot.slane %v2786, 1
  %v2832 = vsel %vm1962, %v2830, %v2831
  %v2833 = vrot.slane %v2771, 1
  %v2834 = vrot.slane %v2787, 1
  %v2835 = vsel %vm1962, %v2833, %v2834
  %v2836 = vrot.slane %v2772, 1
  %v2837 = vrot.slane %v2788, 1
  %v2838 = vsel %vm1962, %v2836, %v2837
  %v2839 = vrot.slane %v2773, 1
  %v2840 = vrot.slane %v2789, 1
  %v2841 = vsel %vm1962, %v2839, %v2840
  %v2842 = vrot.slane %v2774, 1
  %v2843 = vrot.slane %v2790, 1
  %v2844 = vsel %vm1962, %v2842, %v2843
  %v2845 = vrot.slane %v2775, 1
  %v2846 = vrot.slane %v2791, 1
  %v2847 = vsel %vm1962, %v2845, %v2846
  %v2848 = vrot.slane %v2776, 1
  %v2849 = vrot.slane %v2792, 1
  %v2850 = vsel %vm1962, %v2848, %v2849
  %v2851 = vrot.slane %v2778, 1
  %v2852 = vrot.slane %v2794, 1
  %v2853 = vsel %vm1962, %v2851, %v2852
  %v2854 = vrot.slane %v2779, 1
  %v2855 = vrot.slane %v2795, 1
  %v2856 = vsel %vm1962, %v2854, %v2855
  %v2857 = vrot.slane %v2780, 1
  %v2858 = vrot.slane %v2796, 1
  %v2859 = vsel %vm1962, %v2857, %v2858
  %v2860 = vrot.slane %v2781, 1
  %v2861 = vrot.slane %v2797, 1
  %v2862 = vsel %vm1962, %v2860, %v2861
  %v2863 = vrot.slane %v2782, 1
  %v2864 = vrot.slane %v2798, 1
  %v2865 = vsel %vm1962, %v2863, %v2864
  %v2866 = vrot.slane %v2783, 1
  %v2867 = vrot.slane %v2799, 1
  %v2868 = vsel %vm1962, %v2866, %v2867
  %v2869 = vrot.slane %v2784, 1
  %v2870 = vrot.slane %v2800, 1
  %v2871 = vsel %vm1962, %v2869, %v2870
  %2872 = vrot.lane.b32.xlu0 %v2832, 32
  %v2873 = vpop.permute.xlu0 %2872
  %2874 = vrot.lane.b32.xlu0 %v2835, 32
  %v2875 = vpop.permute.xlu0 %2874
  %2876 = vrot.lane.b32.xlu0 %v2838, 32
  %v2877 = vpop.permute.xlu0 %2876
  %2878 = vrot.lane.b32.xlu0 %v2841, 32
  %v2879 = vpop.permute.xlu0 %2878
  %2880 = vrot.lane.b32.xlu0 %v2844, 32
  %v2881 = vpop.permute.xlu0 %2880
  %2882 = vrot.lane.b32.xlu0 %v2847, 32
  %v2883 = vpop.permute.xlu0 %2882
  %2884 = vrot.lane.b32.xlu0 %v2850, 32
  %v2885 = vpop.permute.xlu0 %2884
  %2886 = vrot.lane.b32.xlu0 %v2853, 32
  %v2887 = vpop.permute.xlu0 %2886
  %2888 = vrot.lane.b32.xlu0 %v2856, 32
  %v2889 = vpop.permute.xlu0 %2888
  %2890 = vrot.lane.b32.xlu0 %v2859, 32
  %v2891 = vpop.permute.xlu0 %2890
  %2892 = vrot.lane.b32.xlu0 %v2862, 32
  %v2893 = vpop.permute.xlu0 %2892
  %2894 = vrot.lane.b32.xlu0 %v2865, 32
  %v2895 = vpop.permute.xlu0 %2894
  %2896 = vrot.lane.b32.xlu0 %v2868, 32
  %v2897 = vpop.permute.xlu0 %2896
  %2898 = vrot.lane.b32.xlu0 %v2871, 32
  %v2899 = vpop.permute.xlu0 %2898
  %v2914 = vrot.slane %v2770, 2
  %v2915 = vrot.slane %v2786, 2
  %v2916 = vsel %vm2017, %v2914, %v2915
  %v2917 = vrot.slane %v2771, 2
  %v2918 = vrot.slane %v2787, 2
  %v2919 = vsel %vm2017, %v2917, %v2918
  %v2920 = vrot.slane %v2772, 2
  %v2921 = vrot.slane %v2788, 2
  %v2922 = vsel %vm2017, %v2920, %v2921
  %v2923 = vrot.slane %v2773, 2
  %v2924 = vrot.slane %v2789, 2
  %v2925 = vsel %vm2017, %v2923, %v2924
  %v2926 = vrot.slane %v2774, 2
  %v2927 = vrot.slane %v2790, 2
  %v2928 = vsel %vm2017, %v2926, %v2927
  %v2929 = vrot.slane %v2775, 2
  %v2930 = vrot.slane %v2791, 2
  %v2931 = vsel %vm2017, %v2929, %v2930
  %v2932 = vrot.slane %v2776, 2
  %v2933 = vrot.slane %v2792, 2
  %v2934 = vsel %vm2017, %v2932, %v2933
  %v2935 = vrot.slane %v2778, 2
  %v2936 = vrot.slane %v2794, 2
  %v2937 = vsel %vm2017, %v2935, %v2936
  %v2938 = vrot.slane %v2779, 2
  %v2939 = vrot.slane %v2795, 2
  %v2940 = vsel %vm2017, %v2938, %v2939
  %v2941 = vrot.slane %v2780, 2
  %v2942 = vrot.slane %v2796, 2
  %v2943 = vsel %vm2017, %v2941, %v2942
  %v2944 = vrot.slane %v2781, 2
  %v2945 = vrot.slane %v2797, 2
  %v2946 = vsel %vm2017, %v2944, %v2945
  %v2947 = vrot.slane %v2782, 2
  %v2948 = vrot.slane %v2798, 2
  %v2949 = vsel %vm2017, %v2947, %v2948
  %v2950 = vrot.slane %v2783, 2
  %v2951 = vrot.slane %v2799, 2
  %v2952 = vsel %vm2017, %v2950, %v2951
  %v2953 = vrot.slane %v2784, 2
  %v2954 = vrot.slane %v2800, 2
  %v2955 = vsel %vm2017, %v2953, %v2954
  %2956 = vrot.lane.b32.xlu0 %v2916, 64
  %v2957 = vpop.permute.xlu0 %2956
  %2958 = vrot.lane.b32.xlu0 %v2919, 64
  %v2959 = vpop.permute.xlu0 %2958
  %2960 = vrot.lane.b32.xlu0 %v2922, 64
  %v2961 = vpop.permute.xlu0 %2960
  %2962 = vrot.lane.b32.xlu0 %v2925, 64
  %v2963 = vpop.permute.xlu0 %2962
  %2964 = vrot.lane.b32.xlu0 %v2928, 64
  %v2965 = vpop.permute.xlu0 %2964
  %2966 = vrot.lane.b32.xlu0 %v2931, 64
  %v2967 = vpop.permute.xlu0 %2966
  %2968 = vrot.lane.b32.xlu0 %v2934, 64
  %v2969 = vpop.permute.xlu0 %2968
  %2970 = vrot.lane.b32.xlu0 %v2937, 64
  %v2971 = vpop.permute.xlu0 %2970
  %2972 = vrot.lane.b32.xlu0 %v2940, 64
  %v2973 = vpop.permute.xlu0 %2972
  %2974 = vrot.lane.b32.xlu0 %v2943, 64
  %v2975 = vpop.permute.xlu0 %2974
  %2976 = vrot.lane.b32.xlu0 %v2946, 64
  %v2977 = vpop.permute.xlu0 %2976
  %2978 = vrot.lane.b32.xlu0 %v2949, 64
  %v2979 = vpop.permute.xlu0 %2978
  %2980 = vrot.lane.b32.xlu0 %v2952, 64
  %v2981 = vpop.permute.xlu0 %2980
  %2982 = vrot.lane.b32.xlu0 %v2955, 64
  %v2983 = vpop.permute.xlu0 %2982
  %v2998 = vsel %vm115, %v2770, %v2873
  %v2999 = vsel %vm115, %v2771, %v2875
  %v3000 = vsel %vm115, %v2772, %v2877
  %v3001 = vsel %vm115, %v2773, %v2879
  %v3002 = vsel %vm115, %v2774, %v2881
  %v3003 = vsel %vm115, %v2775, %v2883
  %v3004 = vsel %vm115, %v2776, %v2885
  %v3005 = vsel %vm115, %v2778, %v2887
  %v3006 = vsel %vm115, %v2779, %v2889
  %v3007 = vsel %vm115, %v2780, %v2891
  %v3008 = vsel %vm115, %v2781, %v2893
  %v3009 = vsel %vm115, %v2782, %v2895
  %v3010 = vsel %vm115, %v2783, %v2897
  %v3011 = vsel %vm115, %v2784, %v2899
  %v3012 = vsel %vm663, %v2998, %v2957
  %v3013 = vsel %vm663, %v2999, %v2959
  %v3014 = vsel %vm663, %v3000, %v2961
  %v3015 = vsel %vm663, %v3001, %v2963
  %v3016 = vsel %vm663, %v3002, %v2965
  %v3017 = vsel %vm663, %v3003, %v2967
  %v3018 = vsel %vm663, %v3004, %v2969
  %v3019 = vsel %vm663, %v3005, %v2971
  %v3020 = vsel %vm663, %v3006, %v2973
  %v3021 = vsel %vm663, %v3007, %v2975
  %v3022 = vsel %vm663, %v3008, %v2977
  %v3023 = vsel %vm663, %v3009, %v2979
  %v3024 = vsel %vm663, %v3010, %v2981
  %v3025 = vsel %vm663, %v3011, %v2983
  %v3026 = vpack.c.bf16 %v3012, %v2081
  %v3027 = vpack.c.bf16 %v3014, %v3013
  %v3028 = vpack.c.bf16 %v3016, %v3015
  %v3029 = vpack.c.bf16 %v3018, %v3017
  %v3030 = vpack.c.bf16 %v3019, %v2081
  %v3031 = vpack.c.bf16 %v3021, %v3020
  %v3032 = vpack.c.bf16 %v3023, %v3022
  %v3033 = vpack.c.bf16 %v3025, %v3024
  %v3034 = vpack.c.bf16 %v2686, %v2685
  %v3035 = vpack.c.bf16 %v2688, %v2687
  %v3036 = vpack.c.bf16 %v2690, %v2689
  %v3037 = vpack.c.bf16 %v2692, %v2691
  %v3038 = vpack.c.bf16 %v2694, %v2693
  %v3039 = vpack.c.bf16 %v2696, %v2695
  %v3044 = vrot.slane %v2777, 1
  %v3045 = vrot.slane %v2793, 1
  %v3046 = vsel %vm1962, %v3044, %v3045
  %v3047 = vrot.slane %v2785, 1
  %v3048 = vrot.slane %v2801, 1
  %v3049 = vsel %vm1962, %v3047, %v3048
  %3050 = vrot.lane.b32.xlu0 %v3046, 32
  %v3051 = vpop.permute.xlu0 %3050
  %3052 = vrot.lane.b32.xlu0 %v3049, 32
  %v3053 = vpop.permute.xlu0 %3052
  %v3056 = vrot.slane %v2777, 2
  %v3057 = vrot.slane %v2793, 2
  %v3058 = vsel %vm2017, %v3056, %v3057
  %v3059 = vrot.slane %v2785, 2
  %v3060 = vrot.slane %v2801, 2
  %v3061 = vsel %vm2017, %v3059, %v3060
  %3062 = vrot.lane.b32.xlu0 %v3058, 64
  %v3063 = vpop.permute.xlu0 %3062
  %3064 = vrot.lane.b32.xlu0 %v3061, 64
  %v3065 = vpop.permute.xlu0 %3064
  %v3068 = vsel %vm115, %v2777, %v3051
  %v3069 = vsel %vm115, %v2785, %v3053
  %v3070 = vsel %vm663, %v3068, %v3063
  %v3071 = vsel %vm663, %v3069, %v3065
  %v3072 = vpack.c.bf16 %v3013, %v3012
  %v3073 = vpack.c.bf16 %v3015, %v3014
  %v3074 = vpack.c.bf16 %v3017, %v3016
  %v3075 = vpack.c.bf16 %v3070, %v3018
  %v3076 = vpack.c.bf16 %v3020, %v3019
  %v3077 = vpack.c.bf16 %v3022, %v3021
  %v3078 = vpack.c.bf16 %v3024, %v3023
  %v3079 = vpack.c.bf16 %v3071, %v3025
  %v3080 = vpack.c.bf16 %v2698, %v2697
  %v3081 = vpack.c.bf16 %v2700, %v2699
  %v3082 = vpack.c.bf16 %v2702, %v2701
  %v3083 = vpack.c.bf16 %v2704, %v2703
  %v3084 = vpack.c.bf16 %v2706, %v2705
  %v3085 = vpack.c.bf16 %v2708, %v2707
  %v3087 = vsel %vm734, %v3072, 0
  %v3090 = vsel %vm734, %v3073, 0
  %v3093 = vsel %vm734, %v3074, 0
  %v3096 = vsel %vm734, %v3075, 0
  %v3099 = vsel %vm734, %v3076, 0
  %v3102 = vsel %vm734, %v3077, 0
  %v3105 = vsel %vm734, %v3078, 0
  %v3108 = vsel %vm734, %v3079, 0
  %3110 = vmatprep.subr.bf16.mxu0 0
  %3111 = vmatpush1.bf16.msra.mxu0 0
  %3112 = vmatprep.subr.bf16.mxu0 0
  %3113 = vmatpush1.bf16.msra.mxu0 0
  %3114 = vmatprep.subr.bf16.mxu0 0
  %3115 = vmatpush1.bf16.msra.mxu0 %v3085
  %3116 = vmatprep.subr.bf16.mxu0 0
  %3117 = vmatpush1.bf16.msra.mxu0 %v3084
  %3118 = vmatprep.subr.bf16.mxu0 0
  %3119 = vmatpush1.bf16.msra.mxu0 %v3083
  %3120 = vmatprep.subr.bf16.mxu0 0
  %3121 = vmatpush1.bf16.msra.mxu0 %v3082
  %3122 = vmatprep.subr.bf16.mxu0 0
  %3123 = vmatpush1.bf16.msra.mxu0 %v3081
  %3124 = vmatprep.subr.bf16.mxu0 0
  %3125 = vmatpush1.bf16.msra.mxu0 %v3080
  %3126 = vmatprep.subr.bf16.mxu0 0
  %3127 = vmatpush2.bf16.msra.mxu0 0
  %3128 = vmatprep.subr.bf16.mxu0 0
  %3129 = vmatpush2.bf16.msra.mxu0 0
  %3130 = vmatprep.subr.bf16.mxu0 0
  %3131 = vmatpush2.bf16.msra.mxu0 0
  %3132 = vmatprep.subr.bf16.mxu0 0
  %3133 = vmatpush2.bf16.msra.mxu0 0
  %3134 = vmatprep.subr.bf16.mxu0 0
  %3135 = vmatpush2.bf16.msra.mxu0 0
  %3136 = vmatprep.subr.bf16.mxu0 0
  %3137 = vmatpush2.bf16.msra.mxu0 0
  %3138 = vmatprep.subr.bf16.mxu0 0
  %3139 = vmatpush2.bf16.msra.mxu0 0
  %3140 = vmatprep.subr.bf16.mxu0 0
  %3141 = vmatpush2.bf16.msra.mxu0 0
  %3142 = vmatprep.mubr.bf16.mxu0 0
  %3143 = vmatmul.mubr.bf16.gmra.mxu0 %v3087
  %v3144 = vpop.f32.mrf.mxu0
  %v3145 = vadd.f32 0.0, %v3144
  %v3146 = vpop.f32.mrf.mxu0
  %v3147 = vpop.f32.mrf.mxu0
  %v3148 = vadd.f32 0.0, %v3147
  %v3149 = vpop.f32.mrf.mxu0
  %3150 = vmatprep.mubr.bf16.mxu0 0
  %3151 = vmatmul.mubr.bf16.gmra.mxu0 %v3090
  %v3152 = vpop.f32.mrf.mxu0
  %v3153 = vadd.f32 0.0, %v3152
  %v3154 = vpop.f32.mrf.mxu0
  %v3155 = vpop.f32.mrf.mxu0
  %v3156 = vadd.f32 0.0, %v3155
  %v3157 = vpop.f32.mrf.mxu0
  %3158 = vmatprep.mubr.bf16.mxu0 0
  %3159 = vmatmul.mubr.bf16.gmra.mxu0 %v3093
  %v3160 = vpop.f32.mrf.mxu0
  %v3161 = vadd.f32 0.0, %v3160
  %v3162 = vpop.f32.mrf.mxu0
  %v3163 = vpop.f32.mrf.mxu0
  %v3164 = vadd.f32 0.0, %v3163
  %v3165 = vpop.f32.mrf.mxu0
  %3166 = vmatprep.mubr.bf16.mxu0 0
  %3167 = vmatmul.mubr.bf16.gmra.mxu0 %v3096
  %v3168 = vpop.f32.mrf.mxu0
  %v3169 = vadd.f32 0.0, %v3168
  %v3170 = vpop.f32.mrf.mxu0
  %v3171 = vpop.f32.mrf.mxu0
  %v3172 = vadd.f32 0.0, %v3171
  %v3173 = vpop.f32.mrf.mxu0
  %3174 = vmatprep.mubr.bf16.mxu0 0
  %3175 = vmatmul.mubr.bf16.gmra.mxu0 %v3099
  %v3176 = vpop.f32.mrf.mxu0
  %v3177 = vadd.f32 0.0, %v3176
  %v3178 = vpop.f32.mrf.mxu0
  %v3179 = vpop.f32.mrf.mxu0
  %v3180 = vadd.f32 0.0, %v3179
  %v3181 = vpop.f32.mrf.mxu0
  %3182 = vmatprep.mubr.bf16.mxu0 0
  %3183 = vmatmul.mubr.bf16.gmra.mxu0 %v3102
  %v3184 = vpop.f32.mrf.mxu0
  %v3185 = vadd.f32 0.0, %v3184
  %v3186 = vpop.f32.mrf.mxu0
  %v3187 = vpop.f32.mrf.mxu0
  %v3188 = vadd.f32 0.0, %v3187
  %v3189 = vpop.f32.mrf.mxu0
  %3190 = vmatprep.mubr.bf16.mxu0 0
  %3191 = vmatmul.mubr.bf16.gmra.mxu0 %v3105
  %v3192 = vpop.f32.mrf.mxu0
  %v3193 = vadd.f32 0.0, %v3192
  %v3194 = vpop.f32.mrf.mxu0
  %v3195 = vpop.f32.mrf.mxu0
  %v3196 = vadd.f32 0.0, %v3195
  %v3197 = vpop.f32.mrf.mxu0
  %3198 = vmatprep.mubr.bf16.mxu0 0
  %3199 = vmatmul.mubr.bf16.gmra.mxu0 %v3108
  %v3200 = vpop.f32.mrf.mxu0
  %v3201 = vadd.f32 0.0, %v3200
  %v3202 = vpop.f32.mrf.mxu0
  %v3203 = vpop.f32.mrf.mxu0
  %v3204 = vadd.f32 0.0, %v3203
  %v3205 = vpop.f32.mrf.mxu0
  %3206 = vdwg.mxu0
  %v3208 = vsel %vm734, %v3026, 0
  %v3211 = vsel %vm734, %v3027, 0
  %v3214 = vsel %vm734, %v3028, 0
  %v3217 = vsel %vm734, %v3029, 0
  %v3220 = vsel %vm734, %v3030, 0
  %v3223 = vsel %vm734, %v3031, 0
  %v3226 = vsel %vm734, %v3032, 0
  %v3229 = vsel %vm734, %v3033, 0
  %3231 = vmatprep.subr.bf16.mxu0 0
  %3232 = vmatpush1.bf16.msra.mxu0 0
  %3233 = vmatprep.subr.bf16.mxu0 0
  %3234 = vmatpush1.bf16.msra.mxu0 0
  %3235 = vmatprep.subr.bf16.mxu0 0
  %3236 = vmatpush1.bf16.msra.mxu0 %v3039
  %3237 = vmatprep.subr.bf16.mxu0 0
  %3238 = vmatpush1.bf16.msra.mxu0 %v3038
  %3239 = vmatprep.subr.bf16.mxu0 0
  %3240 = vmatpush1.bf16.msra.mxu0 %v3037
  %3241 = vmatprep.subr.bf16.mxu0 0
  %3242 = vmatpush1.bf16.msra.mxu0 %v3036
  %3243 = vmatprep.subr.bf16.mxu0 0
  %3244 = vmatpush1.bf16.msra.mxu0 %v3035
  %3245 = vmatprep.subr.bf16.mxu0 0
  %3246 = vmatpush1.bf16.msra.mxu0 %v3034
  %3247 = vmatprep.subr.bf16.mxu0 0
  %3248 = vmatpush2.bf16.msra.mxu0 0
  %3249 = vmatprep.subr.bf16.mxu0 0
  %3250 = vmatpush2.bf16.msra.mxu0 0
  %3251 = vmatprep.subr.bf16.mxu0 0
  %3252 = vmatpush2.bf16.msra.mxu0 0
  %3253 = vmatprep.subr.bf16.mxu0 0
  %3254 = vmatpush2.bf16.msra.mxu0 0
  %3255 = vmatprep.subr.bf16.mxu0 0
  %3256 = vmatpush2.bf16.msra.mxu0 0
  %3257 = vmatprep.subr.bf16.mxu0 0
  %3258 = vmatpush2.bf16.msra.mxu0 0
  %3259 = vmatprep.subr.bf16.mxu0 0
  %3260 = vmatpush2.bf16.msra.mxu0 0
  %3261 = vmatprep.subr.bf16.mxu0 0
  %3262 = vmatpush2.bf16.msra.mxu0 0
  %3263 = vmatprep.mubr.bf16.mxu0 0
  %3264 = vmatmul.mubr.bf16.gmra.mxu0 %v3208
  %v3265 = vpop.f32.mrf.mxu0
  %v3266 = vadd.f32 %v3145, %v3265
  %v3267 = vpop.f32.mrf.mxu0
  %v3268 = vpop.f32.mrf.mxu0
  %v3269 = vadd.f32 %v3148, %v3268
  %v3270 = vpop.f32.mrf.mxu0
  %3271 = vmatprep.mubr.bf16.mxu0 0
  %3272 = vmatmul.mubr.bf16.gmra.mxu0 %v3211
  %v3273 = vpop.f32.mrf.mxu0
  %v3274 = vadd.f32 %v3153, %v3273
  %v3275 = vpop.f32.mrf.mxu0
  %v3276 = vpop.f32.mrf.mxu0
  %v3277 = vadd.f32 %v3156, %v3276
  %v3278 = vpop.f32.mrf.mxu0
  %3279 = vmatprep.mubr.bf16.mxu0 0
  %3280 = vmatmul.mubr.bf16.gmra.mxu0 %v3214
  %v3281 = vpop.f32.mrf.mxu0
  %v3282 = vadd.f32 %v3161, %v3281
  %v3283 = vpop.f32.mrf.mxu0
  %v3284 = vpop.f32.mrf.mxu0
  %v3285 = vadd.f32 %v3164, %v3284
  %v3286 = vpop.f32.mrf.mxu0
  %3287 = vmatprep.mubr.bf16.mxu0 0
  %3288 = vmatmul.mubr.bf16.gmra.mxu0 %v3217
  %v3289 = vpop.f32.mrf.mxu0
  %v3290 = vadd.f32 %v3169, %v3289
  %v3291 = vpop.f32.mrf.mxu0
  %v3292 = vpop.f32.mrf.mxu0
  %v3293 = vadd.f32 %v3172, %v3292
  %v3294 = vpop.f32.mrf.mxu0
  %3295 = vmatprep.mubr.bf16.mxu0 0
  %3296 = vmatmul.mubr.bf16.gmra.mxu0 %v3220
  %v3297 = vpop.f32.mrf.mxu0
  %v3298 = vadd.f32 %v3177, %v3297
  %v3299 = vpop.f32.mrf.mxu0
  %v3300 = vpop.f32.mrf.mxu0
  %v3301 = vadd.f32 %v3180, %v3300
  %v3302 = vpop.f32.mrf.mxu0
  %3303 = vmatprep.mubr.bf16.mxu0 0
  %3304 = vmatmul.mubr.bf16.gmra.mxu0 %v3223
  %v3305 = vpop.f32.mrf.mxu0
  %v3306 = vadd.f32 %v3185, %v3305
  %v3307 = vpop.f32.mrf.mxu0
  %v3308 = vpop.f32.mrf.mxu0
  %v3309 = vadd.f32 %v3188, %v3308
  %v3310 = vpop.f32.mrf.mxu0
  %3311 = vmatprep.mubr.bf16.mxu0 0
  %3312 = vmatmul.mubr.bf16.gmra.mxu0 %v3226
  %v3313 = vpop.f32.mrf.mxu0
  %v3314 = vadd.f32 %v3193, %v3313
  %v3315 = vpop.f32.mrf.mxu0
  %v3316 = vpop.f32.mrf.mxu0
  %v3317 = vadd.f32 %v3196, %v3316
  %v3318 = vpop.f32.mrf.mxu0
  %3319 = vmatprep.mubr.bf16.mxu0 0
  %3320 = vmatmul.mubr.bf16.gmra.mxu0 %v3229
  %v3321 = vpop.f32.mrf.mxu0
  %v3322 = vadd.f32 %v3201, %v3321
  %v3323 = vpop.f32.mrf.mxu0
  %v3324 = vpop.f32.mrf.mxu0
  %v3325 = vadd.f32 %v3204, %v3324
  %v3326 = vpop.f32.mrf.mxu0
  %3327 = vdwg.mxu0
  %v3328 = vpack.c.bf16 %v2081, %v3070
  %v3329 = vpack.c.bf16 %v2081, %v3071
  %v3330 = vpack.c.bf16 %v2710, %v2709
  %v3331 = vpack.c.bf16 %v2712, %v2711
  %v3332 = vpack.c.bf16 %v2714, %v2713
  %v3333 = vpack.c.bf16 %v2716, %v2715
  %v3334 = vpack.c.bf16 %v2718, %v2717
  %v3335 = vpack.c.bf16 %v2720, %v2719
  %v3337 = vsel %vm734, %v3328, 0
  %v3340 = vsel %vm734, %v3329, 0
  %3342 = vmatprep.subr.bf16.mxu0 0
  %3343 = vmatpush1.bf16.msra.mxu0 0
  %3344 = vmatprep.subr.bf16.mxu0 0
  %3345 = vmatpush1.bf16.msra.mxu0 0
  %3346 = vmatprep.subr.bf16.mxu0 0
  %3347 = vmatpush1.bf16.msra.mxu0 %v3335
  %3348 = vmatprep.subr.bf16.mxu0 0
  %3349 = vmatpush1.bf16.msra.mxu0 %v3334
  %3350 = vmatprep.subr.bf16.mxu0 0
  %3351 = vmatpush1.bf16.msra.mxu0 %v3333
  %3352 = vmatprep.subr.bf16.mxu0 0
  %3353 = vmatpush1.bf16.msra.mxu0 %v3332
  %3354 = vmatprep.subr.bf16.mxu0 0
  %3355 = vmatpush1.bf16.msra.mxu0 %v3331
  %3356 = vmatprep.subr.bf16.mxu0 0
  %3357 = vmatpush1.bf16.msra.mxu0 %v3330
  %3358 = vmatprep.subr.bf16.mxu0 0
  %3359 = vmatpush2.bf16.msra.mxu0 0
  %3360 = vmatprep.subr.bf16.mxu0 0
  %3361 = vmatpush2.bf16.msra.mxu0 0
  %3362 = vmatprep.subr.bf16.mxu0 0
  %3363 = vmatpush2.bf16.msra.mxu0 0
  %3364 = vmatprep.subr.bf16.mxu0 0
  %3365 = vmatpush2.bf16.msra.mxu0 0
  %3366 = vmatprep.subr.bf16.mxu0 0
  %3367 = vmatpush2.bf16.msra.mxu0 0
  %3368 = vmatprep.subr.bf16.mxu0 0
  %3369 = vmatpush2.bf16.msra.mxu0 0
  %3370 = vmatprep.subr.bf16.mxu0 0
  %3371 = vmatpush2.bf16.msra.mxu0 0
  %3372 = vmatprep.subr.bf16.mxu0 0
  %3373 = vmatpush2.bf16.msra.mxu0 0
  %3374 = vmatprep.mubr.bf16.mxu0 0
  %3375 = vmatmul.mubr.bf16.gmra.mxu0 %v3211
  %v3376 = vpop.f32.mrf.mxu0
  %v3377 = vadd.f32 0.0, %v3376
  %v3378 = vpop.f32.mrf.mxu0
  %v3379 = vpop.f32.mrf.mxu0
  %v3380 = vadd.f32 0.0, %v3379
  %v3381 = vpop.f32.mrf.mxu0
  %3382 = vmatprep.mubr.bf16.mxu0 0
  %3383 = vmatmul.mubr.bf16.gmra.mxu0 %v3214
  %v3384 = vpop.f32.mrf.mxu0
  %v3385 = vadd.f32 0.0, %v3384
  %v3386 = vpop.f32.mrf.mxu0
  %v3387 = vpop.f32.mrf.mxu0
  %v3388 = vadd.f32 0.0, %v3387
  %v3389 = vpop.f32.mrf.mxu0
  %3390 = vmatprep.mubr.bf16.mxu0 0
  %3391 = vmatmul.mubr.bf16.gmra.mxu0 %v3217
  %v3392 = vpop.f32.mrf.mxu0
  %v3393 = vadd.f32 0.0, %v3392
  %v3394 = vpop.f32.mrf.mxu0
  %v3395 = vpop.f32.mrf.mxu0
  %v3396 = vadd.f32 0.0, %v3395
  %v3397 = vpop.f32.mrf.mxu0
  %3398 = vmatprep.mubr.bf16.mxu0 0
  %3399 = vmatmul.mubr.bf16.gmra.mxu0 %v3337
  %v3400 = vpop.f32.mrf.mxu0
  %v3401 = vadd.f32 0.0, %v3400
  %v3402 = vpop.f32.mrf.mxu0
  %v3403 = vpop.f32.mrf.mxu0
  %v3404 = vadd.f32 0.0, %v3403
  %v3405 = vpop.f32.mrf.mxu0
  %3406 = vmatprep.mubr.bf16.mxu0 0
  %3407 = vmatmul.mubr.bf16.gmra.mxu0 %v3223
  %v3408 = vpop.f32.mrf.mxu0
  %v3409 = vadd.f32 0.0, %v3408
  %v3410 = vpop.f32.mrf.mxu0
  %v3411 = vpop.f32.mrf.mxu0
  %v3412 = vadd.f32 0.0, %v3411
  %v3413 = vpop.f32.mrf.mxu0
  %3414 = vmatprep.mubr.bf16.mxu0 0
  %3415 = vmatmul.mubr.bf16.gmra.mxu0 %v3226
  %v3416 = vpop.f32.mrf.mxu0
  %v3417 = vadd.f32 0.0, %v3416
  %v3418 = vpop.f32.mrf.mxu0
  %v3419 = vpop.f32.mrf.mxu0
  %v3420 = vadd.f32 0.0, %v3419
  %v3421 = vpop.f32.mrf.mxu0
  %3422 = vmatprep.mubr.bf16.mxu0 0
  %3423 = vmatmul.mubr.bf16.gmra.mxu0 %v3229
  %v3424 = vpop.f32.mrf.mxu0
  %v3425 = vadd.f32 0.0, %v3424
  %v3426 = vpop.f32.mrf.mxu0
  %v3427 = vpop.f32.mrf.mxu0
  %v3428 = vadd.f32 0.0, %v3427
  %v3429 = vpop.f32.mrf.mxu0
  %3430 = vmatprep.mubr.bf16.mxu0 0
  %3431 = vmatmul.mubr.bf16.gmra.mxu0 %v3340
  %v3432 = vpop.f32.mrf.mxu0
  %v3433 = vadd.f32 0.0, %v3432
  %v3434 = vpop.f32.mrf.mxu0
  %v3435 = vpop.f32.mrf.mxu0
  %v3436 = vadd.f32 0.0, %v3435
  %v3437 = vpop.f32.mrf.mxu0
  %3438 = vdwg.mxu0
  %v3439 = vadd.f32 %v3266, %v3377
  %v3440 = vadd.f32 %v3269, %v3380
  %v3441 = vadd.f32 %v3274, %v3385
  %v3442 = vadd.f32 %v3277, %v3388
  %v3443 = vadd.f32 %v3282, %v3393
  %v3444 = vadd.f32 %v3285, %v3396
  %v3445 = vadd.f32 %v3290, %v3401
  %v3446 = vadd.f32 %v3293, %v3404
  %v3447 = vadd.f32 %v3298, %v3409
  %v3448 = vadd.f32 %v3301, %v3412
  %v3449 = vadd.f32 %v3306, %v3417
  %v3450 = vadd.f32 %v3309, %v3420
  %v3451 = vadd.f32 %v3314, %v3425
  %v3452 = vadd.f32 %v3317, %v3428
  %v3453 = vadd.f32 %v3322, %v3433
  %v3454 = vadd.f32 %v3325, %v3436
  %v3456 = vlaneseq
  %v3457 = vshrl.u32 %v3456, 7
  %v3458 = vsub.s32 0, %v3457
  %v3459 = vrot.slane %v2721, %v3458
  %v3461 = vadd.f32 %v3439, %v3459
  %v3462 = vadd.f32 %v3440, %v3459
  %v3463 = vadd.f32 %v3441, %v3459
  %v3464 = vadd.f32 %v3442, %v3459
  %v3465 = vadd.f32 %v3443, %v3459
  %v3466 = vadd.f32 %v3444, %v3459
  %v3467 = vadd.f32 %v3445, %v3459
  %v3468 = vadd.f32 %v3446, %v3459
  %v3469 = vadd.f32 %v3447, %v3459
  %v3470 = vadd.f32 %v3448, %v3459
  %v3471 = vadd.f32 %v3449, %v3459
  %v3472 = vadd.f32 %v3450, %v3459
  %v3473 = vadd.f32 %v3451, %v3459
  %v3474 = vadd.f32 %v3452, %v3459
  %v3475 = vadd.f32 %v3453, %v3459
  %v3476 = vadd.f32 %v3454, %v3459
  %vm3477 = vcmp.ge.f32.partialorder %v3461, 0.0
  %vm3478 = vcmp.ge.f32.partialorder %v3462, 0.0
  %vm3479 = vcmp.ge.f32.partialorder %v3463, 0.0
  %vm3480 = vcmp.ge.f32.partialorder %v3464, 0.0
  %vm3481 = vcmp.ge.f32.partialorder %v3465, 0.0
  %vm3482 = vcmp.ge.f32.partialorder %v3466, 0.0
  %vm3483 = vcmp.ge.f32.partialorder %v3467, 0.0
  %vm3484 = vcmp.ge.f32.partialorder %v3468, 0.0
  %vm3485 = vcmp.ge.f32.partialorder %v3469, 0.0
  %vm3486 = vcmp.ge.f32.partialorder %v3470, 0.0
  %vm3487 = vcmp.ge.f32.partialorder %v3471, 0.0
  %vm3488 = vcmp.ge.f32.partialorder %v3472, 0.0
  %vm3489 = vcmp.ge.f32.partialorder %v3473, 0.0
  %vm3490 = vcmp.ge.f32.partialorder %v3474, 0.0
  %vm3491 = vcmp.ge.f32.partialorder %v3475, 0.0
  %vm3492 = vcmp.ge.f32.partialorder %v3476, 0.0
  %v3493 = vmul.f32 %v3461, 0.2
  %v3494 = vmul.f32 %v3462, 0.2
  %v3495 = vmul.f32 %v3463, 0.2
  %v3496 = vmul.f32 %v3464, 0.2
  %v3497 = vmul.f32 %v3465, 0.2
  %v3498 = vmul.f32 %v3466, 0.2
  %v3499 = vmul.f32 %v3467, 0.2
  %v3500 = vmul.f32 %v3468, 0.2
  %v3501 = vmul.f32 %v3469, 0.2
  %v3502 = vmul.f32 %v3470, 0.2
  %v3503 = vmul.f32 %v3471, 0.2
  %v3504 = vmul.f32 %v3472, 0.2
  %v3505 = vmul.f32 %v3473, 0.2
  %v3506 = vmul.f32 %v3474, 0.2
  %v3507 = vmul.f32 %v3475, 0.2
  %v3508 = vmul.f32 %v3476, 0.2
  %v3509 = vsel %vm3477, %v3461, %v3493
  %v3510 = vsel %vm3478, %v3462, %v3494
  %v3511 = vsel %vm3479, %v3463, %v3495
  %v3512 = vsel %vm3480, %v3464, %v3496
  %v3513 = vsel %vm3481, %v3465, %v3497
  %v3514 = vsel %vm3482, %v3466, %v3498
  %v3515 = vsel %vm3483, %v3467, %v3499
  %v3516 = vsel %vm3484, %v3468, %v3500
  %v3517 = vsel %vm3485, %v3469, %v3501
  %v3518 = vsel %vm3486, %v3470, %v3502
  %v3519 = vsel %vm3487, %v3471, %v3503
  %v3520 = vsel %vm3488, %v3472, %v3504
  %v3521 = vsel %vm3489, %v3473, %v3505
  %v3522 = vsel %vm3490, %v3474, %v3506
  %v3523 = vsel %vm3491, %v3475, %v3507
  %v3524 = vsel %vm3492, %v3476, %v3508
  %v3525 = vmul.f32 %v3509, %v3509
  %v3526 = vmul.f32 %v3510, %v3510
  %v3527 = vmul.f32 %v3511, %v3511
  %v3528 = vmul.f32 %v3512, %v3512
  %v3529 = vmul.f32 %v3513, %v3513
  %v3530 = vmul.f32 %v3514, %v3514
  %v3531 = vmul.f32 %v3515, %v3515
  %v3532 = vmul.f32 %v3516, %v3516
  %v3533 = vmul.f32 %v3517, %v3517
  %v3534 = vmul.f32 %v3518, %v3518
  %v3535 = vmul.f32 %v3519, %v3519
  %v3536 = vmul.f32 %v3520, %v3520
  %v3537 = vmul.f32 %v3521, %v3521
  %v3538 = vmul.f32 %v3522, %v3522
  %v3539 = vmul.f32 %v3523, %v3523
  %v3540 = vmul.f32 %v3524, %v3524
  %v3541 = vsel %vm115, %v3525, 0.0
  %3542 = vadd.xlane.f32.xlu0 %v3541
  %v3543 = vpop.xlane.xlu0 %3542
  %v3544 = vsel %vm115, %v3526, 0.0
  %3545 = vadd.xlane.f32.xlu0 %v3544
  %v3546 = vpop.xlane.xlu0 %3545
  %v3547 = vsel %vm115, %v3527, 0.0
  %3548 = vadd.xlane.f32.xlu0 %v3547
  %v3549 = vpop.xlane.xlu0 %3548
  %v3550 = vsel %vm115, %v3528, 0.0
  %3551 = vadd.xlane.f32.xlu0 %v3550
  %v3552 = vpop.xlane.xlu0 %3551
  %v3553 = vsel %vm115, %v3529, 0.0
  %3554 = vadd.xlane.f32.xlu0 %v3553
  %v3555 = vpop.xlane.xlu0 %3554
  %v3556 = vsel %vm115, %v3530, 0.0
  %3557 = vadd.xlane.f32.xlu0 %v3556
  %v3558 = vpop.xlane.xlu0 %3557
  %v3559 = vsel %vm115, %v3531, 0.0
  %3560 = vadd.xlane.f32.xlu0 %v3559
  %v3561 = vpop.xlane.xlu0 %3560
  %v3562 = vsel %vm115, %v3532, 0.0
  %3563 = vadd.xlane.f32.xlu0 %v3562
  %v3564 = vpop.xlane.xlu0 %3563
  %v3565 = vsel %vm115, %v3533, 0.0
  %3566 = vadd.xlane.f32.xlu0 %v3565
  %v3567 = vpop.xlane.xlu0 %3566
  %v3568 = vsel %vm115, %v3534, 0.0
  %3569 = vadd.xlane.f32.xlu0 %v3568
  %v3570 = vpop.xlane.xlu0 %3569
  %v3571 = vsel %vm115, %v3535, 0.0
  %3572 = vadd.xlane.f32.xlu0 %v3571
  %v3573 = vpop.xlane.xlu0 %3572
  %v3574 = vsel %vm115, %v3536, 0.0
  %3575 = vadd.xlane.f32.xlu0 %v3574
  %v3576 = vpop.xlane.xlu0 %3575
  %v3577 = vsel %vm115, %v3537, 0.0
  %3578 = vadd.xlane.f32.xlu0 %v3577
  %v3579 = vpop.xlane.xlu0 %3578
  %v3580 = vsel %vm115, %v3538, 0.0
  %3581 = vadd.xlane.f32.xlu0 %v3580
  %v3582 = vpop.xlane.xlu0 %3581
  %v3583 = vsel %vm115, %v3539, 0.0
  %3584 = vadd.xlane.f32.xlu0 %v3583
  %v3585 = vpop.xlane.xlu0 %3584
  %v3586 = vsel %vm115, %v3540, 0.0
  %3587 = vadd.xlane.f32.xlu0 %v3586
  %v3588 = vpop.xlane.xlu0 %3587
  %v3589 = vmul.f32 %v3543, %v477
  %v3590 = vmul.f32 %v3546, %v477
  %v3591 = vmul.f32 %v3549, %v477
  %v3592 = vmul.f32 %v3552, %v477
  %v3593 = vmul.f32 %v3555, %v477
  %v3594 = vmul.f32 %v3558, %v477
  %v3595 = vmul.f32 %v3561, %v477
  %v3596 = vmul.f32 %v3564, %v477
  %v3597 = vmul.f32 %v3567, %v477
  %v3598 = vmul.f32 %v3570, %v477
  %v3599 = vmul.f32 %v3573, %v477
  %v3600 = vmul.f32 %v3576, %v477
  %v3601 = vmul.f32 %v3579, %v477
  %v3602 = vmul.f32 %v3582, %v477
  %v3603 = vmul.f32 %v3585, %v477
  %v3604 = vmul.f32 %v3588, %v477
  %v3605 = vadd.f32 %v3589, 1e-08
  %v3606 = vadd.f32 %v3590, 1e-08
  %v3607 = vadd.f32 %v3591, 1e-08
  %v3608 = vadd.f32 %v3592, 1e-08
  %v3609 = vadd.f32 %v3593, 1e-08
  %v3610 = vadd.f32 %v3594, 1e-08
  %v3611 = vadd.f32 %v3595, 1e-08
  %v3612 = vadd.f32 %v3596, 1e-08
  %v3613 = vadd.f32 %v3597, 1e-08
  %v3614 = vadd.f32 %v3598, 1e-08
  %v3615 = vadd.f32 %v3599, 1e-08
  %v3616 = vadd.f32 %v3600, 1e-08
  %v3617 = vadd.f32 %v3601, 1e-08
  %v3618 = vadd.f32 %v3602, 1e-08
  %v3619 = vadd.f32 %v3603, 1e-08
  %v3620 = vadd.f32 %v3604, 1e-08
  %v3621 = vrsqrt.pop %v3605
  %v3622 = vrsqrt.pop %v3606
  %v3623 = vrsqrt.pop %v3607
  %v3624 = vrsqrt.pop %v3608
  %v3625 = vrsqrt.pop %v3609
  %v3626 = vrsqrt.pop %v3610
  %v3627 = vrsqrt.pop %v3611
  %v3628 = vrsqrt.pop %v3612
  %v3629 = vrsqrt.pop %v3613
  %v3630 = vrsqrt.pop %v3614
  %v3631 = vrsqrt.pop %v3615
  %v3632 = vrsqrt.pop %v3616
  %v3633 = vrsqrt.pop %v3617
  %v3634 = vrsqrt.pop %v3618
  %v3635 = vrsqrt.pop %v3619
  %v3636 = vrsqrt.pop %v3620
  %v3637 = vmul.f32 %v3509, %v3621
  %v3638 = vmul.f32 %v3510, %v3622
  %v3639 = vmul.f32 %v3511, %v3623
  %v3640 = vmul.f32 %v3512, %v3624
  %v3641 = vmul.f32 %v3513, %v3625
  %v3642 = vmul.f32 %v3514, %v3626
  %v3643 = vmul.f32 %v3515, %v3627
  %v3644 = vmul.f32 %v3516, %v3628
  %v3645 = vmul.f32 %v3517, %v3629
  %v3646 = vmul.f32 %v3518, %v3630
  %v3647 = vmul.f32 %v3519, %v3631
  %v3648 = vmul.f32 %v3520, %v3632
  %v3649 = vmul.f32 %v3521, %v3633
  %v3650 = vmul.f32 %v3522, %v3634
  %v3651 = vmul.f32 %v3523, %v3635
  %v3652 = vmul.f32 %v3524, %v3636
  %v3669 = vcombine.high %v3637, %v3637
  %v3671 = vunpack.c.l.s4 1966171168
  %v3672 = vunpack.c.0.s8 %v3671
  %v3673 = vlaneseq
  %v3674 = vshrl.u32 %v3673, 7
  %v3675 = vsub.s32 %v3672, %v3674
  %v3676 = vrot.slane %v3637, %v3675
  %v3678 = vunpack.c.l.s4 1966171168
  %v3679 = vunpack.c.0.s8 %v3678
  %v3680 = vlaneseq
  %v3681 = vshrl.u32 %v3680, 7
  %v3682 = vsub.s32 %v3679, %v3681
  %v3683 = vrot.slane %v3669, %v3682
  %v3684 = vcombine.high %v3676, %v3676
  %v3685 = vcombine.high %v3683, %v3683
  %v3687 = vunpack.c.l.s4 1966171168
  %v3688 = vunpack.c.0.s8 %v3687
  %v3689 = vlaneseq
  %v3690 = vshrl.u32 %v3689, 7
  %v3691 = vsub.s32 %v3688, %v3690
  %v3692 = vrot.slane %v3676, %v3691
  %v3694 = vunpack.c.l.s4 1966171168
  %v3695 = vunpack.c.0.s8 %v3694
  %v3696 = vlaneseq
  %v3697 = vshrl.u32 %v3696, 7
  %v3698 = vsub.s32 %v3695, %v3697
  %v3699 = vrot.slane %v3683, %v3698
  %v3701 = vunpack.c.l.s4 1966171168
  %v3702 = vunpack.c.0.s8 %v3701
  %v3703 = vlaneseq
  %v3704 = vshrl.u32 %v3703, 7
  %v3705 = vsub.s32 %v3702, %v3704
  %v3706 = vrot.slane %v3684, %v3705
  %v3708 = vunpack.c.l.s4 1966171168
  %v3709 = vunpack.c.0.s8 %v3708
  %v3710 = vlaneseq
  %v3711 = vshrl.u32 %v3710, 7
  %v3712 = vsub.s32 %v3709, %v3711
  %v3713 = vrot.slane %v3685, %v3712
  %v3714 = vcombine.high %v3692, %v3692
  %v3715 = vcombine.high %v3699, %v3699
  %v3716 = vcombine.high %v3706, %v3706
  %v3717 = vcombine.high %v3713, %v3713
  %v3718 = vcombine.high %v3638, %v3638
  %v3720 = vunpack.c.l.s4 1966171168
  %v3721 = vunpack.c.0.s8 %v3720
  %v3722 = vlaneseq
  %v3723 = vshrl.u32 %v3722, 7
  %v3724 = vsub.s32 %v3721, %v3723
  %v3725 = vrot.slane %v3638, %v3724
  %v3727 = vunpack.c.l.s4 1966171168
  %v3728 = vunpack.c.0.s8 %v3727
  %v3729 = vlaneseq
  %v3730 = vshrl.u32 %v3729, 7
  %v3731 = vsub.s32 %v3728, %v3730
  %v3732 = vrot.slane %v3718, %v3731
  %v3733 = vcombine.high %v3725, %v3725
  %v3734 = vcombine.high %v3732, %v3732
  %v3736 = vunpack.c.l.s4 1966171168
  %v3737 = vunpack.c.0.s8 %v3736
  %v3738 = vlaneseq
  %v3739 = vshrl.u32 %v3738, 7
  %v3740 = vsub.s32 %v3737, %v3739
  %v3741 = vrot.slane %v3725, %v3740
  %v3743 = vunpack.c.l.s4 1966171168
  %v3744 = vunpack.c.0.s8 %v3743
  %v3745 = vlaneseq
  %v3746 = vshrl.u32 %v3745, 7
  %v3747 = vsub.s32 %v3744, %v3746
  %v3748 = vrot.slane %v3732, %v3747
  %v3750 = vunpack.c.l.s4 1966171168
  %v3751 = vunpack.c.0.s8 %v3750
  %v3752 = vlaneseq
  %v3753 = vshrl.u32 %v3752, 7
  %v3754 = vsub.s32 %v3751, %v3753
  %v3755 = vrot.slane %v3733, %v3754
  %v3757 = vunpack.c.l.s4 1966171168
  %v3758 = vunpack.c.0.s8 %v3757
  %v3759 = vlaneseq
  %v3760 = vshrl.u32 %v3759, 7
  %v3761 = vsub.s32 %v3758, %v3760
  %v3762 = vrot.slane %v3734, %v3761
  %v3763 = vcombine.high %v3741, %v3741
  %v3764 = vcombine.high %v3748, %v3748
  %v3765 = vcombine.high %v3755, %v3755
  %v3766 = vcombine.high %v3762, %v3762
  %v3767 = vcombine.high %v3639, %v3639
  %v3769 = vunpack.c.l.s4 1966171168
  %v3770 = vunpack.c.0.s8 %v3769
  %v3771 = vlaneseq
  %v3772 = vshrl.u32 %v3771, 7
  %v3773 = vsub.s32 %v3770, %v3772
  %v3774 = vrot.slane %v3639, %v3773
  %v3776 = vunpack.c.l.s4 1966171168
  %v3777 = vunpack.c.0.s8 %v3776
  %v3778 = vlaneseq
  %v3779 = vshrl.u32 %v3778, 7
  %v3780 = vsub.s32 %v3777, %v3779
  %v3781 = vrot.slane %v3767, %v3780
  %v3782 = vcombine.high %v3774, %v3774
  %v3783 = vcombine.high %v3781, %v3781
  %v3785 = vunpack.c.l.s4 1966171168
  %v3786 = vunpack.c.0.s8 %v3785
  %v3787 = vlaneseq
  %v3788 = vshrl.u32 %v3787, 7
  %v3789 = vsub.s32 %v3786, %v3788
  %v3790 = vrot.slane %v3774, %v3789
  %v3792 = vunpack.c.l.s4 1966171168
  %v3793 = vunpack.c.0.s8 %v3792
  %v3794 = vlaneseq
  %v3795 = vshrl.u32 %v3794, 7
  %v3796 = vsub.s32 %v3793, %v3795
  %v3797 = vrot.slane %v3781, %v3796
  %v3799 = vunpack.c.l.s4 1966171168
  %v3800 = vunpack.c.0.s8 %v3799
  %v3801 = vlaneseq
  %v3802 = vshrl.u32 %v3801, 7
  %v3803 = vsub.s32 %v3800, %v3802
  %v3804 = vrot.slane %v3782, %v3803
  %v3806 = vunpack.c.l.s4 1966171168
  %v3807 = vunpack.c.0.s8 %v3806
  %v3808 = vlaneseq
  %v3809 = vshrl.u32 %v3808, 7
  %v3810 = vsub.s32 %v3807, %v3809
  %v3811 = vrot.slane %v3783, %v3810
  %v3812 = vcombine.high %v3790, %v3790
  %v3813 = vcombine.high %v3797, %v3797
  %v3814 = vcombine.high %v3804, %v3804
  %v3815 = vcombine.high %v3811, %v3811
  %v3816 = vcombine.high %v3640, %v3640
  %v3818 = vunpack.c.l.s4 1966171168
  %v3819 = vunpack.c.0.s8 %v3818
  %v3820 = vlaneseq
  %v3821 = vshrl.u32 %v3820, 7
  %v3822 = vsub.s32 %v3819, %v3821
  %v3823 = vrot.slane %v3640, %v3822
  %v3825 = vunpack.c.l.s4 1966171168
  %v3826 = vunpack.c.0.s8 %v3825
  %v3827 = vlaneseq
  %v3828 = vshrl.u32 %v3827, 7
  %v3829 = vsub.s32 %v3826, %v3828
  %v3830 = vrot.slane %v3816, %v3829
  %v3831 = vcombine.high %v3823, %v3823
  %v3832 = vcombine.high %v3830, %v3830
  %v3834 = vunpack.c.l.s4 1966171168
  %v3835 = vunpack.c.0.s8 %v3834
  %v3836 = vlaneseq
  %v3837 = vshrl.u32 %v3836, 7
  %v3838 = vsub.s32 %v3835, %v3837
  %v3839 = vrot.slane %v3823, %v3838
  %v3841 = vunpack.c.l.s4 1966171168
  %v3842 = vunpack.c.0.s8 %v3841
  %v3843 = vlaneseq
  %v3844 = vshrl.u32 %v3843, 7
  %v3845 = vsub.s32 %v3842, %v3844
  %v3846 = vrot.slane %v3830, %v3845
  %v3848 = vunpack.c.l.s4 1966171168
  %v3849 = vunpack.c.0.s8 %v3848
  %v3850 = vlaneseq
  %v3851 = vshrl.u32 %v3850, 7
  %v3852 = vsub.s32 %v3849, %v3851
  %v3853 = vrot.slane %v3831, %v3852
  %v3855 = vunpack.c.l.s4 1966171168
  %v3856 = vunpack.c.0.s8 %v3855
  %v3857 = vlaneseq
  %v3858 = vshrl.u32 %v3857, 7
  %v3859 = vsub.s32 %v3856, %v3858
  %v3860 = vrot.slane %v3832, %v3859
  %v3861 = vcombine.high %v3839, %v3839
  %v3862 = vcombine.high %v3846, %v3846
  %v3863 = vcombine.high %v3853, %v3853
  %v3864 = vcombine.high %v3860, %v3860
  %v3865 = vcombine.high %v3641, %v3641
  %v3867 = vunpack.c.l.s4 1966171168
  %v3868 = vunpack.c.0.s8 %v3867
  %v3869 = vlaneseq
  %v3870 = vshrl.u32 %v3869, 7
  %v3871 = vsub.s32 %v3868, %v3870
  %v3872 = vrot.slane %v3641, %v3871
  %v3874 = vunpack.c.l.s4 1966171168
  %v3875 = vunpack.c.0.s8 %v3874
  %v3876 = vlaneseq
  %v3877 = vshrl.u32 %v3876, 7
  %v3878 = vsub.s32 %v3875, %v3877
  %v3879 = vrot.slane %v3865, %v3878
  %v3880 = vcombine.high %v3872, %v3872
  %v3881 = vcombine.high %v3879, %v3879
  %v3883 = vunpack.c.l.s4 1966171168
  %v3884 = vunpack.c.0.s8 %v3883
  %v3885 = vlaneseq
  %v3886 = vshrl.u32 %v3885, 7
  %v3887 = vsub.s32 %v3884, %v3886
  %v3888 = vrot.slane %v3872, %v3887
  %v3890 = vunpack.c.l.s4 1966171168
  %v3891 = vunpack.c.0.s8 %v3890
  %v3892 = vlaneseq
  %v3893 = vshrl.u32 %v3892, 7
  %v3894 = vsub.s32 %v3891, %v3893
  %v3895 = vrot.slane %v3879, %v3894
  %v3897 = vunpack.c.l.s4 1966171168
  %v3898 = vunpack.c.0.s8 %v3897
  %v3899 = vlaneseq
  %v3900 = vshrl.u32 %v3899, 7
  %v3901 = vsub.s32 %v3898, %v3900
  %v3902 = vrot.slane %v3880, %v3901
  %v3904 = vunpack.c.l.s4 1966171168
  %v3905 = vunpack.c.0.s8 %v3904
  %v3906 = vlaneseq
  %v3907 = vshrl.u32 %v3906, 7
  %v3908 = vsub.s32 %v3905, %v3907
  %v3909 = vrot.slane %v3881, %v3908
  %v3910 = vcombine.high %v3888, %v3888
  %v3911 = vcombine.high %v3895, %v3895
  %v3912 = vcombine.high %v3902, %v3902
  %v3913 = vcombine.high %v3909, %v3909
  %v3914 = vcombine.high %v3642, %v3642
  %v3916 = vunpack.c.l.s4 1966171168
  %v3917 = vunpack.c.0.s8 %v3916
  %v3918 = vlaneseq
  %v3919 = vshrl.u32 %v3918, 7
  %v3920 = vsub.s32 %v3917, %v3919
  %v3921 = vrot.slane %v3642, %v3920
  %v3923 = vunpack.c.l.s4 1966171168
  %v3924 = vunpack.c.0.s8 %v3923
  %v3925 = vlaneseq
  %v3926 = vshrl.u32 %v3925, 7
  %v3927 = vsub.s32 %v3924, %v3926
  %v3928 = vrot.slane %v3914, %v3927
  %v3929 = vcombine.high %v3921, %v3921
  %v3930 = vcombine.high %v3928, %v3928
  %v3932 = vunpack.c.l.s4 1966171168
  %v3933 = vunpack.c.0.s8 %v3932
  %v3934 = vlaneseq
  %v3935 = vshrl.u32 %v3934, 7
  %v3936 = vsub.s32 %v3933, %v3935
  %v3937 = vrot.slane %v3921, %v3936
  %v3939 = vunpack.c.l.s4 1966171168
  %v3940 = vunpack.c.0.s8 %v3939
  %v3941 = vlaneseq
  %v3942 = vshrl.u32 %v3941, 7
  %v3943 = vsub.s32 %v3940, %v3942
  %v3944 = vrot.slane %v3928, %v3943
  %v3946 = vunpack.c.l.s4 1966171168
  %v3947 = vunpack.c.0.s8 %v3946
  %v3948 = vlaneseq
  %v3949 = vshrl.u32 %v3948, 7
  %v3950 = vsub.s32 %v3947, %v3949
  %v3951 = vrot.slane %v3929, %v3950
  %v3953 = vunpack.c.l.s4 1966171168
  %v3954 = vunpack.c.0.s8 %v3953
  %v3955 = vlaneseq
  %v3956 = vshrl.u32 %v3955, 7
  %v3957 = vsub.s32 %v3954, %v3956
  %v3958 = vrot.slane %v3930, %v3957
  %v3959 = vcombine.high %v3937, %v3937
  %v3960 = vcombine.high %v3944, %v3944
  %v3961 = vcombine.high %v3951, %v3951
  %v3962 = vcombine.high %v3958, %v3958
  %v3963 = vcombine.high %v3643, %v3643
  %v3965 = vunpack.c.l.s4 1966171168
  %v3966 = vunpack.c.0.s8 %v3965
  %v3967 = vlaneseq
  %v3968 = vshrl.u32 %v3967, 7
  %v3969 = vsub.s32 %v3966, %v3968
  %v3970 = vrot.slane %v3643, %v3969
  %v3972 = vunpack.c.l.s4 1966171168
  %v3973 = vunpack.c.0.s8 %v3972
  %v3974 = vlaneseq
  %v3975 = vshrl.u32 %v3974, 7
  %v3976 = vsub.s32 %v3973, %v3975
  %v3977 = vrot.slane %v3963, %v3976
  %v3978 = vcombine.high %v3970, %v3970
  %v3979 = vcombine.high %v3977, %v3977
  %v3981 = vunpack.c.l.s4 1966171168
  %v3982 = vunpack.c.0.s8 %v3981
  %v3983 = vlaneseq
  %v3984 = vshrl.u32 %v3983, 7
  %v3985 = vsub.s32 %v3982, %v3984
  %v3986 = vrot.slane %v3970, %v3985
  %v3988 = vunpack.c.l.s4 1966171168
  %v3989 = vunpack.c.0.s8 %v3988
  %v3990 = vlaneseq
  %v3991 = vshrl.u32 %v3990, 7
  %v3992 = vsub.s32 %v3989, %v3991
  %v3993 = vrot.slane %v3977, %v3992
  %v3995 = vunpack.c.l.s4 1966171168
  %v3996 = vunpack.c.0.s8 %v3995
  %v3997 = vlaneseq
  %v3998 = vshrl.u32 %v3997, 7
  %v3999 = vsub.s32 %v3996, %v3998
  %v4000 = vrot.slane %v3978, %v3999
  %v4002 = vunpack.c.l.s4 1966171168
  %v4003 = vunpack.c.0.s8 %v4002
  %v4004 = vlaneseq
  %v4005 = vshrl.u32 %v4004, 7
  %v4006 = vsub.s32 %v4003, %v4005
  %v4007 = vrot.slane %v3979, %v4006
  %v4008 = vcombine.high %v3986, %v3986
  %v4009 = vcombine.high %v3993, %v3993
  %v4010 = vcombine.high %v4000, %v4000
  %v4011 = vcombine.high %v4007, %v4007
  %v4012 = vcombine.high %v3644, %v3644
  %v4014 = vunpack.c.l.s4 1966171168
  %v4015 = vunpack.c.0.s8 %v4014
  %v4016 = vlaneseq
  %v4017 = vshrl.u32 %v4016, 7
  %v4018 = vsub.s32 %v4015, %v4017
  %v4019 = vrot.slane %v3644, %v4018
  %v4021 = vunpack.c.l.s4 1966171168
  %v4022 = vunpack.c.0.s8 %v4021
  %v4023 = vlaneseq
  %v4024 = vshrl.u32 %v4023, 7
  %v4025 = vsub.s32 %v4022, %v4024
  %v4026 = vrot.slane %v4012, %v4025
  %v4027 = vcombine.high %v4019, %v4019
  %v4028 = vcombine.high %v4026, %v4026
  %v4030 = vunpack.c.l.s4 1966171168
  %v4031 = vunpack.c.0.s8 %v4030
  %v4032 = vlaneseq
  %v4033 = vshrl.u32 %v4032, 7
  %v4034 = vsub.s32 %v4031, %v4033
  %v4035 = vrot.slane %v4019, %v4034
  %v4037 = vunpack.c.l.s4 1966171168
  %v4038 = vunpack.c.0.s8 %v4037
  %v4039 = vlaneseq
  %v4040 = vshrl.u32 %v4039, 7
  %v4041 = vsub.s32 %v4038, %v4040
  %v4042 = vrot.slane %v4026, %v4041
  %v4044 = vunpack.c.l.s4 1966171168
  %v4045 = vunpack.c.0.s8 %v4044
  %v4046 = vlaneseq
  %v4047 = vshrl.u32 %v4046, 7
  %v4048 = vsub.s32 %v4045, %v4047
  %v4049 = vrot.slane %v4027, %v4048
  %v4051 = vunpack.c.l.s4 1966171168
  %v4052 = vunpack.c.0.s8 %v4051
  %v4053 = vlaneseq
  %v4054 = vshrl.u32 %v4053, 7
  %v4055 = vsub.s32 %v4052, %v4054
  %v4056 = vrot.slane %v4028, %v4055
  %v4057 = vcombine.high %v4035, %v4035
  %v4058 = vcombine.high %v4042, %v4042
  %v4059 = vcombine.high %v4049, %v4049
  %v4060 = vcombine.high %v4056, %v4056
  %v4061 = vcombine.high %v3645, %v3645
  %v4063 = vunpack.c.l.s4 1966171168
  %v4064 = vunpack.c.0.s8 %v4063
  %v4065 = vlaneseq
  %v4066 = vshrl.u32 %v4065, 7
  %v4067 = vsub.s32 %v4064, %v4066
  %v4068 = vrot.slane %v3645, %v4067
  %v4070 = vunpack.c.l.s4 1966171168
  %v4071 = vunpack.c.0.s8 %v4070
  %v4072 = vlaneseq
  %v4073 = vshrl.u32 %v4072, 7
  %v4074 = vsub.s32 %v4071, %v4073
  %v4075 = vrot.slane %v4061, %v4074
  %v4076 = vcombine.high %v4068, %v4068
  %v4077 = vcombine.high %v4075, %v4075
  %v4079 = vunpack.c.l.s4 1966171168
  %v4080 = vunpack.c.0.s8 %v4079
  %v4081 = vlaneseq
  %v4082 = vshrl.u32 %v4081, 7
  %v4083 = vsub.s32 %v4080, %v4082
  %v4084 = vrot.slane %v4068, %v4083
  %v4086 = vunpack.c.l.s4 1966171168
  %v4087 = vunpack.c.0.s8 %v4086
  %v4088 = vlaneseq
  %v4089 = vshrl.u32 %v4088, 7
  %v4090 = vsub.s32 %v4087, %v4089
  %v4091 = vrot.slane %v4075, %v4090
  %v4093 = vunpack.c.l.s4 1966171168
  %v4094 = vunpack.c.0.s8 %v4093
  %v4095 = vlaneseq
  %v4096 = vshrl.u32 %v4095, 7
  %v4097 = vsub.s32 %v4094, %v4096
  %v4098 = vrot.slane %v4076, %v4097
  %v4100 = vunpack.c.l.s4 1966171168
  %v4101 = vunpack.c.0.s8 %v4100
  %v4102 = vlaneseq
  %v4103 = vshrl.u32 %v4102, 7
  %v4104 = vsub.s32 %v4101, %v4103
  %v4105 = vrot.slane %v4077, %v4104
  %v4106 = vcombine.high %v4084, %v4084
  %v4107 = vcombine.high %v4091, %v4091
  %v4108 = vcombine.high %v4098, %v4098
  %v4109 = vcombine.high %v4105, %v4105
  %v4110 = vcombine.high %v3646, %v3646
  %v4112 = vunpack.c.l.s4 1966171168
  %v4113 = vunpack.c.0.s8 %v4112
  %v4114 = vlaneseq
  %v4115 = vshrl.u32 %v4114, 7
  %v4116 = vsub.s32 %v4113, %v4115
  %v4117 = vrot.slane %v3646, %v4116
  %v4119 = vunpack.c.l.s4 1966171168
  %v4120 = vunpack.c.0.s8 %v4119
  %v4121 = vlaneseq
  %v4122 = vshrl.u32 %v4121, 7
  %v4123 = vsub.s32 %v4120, %v4122
  %v4124 = vrot.slane %v4110, %v4123
  %v4125 = vcombine.high %v4117, %v4117
  %v4126 = vcombine.high %v4124, %v4124
  %v4128 = vunpack.c.l.s4 1966171168
  %v4129 = vunpack.c.0.s8 %v4128
  %v4130 = vlaneseq
  %v4131 = vshrl.u32 %v4130, 7
  %v4132 = vsub.s32 %v4129, %v4131
  %v4133 = vrot.slane %v4117, %v4132
  %v4135 = vunpack.c.l.s4 1966171168
  %v4136 = vunpack.c.0.s8 %v4135
  %v4137 = vlaneseq
  %v4138 = vshrl.u32 %v4137, 7
  %v4139 = vsub.s32 %v4136, %v4138
  %v4140 = vrot.slane %v4124, %v4139
  %v4142 = vunpack.c.l.s4 1966171168
  %v4143 = vunpack.c.0.s8 %v4142
  %v4144 = vlaneseq
  %v4145 = vshrl.u32 %v4144, 7
  %v4146 = vsub.s32 %v4143, %v4145
  %v4147 = vrot.slane %v4125, %v4146
  %v4149 = vunpack.c.l.s4 1966171168
  %v4150 = vunpack.c.0.s8 %v4149
  %v4151 = vlaneseq
  %v4152 = vshrl.u32 %v4151, 7
  %v4153 = vsub.s32 %v4150, %v4152
  %v4154 = vrot.slane %v4126, %v4153
  %v4155 = vcombine.high %v4133, %v4133
  %v4156 = vcombine.high %v4140, %v4140
  %v4157 = vcombine.high %v4147, %v4147
  %v4158 = vcombine.high %v4154, %v4154
  %v4159 = vcombine.high %v3647, %v3647
  %v4161 = vunpack.c.l.s4 1966171168
  %v4162 = vunpack.c.0.s8 %v4161
  %v4163 = vlaneseq
  %v4164 = vshrl.u32 %v4163, 7
  %v4165 = vsub.s32 %v4162, %v4164
  %v4166 = vrot.slane %v3647, %v4165
  %v4168 = vunpack.c.l.s4 1966171168
  %v4169 = vunpack.c.0.s8 %v4168
  %v4170 = vlaneseq
  %v4171 = vshrl.u32 %v4170, 7
  %v4172 = vsub.s32 %v4169, %v4171
  %v4173 = vrot.slane %v4159, %v4172
  %v4174 = vcombine.high %v4166, %v4166
  %v4175 = vcombine.high %v4173, %v4173
  %v4177 = vunpack.c.l.s4 1966171168
  %v4178 = vunpack.c.0.s8 %v4177
  %v4179 = vlaneseq
  %v4180 = vshrl.u32 %v4179, 7
  %v4181 = vsub.s32 %v4178, %v4180
  %v4182 = vrot.slane %v4166, %v4181
  %v4184 = vunpack.c.l.s4 1966171168
  %v4185 = vunpack.c.0.s8 %v4184
  %v4186 = vlaneseq
  %v4187 = vshrl.u32 %v4186, 7
  %v4188 = vsub.s32 %v4185, %v4187
  %v4189 = vrot.slane %v4173, %v4188
  %v4191 = vunpack.c.l.s4 1966171168
  %v4192 = vunpack.c.0.s8 %v4191
  %v4193 = vlaneseq
  %v4194 = vshrl.u32 %v4193, 7
  %v4195 = vsub.s32 %v4192, %v4194
  %v4196 = vrot.slane %v4174, %v4195
  %v4198 = vunpack.c.l.s4 1966171168
  %v4199 = vunpack.c.0.s8 %v4198
  %v4200 = vlaneseq
  %v4201 = vshrl.u32 %v4200, 7
  %v4202 = vsub.s32 %v4199, %v4201
  %v4203 = vrot.slane %v4175, %v4202
  %v4204 = vcombine.high %v4182, %v4182
  %v4205 = vcombine.high %v4189, %v4189
  %v4206 = vcombine.high %v4196, %v4196
  %v4207 = vcombine.high %v4203, %v4203
  %v4208 = vcombine.high %v3648, %v3648
  %v4210 = vunpack.c.l.s4 1966171168
  %v4211 = vunpack.c.0.s8 %v4210
  %v4212 = vlaneseq
  %v4213 = vshrl.u32 %v4212, 7
  %v4214 = vsub.s32 %v4211, %v4213
  %v4215 = vrot.slane %v3648, %v4214
  %v4217 = vunpack.c.l.s4 1966171168
  %v4218 = vunpack.c.0.s8 %v4217
  %v4219 = vlaneseq
  %v4220 = vshrl.u32 %v4219, 7
  %v4221 = vsub.s32 %v4218, %v4220
  %v4222 = vrot.slane %v4208, %v4221
  %v4223 = vcombine.high %v4215, %v4215
  %v4224 = vcombine.high %v4222, %v4222
  %v4226 = vunpack.c.l.s4 1966171168
  %v4227 = vunpack.c.0.s8 %v4226
  %v4228 = vlaneseq
  %v4229 = vshrl.u32 %v4228, 7
  %v4230 = vsub.s32 %v4227, %v4229
  %v4231 = vrot.slane %v4215, %v4230
  %v4233 = vunpack.c.l.s4 1966171168
  %v4234 = vunpack.c.0.s8 %v4233
  %v4235 = vlaneseq
  %v4236 = vshrl.u32 %v4235, 7
  %v4237 = vsub.s32 %v4234, %v4236
  %v4238 = vrot.slane %v4222, %v4237
  %v4240 = vunpack.c.l.s4 1966171168
  %v4241 = vunpack.c.0.s8 %v4240
  %v4242 = vlaneseq
  %v4243 = vshrl.u32 %v4242, 7
  %v4244 = vsub.s32 %v4241, %v4243
  %v4245 = vrot.slane %v4223, %v4244
  %v4247 = vunpack.c.l.s4 1966171168
  %v4248 = vunpack.c.0.s8 %v4247
  %v4249 = vlaneseq
  %v4250 = vshrl.u32 %v4249, 7
  %v4251 = vsub.s32 %v4248, %v4250
  %v4252 = vrot.slane %v4224, %v4251
  %v4253 = vcombine.high %v4231, %v4231
  %v4254 = vcombine.high %v4238, %v4238
  %v4255 = vcombine.high %v4245, %v4245
  %v4256 = vcombine.high %v4252, %v4252
  %v4257 = vcombine.high %v3649, %v3649
  %v4259 = vunpack.c.l.s4 1966171168
  %v4260 = vunpack.c.0.s8 %v4259
  %v4261 = vlaneseq
  %v4262 = vshrl.u32 %v4261, 7
  %v4263 = vsub.s32 %v4260, %v4262
  %v4264 = vrot.slane %v3649, %v4263
  %v4266 = vunpack.c.l.s4 1966171168
  %v4267 = vunpack.c.0.s8 %v4266
  %v4268 = vlaneseq
  %v4269 = vshrl.u32 %v4268, 7
  %v4270 = vsub.s32 %v4267, %v4269
  %v4271 = vrot.slane %v4257, %v4270
  %v4272 = vcombine.high %v4264, %v4264
  %v4273 = vcombine.high %v4271, %v4271
  %v4275 = vunpack.c.l.s4 1966171168
  %v4276 = vunpack.c.0.s8 %v4275
  %v4277 = vlaneseq
  %v4278 = vshrl.u32 %v4277, 7
  %v4279 = vsub.s32 %v4276, %v4278
  %v4280 = vrot.slane %v4264, %v4279
  %v4282 = vunpack.c.l.s4 1966171168
  %v4283 = vunpack.c.0.s8 %v4282
  %v4284 = vlaneseq
  %v4285 = vshrl.u32 %v4284, 7
  %v4286 = vsub.s32 %v4283, %v4285
  %v4287 = vrot.slane %v4271, %v4286
  %v4289 = vunpack.c.l.s4 1966171168
  %v4290 = vunpack.c.0.s8 %v4289
  %v4291 = vlaneseq
  %v4292 = vshrl.u32 %v4291, 7
  %v4293 = vsub.s32 %v4290, %v4292
  %v4294 = vrot.slane %v4272, %v4293
  %v4296 = vunpack.c.l.s4 1966171168
  %v4297 = vunpack.c.0.s8 %v4296
  %v4298 = vlaneseq
  %v4299 = vshrl.u32 %v4298, 7
  %v4300 = vsub.s32 %v4297, %v4299
  %v4301 = vrot.slane %v4273, %v4300
  %v4302 = vcombine.high %v4280, %v4280
  %v4303 = vcombine.high %v4287, %v4287
  %v4304 = vcombine.high %v4294, %v4294
  %v4305 = vcombine.high %v4301, %v4301
  %v4306 = vcombine.high %v3650, %v3650
  %v4308 = vunpack.c.l.s4 1966171168
  %v4309 = vunpack.c.0.s8 %v4308
  %v4310 = vlaneseq
  %v4311 = vshrl.u32 %v4310, 7
  %v4312 = vsub.s32 %v4309, %v4311
  %v4313 = vrot.slane %v3650, %v4312
  %v4315 = vunpack.c.l.s4 1966171168
  %v4316 = vunpack.c.0.s8 %v4315
  %v4317 = vlaneseq
  %v4318 = vshrl.u32 %v4317, 7
  %v4319 = vsub.s32 %v4316, %v4318
  %v4320 = vrot.slane %v4306, %v4319
  %v4321 = vcombine.high %v4313, %v4313
  %v4322 = vcombine.high %v4320, %v4320
  %v4324 = vunpack.c.l.s4 1966171168
  %v4325 = vunpack.c.0.s8 %v4324
  %v4326 = vlaneseq
  %v4327 = vshrl.u32 %v4326, 7
  %v4328 = vsub.s32 %v4325, %v4327
  %v4329 = vrot.slane %v4313, %v4328
  %v4331 = vunpack.c.l.s4 1966171168
  %v4332 = vunpack.c.0.s8 %v4331
  %v4333 = vlaneseq
  %v4334 = vshrl.u32 %v4333, 7
  %v4335 = vsub.s32 %v4332, %v4334
  %v4336 = vrot.slane %v4320, %v4335
  %v4338 = vunpack.c.l.s4 1966171168
  %v4339 = vunpack.c.0.s8 %v4338
  %v4340 = vlaneseq
  %v4341 = vshrl.u32 %v4340, 7
  %v4342 = vsub.s32 %v4339, %v4341
  %v4343 = vrot.slane %v4321, %v4342
  %v4345 = vunpack.c.l.s4 1966171168
  %v4346 = vunpack.c.0.s8 %v4345
  %v4347 = vlaneseq
  %v4348 = vshrl.u32 %v4347, 7
  %v4349 = vsub.s32 %v4346, %v4348
  %v4350 = vrot.slane %v4322, %v4349
  %v4351 = vcombine.high %v4329, %v4329
  %v4352 = vcombine.high %v4336, %v4336
  %v4353 = vcombine.high %v4343, %v4343
  %v4354 = vcombine.high %v4350, %v4350
  %v4355 = vcombine.high %v3651, %v3651
  %v4357 = vunpack.c.l.s4 1966171168
  %v4358 = vunpack.c.0.s8 %v4357
  %v4359 = vlaneseq
  %v4360 = vshrl.u32 %v4359, 7
  %v4361 = vsub.s32 %v4358, %v4360
  %v4362 = vrot.slane %v3651, %v4361
  %v4364 = vunpack.c.l.s4 1966171168
  %v4365 = vunpack.c.0.s8 %v4364
  %v4366 = vlaneseq
  %v4367 = vshrl.u32 %v4366, 7
  %v4368 = vsub.s32 %v4365, %v4367
  %v4369 = vrot.slane %v4355, %v4368
  %v4370 = vcombine.high %v4362, %v4362
  %v4371 = vcombine.high %v4369, %v4369
  %v4373 = vunpack.c.l.s4 1966171168
  %v4374 = vunpack.c.0.s8 %v4373
  %v4375 = vlaneseq
  %v4376 = vshrl.u32 %v4375, 7
  %v4377 = vsub.s32 %v4374, %v4376
  %v4378 = vrot.slane %v4362, %v4377
  %v4380 = vunpack.c.l.s4 1966171168
  %v4381 = vunpack.c.0.s8 %v4380
  %v4382 = vlaneseq
  %v4383 = vshrl.u32 %v4382, 7
  %v4384 = vsub.s32 %v4381, %v4383
  %v4385 = vrot.slane %v4369, %v4384
  %v4387 = vunpack.c.l.s4 1966171168
  %v4388 = vunpack.c.0.s8 %v4387
  %v4389 = vlaneseq
  %v4390 = vshrl.u32 %v4389, 7
  %v4391 = vsub.s32 %v4388, %v4390
  %v4392 = vrot.slane %v4370, %v4391
  %v4394 = vunpack.c.l.s4 1966171168
  %v4395 = vunpack.c.0.s8 %v4394
  %v4396 = vlaneseq
  %v4397 = vshrl.u32 %v4396, 7
  %v4398 = vsub.s32 %v4395, %v4397
  %v4399 = vrot.slane %v4371, %v4398
  %v4400 = vcombine.high %v4378, %v4378
  %v4401 = vcombine.high %v4385, %v4385
  %v4402 = vcombine.high %v4392, %v4392
  %v4403 = vcombine.high %v4399, %v4399
  %v4404 = vcombine.high %v3652, %v3652
  %v4406 = vunpack.c.l.s4 1966171168
  %v4407 = vunpack.c.0.s8 %v4406
  %v4408 = vlaneseq
  %v4409 = vshrl.u32 %v4408, 7
  %v4410 = vsub.s32 %v4407, %v4409
  %v4411 = vrot.slane %v3652, %v4410
  %v4413 = vunpack.c.l.s4 1966171168
  %v4414 = vunpack.c.0.s8 %v4413
  %v4415 = vlaneseq
  %v4416 = vshrl.u32 %v4415, 7
  %v4417 = vsub.s32 %v4414, %v4416
  %v4418 = vrot.slane %v4404, %v4417
  %v4419 = vcombine.high %v4411, %v4411
  %v4420 = vcombine.high %v4418, %v4418
  %v4422 = vunpack.c.l.s4 1966171168
  %v4423 = vunpack.c.0.s8 %v4422
  %v4424 = vlaneseq
  %v4425 = vshrl.u32 %v4424, 7
  %v4426 = vsub.s32 %v4423, %v4425
  %v4427 = vrot.slane %v4411, %v4426
  %v4429 = vunpack.c.l.s4 1966171168
  %v4430 = vunpack.c.0.s8 %v4429
  %v4431 = vlaneseq
  %v4432 = vshrl.u32 %v4431, 7
  %v4433 = vsub.s32 %v4430, %v4432
  %v4434 = vrot.slane %v4418, %v4433
  %v4436 = vunpack.c.l.s4 1966171168
  %v4437 = vunpack.c.0.s8 %v4436
  %v4438 = vlaneseq
  %v4439 = vshrl.u32 %v4438, 7
  %v4440 = vsub.s32 %v4437, %v4439
  %v4441 = vrot.slane %v4419, %v4440
  %v4443 = vunpack.c.l.s4 1966171168
  %v4444 = vunpack.c.0.s8 %v4443
  %v4445 = vlaneseq
  %v4446 = vshrl.u32 %v4445, 7
  %v4447 = vsub.s32 %v4444, %v4446
  %v4448 = vrot.slane %v4420, %v4447
  %v4449 = vcombine.high %v4427, %v4427
  %v4450 = vcombine.high %v4434, %v4434
  %v4451 = vcombine.high %v4441, %v4441
  %v4452 = vcombine.high %v4448, %v4448
  %v4453 = vlaneseq
  %v4454 = vshrl.u32 %v4453, 7
  %v4455 = vsub.s32 0, %v4454
  %v4456 = vrot.slane %v3692, %v4455
  %v4457 = vlaneseq
  %v4458 = vshrl.u32 %v4457, 7
  %v4459 = vsub.s32 0, %v4458
  %v4460 = vrot.slane %v3706, %v4459
  %v4461 = vlaneseq
  %v4462 = vshrl.u32 %v4461, 7
  %v4463 = vsub.s32 0, %v4462
  %v4464 = vrot.slane %v3714, %v4463
  %v4465 = vlaneseq
  %v4466 = vshrl.u32 %v4465, 7
  %v4467 = vsub.s32 0, %v4466
  %v4468 = vrot.slane %v3716, %v4467
  %v4469 = vlaneseq
  %v4470 = vshrl.u32 %v4469, 7
  %v4471 = vsub.s32 0, %v4470
  %v4472 = vrot.slane %v3699, %v4471
  %v4473 = vlaneseq
  %v4474 = vshrl.u32 %v4473, 7
  %v4475 = vsub.s32 0, %v4474
  %v4476 = vrot.slane %v3713, %v4475
  %v4477 = vlaneseq
  %v4478 = vshrl.u32 %v4477, 7
  %v4479 = vsub.s32 0, %v4478
  %v4480 = vrot.slane %v3715, %v4479
  %v4481 = vlaneseq
  %v4482 = vshrl.u32 %v4481, 7
  %v4483 = vsub.s32 0, %v4482
  %v4484 = vrot.slane %v3717, %v4483
  %v4485 = vlaneseq
  %v4486 = vshrl.u32 %v4485, 7
  %v4487 = vsub.s32 0, %v4486
  %v4488 = vrot.slane %v3741, %v4487
  %v4489 = vlaneseq
  %v4490 = vshrl.u32 %v4489, 7
  %v4491 = vsub.s32 0, %v4490
  %v4492 = vrot.slane %v3755, %v4491
  %v4493 = vlaneseq
  %v4494 = vshrl.u32 %v4493, 7
  %v4495 = vsub.s32 0, %v4494
  %v4496 = vrot.slane %v3763, %v4495
  %v4497 = vlaneseq
  %v4498 = vshrl.u32 %v4497, 7
  %v4499 = vsub.s32 0, %v4498
  %v4500 = vrot.slane %v3765, %v4499
  %v4501 = vlaneseq
  %v4502 = vshrl.u32 %v4501, 7
  %v4503 = vsub.s32 0, %v4502
  %v4504 = vrot.slane %v3748, %v4503
  %v4505 = vlaneseq
  %v4506 = vshrl.u32 %v4505, 7
  %v4507 = vsub.s32 0, %v4506
  %v4508 = vrot.slane %v3762, %v4507
  %v4509 = vlaneseq
  %v4510 = vshrl.u32 %v4509, 7
  %v4511 = vsub.s32 0, %v4510
  %v4512 = vrot.slane %v3764, %v4511
  %v4513 = vlaneseq
  %v4514 = vshrl.u32 %v4513, 7
  %v4515 = vsub.s32 0, %v4514
  %v4516 = vrot.slane %v3766, %v4515
  %v4517 = vlaneseq
  %v4518 = vshrl.u32 %v4517, 7
  %v4519 = vsub.s32 0, %v4518
  %v4520 = vrot.slane %v3790, %v4519
  %v4521 = vlaneseq
  %v4522 = vshrl.u32 %v4521, 7
  %v4523 = vsub.s32 0, %v4522
  %v4524 = vrot.slane %v3804, %v4523
  %v4525 = vlaneseq
  %v4526 = vshrl.u32 %v4525, 7
  %v4527 = vsub.s32 0, %v4526
  %v4528 = vrot.slane %v3812, %v4527
  %v4529 = vlaneseq
  %v4530 = vshrl.u32 %v4529, 7
  %v4531 = vsub.s32 0, %v4530
  %v4532 = vrot.slane %v3814, %v4531
  %v4533 = vlaneseq
  %v4534 = vshrl.u32 %v4533, 7
  %v4535 = vsub.s32 0, %v4534
  %v4536 = vrot.slane %v3797, %v4535
  %v4537 = vlaneseq
  %v4538 = vshrl.u32 %v4537, 7
  %v4539 = vsub.s32 0, %v4538
  %v4540 = vrot.slane %v3811, %v4539
  %v4541 = vlaneseq
  %v4542 = vshrl.u32 %v4541, 7
  %v4543 = vsub.s32 0, %v4542
  %v4544 = vrot.slane %v3813, %v4543
  %v4545 = vlaneseq
  %v4546 = vshrl.u32 %v4545, 7
  %v4547 = vsub.s32 0, %v4546
  %v4548 = vrot.slane %v3815, %v4547
  %v4549 = vlaneseq
  %v4550 = vshrl.u32 %v4549, 7
  %v4551 = vsub.s32 0, %v4550
  %v4552 = vrot.slane %v3839, %v4551
  %v4553 = vlaneseq
  %v4554 = vshrl.u32 %v4553, 7
  %v4555 = vsub.s32 0, %v4554
  %v4556 = vrot.slane %v3853, %v4555
  %v4557 = vlaneseq
  %v4558 = vshrl.u32 %v4557, 7
  %v4559 = vsub.s32 0, %v4558
  %v4560 = vrot.slane %v3861, %v4559
  %v4561 = vlaneseq
  %v4562 = vshrl.u32 %v4561, 7
  %v4563 = vsub.s32 0, %v4562
  %v4564 = vrot.slane %v3863, %v4563
  %v4565 = vlaneseq
  %v4566 = vshrl.u32 %v4565, 7
  %v4567 = vsub.s32 0, %v4566
  %v4568 = vrot.slane %v3846, %v4567
  %v4569 = vlaneseq
  %v4570 = vshrl.u32 %v4569, 7
  %v4571 = vsub.s32 0, %v4570
  %v4572 = vrot.slane %v3860, %v4571
  %v4573 = vlaneseq
  %v4574 = vshrl.u32 %v4573, 7
  %v4575 = vsub.s32 0, %v4574
  %v4576 = vrot.slane %v3862, %v4575
  %v4577 = vlaneseq
  %v4578 = vshrl.u32 %v4577, 7
  %v4579 = vsub.s32 0, %v4578
  %v4580 = vrot.slane %v3864, %v4579
  %v4581 = vlaneseq
  %v4582 = vshrl.u32 %v4581, 7
  %v4583 = vsub.s32 0, %v4582
  %v4584 = vrot.slane %v3888, %v4583
  %v4585 = vlaneseq
  %v4586 = vshrl.u32 %v4585, 7
  %v4587 = vsub.s32 0, %v4586
  %v4588 = vrot.slane %v3902, %v4587
  %v4589 = vlaneseq
  %v4590 = vshrl.u32 %v4589, 7
  %v4591 = vsub.s32 0, %v4590
  %v4592 = vrot.slane %v3910, %v4591
  %v4593 = vlaneseq
  %v4594 = vshrl.u32 %v4593, 7
  %v4595 = vsub.s32 0, %v4594
  %v4596 = vrot.slane %v3912, %v4595
  %v4597 = vlaneseq
  %v4598 = vshrl.u32 %v4597, 7
  %v4599 = vsub.s32 0, %v4598
  %v4600 = vrot.slane %v3895, %v4599
  %v4601 = vlaneseq
  %v4602 = vshrl.u32 %v4601, 7
  %v4603 = vsub.s32 0, %v4602
  %v4604 = vrot.slane %v3909, %v4603
  %v4605 = vlaneseq
  %v4606 = vshrl.u32 %v4605, 7
  %v4607 = vsub.s32 0, %v4606
  %v4608 = vrot.slane %v3911, %v4607
  %v4609 = vlaneseq
  %v4610 = vshrl.u32 %v4609, 7
  %v4611 = vsub.s32 0, %v4610
  %v4612 = vrot.slane %v3913, %v4611
  %v4613 = vlaneseq
  %v4614 = vshrl.u32 %v4613, 7
  %v4615 = vsub.s32 0, %v4614
  %v4616 = vrot.slane %v3937, %v4615
  %v4617 = vlaneseq
  %v4618 = vshrl.u32 %v4617, 7
  %v4619 = vsub.s32 0, %v4618
  %v4620 = vrot.slane %v3951, %v4619
  %v4621 = vlaneseq
  %v4622 = vshrl.u32 %v4621, 7
  %v4623 = vsub.s32 0, %v4622
  %v4624 = vrot.slane %v3959, %v4623
  %v4625 = vlaneseq
  %v4626 = vshrl.u32 %v4625, 7
  %v4627 = vsub.s32 0, %v4626
  %v4628 = vrot.slane %v3961, %v4627
  %v4629 = vlaneseq
  %v4630 = vshrl.u32 %v4629, 7
  %v4631 = vsub.s32 0, %v4630
  %v4632 = vrot.slane %v3944, %v4631
  %v4633 = vlaneseq
  %v4634 = vshrl.u32 %v4633, 7
  %v4635 = vsub.s32 0, %v4634
  %v4636 = vrot.slane %v3958, %v4635
  %v4637 = vlaneseq
  %v4638 = vshrl.u32 %v4637, 7
  %v4639 = vsub.s32 0, %v4638
  %v4640 = vrot.slane %v3960, %v4639
  %v4641 = vlaneseq
  %v4642 = vshrl.u32 %v4641, 7
  %v4643 = vsub.s32 0, %v4642
  %v4644 = vrot.slane %v3962, %v4643
  %v4645 = vlaneseq
  %v4646 = vshrl.u32 %v4645, 7
  %v4647 = vsub.s32 0, %v4646
  %v4648 = vrot.slane %v3986, %v4647
  %v4649 = vlaneseq
  %v4650 = vshrl.u32 %v4649, 7
  %v4651 = vsub.s32 0, %v4650
  %v4652 = vrot.slane %v4000, %v4651
  %v4653 = vlaneseq
  %v4654 = vshrl.u32 %v4653, 7
  %v4655 = vsub.s32 0, %v4654
  %v4656 = vrot.slane %v4008, %v4655
  %v4657 = vlaneseq
  %v4658 = vshrl.u32 %v4657, 7
  %v4659 = vsub.s32 0, %v4658
  %v4660 = vrot.slane %v4010, %v4659
  %v4661 = vlaneseq
  %v4662 = vshrl.u32 %v4661, 7
  %v4663 = vsub.s32 0, %v4662
  %v4664 = vrot.slane %v3993, %v4663
  %v4665 = vlaneseq
  %v4666 = vshrl.u32 %v4665, 7
  %v4667 = vsub.s32 0, %v4666
  %v4668 = vrot.slane %v4007, %v4667
  %v4669 = vlaneseq
  %v4670 = vshrl.u32 %v4669, 7
  %v4671 = vsub.s32 0, %v4670
  %v4672 = vrot.slane %v4009, %v4671
  %v4673 = vlaneseq
  %v4674 = vshrl.u32 %v4673, 7
  %v4675 = vsub.s32 0, %v4674
  %v4676 = vrot.slane %v4011, %v4675
  %v4677 = vlaneseq
  %v4678 = vshrl.u32 %v4677, 7
  %v4679 = vsub.s32 0, %v4678
  %v4680 = vrot.slane %v4035, %v4679
  %v4681 = vlaneseq
  %v4682 = vshrl.u32 %v4681, 7
  %v4683 = vsub.s32 0, %v4682
  %v4684 = vrot.slane %v4049, %v4683
  %v4685 = vlaneseq
  %v4686 = vshrl.u32 %v4685, 7
  %v4687 = vsub.s32 0, %v4686
  %v4688 = vrot.slane %v4057, %v4687
  %v4689 = vlaneseq
  %v4690 = vshrl.u32 %v4689, 7
  %v4691 = vsub.s32 0, %v4690
  %v4692 = vrot.slane %v4059, %v4691
  %v4693 = vlaneseq
  %v4694 = vshrl.u32 %v4693, 7
  %v4695 = vsub.s32 0, %v4694
  %v4696 = vrot.slane %v4042, %v4695
  %v4697 = vlaneseq
  %v4698 = vshrl.u32 %v4697, 7
  %v4699 = vsub.s32 0, %v4698
  %v4700 = vrot.slane %v4056, %v4699
  %v4701 = vlaneseq
  %v4702 = vshrl.u32 %v4701, 7
  %v4703 = vsub.s32 0, %v4702
  %v4704 = vrot.slane %v4058, %v4703
  %v4705 = vlaneseq
  %v4706 = vshrl.u32 %v4705, 7
  %v4707 = vsub.s32 0, %v4706
  %v4708 = vrot.slane %v4060, %v4707
  %v4709 = vlaneseq
  %v4710 = vshrl.u32 %v4709, 7
  %v4711 = vsub.s32 0, %v4710
  %v4712 = vrot.slane %v4084, %v4711
  %v4713 = vlaneseq
  %v4714 = vshrl.u32 %v4713, 7
  %v4715 = vsub.s32 0, %v4714
  %v4716 = vrot.slane %v4098, %v4715
  %v4717 = vlaneseq
  %v4718 = vshrl.u32 %v4717, 7
  %v4719 = vsub.s32 0, %v4718
  %v4720 = vrot.slane %v4106, %v4719
  %v4721 = vlaneseq
  %v4722 = vshrl.u32 %v4721, 7
  %v4723 = vsub.s32 0, %v4722
  %v4724 = vrot.slane %v4108, %v4723
  %v4725 = vlaneseq
  %v4726 = vshrl.u32 %v4725, 7
  %v4727 = vsub.s32 0, %v4726
  %v4728 = vrot.slane %v4091, %v4727
  %v4729 = vlaneseq
  %v4730 = vshrl.u32 %v4729, 7
  %v4731 = vsub.s32 0, %v4730
  %v4732 = vrot.slane %v4105, %v4731
  %v4733 = vlaneseq
  %v4734 = vshrl.u32 %v4733, 7
  %v4735 = vsub.s32 0, %v4734
  %v4736 = vrot.slane %v4107, %v4735
  %v4737 = vlaneseq
  %v4738 = vshrl.u32 %v4737, 7
  %v4739 = vsub.s32 0, %v4738
  %v4740 = vrot.slane %v4109, %v4739
  %v4741 = vlaneseq
  %v4742 = vshrl.u32 %v4741, 7
  %v4743 = vsub.s32 0, %v4742
  %v4744 = vrot.slane %v4133, %v4743
  %v4745 = vlaneseq
  %v4746 = vshrl.u32 %v4745, 7
  %v4747 = vsub.s32 0, %v4746
  %v4748 = vrot.slane %v4147, %v4747
  %v4749 = vlaneseq
  %v4750 = vshrl.u32 %v4749, 7
  %v4751 = vsub.s32 0, %v4750
  %v4752 = vrot.slane %v4155, %v4751
  %v4753 = vlaneseq
  %v4754 = vshrl.u32 %v4753, 7
  %v4755 = vsub.s32 0, %v4754
  %v4756 = vrot.slane %v4157, %v4755
  %v4757 = vlaneseq
  %v4758 = vshrl.u32 %v4757, 7
  %v4759 = vsub.s32 0, %v4758
  %v4760 = vrot.slane %v4140, %v4759
  %v4761 = vlaneseq
  %v4762 = vshrl.u32 %v4761, 7
  %v4763 = vsub.s32 0, %v4762
  %v4764 = vrot.slane %v4154, %v4763
  %v4765 = vlaneseq
  %v4766 = vshrl.u32 %v4765, 7
  %v4767 = vsub.s32 0, %v4766
  %v4768 = vrot.slane %v4156, %v4767
  %v4769 = vlaneseq
  %v4770 = vshrl.u32 %v4769, 7
  %v4771 = vsub.s32 0, %v4770
  %v4772 = vrot.slane %v4158, %v4771
  %v4773 = vlaneseq
  %v4774 = vshrl.u32 %v4773, 7
  %v4775 = vsub.s32 0, %v4774
  %v4776 = vrot.slane %v4182, %v4775
  %v4777 = vlaneseq
  %v4778 = vshrl.u32 %v4777, 7
  %v4779 = vsub.s32 0, %v4778
  %v4780 = vrot.slane %v4196, %v4779
  %v4781 = vlaneseq
  %v4782 = vshrl.u32 %v4781, 7
  %v4783 = vsub.s32 0, %v4782
  %v4784 = vrot.slane %v4204, %v4783
  %v4785 = vlaneseq
  %v4786 = vshrl.u32 %v4785, 7
  %v4787 = vsub.s32 0, %v4786
  %v4788 = vrot.slane %v4206, %v4787
  %v4789 = vlaneseq
  %v4790 = vshrl.u32 %v4789, 7
  %v4791 = vsub.s32 0, %v4790
  %v4792 = vrot.slane %v4189, %v4791
  %v4793 = vlaneseq
  %v4794 = vshrl.u32 %v4793, 7
  %v4795 = vsub.s32 0, %v4794
  %v4796 = vrot.slane %v4203, %v4795
  %v4797 = vlaneseq
  %v4798 = vshrl.u32 %v4797, 7
  %v4799 = vsub.s32 0, %v4798
  %v4800 = vrot.slane %v4205, %v4799
  %v4801 = vlaneseq
  %v4802 = vshrl.u32 %v4801, 7
  %v4803 = vsub.s32 0, %v4802
  %v4804 = vrot.slane %v4207, %v4803
  %v4805 = vlaneseq
  %v4806 = vshrl.u32 %v4805, 7
  %v4807 = vsub.s32 0, %v4806
  %v4808 = vrot.slane %v4231, %v4807
  %v4809 = vlaneseq
  %v4810 = vshrl.u32 %v4809, 7
  %v4811 = vsub.s32 0, %v4810
  %v4812 = vrot.slane %v4245, %v4811
  %v4813 = vlaneseq
  %v4814 = vshrl.u32 %v4813, 7
  %v4815 = vsub.s32 0, %v4814
  %v4816 = vrot.slane %v4253, %v4815
  %v4817 = vlaneseq
  %v4818 = vshrl.u32 %v4817, 7
  %v4819 = vsub.s32 0, %v4818
  %v4820 = vrot.slane %v4255, %v4819
  %v4821 = vlaneseq
  %v4822 = vshrl.u32 %v4821, 7
  %v4823 = vsub.s32 0, %v4822
  %v4824 = vrot.slane %v4238, %v4823
  %v4825 = vlaneseq
  %v4826 = vshrl.u32 %v4825, 7
  %v4827 = vsub.s32 0, %v4826
  %v4828 = vrot.slane %v4252, %v4827
  %v4829 = vlaneseq
  %v4830 = vshrl.u32 %v4829, 7
  %v4831 = vsub.s32 0, %v4830
  %v4832 = vrot.slane %v4254, %v4831
  %v4833 = vlaneseq
  %v4834 = vshrl.u32 %v4833, 7
  %v4835 = vsub.s32 0, %v4834
  %v4836 = vrot.slane %v4256, %v4835
  %v4837 = vlaneseq
  %v4838 = vshrl.u32 %v4837, 7
  %v4839 = vsub.s32 0, %v4838
  %v4840 = vrot.slane %v4280, %v4839
  %v4841 = vlaneseq
  %v4842 = vshrl.u32 %v4841, 7
  %v4843 = vsub.s32 0, %v4842
  %v4844 = vrot.slane %v4294, %v4843
  %v4845 = vlaneseq
  %v4846 = vshrl.u32 %v4845, 7
  %v4847 = vsub.s32 0, %v4846
  %v4848 = vrot.slane %v4302, %v4847
  %v4849 = vlaneseq
  %v4850 = vshrl.u32 %v4849, 7
  %v4851 = vsub.s32 0, %v4850
  %v4852 = vrot.slane %v4304, %v4851
  %v4853 = vlaneseq
  %v4854 = vshrl.u32 %v4853, 7
  %v4855 = vsub.s32 0, %v4854
  %v4856 = vrot.slane %v4287, %v4855
  %v4857 = vlaneseq
  %v4858 = vshrl.u32 %v4857, 7
  %v4859 = vsub.s32 0, %v4858
  %v4860 = vrot.slane %v4301, %v4859
  %v4861 = vlaneseq
  %v4862 = vshrl.u32 %v4861, 7
  %v4863 = vsub.s32 0, %v4862
  %v4864 = vrot.slane %v4303, %v4863
  %v4865 = vlaneseq
  %v4866 = vshrl.u32 %v4865, 7
  %v4867 = vsub.s32 0, %v4866
  %v4868 = vrot.slane %v4305, %v4867
  %v4869 = vlaneseq
  %v4870 = vshrl.u32 %v4869, 7
  %v4871 = vsub.s32 0, %v4870
  %v4872 = vrot.slane %v4329, %v4871
  %v4873 = vlaneseq
  %v4874 = vshrl.u32 %v4873, 7
  %v4875 = vsub.s32 0, %v4874
  %v4876 = vrot.slane %v4343, %v4875
  %v4877 = vlaneseq
  %v4878 = vshrl.u32 %v4877, 7
  %v4879 = vsub.s32 0, %v4878
  %v4880 = vrot.slane %v4351, %v4879
  %v4881 = vlaneseq
  %v4882 = vshrl.u32 %v4881, 7
  %v4883 = vsub.s32 0, %v4882
  %v4884 = vrot.slane %v4353, %v4883
  %v4885 = vlaneseq
  %v4886 = vshrl.u32 %v4885, 7
  %v4887 = vsub.s32 0, %v4886
  %v4888 = vrot.slane %v4336, %v4887
  %v4889 = vlaneseq
  %v4890 = vshrl.u32 %v4889, 7
  %v4891 = vsub.s32 0, %v4890
  %v4892 = vrot.slane %v4350, %v4891
  %v4893 = vlaneseq
  %v4894 = vshrl.u32 %v4893, 7
  %v4895 = vsub.s32 0, %v4894
  %v4896 = vrot.slane %v4352, %v4895
  %v4897 = vlaneseq
  %v4898 = vshrl.u32 %v4897, 7
  %v4899 = vsub.s32 0, %v4898
  %v4900 = vrot.slane %v4354, %v4899
  %v4901 = vlaneseq
  %v4902 = vshrl.u32 %v4901, 7
  %v4903 = vsub.s32 0, %v4902
  %v4904 = vrot.slane %v4378, %v4903
  %v4905 = vlaneseq
  %v4906 = vshrl.u32 %v4905, 7
  %v4907 = vsub.s32 0, %v4906
  %v4908 = vrot.slane %v4392, %v4907
  %v4909 = vlaneseq
  %v4910 = vshrl.u32 %v4909, 7
  %v4911 = vsub.s32 0, %v4910
  %v4912 = vrot.slane %v4400, %v4911
  %v4913 = vlaneseq
  %v4914 = vshrl.u32 %v4913, 7
  %v4915 = vsub.s32 0, %v4914
  %v4916 = vrot.slane %v4402, %v4915
  %v4917 = vlaneseq
  %v4918 = vshrl.u32 %v4917, 7
  %v4919 = vsub.s32 0, %v4918
  %v4920 = vrot.slane %v4385, %v4919
  %v4921 = vlaneseq
  %v4922 = vshrl.u32 %v4921, 7
  %v4923 = vsub.s32 0, %v4922
  %v4924 = vrot.slane %v4399, %v4923
  %v4925 = vlaneseq
  %v4926 = vshrl.u32 %v4925, 7
  %v4927 = vsub.s32 0, %v4926
  %v4928 = vrot.slane %v4401, %v4927
  %v4929 = vlaneseq
  %v4930 = vshrl.u32 %v4929, 7
  %v4931 = vsub.s32 0, %v4930
  %v4932 = vrot.slane %v4403, %v4931
  %v4933 = vlaneseq
  %v4934 = vshrl.u32 %v4933, 7
  %v4935 = vsub.s32 0, %v4934
  %v4936 = vrot.slane %v4427, %v4935
  %v4937 = vlaneseq
  %v4938 = vshrl.u32 %v4937, 7
  %v4939 = vsub.s32 0, %v4938
  %v4940 = vrot.slane %v4441, %v4939
  %v4941 = vlaneseq
  %v4942 = vshrl.u32 %v4941, 7
  %v4943 = vsub.s32 0, %v4942
  %v4944 = vrot.slane %v4449, %v4943
  %v4945 = vlaneseq
  %v4946 = vshrl.u32 %v4945, 7
  %v4947 = vsub.s32 0, %v4946
  %v4948 = vrot.slane %v4451, %v4947
  %v4949 = vlaneseq
  %v4950 = vshrl.u32 %v4949, 7
  %v4951 = vsub.s32 0, %v4950
  %v4952 = vrot.slane %v4434, %v4951
  %v4953 = vlaneseq
  %v4954 = vshrl.u32 %v4953, 7
  %v4955 = vsub.s32 0, %v4954
  %v4956 = vrot.slane %v4448, %v4955
  %v4957 = vlaneseq
  %v4958 = vshrl.u32 %v4957, 7
  %v4959 = vsub.s32 0, %v4958
  %v4960 = vrot.slane %v4450, %v4959
  %v4961 = vlaneseq
  %v4962 = vshrl.u32 %v4961, 7
  %v4963 = vsub.s32 0, %v4962
  %v4964 = vrot.slane %v4452, %v4963
  %v4965 = vld [vmem:[%s12] sm:$0xff]
  %v4966 = vld [vmem:[%s12 + $0x8] sm:$0xff]
  %v4967 = vld [vmem:[%s12 + $0x10] sm:$0xff]
  %v4968 = vld [vmem:[%s12 + $0x18] sm:$0xff]
  %v4969 = vld [vmem:[%s12 + $0x20] sm:$0xff]
  %v4970 = vld [vmem:[%s12 + $0x28] sm:$0xff]
  %v4971 = vld [vmem:[%s12 + $0x30] sm:$0xff]
  %v4972 = vld [vmem:[%s12 + $0x38] sm:$0xff]
  %v4973 = vld [vmem:[%s12 + $0x40] sm:$0xff]
  %v4974 = vld [vmem:[%s12 + $0x48] sm:$0xff]
  %v4975 = vld [vmem:[%s12 + $0x50] sm:$0xff]
  %v4976 = vld [vmem:[%s12 + $0x58] sm:$0xff]
  %v4977 = vld [vmem:[%s12 + $0x60] sm:$0xff]
  %v4978 = vld [vmem:[%s12 + $0x68] sm:$0xff]
  %v4979 = vld [vmem:[%s12 + $0x70] sm:$0xff]
  %v4980 = vld [vmem:[%s12 + $0x78] sm:$0xff]
  %v4981 = vld [vmem:[%s12 + $0x80] sm:$0xff]
  %v4982 = vld [vmem:[%s12 + $0x88] sm:$0xff]
  %v4983 = vld [vmem:[%s12 + $0x90] sm:$0xff]
  %v4984 = vld [vmem:[%s12 + $0x98] sm:$0xff]
  %v4985 = vld [vmem:[%s12 + $0xa0] sm:$0xff]
  %v4986 = vld [vmem:[%s12 + $0xa8] sm:$0xff]
  %v4987 = vld [vmem:[%s12 + $0xb0] sm:$0xff]
  %v4988 = vld [vmem:[%s12 + $0xb8] sm:$0xff]
  %v4989 = vld [vmem:[%s12 + $0xc0] sm:$0xff]
  %v4990 = vld [vmem:[%s12 + $0xc8] sm:$0xff]
  %v4991 = vld [vmem:[%s12 + $0xd0] sm:$0xff]
  %v4992 = vld [vmem:[%s12 + $0xd8] sm:$0xff]
  %v4993 = vld [vmem:[%s12 + $0xe0] sm:$0xff]
  %v4994 = vld [vmem:[%s12 + $0xe8] sm:$0xff]
  %v4995 = vld [vmem:[%s12 + $0xf0] sm:$0xff]
  %v4996 = vld [vmem:[%s12 + $0xf8] sm:$0xff]
  %v4997 = vld [vmem:[%s12 + $0x100] sm:$0xff]
  %v4998 = vld [vmem:[%s12 + $0x108] sm:$0xff]
  %v4999 = vld [vmem:[%s12 + $0x110] sm:$0xff]
  %v5000 = vld [vmem:[%s12 + $0x118] sm:$0xff]
  %v5001 = vld [vmem:[%s13] sm:$0x1]
  %v5002 = vcombine.low %v4456, %v4460
  %v5003 = vcombine.low %v4464, %v4468
  %v5005 = vunpack.c.l.s4 1983009808
  %v5006 = vunpack.c.0.s8 %v5005
  %v5007 = vlaneseq
  %v5008 = vshrl.u32 %v5007, 7
  %v5009 = vsub.s32 %v5006, %v5008
  %v5010 = vrot.slane %v5002, %v5009
  %v5012 = vunpack.c.l.s4 1983009808
  %v5013 = vunpack.c.0.s8 %v5012
  %v5014 = vlaneseq
  %v5015 = vshrl.u32 %v5014, 7
  %v5016 = vsub.s32 %v5013, %v5015
  %v5017 = vrot.slane %v5003, %v5016
  %v5018 = vcombine.low %v5010, %v5017
  %v5019 = vcombine.low %v4472, %v4476
  %v5020 = vcombine.low %v4480, %v4484
  %v5022 = vunpack.c.l.s4 1983009808
  %v5023 = vunpack.c.0.s8 %v5022
  %v5024 = vlaneseq
  %v5025 = vshrl.u32 %v5024, 7
  %v5026 = vsub.s32 %v5023, %v5025
  %v5027 = vrot.slane %v5019, %v5026
  %v5029 = vunpack.c.l.s4 1983009808
  %v5030 = vunpack.c.0.s8 %v5029
  %v5031 = vlaneseq
  %v5032 = vshrl.u32 %v5031, 7
  %v5033 = vsub.s32 %v5030, %v5032
  %v5034 = vrot.slane %v5020, %v5033
  %v5035 = vcombine.low %v5027, %v5034
  %v5036 = vcombine.low %v4488, %v4492
  %v5037 = vcombine.low %v4496, %v4500
  %v5039 = vunpack.c.l.s4 1983009808
  %v5040 = vunpack.c.0.s8 %v5039
  %v5041 = vlaneseq
  %v5042 = vshrl.u32 %v5041, 7
  %v5043 = vsub.s32 %v5040, %v5042
  %v5044 = vrot.slane %v5036, %v5043
  %v5046 = vunpack.c.l.s4 1983009808
  %v5047 = vunpack.c.0.s8 %v5046
  %v5048 = vlaneseq
  %v5049 = vshrl.u32 %v5048, 7
  %v5050 = vsub.s32 %v5047, %v5049
  %v5051 = vrot.slane %v5037, %v5050
  %v5052 = vcombine.low %v5044, %v5051
  %v5053 = vcombine.low %v4504, %v4508
  %v5054 = vcombine.low %v4512, %v4516
  %v5056 = vunpack.c.l.s4 1983009808
  %v5057 = vunpack.c.0.s8 %v5056
  %v5058 = vlaneseq
  %v5059 = vshrl.u32 %v5058, 7
  %v5060 = vsub.s32 %v5057, %v5059
  %v5061 = vrot.slane %v5053, %v5060
  %v5063 = vunpack.c.l.s4 1983009808
  %v5064 = vunpack.c.0.s8 %v5063
  %v5065 = vlaneseq
  %v5066 = vshrl.u32 %v5065, 7
  %v5067 = vsub.s32 %v5064, %v5066
  %v5068 = vrot.slane %v5054, %v5067
  %v5069 = vcombine.low %v5061, %v5068
  %v5070 = vcombine.low %v4520, %v4524
  %v5071 = vcombine.low %v4528, %v4532
  %v5073 = vunpack.c.l.s4 1983009808
  %v5074 = vunpack.c.0.s8 %v5073
  %v5075 = vlaneseq
  %v5076 = vshrl.u32 %v5075, 7
  %v5077 = vsub.s32 %v5074, %v5076
  %v5078 = vrot.slane %v5070, %v5077
  %v5080 = vunpack.c.l.s4 1983009808
  %v5081 = vunpack.c.0.s8 %v5080
  %v5082 = vlaneseq
  %v5083 = vshrl.u32 %v5082, 7
  %v5084 = vsub.s32 %v5081, %v5083
  %v5085 = vrot.slane %v5071, %v5084
  %v5086 = vcombine.low %v5078, %v5085
  %v5087 = vcombine.low %v4536, %v4540
  %v5088 = vcombine.low %v4544, %v4548
  %v5090 = vunpack.c.l.s4 1983009808
  %v5091 = vunpack.c.0.s8 %v5090
  %v5092 = vlaneseq
  %v5093 = vshrl.u32 %v5092, 7
  %v5094 = vsub.s32 %v5091, %v5093
  %v5095 = vrot.slane %v5087, %v5094
  %v5097 = vunpack.c.l.s4 1983009808
  %v5098 = vunpack.c.0.s8 %v5097
  %v5099 = vlaneseq
  %v5100 = vshrl.u32 %v5099, 7
  %v5101 = vsub.s32 %v5098, %v5100
  %v5102 = vrot.slane %v5088, %v5101
  %v5103 = vcombine.low %v5095, %v5102
  %v5104 = vcombine.low %v4552, %v4556
  %v5105 = vcombine.low %v4560, %v4564
  %v5107 = vunpack.c.l.s4 1983009808
  %v5108 = vunpack.c.0.s8 %v5107
  %v5109 = vlaneseq
  %v5110 = vshrl.u32 %v5109, 7
  %v5111 = vsub.s32 %v5108, %v5110
  %v5112 = vrot.slane %v5104, %v5111
  %v5114 = vunpack.c.l.s4 1983009808
  %v5115 = vunpack.c.0.s8 %v5114
  %v5116 = vlaneseq
  %v5117 = vshrl.u32 %v5116, 7
  %v5118 = vsub.s32 %v5115, %v5117
  %v5119 = vrot.slane %v5105, %v5118
  %v5120 = vcombine.low %v5112, %v5119
  %v5121 = vcombine.low %v4568, %v4572
  %v5122 = vcombine.low %v4576, %v4580
  %v5124 = vunpack.c.l.s4 1983009808
  %v5125 = vunpack.c.0.s8 %v5124
  %v5126 = vlaneseq
  %v5127 = vshrl.u32 %v5126, 7
  %v5128 = vsub.s32 %v5125, %v5127
  %v5129 = vrot.slane %v5121, %v5128
  %v5131 = vunpack.c.l.s4 1983009808
  %v5132 = vunpack.c.0.s8 %v5131
  %v5133 = vlaneseq
  %v5134 = vshrl.u32 %v5133, 7
  %v5135 = vsub.s32 %v5132, %v5134
  %v5136 = vrot.slane %v5122, %v5135
  %v5137 = vcombine.low %v5129, %v5136
  %v5138 = vcombine.low %v4584, %v4588
  %v5139 = vcombine.low %v4592, %v4596
  %v5141 = vunpack.c.l.s4 1983009808
  %v5142 = vunpack.c.0.s8 %v5141
  %v5143 = vlaneseq
  %v5144 = vshrl.u32 %v5143, 7
  %v5145 = vsub.s32 %v5142, %v5144
  %v5146 = vrot.slane %v5138, %v5145
  %v5148 = vunpack.c.l.s4 1983009808
  %v5149 = vunpack.c.0.s8 %v5148
  %v5150 = vlaneseq
  %v5151 = vshrl.u32 %v5150, 7
  %v5152 = vsub.s32 %v5149, %v5151
  %v5153 = vrot.slane %v5139, %v5152
  %v5154 = vcombine.low %v5146, %v5153
  %v5155 = vcombine.low %v4600, %v4604
  %v5156 = vcombine.low %v4608, %v4612
  %v5158 = vunpack.c.l.s4 1983009808
  %v5159 = vunpack.c.0.s8 %v5158
  %v5160 = vlaneseq
  %v5161 = vshrl.u32 %v5160, 7
  %v5162 = vsub.s32 %v5159, %v5161
  %v5163 = vrot.slane %v5155, %v5162
  %v5165 = vunpack.c.l.s4 1983009808
  %v5166 = vunpack.c.0.s8 %v5165
  %v5167 = vlaneseq
  %v5168 = vshrl.u32 %v5167, 7
  %v5169 = vsub.s32 %v5166, %v5168
  %v5170 = vrot.slane %v5156, %v5169
  %v5171 = vcombine.low %v5163, %v5170
  %v5172 = vcombine.low %v4616, %v4620
  %v5173 = vcombine.low %v4624, %v4628
  %v5175 = vunpack.c.l.s4 1983009808
  %v5176 = vunpack.c.0.s8 %v5175
  %v5177 = vlaneseq
  %v5178 = vshrl.u32 %v5177, 7
  %v5179 = vsub.s32 %v5176, %v5178
  %v5180 = vrot.slane %v5172, %v5179
  %v5182 = vunpack.c.l.s4 1983009808
  %v5183 = vunpack.c.0.s8 %v5182
  %v5184 = vlaneseq
  %v5185 = vshrl.u32 %v5184, 7
  %v5186 = vsub.s32 %v5183, %v5185
  %v5187 = vrot.slane %v5173, %v5186
  %v5188 = vcombine.low %v5180, %v5187
  %v5189 = vcombine.low %v4632, %v4636
  %v5190 = vcombine.low %v4640, %v4644
  %v5192 = vunpack.c.l.s4 1983009808
  %v5193 = vunpack.c.0.s8 %v5192
  %v5194 = vlaneseq
  %v5195 = vshrl.u32 %v5194, 7
  %v5196 = vsub.s32 %v5193, %v5195
  %v5197 = vrot.slane %v5189, %v5196
  %v5199 = vunpack.c.l.s4 1983009808
  %v5200 = vunpack.c.0.s8 %v5199
  %v5201 = vlaneseq
  %v5202 = vshrl.u32 %v5201, 7
  %v5203 = vsub.s32 %v5200, %v5202
  %v5204 = vrot.slane %v5190, %v5203
  %v5205 = vcombine.low %v5197, %v5204
  %v5206 = vcombine.low %v4648, %v4652
  %v5207 = vcombine.low %v4656, %v4660
  %v5209 = vunpack.c.l.s4 1983009808
  %v5210 = vunpack.c.0.s8 %v5209
  %v5211 = vlaneseq
  %v5212 = vshrl.u32 %v5211, 7
  %v5213 = vsub.s32 %v5210, %v5212
  %v5214 = vrot.slane %v5206, %v5213
  %v5216 = vunpack.c.l.s4 1983009808
  %v5217 = vunpack.c.0.s8 %v5216
  %v5218 = vlaneseq
  %v5219 = vshrl.u32 %v5218, 7
  %v5220 = vsub.s32 %v5217, %v5219
  %v5221 = vrot.slane %v5207, %v5220
  %v5222 = vcombine.low %v5214, %v5221
  %v5223 = vcombine.low %v4664, %v4668
  %v5224 = vcombine.low %v4672, %v4676
  %v5226 = vunpack.c.l.s4 1983009808
  %v5227 = vunpack.c.0.s8 %v5226
  %v5228 = vlaneseq
  %v5229 = vshrl.u32 %v5228, 7
  %v5230 = vsub.s32 %v5227, %v5229
  %v5231 = vrot.slane %v5223, %v5230
  %v5233 = vunpack.c.l.s4 1983009808
  %v5234 = vunpack.c.0.s8 %v5233
  %v5235 = vlaneseq
  %v5236 = vshrl.u32 %v5235, 7
  %v5237 = vsub.s32 %v5234, %v5236
  %v5238 = vrot.slane %v5224, %v5237
  %v5239 = vcombine.low %v5231, %v5238
  %v5240 = vcombine.low %v4680, %v4684
  %v5241 = vcombine.low %v4688, %v4692
  %v5243 = vunpack.c.l.s4 1983009808
  %v5244 = vunpack.c.0.s8 %v5243
  %v5245 = vlaneseq
  %v5246 = vshrl.u32 %v5245, 7
  %v5247 = vsub.s32 %v5244, %v5246
  %v5248 = vrot.slane %v5240, %v5247
  %v5250 = vunpack.c.l.s4 1983009808
  %v5251 = vunpack.c.0.s8 %v5250
  %v5252 = vlaneseq
  %v5253 = vshrl.u32 %v5252, 7
  %v5254 = vsub.s32 %v5251, %v5253
  %v5255 = vrot.slane %v5241, %v5254
  %v5256 = vcombine.low %v5248, %v5255
  %v5257 = vcombine.low %v4696, %v4700
  %v5258 = vcombine.low %v4704, %v4708
  %v5260 = vunpack.c.l.s4 1983009808
  %v5261 = vunpack.c.0.s8 %v5260
  %v5262 = vlaneseq
  %v5263 = vshrl.u32 %v5262, 7
  %v5264 = vsub.s32 %v5261, %v5263
  %v5265 = vrot.slane %v5257, %v5264
  %v5267 = vunpack.c.l.s4 1983009808
  %v5268 = vunpack.c.0.s8 %v5267
  %v5269 = vlaneseq
  %v5270 = vshrl.u32 %v5269, 7
  %v5271 = vsub.s32 %v5268, %v5270
  %v5272 = vrot.slane %v5258, %v5271
  %v5273 = vcombine.low %v5265, %v5272
  %v5274 = vcombine.low %v4712, %v4716
  %v5275 = vcombine.low %v4720, %v4724
  %v5277 = vunpack.c.l.s4 1983009808
  %v5278 = vunpack.c.0.s8 %v5277
  %v5279 = vlaneseq
  %v5280 = vshrl.u32 %v5279, 7
  %v5281 = vsub.s32 %v5278, %v5280
  %v5282 = vrot.slane %v5274, %v5281
  %v5284 = vunpack.c.l.s4 1983009808
  %v5285 = vunpack.c.0.s8 %v5284
  %v5286 = vlaneseq
  %v5287 = vshrl.u32 %v5286, 7
  %v5288 = vsub.s32 %v5285, %v5287
  %v5289 = vrot.slane %v5275, %v5288
  %v5290 = vcombine.low %v5282, %v5289
  %v5291 = vcombine.low %v4728, %v4732
  %v5292 = vcombine.low %v4736, %v4740
  %v5294 = vunpack.c.l.s4 1983009808
  %v5295 = vunpack.c.0.s8 %v5294
  %v5296 = vlaneseq
  %v5297 = vshrl.u32 %v5296, 7
  %v5298 = vsub.s32 %v5295, %v5297
  %v5299 = vrot.slane %v5291, %v5298
  %v5301 = vunpack.c.l.s4 1983009808
  %v5302 = vunpack.c.0.s8 %v5301
  %v5303 = vlaneseq
  %v5304 = vshrl.u32 %v5303, 7
  %v5305 = vsub.s32 %v5302, %v5304
  %v5306 = vrot.slane %v5292, %v5305
  %v5307 = vcombine.low %v5299, %v5306
  %v5308 = vcombine.low %v4744, %v4748
  %v5309 = vcombine.low %v4752, %v4756
  %v5311 = vunpack.c.l.s4 1983009808
  %v5312 = vunpack.c.0.s8 %v5311
  %v5313 = vlaneseq
  %v5314 = vshrl.u32 %v5313, 7
  %v5315 = vsub.s32 %v5312, %v5314
  %v5316 = vrot.slane %v5308, %v5315
  %v5318 = vunpack.c.l.s4 1983009808
  %v5319 = vunpack.c.0.s8 %v5318
  %v5320 = vlaneseq
  %v5321 = vshrl.u32 %v5320, 7
  %v5322 = vsub.s32 %v5319, %v5321
  %v5323 = vrot.slane %v5309, %v5322
  %v5324 = vcombine.low %v5316, %v5323
  %v5325 = vcombine.low %v4760, %v4764
  %v5326 = vcombine.low %v4768, %v4772
  %v5328 = vunpack.c.l.s4 1983009808
  %v5329 = vunpack.c.0.s8 %v5328
  %v5330 = vlaneseq
  %v5331 = vshrl.u32 %v5330, 7
  %v5332 = vsub.s32 %v5329, %v5331
  %v5333 = vrot.slane %v5325, %v5332
  %v5335 = vunpack.c.l.s4 1983009808
  %v5336 = vunpack.c.0.s8 %v5335
  %v5337 = vlaneseq
  %v5338 = vshrl.u32 %v5337, 7
  %v5339 = vsub.s32 %v5336, %v5338
  %v5340 = vrot.slane %v5326, %v5339
  %v5341 = vcombine.low %v5333, %v5340
  %v5342 = vcombine.low %v4776, %v4780
  %v5343 = vcombine.low %v4784, %v4788
  %v5345 = vunpack.c.l.s4 1983009808
  %v5346 = vunpack.c.0.s8 %v5345
  %v5347 = vlaneseq
  %v5348 = vshrl.u32 %v5347, 7
  %v5349 = vsub.s32 %v5346, %v5348
  %v5350 = vrot.slane %v5342, %v5349
  %v5352 = vunpack.c.l.s4 1983009808
  %v5353 = vunpack.c.0.s8 %v5352
  %v5354 = vlaneseq
  %v5355 = vshrl.u32 %v5354, 7
  %v5356 = vsub.s32 %v5353, %v5355
  %v5357 = vrot.slane %v5343, %v5356
  %v5358 = vcombine.low %v5350, %v5357
  %v5359 = vcombine.low %v4792, %v4796
  %v5360 = vcombine.low %v4800, %v4804
  %v5362 = vunpack.c.l.s4 1983009808
  %v5363 = vunpack.c.0.s8 %v5362
  %v5364 = vlaneseq
  %v5365 = vshrl.u32 %v5364, 7
  %v5366 = vsub.s32 %v5363, %v5365
  %v5367 = vrot.slane %v5359, %v5366
  %v5369 = vunpack.c.l.s4 1983009808
  %v5370 = vunpack.c.0.s8 %v5369
  %v5371 = vlaneseq
  %v5372 = vshrl.u32 %v5371, 7
  %v5373 = vsub.s32 %v5370, %v5372
  %v5374 = vrot.slane %v5360, %v5373
  %v5375 = vcombine.low %v5367, %v5374
  %v5376 = vcombine.low %v4808, %v4812
  %v5377 = vcombine.low %v4816, %v4820
  %v5379 = vunpack.c.l.s4 1983009808
  %v5380 = vunpack.c.0.s8 %v5379
  %v5381 = vlaneseq
  %v5382 = vshrl.u32 %v5381, 7
  %v5383 = vsub.s32 %v5380, %v5382
  %v5384 = vrot.slane %v5376, %v5383
  %v5386 = vunpack.c.l.s4 1983009808
  %v5387 = vunpack.c.0.s8 %v5386
  %v5388 = vlaneseq
  %v5389 = vshrl.u32 %v5388, 7
  %v5390 = vsub.s32 %v5387, %v5389
  %v5391 = vrot.slane %v5377, %v5390
  %v5392 = vcombine.low %v5384, %v5391
  %v5393 = vcombine.low %v4824, %v4828
  %v5394 = vcombine.low %v4832, %v4836
  %v5396 = vunpack.c.l.s4 1983009808
  %v5397 = vunpack.c.0.s8 %v5396
  %v5398 = vlaneseq
  %v5399 = vshrl.u32 %v5398, 7
  %v5400 = vsub.s32 %v5397, %v5399
  %v5401 = vrot.slane %v5393, %v5400
  %v5403 = vunpack.c.l.s4 1983009808
  %v5404 = vunpack.c.0.s8 %v5403
  %v5405 = vlaneseq
  %v5406 = vshrl.u32 %v5405, 7
  %v5407 = vsub.s32 %v5404, %v5406
  %v5408 = vrot.slane %v5394, %v5407
  %v5409 = vcombine.low %v5401, %v5408
  %v5410 = vcombine.low %v4840, %v4844
  %v5411 = vcombine.low %v4848, %v4852
  %v5413 = vunpack.c.l.s4 1983009808
  %v5414 = vunpack.c.0.s8 %v5413
  %v5415 = vlaneseq
  %v5416 = vshrl.u32 %v5415, 7
  %v5417 = vsub.s32 %v5414, %v5416
  %v5418 = vrot.slane %v5410, %v5417
  %v5420 = vunpack.c.l.s4 1983009808
  %v5421 = vunpack.c.0.s8 %v5420
  %v5422 = vlaneseq
  %v5423 = vshrl.u32 %v5422, 7
  %v5424 = vsub.s32 %v5421, %v5423
  %v5425 = vrot.slane %v5411, %v5424
  %v5426 = vcombine.low %v5418, %v5425
  %v5427 = vcombine.low %v4856, %v4860
  %v5428 = vcombine.low %v4864, %v4868
  %v5430 = vunpack.c.l.s4 1983009808
  %v5431 = vunpack.c.0.s8 %v5430
  %v5432 = vlaneseq
  %v5433 = vshrl.u32 %v5432, 7
  %v5434 = vsub.s32 %v5431, %v5433
  %v5435 = vrot.slane %v5427, %v5434
  %v5437 = vunpack.c.l.s4 1983009808
  %v5438 = vunpack.c.0.s8 %v5437
  %v5439 = vlaneseq
  %v5440 = vshrl.u32 %v5439, 7
  %v5441 = vsub.s32 %v5438, %v5440
  %v5442 = vrot.slane %v5428, %v5441
  %v5443 = vcombine.low %v5435, %v5442
  %v5444 = vcombine.low %v4872, %v4876
  %v5445 = vcombine.low %v4880, %v4884
  %v5447 = vunpack.c.l.s4 1983009808
  %v5448 = vunpack.c.0.s8 %v5447
  %v5449 = vlaneseq
  %v5450 = vshrl.u32 %v5449, 7
  %v5451 = vsub.s32 %v5448, %v5450
  %v5452 = vrot.slane %v5444, %v5451
  %v5454 = vunpack.c.l.s4 1983009808
  %v5455 = vunpack.c.0.s8 %v5454
  %v5456 = vlaneseq
  %v5457 = vshrl.u32 %v5456, 7
  %v5458 = vsub.s32 %v5455, %v5457
  %v5459 = vrot.slane %v5445, %v5458
  %v5460 = vcombine.low %v5452, %v5459
  %v5461 = vcombine.low %v4888, %v4892
  %v5462 = vcombine.low %v4896, %v4900
  %v5464 = vunpack.c.l.s4 1983009808
  %v5465 = vunpack.c.0.s8 %v5464
  %v5466 = vlaneseq
  %v5467 = vshrl.u32 %v5466, 7
  %v5468 = vsub.s32 %v5465, %v5467
  %v5469 = vrot.slane %v5461, %v5468
  %v5471 = vunpack.c.l.s4 1983009808
  %v5472 = vunpack.c.0.s8 %v5471
  %v5473 = vlaneseq
  %v5474 = vshrl.u32 %v5473, 7
  %v5475 = vsub.s32 %v5472, %v5474
  %v5476 = vrot.slane %v5462, %v5475
  %v5477 = vcombine.low %v5469, %v5476
  %v5478 = vcombine.low %v4904, %v4908
  %v5479 = vcombine.low %v4912, %v4916
  %v5481 = vunpack.c.l.s4 1983009808
  %v5482 = vunpack.c.0.s8 %v5481
  %v5483 = vlaneseq
  %v5484 = vshrl.u32 %v5483, 7
  %v5485 = vsub.s32 %v5482, %v5484
  %v5486 = vrot.slane %v5478, %v5485
  %v5488 = vunpack.c.l.s4 1983009808
  %v5489 = vunpack.c.0.s8 %v5488
  %v5490 = vlaneseq
  %v5491 = vshrl.u32 %v5490, 7
  %v5492 = vsub.s32 %v5489, %v5491
  %v5493 = vrot.slane %v5479, %v5492
  %v5494 = vcombine.low %v5486, %v5493
  %v5495 = vcombine.low %v4920, %v4924
  %v5496 = vcombine.low %v4928, %v4932
  %v5498 = vunpack.c.l.s4 1983009808
  %v5499 = vunpack.c.0.s8 %v5498
  %v5500 = vlaneseq
  %v5501 = vshrl.u32 %v5500, 7
  %v5502 = vsub.s32 %v5499, %v5501
  %v5503 = vrot.slane %v5495, %v5502
  %v5505 = vunpack.c.l.s4 1983009808
  %v5506 = vunpack.c.0.s8 %v5505
  %v5507 = vlaneseq
  %v5508 = vshrl.u32 %v5507, 7
  %v5509 = vsub.s32 %v5506, %v5508
  %v5510 = vrot.slane %v5496, %v5509
  %v5511 = vcombine.low %v5503, %v5510
  %v5512 = vcombine.low %v4936, %v4940
  %v5513 = vcombine.low %v4944, %v4948
  %v5515 = vunpack.c.l.s4 1983009808
  %v5516 = vunpack.c.0.s8 %v5515
  %v5517 = vlaneseq
  %v5518 = vshrl.u32 %v5517, 7
  %v5519 = vsub.s32 %v5516, %v5518
  %v5520 = vrot.slane %v5512, %v5519
  %v5522 = vunpack.c.l.s4 1983009808
  %v5523 = vunpack.c.0.s8 %v5522
  %v5524 = vlaneseq
  %v5525 = vshrl.u32 %v5524, 7
  %v5526 = vsub.s32 %v5523, %v5525
  %v5527 = vrot.slane %v5513, %v5526
  %v5528 = vcombine.low %v5520, %v5527
  %v5529 = vcombine.low %v4952, %v4956
  %v5530 = vcombine.low %v4960, %v4964
  %v5532 = vunpack.c.l.s4 1983009808
  %v5533 = vunpack.c.0.s8 %v5532
  %v5534 = vlaneseq
  %v5535 = vshrl.u32 %v5534, 7
  %v5536 = vsub.s32 %v5533, %v5535
  %v5537 = vrot.slane %v5529, %v5536
  %v5539 = vunpack.c.l.s4 1983009808
  %v5540 = vunpack.c.0.s8 %v5539
  %v5541 = vlaneseq
  %v5542 = vshrl.u32 %v5541, 7
  %v5543 = vsub.s32 %v5540, %v5542
  %v5544 = vrot.slane %v5530, %v5543
  %v5545 = vcombine.low %v5537, %v5544
  %v5546 = vsel %vm264, %v556, %v556
  %v5547 = vrot.slane %v5018, 7
  %v5548 = vrot.slane %v5035, 7
  %v5549 = vsel %vm264, %v5547, %v5548
  %v5550 = vrot.slane %v5052, 7
  %v5551 = vrot.slane %v5069, 7
  %v5552 = vsel %vm264, %v5550, %v5551
  %v5553 = vrot.slane %v5086, 7
  %v5554 = vrot.slane %v5103, 7
  %v5555 = vsel %vm264, %v5553, %v5554
  %v5556 = vrot.slane %v5120, 7
  %v5557 = vrot.slane %v5137, 7
  %v5558 = vsel %vm264, %v5556, %v5557
  %v5559 = vrot.slane %v5154, 7
  %v5560 = vrot.slane %v5171, 7
  %v5561 = vsel %vm264, %v5559, %v5560
  %v5562 = vrot.slane %v5188, 7
  %v5563 = vrot.slane %v5205, 7
  %v5564 = vsel %vm264, %v5562, %v5563
  %v5565 = vrot.slane %v5222, 7
  %v5566 = vrot.slane %v5239, 7
  %v5567 = vsel %vm264, %v5565, %v5566
  %v5568 = vrot.slane %v5256, 7
  %v5569 = vrot.slane %v5273, 7
  %v5570 = vsel %vm264, %v5568, %v5569
  %v5571 = vrot.slane %v5290, 7
  %v5572 = vrot.slane %v5307, 7
  %v5573 = vsel %vm264, %v5571, %v5572
  %v5574 = vrot.slane %v5324, 7
  %v5575 = vrot.slane %v5341, 7
  %v5576 = vsel %vm264, %v5574, %v5575
  %v5577 = vrot.slane %v5358, 7
  %v5578 = vrot.slane %v5375, 7
  %v5579 = vsel %vm264, %v5577, %v5578
  %v5580 = vrot.slane %v5392, 7
  %v5581 = vrot.slane %v5409, 7
  %v5582 = vsel %vm264, %v5580, %v5581
  %v5583 = vrot.slane %v5426, 7
  %v5584 = vrot.slane %v5443, 7
  %v5585 = vsel %vm264, %v5583, %v5584
  %v5586 = vrot.slane %v5460, 7
  %v5587 = vrot.slane %v5477, 7
  %v5588 = vsel %vm264, %v5586, %v5587
  %v5589 = vrot.slane %v5494, 7
  %v5590 = vrot.slane %v5511, 7
  %v5591 = vsel %vm264, %v5589, %v5590
  %v5592 = vrot.slane %v5528, 7
  %v5593 = vrot.slane %v5545, 7
  %v5594 = vsel %vm264, %v5592, %v5593
  %v5644 = vsel %vm264, 0.0, %v5547
  %v5645 = vsel %vm264, 0.0, %v5550
  %v5646 = vsel %vm264, 0.0, %v5553
  %v5647 = vsel %vm264, 0.0, %v5556
  %v5648 = vsel %vm264, 0.0, %v5559
  %v5649 = vsel %vm264, 0.0, %v5562
  %v5650 = vsel %vm264, 0.0, %v5565
  %v5651 = vsel %vm264, 0.0, %v5568
  %v5652 = vsel %vm264, 0.0, %v5571
  %v5653 = vsel %vm264, 0.0, %v5574
  %v5654 = vsel %vm264, 0.0, %v5577
  %v5655 = vsel %vm264, 0.0, %v5580
  %v5656 = vsel %vm264, 0.0, %v5583
  %v5657 = vsel %vm264, 0.0, %v5586
  %v5658 = vsel %vm264, 0.0, %v5589
  %v5659 = vsel %vm264, 0.0, %v5592
  %v5660 = vsel %vm264, %v5548, 0.0
  %v5661 = vsel %vm264, %v5551, 0.0
  %v5662 = vsel %vm264, %v5554, 0.0
  %v5663 = vsel %vm264, %v5557, 0.0
  %v5664 = vsel %vm264, %v5560, 0.0
  %v5665 = vsel %vm264, %v5563, 0.0
  %v5666 = vsel %vm264, %v5566, 0.0
  %v5667 = vsel %vm264, %v5569, 0.0
  %v5668 = vsel %vm264, %v5572, 0.0
  %v5669 = vsel %vm264, %v5575, 0.0
  %v5670 = vsel %vm264, %v5578, 0.0
  %v5671 = vsel %vm264, %v5581, 0.0
  %v5672 = vsel %vm264, %v5584, 0.0
  %v5673 = vsel %vm264, %v5587, 0.0
  %v5674 = vsel %vm264, %v5590, 0.0
  %v5675 = vsel %vm264, %v5593, 0.0
  %v5708 = vrot.slane %v5546, 1
  %v5709 = vsel %vm1962, %v1963, %v5708
  %v5710 = vsel %vm1962, %v5708, %v1964
  %v5711 = vrot.slane %v5644, 1
  %v5712 = vrot.slane %v5549, 1
  %v5713 = vsel %vm1962, %v5711, %v5712
  %v5714 = vrot.slane %v5660, 1
  %v5715 = vsel %vm1962, %v5712, %v5714
  %v5716 = vrot.slane %v5645, 1
  %v5717 = vrot.slane %v5552, 1
  %v5718 = vsel %vm1962, %v5716, %v5717
  %v5719 = vrot.slane %v5661, 1
  %v5720 = vsel %vm1962, %v5717, %v5719
  %v5721 = vrot.slane %v5646, 1
  %v5722 = vrot.slane %v5555, 1
  %v5723 = vsel %vm1962, %v5721, %v5722
  %v5724 = vrot.slane %v5662, 1
  %v5725 = vsel %vm1962, %v5722, %v5724
  %v5726 = vrot.slane %v5647, 1
  %v5727 = vrot.slane %v5558, 1
  %v5728 = vsel %vm1962, %v5726, %v5727
  %v5729 = vrot.slane %v5663, 1
  %v5730 = vsel %vm1962, %v5727, %v5729
  %v5731 = vrot.slane %v5648, 1
  %v5732 = vrot.slane %v5561, 1
  %v5733 = vsel %vm1962, %v5731, %v5732
  %v5734 = vrot.slane %v5664, 1
  %v5735 = vsel %vm1962, %v5732, %v5734
  %v5736 = vrot.slane %v5649, 1
  %v5737 = vrot.slane %v5564, 1
  %v5738 = vsel %vm1962, %v5736, %v5737
  %v5739 = vrot.slane %v5665, 1
  %v5740 = vsel %vm1962, %v5737, %v5739
  %v5741 = vrot.slane %v5650, 1
  %v5742 = vrot.slane %v5567, 1
  %v5743 = vsel %vm1962, %v5741, %v5742
  %v5744 = vrot.slane %v5666, 1
  %v5745 = vsel %vm1962, %v5742, %v5744
  %v5746 = vrot.slane %v5651, 1
  %v5747 = vrot.slane %v5570, 1
  %v5748 = vsel %vm1962, %v5746, %v5747
  %v5749 = vrot.slane %v5667, 1
  %v5750 = vsel %vm1962, %v5747, %v5749
  %v5751 = vrot.slane %v5652, 1
  %v5752 = vrot.slane %v5573, 1
  %v5753 = vsel %vm1962, %v5751, %v5752
  %v5754 = vrot.slane %v5668, 1
  %v5755 = vsel %vm1962, %v5752, %v5754
  %v5756 = vrot.slane %v5653, 1
  %v5757 = vrot.slane %v5576, 1
  %v5758 = vsel %vm1962, %v5756, %v5757
  %v5759 = vrot.slane %v5669, 1
  %v5760 = vsel %vm1962, %v5757, %v5759
  %v5761 = vrot.slane %v5654, 1
  %v5762 = vrot.slane %v5579, 1
  %v5763 = vsel %vm1962, %v5761, %v5762
  %v5764 = vrot.slane %v5670, 1
  %v5765 = vsel %vm1962, %v5762, %v5764
  %v5766 = vrot.slane %v5655, 1
  %v5767 = vrot.slane %v5582, 1
  %v5768 = vsel %vm1962, %v5766, %v5767
  %v5769 = vrot.slane %v5671, 1
  %v5770 = vsel %vm1962, %v5767, %v5769
  %v5771 = vrot.slane %v5656, 1
  %v5772 = vrot.slane %v5585, 1
  %v5773 = vsel %vm1962, %v5771, %v5772
  %v5774 = vrot.slane %v5672, 1
  %v5775 = vsel %vm1962, %v5772, %v5774
  %v5776 = vrot.slane %v5657, 1
  %v5777 = vrot.slane %v5588, 1
  %v5778 = vsel %vm1962, %v5776, %v5777
  %v5779 = vrot.slane %v5673, 1
  %v5780 = vsel %vm1962, %v5777, %v5779
  %v5781 = vrot.slane %v5658, 1
  %v5782 = vrot.slane %v5591, 1
  %v5783 = vsel %vm1962, %v5781, %v5782
  %v5784 = vrot.slane %v5674, 1
  %v5785 = vsel %vm1962, %v5782, %v5784
  %v5786 = vrot.slane %v5659, 1
  %v5787 = vrot.slane %v5594, 1
  %v5788 = vsel %vm1962, %v5786, %v5787
  %v5789 = vrot.slane %v5675, 1
  %v5790 = vsel %vm1962, %v5787, %v5789
  %5791 = vrot.lane.b32.xlu0 %v5709, 32
  %v5792 = vpop.permute.xlu0 %5791
  %5793 = vrot.lane.b32.xlu0 %v5710, 32
  %v5794 = vpop.permute.xlu0 %5793
  %5795 = vrot.lane.b32.xlu0 %v5713, 32
  %v5796 = vpop.permute.xlu0 %5795
  %5797 = vrot.lane.b32.xlu0 %v5715, 32
  %v5798 = vpop.permute.xlu0 %5797
  %5799 = vrot.lane.b32.xlu0 %v5718, 32
  %v5800 = vpop.permute.xlu0 %5799
  %5801 = vrot.lane.b32.xlu0 %v5720, 32
  %v5802 = vpop.permute.xlu0 %5801
  %5803 = vrot.lane.b32.xlu0 %v5723, 32
  %v5804 = vpop.permute.xlu0 %5803
  %5805 = vrot.lane.b32.xlu0 %v5725, 32
  %v5806 = vpop.permute.xlu0 %5805
  %5807 = vrot.lane.b32.xlu0 %v5728, 32
  %v5808 = vpop.permute.xlu0 %5807
  %5809 = vrot.lane.b32.xlu0 %v5730, 32
  %v5810 = vpop.permute.xlu0 %5809
  %5811 = vrot.lane.b32.xlu0 %v5733, 32
  %v5812 = vpop.permute.xlu0 %5811
  %5813 = vrot.lane.b32.xlu0 %v5735, 32
  %v5814 = vpop.permute.xlu0 %5813
  %5815 = vrot.lane.b32.xlu0 %v5738, 32
  %v5816 = vpop.permute.xlu0 %5815
  %5817 = vrot.lane.b32.xlu0 %v5740, 32
  %v5818 = vpop.permute.xlu0 %5817
  %5819 = vrot.lane.b32.xlu0 %v5743, 32
  %v5820 = vpop.permute.xlu0 %5819
  %5821 = vrot.lane.b32.xlu0 %v5745, 32
  %v5822 = vpop.permute.xlu0 %5821
  %5823 = vrot.lane.b32.xlu0 %v5748, 32
  %v5824 = vpop.permute.xlu0 %5823
  %5825 = vrot.lane.b32.xlu0 %v5750, 32
  %v5826 = vpop.permute.xlu0 %5825
  %5827 = vrot.lane.b32.xlu0 %v5753, 32
  %v5828 = vpop.permute.xlu0 %5827
  %5829 = vrot.lane.b32.xlu0 %v5755, 32
  %v5830 = vpop.permute.xlu0 %5829
  %5831 = vrot.lane.b32.xlu0 %v5758, 32
  %v5832 = vpop.permute.xlu0 %5831
  %5833 = vrot.lane.b32.xlu0 %v5760, 32
  %v5834 = vpop.permute.xlu0 %5833
  %5835 = vrot.lane.b32.xlu0 %v5763, 32
  %v5836 = vpop.permute.xlu0 %5835
  %5837 = vrot.lane.b32.xlu0 %v5765, 32
  %v5838 = vpop.permute.xlu0 %5837
  %5839 = vrot.lane.b32.xlu0 %v5768, 32
  %v5840 = vpop.permute.xlu0 %5839
  %5841 = vrot.lane.b32.xlu0 %v5770, 32
  %v5842 = vpop.permute.xlu0 %5841
  %5843 = vrot.lane.b32.xlu0 %v5773, 32
  %v5844 = vpop.permute.xlu0 %5843
  %5845 = vrot.lane.b32.xlu0 %v5775, 32
  %v5846 = vpop.permute.xlu0 %5845
  %5847 = vrot.lane.b32.xlu0 %v5778, 32
  %v5848 = vpop.permute.xlu0 %5847
  %5849 = vrot.lane.b32.xlu0 %v5780, 32
  %v5850 = vpop.permute.xlu0 %5849
  %5851 = vrot.lane.b32.xlu0 %v5783, 32
  %v5852 = vpop.permute.xlu0 %5851
  %5853 = vrot.lane.b32.xlu0 %v5785, 32
  %v5854 = vpop.permute.xlu0 %5853
  %5855 = vrot.lane.b32.xlu0 %v5788, 32
  %v5856 = vpop.permute.xlu0 %5855
  %5857 = vrot.lane.b32.xlu0 %v5790, 32
  %v5858 = vpop.permute.xlu0 %5857
  %v5893 = vrot.slane %v5546, 2
  %v5894 = vsel %vm2017, %v2018, %v5893
  %v5895 = vsel %vm2017, %v5893, %v2019
  %v5896 = vrot.slane %v5644, 2
  %v5897 = vrot.slane %v5549, 2
  %v5898 = vsel %vm2017, %v5896, %v5897
  %v5899 = vrot.slane %v5660, 2
  %v5900 = vsel %vm2017, %v5897, %v5899
  %v5901 = vrot.slane %v5645, 2
  %v5902 = vrot.slane %v5552, 2
  %v5903 = vsel %vm2017, %v5901, %v5902
  %v5904 = vrot.slane %v5661, 2
  %v5905 = vsel %vm2017, %v5902, %v5904
  %v5906 = vrot.slane %v5646, 2
  %v5907 = vrot.slane %v5555, 2
  %v5908 = vsel %vm2017, %v5906, %v5907
  %v5909 = vrot.slane %v5662, 2
  %v5910 = vsel %vm2017, %v5907, %v5909
  %v5911 = vrot.slane %v5647, 2
  %v5912 = vrot.slane %v5558, 2
  %v5913 = vsel %vm2017, %v5911, %v5912
  %v5914 = vrot.slane %v5663, 2
  %v5915 = vsel %vm2017, %v5912, %v5914
  %v5916 = vrot.slane %v5648, 2
  %v5917 = vrot.slane %v5561, 2
  %v5918 = vsel %vm2017, %v5916, %v5917
  %v5919 = vrot.slane %v5664, 2
  %v5920 = vsel %vm2017, %v5917, %v5919
  %v5921 = vrot.slane %v5649, 2
  %v5922 = vrot.slane %v5564, 2
  %v5923 = vsel %vm2017, %v5921, %v5922
  %v5924 = vrot.slane %v5665, 2
  %v5925 = vsel %vm2017, %v5922, %v5924
  %v5926 = vrot.slane %v5650, 2
  %v5927 = vrot.slane %v5567, 2
  %v5928 = vsel %vm2017, %v5926, %v5927
  %v5929 = vrot.slane %v5666, 2
  %v5930 = vsel %vm2017, %v5927, %v5929
  %v5931 = vrot.slane %v5651, 2
  %v5932 = vrot.slane %v5570, 2
  %v5933 = vsel %vm2017, %v5931, %v5932
  %v5934 = vrot.slane %v5667, 2
  %v5935 = vsel %vm2017, %v5932, %v5934
  %v5936 = vrot.slane %v5652, 2
  %v5937 = vrot.slane %v5573, 2
  %v5938 = vsel %vm2017, %v5936, %v5937
  %v5939 = vrot.slane %v5668, 2
  %v5940 = vsel %vm2017, %v5937, %v5939
  %v5941 = vrot.slane %v5653, 2
  %v5942 = vrot.slane %v5576, 2
  %v5943 = vsel %vm2017, %v5941, %v5942
  %v5944 = vrot.slane %v5669, 2
  %v5945 = vsel %vm2017, %v5942, %v5944
  %v5946 = vrot.slane %v5654, 2
  %v5947 = vrot.slane %v5579, 2
  %v5948 = vsel %vm2017, %v5946, %v5947
  %v5949 = vrot.slane %v5670, 2
  %v5950 = vsel %vm2017, %v5947, %v5949
  %v5951 = vrot.slane %v5655, 2
  %v5952 = vrot.slane %v5582, 2
  %v5953 = vsel %vm2017, %v5951, %v5952
  %v5954 = vrot.slane %v5671, 2
  %v5955 = vsel %vm2017, %v5952, %v5954
  %v5956 = vrot.slane %v5656, 2
  %v5957 = vrot.slane %v5585, 2
  %v5958 = vsel %vm2017, %v5956, %v5957
  %v5959 = vrot.slane %v5672, 2
  %v5960 = vsel %vm2017, %v5957, %v5959
  %v5961 = vrot.slane %v5657, 2
  %v5962 = vrot.slane %v5588, 2
  %v5963 = vsel %vm2017, %v5961, %v5962
  %v5964 = vrot.slane %v5673, 2
  %v5965 = vsel %vm2017, %v5962, %v5964
  %v5966 = vrot.slane %v5658, 2
  %v5967 = vrot.slane %v5591, 2
  %v5968 = vsel %vm2017, %v5966, %v5967
  %v5969 = vrot.slane %v5674, 2
  %v5970 = vsel %vm2017, %v5967, %v5969
  %v5971 = vrot.slane %v5659, 2
  %v5972 = vrot.slane %v5594, 2
  %v5973 = vsel %vm2017, %v5971, %v5972
  %v5974 = vrot.slane %v5675, 2
  %v5975 = vsel %vm2017, %v5972, %v5974
  %5976 = vrot.lane.b32.xlu0 %v5894, 64
  %v5977 = vpop.permute.xlu0 %5976
  %5978 = vrot.lane.b32.xlu0 %v5895, 64
  %v5979 = vpop.permute.xlu0 %5978
  %5980 = vrot.lane.b32.xlu0 %v5898, 64
  %v5981 = vpop.permute.xlu0 %5980
  %5982 = vrot.lane.b32.xlu0 %v5900, 64
  %v5983 = vpop.permute.xlu0 %5982
  %5984 = vrot.lane.b32.xlu0 %v5903, 64
  %v5985 = vpop.permute.xlu0 %5984
  %5986 = vrot.lane.b32.xlu0 %v5905, 64
  %v5987 = vpop.permute.xlu0 %5986
  %5988 = vrot.lane.b32.xlu0 %v5908, 64
  %v5989 = vpop.permute.xlu0 %5988
  %5990 = vrot.lane.b32.xlu0 %v5910, 64
  %v5991 = vpop.permute.xlu0 %5990
  %5992 = vrot.lane.b32.xlu0 %v5913, 64
  %v5993 = vpop.permute.xlu0 %5992
  %5994 = vrot.lane.b32.xlu0 %v5915, 64
  %v5995 = vpop.permute.xlu0 %5994
  %5996 = vrot.lane.b32.xlu0 %v5918, 64
  %v5997 = vpop.permute.xlu0 %5996
  %5998 = vrot.lane.b32.xlu0 %v5920, 64
  %v5999 = vpop.permute.xlu0 %5998
  %6000 = vrot.lane.b32.xlu0 %v5923, 64
  %v6001 = vpop.permute.xlu0 %6000
  %6002 = vrot.lane.b32.xlu0 %v5925, 64
  %v6003 = vpop.permute.xlu0 %6002
  %6004 = vrot.lane.b32.xlu0 %v5928, 64
  %v6005 = vpop.permute.xlu0 %6004
  %6006 = vrot.lane.b32.xlu0 %v5930, 64
  %v6007 = vpop.permute.xlu0 %6006
  %6008 = vrot.lane.b32.xlu0 %v5933, 64
  %v6009 = vpop.permute.xlu0 %6008
  %6010 = vrot.lane.b32.xlu0 %v5935, 64
  %v6011 = vpop.permute.xlu0 %6010
  %6012 = vrot.lane.b32.xlu0 %v5938, 64
  %v6013 = vpop.permute.xlu0 %6012
  %6014 = vrot.lane.b32.xlu0 %v5940, 64
  %v6015 = vpop.permute.xlu0 %6014
  %6016 = vrot.lane.b32.xlu0 %v5943, 64
  %v6017 = vpop.permute.xlu0 %6016
  %6018 = vrot.lane.b32.xlu0 %v5945, 64
  %v6019 = vpop.permute.xlu0 %6018
  %6020 = vrot.lane.b32.xlu0 %v5948, 64
  %v6021 = vpop.permute.xlu0 %6020
  %6022 = vrot.lane.b32.xlu0 %v5950, 64
  %v6023 = vpop.permute.xlu0 %6022
  %6024 = vrot.lane.b32.xlu0 %v5953, 64
  %v6025 = vpop.permute.xlu0 %6024
  %6026 = vrot.lane.b32.xlu0 %v5955, 64
  %v6027 = vpop.permute.xlu0 %6026
  %6028 = vrot.lane.b32.xlu0 %v5958, 64
  %v6029 = vpop.permute.xlu0 %6028
  %6030 = vrot.lane.b32.xlu0 %v5960, 64
  %v6031 = vpop.permute.xlu0 %6030
  %6032 = vrot.lane.b32.xlu0 %v5963, 64
  %v6033 = vpop.permute.xlu0 %6032
  %6034 = vrot.lane.b32.xlu0 %v5965, 64
  %v6035 = vpop.permute.xlu0 %6034
  %6036 = vrot.lane.b32.xlu0 %v5968, 64
  %v6037 = vpop.permute.xlu0 %6036
  %6038 = vrot.lane.b32.xlu0 %v5970, 64
  %v6039 = vpop.permute.xlu0 %6038
  %6040 = vrot.lane.b32.xlu0 %v5973, 64
  %v6041 = vpop.permute.xlu0 %6040
  %6042 = vrot.lane.b32.xlu0 %v5975, 64
  %v6043 = vpop.permute.xlu0 %6042
  %v6078 = vsel %vm115, %v574, %v5792
  %v6079 = vsel %vm115, %v5546, %v5794
  %v6080 = vsel %vm115, %v5644, %v5796
  %v6081 = vsel %vm115, %v5549, %v5798
  %v6082 = vsel %vm115, %v5645, %v5800
  %v6083 = vsel %vm115, %v5552, %v5802
  %v6084 = vsel %vm115, %v5646, %v5804
  %v6085 = vsel %vm115, %v5555, %v5806
  %v6086 = vsel %vm115, %v5647, %v5808
  %v6087 = vsel %vm115, %v5558, %v5810
  %v6088 = vsel %vm115, %v5648, %v5812
  %v6089 = vsel %vm115, %v5561, %v5814
  %v6090 = vsel %vm115, %v5649, %v5816
  %v6091 = vsel %vm115, %v5564, %v5818
  %v6092 = vsel %vm115, %v5650, %v5820
  %v6093 = vsel %vm115, %v5567, %v5822
  %v6094 = vsel %vm115, %v5651, %v5824
  %v6095 = vsel %vm115, %v5570, %v5826
  %v6096 = vsel %vm115, %v5652, %v5828
  %v6097 = vsel %vm115, %v5573, %v5830
  %v6098 = vsel %vm115, %v5653, %v5832
  %v6099 = vsel %vm115, %v5576, %v5834
  %v6100 = vsel %vm115, %v5654, %v5836
  %v6101 = vsel %vm115, %v5579, %v5838
  %v6102 = vsel %vm115, %v5655, %v5840
  %v6103 = vsel %vm115, %v5582, %v5842
  %v6104 = vsel %vm115, %v5656, %v5844
  %v6105 = vsel %vm115, %v5585, %v5846
  %v6106 = vsel %vm115, %v5657, %v5848
  %v6107 = vsel %vm115, %v5588, %v5850
  %v6108 = vsel %vm115, %v5658, %v5852
  %v6109 = vsel %vm115, %v5591, %v5854
  %v6110 = vsel %vm115, %v5659, %v5856
  %v6111 = vsel %vm115, %v5594, %v5858
  %v6112 = vsel %vm663, %v6078, %v5977
  %v6113 = vsel %vm663, %v6079, %v5979
  %v6114 = vsel %vm663, %v6080, %v5981
  %v6115 = vsel %vm663, %v6081, %v5983
  %v6116 = vsel %vm663, %v6082, %v5985
  %v6117 = vsel %vm663, %v6083, %v5987
  %v6118 = vsel %vm663, %v6084, %v5989
  %v6119 = vsel %vm663, %v6085, %v5991
  %v6120 = vsel %vm663, %v6086, %v5993
  %v6121 = vsel %vm663, %v6087, %v5995
  %v6122 = vsel %vm663, %v6088, %v5997
  %v6123 = vsel %vm663, %v6089, %v5999
  %v6124 = vsel %vm663, %v6090, %v6001
  %v6125 = vsel %vm663, %v6091, %v6003
  %v6126 = vsel %vm663, %v6092, %v6005
  %v6127 = vsel %vm663, %v6093, %v6007
  %v6128 = vsel %vm663, %v6094, %v6009
  %v6129 = vsel %vm663, %v6095, %v6011
  %v6130 = vsel %vm663, %v6096, %v6013
  %v6131 = vsel %vm663, %v6097, %v6015
  %v6132 = vsel %vm663, %v6098, %v6017
  %v6133 = vsel %vm663, %v6099, %v6019
  %v6134 = vsel %vm663, %v6100, %v6021
  %v6135 = vsel %vm663, %v6101, %v6023
  %v6136 = vsel %vm663, %v6102, %v6025
  %v6137 = vsel %vm663, %v6103, %v6027
  %v6138 = vsel %vm663, %v6104, %v6029
  %v6139 = vsel %vm663, %v6105, %v6031
  %v6140 = vsel %vm663, %v6106, %v6033
  %v6141 = vsel %vm663, %v6107, %v6035
  %v6142 = vsel %vm663, %v6108, %v6037
  %v6143 = vsel %vm663, %v6109, %v6039
  %v6144 = vsel %vm663, %v6110, %v6041
  %v6145 = vsel %vm663, %v6111, %v6043
  %v6146 = vpack.c.bf16 %v6113, %v6112
  %v6147 = vpack.c.bf16 %v6115, %v6114
  %v6148 = vpack.c.bf16 %v6117, %v6116
  %v6149 = vpack.c.bf16 %v6119, %v6118
  %v6150 = vpack.c.bf16 %v6121, %v6120
  %v6151 = vpack.c.bf16 %v6123, %v6122
  %v6152 = vpack.c.bf16 %v6125, %v6124
  %v6153 = vpack.c.bf16 %v6127, %v6126
  %v6154 = vpack.c.bf16 %v6129, %v6128
  %v6155 = vpack.c.bf16 %v6131, %v6130
  %v6156 = vpack.c.bf16 %v6133, %v6132
  %v6157 = vpack.c.bf16 %v6135, %v6134
  %v6158 = vpack.c.bf16 %v6137, %v6136
  %v6159 = vpack.c.bf16 %v6139, %v6138
  %v6160 = vpack.c.bf16 %v6141, %v6140
  %v6161 = vpack.c.bf16 %v6143, %v6142
  %v6162 = vpack.c.bf16 %v6145, %v6144
  %v6163 = vpack.c.bf16 %v4966, %v4965
  %v6164 = vpack.c.bf16 %v4968, %v4967
  %v6165 = vpack.c.bf16 %v4970, %v4969
  %v6166 = vpack.c.bf16 %v4972, %v4971
  %v6167 = vpack.c.bf16 %v4974, %v4973
  %v6168 = vpack.c.bf16 %v4976, %v4975
  %v6169 = vpack.c.bf16 %v4978, %v4977
  %v6170 = vpack.c.bf16 %v4980, %v4979
  %v6171 = vpack.c.bf16 %v4982, %v4981
  %v6172 = vpack.c.bf16 %v4984, %v4983
  %v6173 = vpack.c.bf16 %v4986, %v4985
  %v6174 = vpack.c.bf16 %v4988, %v4987
  %v6176 = vsel %vm734, %v6147, 0
  %v6179 = vsel %vm734, %v6148, 0
  %v6182 = vsel %vm734, %v6149, 0
  %v6185 = vsel %vm734, %v6150, 0
  %v6188 = vsel %vm734, %v6151, 0
  %v6191 = vsel %vm734, %v6152, 0
  %v6194 = vsel %vm734, %v6153, 0
  %v6197 = vsel %vm734, %v6154, 0
  %v6200 = vsel %vm734, %v6155, 0
  %v6203 = vsel %vm734, %v6156, 0
  %v6206 = vsel %vm734, %v6157, 0
  %v6209 = vsel %vm734, %v6158, 0
  %v6212 = vsel %vm734, %v6159, 0
  %v6215 = vsel %vm734, %v6160, 0
  %v6218 = vsel %vm734, %v6161, 0
  %v6221 = vsel %vm734, %v6162, 0
  %6223 = vmatprep.subr.bf16.mxu0 0
  %6224 = vmatpush1.bf16.msra.mxu0 0
  %6225 = vmatprep.subr.bf16.mxu0 0
  %6226 = vmatpush1.bf16.msra.mxu0 0
  %6227 = vmatprep.subr.bf16.mxu0 0
  %6228 = vmatpush1.bf16.msra.mxu0 %v6174
  %6229 = vmatprep.subr.bf16.mxu0 0
  %6230 = vmatpush1.bf16.msra.mxu0 %v6173
  %6231 = vmatprep.subr.bf16.mxu0 0
  %6232 = vmatpush1.bf16.msra.mxu0 %v6172
  %6233 = vmatprep.subr.bf16.mxu0 0
  %6234 = vmatpush1.bf16.msra.mxu0 %v6171
  %6235 = vmatprep.subr.bf16.mxu0 0
  %6236 = vmatpush1.bf16.msra.mxu0 %v6170
  %6237 = vmatprep.subr.bf16.mxu0 0
  %6238 = vmatpush1.bf16.msra.mxu0 %v6169
  %6239 = vmatprep.subr.bf16.mxu0 0
  %6240 = vmatpush2.bf16.msra.mxu0 0
  %6241 = vmatprep.subr.bf16.mxu0 0
  %6242 = vmatpush2.bf16.msra.mxu0 0
  %6243 = vmatprep.subr.bf16.mxu0 0
  %6244 = vmatpush2.bf16.msra.mxu0 0
  %6245 = vmatprep.subr.bf16.mxu0 0
  %6246 = vmatpush2.bf16.msra.mxu0 0
  %6247 = vmatprep.subr.bf16.mxu0 0
  %6248 = vmatpush2.bf16.msra.mxu0 0
  %6249 = vmatprep.subr.bf16.mxu0 0
  %6250 = vmatpush2.bf16.msra.mxu0 0
  %6251 = vmatprep.subr.bf16.mxu0 0
  %6252 = vmatpush2.bf16.msra.mxu0 0
  %6253 = vmatprep.subr.bf16.mxu0 0
  %6254 = vmatpush2.bf16.msra.mxu0 0
  %6255 = vmatprep.mubr.bf16.mxu0 0
  %6256 = vmatmul.mubr.bf16.gmra.mxu0 %v6176
  %v6257 = vpop.f32.mrf.mxu0
  %v6258 = vadd.f32 0.0, %v6257
  %v6259 = vpop.f32.mrf.mxu0
  %v6260 = vpop.f32.mrf.mxu0
  %v6261 = vadd.f32 0.0, %v6260
  %v6262 = vpop.f32.mrf.mxu0
  %6263 = vmatprep.mubr.bf16.mxu0 0
  %6264 = vmatmul.mubr.bf16.gmra.mxu0 %v6176
  %v6265 = vpop.f32.mrf.mxu0
  %v6266 = vadd.f32 0.0, %v6265
  %v6267 = vpop.f32.mrf.mxu0
  %v6268 = vpop.f32.mrf.mxu0
  %v6269 = vadd.f32 0.0, %v6268
  %v6270 = vpop.f32.mrf.mxu0
  %6271 = vmatprep.mubr.bf16.mxu0 0
  %6272 = vmatmul.mubr.bf16.gmra.mxu0 %v6179
  %v6273 = vpop.f32.mrf.mxu0
  %v6274 = vadd.f32 0.0, %v6273
  %v6275 = vpop.f32.mrf.mxu0
  %v6276 = vpop.f32.mrf.mxu0
  %v6277 = vadd.f32 0.0, %v6276
  %v6278 = vpop.f32.mrf.mxu0
  %6279 = vmatprep.mubr.bf16.mxu0 0
  %6280 = vmatmul.mubr.bf16.gmra.mxu0 %v6179
  %v6281 = vpop.f32.mrf.mxu0
  %v6282 = vadd.f32 0.0, %v6281
  %v6283 = vpop.f32.mrf.mxu0
  %v6284 = vpop.f32.mrf.mxu0
  %v6285 = vadd.f32 0.0, %v6284
  %v6286 = vpop.f32.mrf.mxu0
  %6287 = vmatprep.mubr.bf16.mxu0 0
  %6288 = vmatmul.mubr.bf16.gmra.mxu0 %v6182
  %v6289 = vpop.f32.mrf.mxu0
  %v6290 = vadd.f32 0.0, %v6289
  %v6291 = vpop.f32.mrf.mxu0
  %v6292 = vpop.f32.mrf.mxu0
  %v6293 = vadd.f32 0.0, %v6292
  %v6294 = vpop.f32.mrf.mxu0
  %6295 = vmatprep.mubr.bf16.mxu0 0
  %6296 = vmatmul.mubr.bf16.gmra.mxu0 %v6182
  %v6297 = vpop.f32.mrf.mxu0
  %v6298 = vadd.f32 0.0, %v6297
  %v6299 = vpop.f32.mrf.mxu0
  %v6300 = vpop.f32.mrf.mxu0
  %v6301 = vadd.f32 0.0, %v6300
  %v6302 = vpop.f32.mrf.mxu0
  %6303 = vmatprep.mubr.bf16.mxu0 0
  %6304 = vmatmul.mubr.bf16.gmra.mxu0 %v6185
  %v6305 = vpop.f32.mrf.mxu0
  %v6306 = vadd.f32 0.0, %v6305
  %v6307 = vpop.f32.mrf.mxu0
  %v6308 = vpop.f32.mrf.mxu0
  %v6309 = vadd.f32 0.0, %v6308
  %v6310 = vpop.f32.mrf.mxu0
  %6311 = vmatprep.mubr.bf16.mxu0 0
  %6312 = vmatmul.mubr.bf16.gmra.mxu0 %v6185
  %v6313 = vpop.f32.mrf.mxu0
  %v6314 = vadd.f32 0.0, %v6313
  %v6315 = vpop.f32.mrf.mxu0
  %v6316 = vpop.f32.mrf.mxu0
  %v6317 = vadd.f32 0.0, %v6316
  %v6318 = vpop.f32.mrf.mxu0
  %6319 = vmatprep.mubr.bf16.mxu0 0
  %6320 = vmatmul.mubr.bf16.gmra.mxu0 %v6188
  %v6321 = vpop.f32.mrf.mxu0
  %v6322 = vadd.f32 0.0, %v6321
  %v6323 = vpop.f32.mrf.mxu0
  %v6324 = vpop.f32.mrf.mxu0
  %v6325 = vadd.f32 0.0, %v6324
  %v6326 = vpop.f32.mrf.mxu0
  %6327 = vmatprep.mubr.bf16.mxu0 0
  %6328 = vmatmul.mubr.bf16.gmra.mxu0 %v6188
  %v6329 = vpop.f32.mrf.mxu0
  %v6330 = vadd.f32 0.0, %v6329
  %v6331 = vpop.f32.mrf.mxu0
  %v6332 = vpop.f32.mrf.mxu0
  %v6333 = vadd.f32 0.0, %v6332
  %v6334 = vpop.f32.mrf.mxu0
  %6335 = vmatprep.mubr.bf16.mxu0 0
  %6336 = vmatmul.mubr.bf16.gmra.mxu0 %v6191
  %v6337 = vpop.f32.mrf.mxu0
  %v6338 = vadd.f32 0.0, %v6337
  %v6339 = vpop.f32.mrf.mxu0
  %v6340 = vpop.f32.mrf.mxu0
  %v6341 = vadd.f32 0.0, %v6340
  %v6342 = vpop.f32.mrf.mxu0
  %6343 = vmatprep.mubr.bf16.mxu0 0
  %6344 = vmatmul.mubr.bf16.gmra.mxu0 %v6191
  %v6345 = vpop.f32.mrf.mxu0
  %v6346 = vadd.f32 0.0, %v6345
  %v6347 = vpop.f32.mrf.mxu0
  %v6348 = vpop.f32.mrf.mxu0
  %v6349 = vadd.f32 0.0, %v6348
  %v6350 = vpop.f32.mrf.mxu0
  %6351 = vmatprep.mubr.bf16.mxu0 0
  %6352 = vmatmul.mubr.bf16.gmra.mxu0 %v6194
  %v6353 = vpop.f32.mrf.mxu0
  %v6354 = vadd.f32 0.0, %v6353
  %v6355 = vpop.f32.mrf.mxu0
  %v6356 = vpop.f32.mrf.mxu0
  %v6357 = vadd.f32 0.0, %v6356
  %v6358 = vpop.f32.mrf.mxu0
  %6359 = vmatprep.mubr.bf16.mxu0 0
  %6360 = vmatmul.mubr.bf16.gmra.mxu0 %v6194
  %v6361 = vpop.f32.mrf.mxu0
  %v6362 = vadd.f32 0.0, %v6361
  %v6363 = vpop.f32.mrf.mxu0
  %v6364 = vpop.f32.mrf.mxu0
  %v6365 = vadd.f32 0.0, %v6364
  %v6366 = vpop.f32.mrf.mxu0
  %6367 = vmatprep.mubr.bf16.mxu0 0
  %6368 = vmatmul.mubr.bf16.gmra.mxu0 %v6197
  %v6369 = vpop.f32.mrf.mxu0
  %v6370 = vadd.f32 0.0, %v6369
  %v6371 = vpop.f32.mrf.mxu0
  %v6372 = vpop.f32.mrf.mxu0
  %v6373 = vadd.f32 0.0, %v6372
  %v6374 = vpop.f32.mrf.mxu0
  %6375 = vmatprep.mubr.bf16.mxu0 0
  %6376 = vmatmul.mubr.bf16.gmra.mxu0 %v6197
  %v6377 = vpop.f32.mrf.mxu0
  %v6378 = vadd.f32 0.0, %v6377
  %v6379 = vpop.f32.mrf.mxu0
  %v6380 = vpop.f32.mrf.mxu0
  %v6381 = vadd.f32 0.0, %v6380
  %v6382 = vpop.f32.mrf.mxu0
  %6383 = vmatprep.mubr.bf16.mxu0 0
  %6384 = vmatmul.mubr.bf16.gmra.mxu0 %v6200
  %v6385 = vpop.f32.mrf.mxu0
  %v6386 = vadd.f32 0.0, %v6385
  %v6387 = vpop.f32.mrf.mxu0
  %v6388 = vpop.f32.mrf.mxu0
  %v6389 = vadd.f32 0.0, %v6388
  %v6390 = vpop.f32.mrf.mxu0
  %6391 = vmatprep.mubr.bf16.mxu0 0
  %6392 = vmatmul.mubr.bf16.gmra.mxu0 %v6200
  %v6393 = vpop.f32.mrf.mxu0
  %v6394 = vadd.f32 0.0, %v6393
  %v6395 = vpop.f32.mrf.mxu0
  %v6396 = vpop.f32.mrf.mxu0
  %v6397 = vadd.f32 0.0, %v6396
  %v6398 = vpop.f32.mrf.mxu0
  %6399 = vmatprep.mubr.bf16.mxu0 0
  %6400 = vmatmul.mubr.bf16.gmra.mxu0 %v6203
  %v6401 = vpop.f32.mrf.mxu0
  %v6402 = vadd.f32 0.0, %v6401
  %v6403 = vpop.f32.mrf.mxu0
  %v6404 = vpop.f32.mrf.mxu0
  %v6405 = vadd.f32 0.0, %v6404
  %v6406 = vpop.f32.mrf.mxu0
  %6407 = vmatprep.mubr.bf16.mxu0 0
  %6408 = vmatmul.mubr.bf16.gmra.mxu0 %v6203
  %v6409 = vpop.f32.mrf.mxu0
  %v6410 = vadd.f32 0.0, %v6409
  %v6411 = vpop.f32.mrf.mxu0
  %v6412 = vpop.f32.mrf.mxu0
  %v6413 = vadd.f32 0.0, %v6412
  %v6414 = vpop.f32.mrf.mxu0
  %6415 = vmatprep.mubr.bf16.mxu0 0
  %6416 = vmatmul.mubr.bf16.gmra.mxu0 %v6206
  %v6417 = vpop.f32.mrf.mxu0
  %v6418 = vadd.f32 0.0, %v6417
  %v6419 = vpop.f32.mrf.mxu0
  %v6420 = vpop.f32.mrf.mxu0
  %v6421 = vadd.f32 0.0, %v6420
  %v6422 = vpop.f32.mrf.mxu0
  %6423 = vmatprep.mubr.bf16.mxu0 0
  %6424 = vmatmul.mubr.bf16.gmra.mxu0 %v6206
  %v6425 = vpop.f32.mrf.mxu0
  %v6426 = vadd.f32 0.0, %v6425
  %v6427 = vpop.f32.mrf.mxu0
  %v6428 = vpop.f32.mrf.mxu0
  %v6429 = vadd.f32 0.0, %v6428
  %v6430 = vpop.f32.mrf.mxu0
  %6431 = vmatprep.mubr.bf16.mxu0 0
  %6432 = vmatmul.mubr.bf16.gmra.mxu0 %v6209
  %v6433 = vpop.f32.mrf.mxu0
  %v6434 = vadd.f32 0.0, %v6433
  %v6435 = vpop.f32.mrf.mxu0
  %v6436 = vpop.f32.mrf.mxu0
  %v6437 = vadd.f32 0.0, %v6436
  %v6438 = vpop.f32.mrf.mxu0
  %6439 = vmatprep.mubr.bf16.mxu0 0
  %6440 = vmatmul.mubr.bf16.gmra.mxu0 %v6209
  %v6441 = vpop.f32.mrf.mxu0
  %v6442 = vadd.f32 0.0, %v6441
  %v6443 = vpop.f32.mrf.mxu0
  %v6444 = vpop.f32.mrf.mxu0
  %v6445 = vadd.f32 0.0, %v6444
  %v6446 = vpop.f32.mrf.mxu0
  %6447 = vmatprep.mubr.bf16.mxu0 0
  %6448 = vmatmul.mubr.bf16.gmra.mxu0 %v6212
  %v6449 = vpop.f32.mrf.mxu0
  %v6450 = vadd.f32 0.0, %v6449
  %v6451 = vpop.f32.mrf.mxu0
  %v6452 = vpop.f32.mrf.mxu0
  %v6453 = vadd.f32 0.0, %v6452
  %v6454 = vpop.f32.mrf.mxu0
  %6455 = vmatprep.mubr.bf16.mxu0 0
  %6456 = vmatmul.mubr.bf16.gmra.mxu0 %v6212
  %v6457 = vpop.f32.mrf.mxu0
  %v6458 = vadd.f32 0.0, %v6457
  %v6459 = vpop.f32.mrf.mxu0
  %v6460 = vpop.f32.mrf.mxu0
  %v6461 = vadd.f32 0.0, %v6460
  %v6462 = vpop.f32.mrf.mxu0
  %6463 = vmatprep.mubr.bf16.mxu0 0
  %6464 = vmatmul.mubr.bf16.gmra.mxu0 %v6215
  %v6465 = vpop.f32.mrf.mxu0
  %v6466 = vadd.f32 0.0, %v6465
  %v6467 = vpop.f32.mrf.mxu0
  %v6468 = vpop.f32.mrf.mxu0
  %v6469 = vadd.f32 0.0, %v6468
  %v6470 = vpop.f32.mrf.mxu0
  %6471 = vmatprep.mubr.bf16.mxu0 0
  %6472 = vmatmul.mubr.bf16.gmra.mxu0 %v6215
  %v6473 = vpop.f32.mrf.mxu0
  %v6474 = vadd.f32 0.0, %v6473
  %v6475 = vpop.f32.mrf.mxu0
  %v6476 = vpop.f32.mrf.mxu0
  %v6477 = vadd.f32 0.0, %v6476
  %v6478 = vpop.f32.mrf.mxu0
  %6479 = vmatprep.mubr.bf16.mxu0 0
  %6480 = vmatmul.mubr.bf16.gmra.mxu0 %v6218
  %v6481 = vpop.f32.mrf.mxu0
  %v6482 = vadd.f32 0.0, %v6481
  %v6483 = vpop.f32.mrf.mxu0
  %v6484 = vpop.f32.mrf.mxu0
  %v6485 = vadd.f32 0.0, %v6484
  %v6486 = vpop.f32.mrf.mxu0
  %6487 = vmatprep.mubr.bf16.mxu0 0
  %6488 = vmatmul.mubr.bf16.gmra.mxu0 %v6218
  %v6489 = vpop.f32.mrf.mxu0
  %v6490 = vadd.f32 0.0, %v6489
  %v6491 = vpop.f32.mrf.mxu0
  %v6492 = vpop.f32.mrf.mxu0
  %v6493 = vadd.f32 0.0, %v6492
  %v6494 = vpop.f32.mrf.mxu0
  %6495 = vmatprep.mubr.bf16.mxu0 0
  %6496 = vmatmul.mubr.bf16.gmra.mxu0 %v6221
  %v6497 = vpop.f32.mrf.mxu0
  %v6498 = vadd.f32 0.0, %v6497
  %v6499 = vpop.f32.mrf.mxu0
  %v6500 = vpop.f32.mrf.mxu0
  %v6501 = vadd.f32 0.0, %v6500
  %v6502 = vpop.f32.mrf.mxu0
  %6503 = vmatprep.mubr.bf16.mxu0 0
  %6504 = vmatmul.mubr.bf16.gmra.mxu0 %v6221
  %v6505 = vpop.f32.mrf.mxu0
  %v6506 = vadd.f32 0.0, %v6505
  %v6507 = vpop.f32.mrf.mxu0
  %v6508 = vpop.f32.mrf.mxu0
  %v6509 = vadd.f32 0.0, %v6508
  %v6510 = vpop.f32.mrf.mxu0
  %6511 = vdwg.mxu0
  %v6513 = vsel %vm734, %v6146, 0
  %6515 = vmatprep.subr.bf16.mxu0 0
  %6516 = vmatpush1.bf16.msra.mxu0 0
  %6517 = vmatprep.subr.bf16.mxu0 0
  %6518 = vmatpush1.bf16.msra.mxu0 0
  %6519 = vmatprep.subr.bf16.mxu0 0
  %6520 = vmatpush1.bf16.msra.mxu0 %v6168
  %6521 = vmatprep.subr.bf16.mxu0 0
  %6522 = vmatpush1.bf16.msra.mxu0 %v6167
  %6523 = vmatprep.subr.bf16.mxu0 0
  %6524 = vmatpush1.bf16.msra.mxu0 %v6166
  %6525 = vmatprep.subr.bf16.mxu0 0
  %6526 = vmatpush1.bf16.msra.mxu0 %v6165
  %6527 = vmatprep.subr.bf16.mxu0 0
  %6528 = vmatpush1.bf16.msra.mxu0 %v6164
  %6529 = vmatprep.subr.bf16.mxu0 0
  %6530 = vmatpush1.bf16.msra.mxu0 %v6163
  %6531 = vmatprep.subr.bf16.mxu0 0
  %6532 = vmatpush2.bf16.msra.mxu0 0
  %6533 = vmatprep.subr.bf16.mxu0 0
  %6534 = vmatpush2.bf16.msra.mxu0 0
  %6535 = vmatprep.subr.bf16.mxu0 0
  %6536 = vmatpush2.bf16.msra.mxu0 0
  %6537 = vmatprep.subr.bf16.mxu0 0
  %6538 = vmatpush2.bf16.msra.mxu0 0
  %6539 = vmatprep.subr.bf16.mxu0 0
  %6540 = vmatpush2.bf16.msra.mxu0 0
  %6541 = vmatprep.subr.bf16.mxu0 0
  %6542 = vmatpush2.bf16.msra.mxu0 0
  %6543 = vmatprep.subr.bf16.mxu0 0
  %6544 = vmatpush2.bf16.msra.mxu0 0
  %6545 = vmatprep.subr.bf16.mxu0 0
  %6546 = vmatpush2.bf16.msra.mxu0 0
  %6547 = vmatprep.mubr.bf16.mxu0 0
  %6548 = vmatmul.mubr.bf16.gmra.mxu0 %v6513
  %v6549 = vpop.f32.mrf.mxu0
  %v6550 = vadd.f32 %v6258, %v6549
  %v6551 = vpop.f32.mrf.mxu0
  %v6552 = vpop.f32.mrf.mxu0
  %v6553 = vadd.f32 %v6261, %v6552
  %v6554 = vpop.f32.mrf.mxu0
  %6555 = vmatprep.mubr.bf16.mxu0 0
  %6556 = vmatmul.mubr.bf16.gmra.mxu0 %v6176
  %v6557 = vpop.f32.mrf.mxu0
  %v6558 = vadd.f32 %v6266, %v6557
  %v6559 = vpop.f32.mrf.mxu0
  %v6560 = vpop.f32.mrf.mxu0
  %v6561 = vadd.f32 %v6269, %v6560
  %v6562 = vpop.f32.mrf.mxu0
  %6563 = vmatprep.mubr.bf16.mxu0 0
  %6564 = vmatmul.mubr.bf16.gmra.mxu0 %v6176
  %v6565 = vpop.f32.mrf.mxu0
  %v6566 = vadd.f32 %v6274, %v6565
  %v6567 = vpop.f32.mrf.mxu0
  %v6568 = vpop.f32.mrf.mxu0
  %v6569 = vadd.f32 %v6277, %v6568
  %v6570 = vpop.f32.mrf.mxu0
  %6571 = vmatprep.mubr.bf16.mxu0 0
  %6572 = vmatmul.mubr.bf16.gmra.mxu0 %v6179
  %v6573 = vpop.f32.mrf.mxu0
  %v6574 = vadd.f32 %v6282, %v6573
  %v6575 = vpop.f32.mrf.mxu0
  %v6576 = vpop.f32.mrf.mxu0
  %v6577 = vadd.f32 %v6285, %v6576
  %v6578 = vpop.f32.mrf.mxu0
  %6579 = vmatprep.mubr.bf16.mxu0 0
  %6580 = vmatmul.mubr.bf16.gmra.mxu0 %v6179
  %v6581 = vpop.f32.mrf.mxu0
  %v6582 = vadd.f32 %v6290, %v6581
  %v6583 = vpop.f32.mrf.mxu0
  %v6584 = vpop.f32.mrf.mxu0
  %v6585 = vadd.f32 %v6293, %v6584
  %v6586 = vpop.f32.mrf.mxu0
  %6587 = vmatprep.mubr.bf16.mxu0 0
  %6588 = vmatmul.mubr.bf16.gmra.mxu0 %v6182
  %v6589 = vpop.f32.mrf.mxu0
  %v6590 = vadd.f32 %v6298, %v6589
  %v6591 = vpop.f32.mrf.mxu0
  %v6592 = vpop.f32.mrf.mxu0
  %v6593 = vadd.f32 %v6301, %v6592
  %v6594 = vpop.f32.mrf.mxu0
  %6595 = vmatprep.mubr.bf16.mxu0 0
  %6596 = vmatmul.mubr.bf16.gmra.mxu0 %v6182
  %v6597 = vpop.f32.mrf.mxu0
  %v6598 = vadd.f32 %v6306, %v6597
  %v6599 = vpop.f32.mrf.mxu0
  %v6600 = vpop.f32.mrf.mxu0
  %v6601 = vadd.f32 %v6309, %v6600
  %v6602 = vpop.f32.mrf.mxu0
  %6603 = vmatprep.mubr.bf16.mxu0 0
  %6604 = vmatmul.mubr.bf16.gmra.mxu0 %v6185
  %v6605 = vpop.f32.mrf.mxu0
  %v6606 = vadd.f32 %v6314, %v6605
  %v6607 = vpop.f32.mrf.mxu0
  %v6608 = vpop.f32.mrf.mxu0
  %v6609 = vadd.f32 %v6317, %v6608
  %v6610 = vpop.f32.mrf.mxu0
  %6611 = vmatprep.mubr.bf16.mxu0 0
  %6612 = vmatmul.mubr.bf16.gmra.mxu0 %v6185
  %v6613 = vpop.f32.mrf.mxu0
  %v6614 = vadd.f32 %v6322, %v6613
  %v6615 = vpop.f32.mrf.mxu0
  %v6616 = vpop.f32.mrf.mxu0
  %v6617 = vadd.f32 %v6325, %v6616
  %v6618 = vpop.f32.mrf.mxu0
  %6619 = vmatprep.mubr.bf16.mxu0 0
  %6620 = vmatmul.mubr.bf16.gmra.mxu0 %v6188
  %v6621 = vpop.f32.mrf.mxu0
  %v6622 = vadd.f32 %v6330, %v6621
  %v6623 = vpop.f32.mrf.mxu0
  %v6624 = vpop.f32.mrf.mxu0
  %v6625 = vadd.f32 %v6333, %v6624
  %v6626 = vpop.f32.mrf.mxu0
  %6627 = vmatprep.mubr.bf16.mxu0 0
  %6628 = vmatmul.mubr.bf16.gmra.mxu0 %v6188
  %v6629 = vpop.f32.mrf.mxu0
  %v6630 = vadd.f32 %v6338, %v6629
  %v6631 = vpop.f32.mrf.mxu0
  %v6632 = vpop.f32.mrf.mxu0
  %v6633 = vadd.f32 %v6341, %v6632
  %v6634 = vpop.f32.mrf.mxu0
  %6635 = vmatprep.mubr.bf16.mxu0 0
  %6636 = vmatmul.mubr.bf16.gmra.mxu0 %v6191
  %v6637 = vpop.f32.mrf.mxu0
  %v6638 = vadd.f32 %v6346, %v6637
  %v6639 = vpop.f32.mrf.mxu0
  %v6640 = vpop.f32.mrf.mxu0
  %v6641 = vadd.f32 %v6349, %v6640
  %v6642 = vpop.f32.mrf.mxu0
  %6643 = vmatprep.mubr.bf16.mxu0 0
  %6644 = vmatmul.mubr.bf16.gmra.mxu0 %v6191
  %v6645 = vpop.f32.mrf.mxu0
  %v6646 = vadd.f32 %v6354, %v6645
  %v6647 = vpop.f32.mrf.mxu0
  %v6648 = vpop.f32.mrf.mxu0
  %v6649 = vadd.f32 %v6357, %v6648
  %v6650 = vpop.f32.mrf.mxu0
  %6651 = vmatprep.mubr.bf16.mxu0 0
  %6652 = vmatmul.mubr.bf16.gmra.mxu0 %v6194
  %v6653 = vpop.f32.mrf.mxu0
  %v6654 = vadd.f32 %v6362, %v6653
  %v6655 = vpop.f32.mrf.mxu0
  %v6656 = vpop.f32.mrf.mxu0
  %v6657 = vadd.f32 %v6365, %v6656
  %v6658 = vpop.f32.mrf.mxu0
  %6659 = vmatprep.mubr.bf16.mxu0 0
  %6660 = vmatmul.mubr.bf16.gmra.mxu0 %v6194
  %v6661 = vpop.f32.mrf.mxu0
  %v6662 = vadd.f32 %v6370, %v6661
  %v6663 = vpop.f32.mrf.mxu0
  %v6664 = vpop.f32.mrf.mxu0
  %v6665 = vadd.f32 %v6373, %v6664
  %v6666 = vpop.f32.mrf.mxu0
  %6667 = vmatprep.mubr.bf16.mxu0 0
  %6668 = vmatmul.mubr.bf16.gmra.mxu0 %v6197
  %v6669 = vpop.f32.mrf.mxu0
  %v6670 = vadd.f32 %v6378, %v6669
  %v6671 = vpop.f32.mrf.mxu0
  %v6672 = vpop.f32.mrf.mxu0
  %v6673 = vadd.f32 %v6381, %v6672
  %v6674 = vpop.f32.mrf.mxu0
  %6675 = vmatprep.mubr.bf16.mxu0 0
  %6676 = vmatmul.mubr.bf16.gmra.mxu0 %v6513
  %v6677 = vpop.f32.mrf.mxu0
  %v6678 = vadd.f32 %v6386, %v6677
  %v6679 = vpop.f32.mrf.mxu0
  %v6680 = vpop.f32.mrf.mxu0
  %v6681 = vadd.f32 %v6389, %v6680
  %v6682 = vpop.f32.mrf.mxu0
  %6683 = vmatprep.mubr.bf16.mxu0 0
  %6684 = vmatmul.mubr.bf16.gmra.mxu0 %v6200
  %v6685 = vpop.f32.mrf.mxu0
  %v6686 = vadd.f32 %v6394, %v6685
  %v6687 = vpop.f32.mrf.mxu0
  %v6688 = vpop.f32.mrf.mxu0
  %v6689 = vadd.f32 %v6397, %v6688
  %v6690 = vpop.f32.mrf.mxu0
  %6691 = vmatprep.mubr.bf16.mxu0 0
  %6692 = vmatmul.mubr.bf16.gmra.mxu0 %v6200
  %v6693 = vpop.f32.mrf.mxu0
  %v6694 = vadd.f32 %v6402, %v6693
  %v6695 = vpop.f32.mrf.mxu0
  %v6696 = vpop.f32.mrf.mxu0
  %v6697 = vadd.f32 %v6405, %v6696
  %v6698 = vpop.f32.mrf.mxu0
  %6699 = vmatprep.mubr.bf16.mxu0 0
  %6700 = vmatmul.mubr.bf16.gmra.mxu0 %v6203
  %v6701 = vpop.f32.mrf.mxu0
  %v6702 = vadd.f32 %v6410, %v6701
  %v6703 = vpop.f32.mrf.mxu0
  %v6704 = vpop.f32.mrf.mxu0
  %v6705 = vadd.f32 %v6413, %v6704
  %v6706 = vpop.f32.mrf.mxu0
  %6707 = vmatprep.mubr.bf16.mxu0 0
  %6708 = vmatmul.mubr.bf16.gmra.mxu0 %v6203
  %v6709 = vpop.f32.mrf.mxu0
  %v6710 = vadd.f32 %v6418, %v6709
  %v6711 = vpop.f32.mrf.mxu0
  %v6712 = vpop.f32.mrf.mxu0
  %v6713 = vadd.f32 %v6421, %v6712
  %v6714 = vpop.f32.mrf.mxu0
  %6715 = vmatprep.mubr.bf16.mxu0 0
  %6716 = vmatmul.mubr.bf16.gmra.mxu0 %v6206
  %v6717 = vpop.f32.mrf.mxu0
  %v6718 = vadd.f32 %v6426, %v6717
  %v6719 = vpop.f32.mrf.mxu0
  %v6720 = vpop.f32.mrf.mxu0
  %v6721 = vadd.f32 %v6429, %v6720
  %v6722 = vpop.f32.mrf.mxu0
  %6723 = vmatprep.mubr.bf16.mxu0 0
  %6724 = vmatmul.mubr.bf16.gmra.mxu0 %v6206
  %v6725 = vpop.f32.mrf.mxu0
  %v6726 = vadd.f32 %v6434, %v6725
  %v6727 = vpop.f32.mrf.mxu0
  %v6728 = vpop.f32.mrf.mxu0
  %v6729 = vadd.f32 %v6437, %v6728
  %v6730 = vpop.f32.mrf.mxu0
  %6731 = vmatprep.mubr.bf16.mxu0 0
  %6732 = vmatmul.mubr.bf16.gmra.mxu0 %v6209
  %v6733 = vpop.f32.mrf.mxu0
  %v6734 = vadd.f32 %v6442, %v6733
  %v6735 = vpop.f32.mrf.mxu0
  %v6736 = vpop.f32.mrf.mxu0
  %v6737 = vadd.f32 %v6445, %v6736
  %v6738 = vpop.f32.mrf.mxu0
  %6739 = vmatprep.mubr.bf16.mxu0 0
  %6740 = vmatmul.mubr.bf16.gmra.mxu0 %v6209
  %v6741 = vpop.f32.mrf.mxu0
  %v6742 = vadd.f32 %v6450, %v6741
  %v6743 = vpop.f32.mrf.mxu0
  %v6744 = vpop.f32.mrf.mxu0
  %v6745 = vadd.f32 %v6453, %v6744
  %v6746 = vpop.f32.mrf.mxu0
  %6747 = vmatprep.mubr.bf16.mxu0 0
  %6748 = vmatmul.mubr.bf16.gmra.mxu0 %v6212
  %v6749 = vpop.f32.mrf.mxu0
  %v6750 = vadd.f32 %v6458, %v6749
  %v6751 = vpop.f32.mrf.mxu0
  %v6752 = vpop.f32.mrf.mxu0
  %v6753 = vadd.f32 %v6461, %v6752
  %v6754 = vpop.f32.mrf.mxu0
  %6755 = vmatprep.mubr.bf16.mxu0 0
  %6756 = vmatmul.mubr.bf16.gmra.mxu0 %v6212
  %v6757 = vpop.f32.mrf.mxu0
  %v6758 = vadd.f32 %v6466, %v6757
  %v6759 = vpop.f32.mrf.mxu0
  %v6760 = vpop.f32.mrf.mxu0
  %v6761 = vadd.f32 %v6469, %v6760
  %v6762 = vpop.f32.mrf.mxu0
  %6763 = vmatprep.mubr.bf16.mxu0 0
  %6764 = vmatmul.mubr.bf16.gmra.mxu0 %v6215
  %v6765 = vpop.f32.mrf.mxu0
  %v6766 = vadd.f32 %v6474, %v6765
  %v6767 = vpop.f32.mrf.mxu0
  %v6768 = vpop.f32.mrf.mxu0
  %v6769 = vadd.f32 %v6477, %v6768
  %v6770 = vpop.f32.mrf.mxu0
  %6771 = vmatprep.mubr.bf16.mxu0 0
  %6772 = vmatmul.mubr.bf16.gmra.mxu0 %v6215
  %v6773 = vpop.f32.mrf.mxu0
  %v6774 = vadd.f32 %v6482, %v6773
  %v6775 = vpop.f32.mrf.mxu0
  %v6776 = vpop.f32.mrf.mxu0
  %v6777 = vadd.f32 %v6485, %v6776
  %v6778 = vpop.f32.mrf.mxu0
  %6779 = vmatprep.mubr.bf16.mxu0 0
  %6780 = vmatmul.mubr.bf16.gmra.mxu0 %v6218
  %v6781 = vpop.f32.mrf.mxu0
  %v6782 = vadd.f32 %v6490, %v6781
  %v6783 = vpop.f32.mrf.mxu0
  %v6784 = vpop.f32.mrf.mxu0
  %v6785 = vadd.f32 %v6493, %v6784
  %v6786 = vpop.f32.mrf.mxu0
  %6787 = vmatprep.mubr.bf16.mxu0 0
  %6788 = vmatmul.mubr.bf16.gmra.mxu0 %v6218
  %v6789 = vpop.f32.mrf.mxu0
  %v6790 = vadd.f32 %v6498, %v6789
  %v6791 = vpop.f32.mrf.mxu0
  %v6792 = vpop.f32.mrf.mxu0
  %v6793 = vadd.f32 %v6501, %v6792
  %v6794 = vpop.f32.mrf.mxu0
  %6795 = vmatprep.mubr.bf16.mxu0 0
  %6796 = vmatmul.mubr.bf16.gmra.mxu0 %v6221
  %v6797 = vpop.f32.mrf.mxu0
  %v6798 = vadd.f32 %v6506, %v6797
  %v6799 = vpop.f32.mrf.mxu0
  %v6800 = vpop.f32.mrf.mxu0
  %v6801 = vadd.f32 %v6509, %v6800
  %v6802 = vpop.f32.mrf.mxu0
  %6803 = vdwg.mxu0
  %v6804 = vpack.c.bf16 %v4990, %v4989
  %v6805 = vpack.c.bf16 %v4992, %v4991
  %v6806 = vpack.c.bf16 %v4994, %v4993
  %v6807 = vpack.c.bf16 %v4996, %v4995
  %v6808 = vpack.c.bf16 %v4998, %v4997
  %v6809 = vpack.c.bf16 %v5000, %v4999
  %6810 = vmatprep.subr.bf16.mxu0 0
  %6811 = vmatpush1.bf16.msra.mxu0 0
  %6812 = vmatprep.subr.bf16.mxu0 0
  %6813 = vmatpush1.bf16.msra.mxu0 0
  %6814 = vmatprep.subr.bf16.mxu0 0
  %6815 = vmatpush1.bf16.msra.mxu0 %v6809
  %6816 = vmatprep.subr.bf16.mxu0 0
  %6817 = vmatpush1.bf16.msra.mxu0 %v6808
  %6818 = vmatprep.subr.bf16.mxu0 0
  %6819 = vmatpush1.bf16.msra.mxu0 %v6807
  %6820 = vmatprep.subr.bf16.mxu0 0
  %6821 = vmatpush1.bf16.msra.mxu0 %v6806
  %6822 = vmatprep.subr.bf16.mxu0 0
  %6823 = vmatpush1.bf16.msra.mxu0 %v6805
  %6824 = vmatprep.subr.bf16.mxu0 0
  %6825 = vmatpush1.bf16.msra.mxu0 %v6804
  %6826 = vmatprep.subr.bf16.mxu0 0
  %6827 = vmatpush2.bf16.msra.mxu0 0
  %6828 = vmatprep.subr.bf16.mxu0 0
  %6829 = vmatpush2.bf16.msra.mxu0 0
  %6830 = vmatprep.subr.bf16.mxu0 0
  %6831 = vmatpush2.bf16.msra.mxu0 0
  %6832 = vmatprep.subr.bf16.mxu0 0
  %6833 = vmatpush2.bf16.msra.mxu0 0
  %6834 = vmatprep.subr.bf16.mxu0 0
  %6835 = vmatpush2.bf16.msra.mxu0 0
  %6836 = vmatprep.subr.bf16.mxu0 0
  %6837 = vmatpush2.bf16.msra.mxu0 0
  %6838 = vmatprep.subr.bf16.mxu0 0
  %6839 = vmatpush2.bf16.msra.mxu0 0
  %6840 = vmatprep.subr.bf16.mxu0 0
  %6841 = vmatpush2.bf16.msra.mxu0 0
  %6842 = vmatprep.mubr.bf16.mxu0 0
  %6843 = vmatmul.mubr.bf16.gmra.mxu0 %v6176
  %v6844 = vpop.f32.mrf.mxu0
  %v6845 = vadd.f32 0.0, %v6844
  %v6846 = vpop.f32.mrf.mxu0
  %v6847 = vpop.f32.mrf.mxu0
  %v6848 = vadd.f32 0.0, %v6847
  %v6849 = vpop.f32.mrf.mxu0
  %6850 = vmatprep.mubr.bf16.mxu0 0
  %6851 = vmatmul.mubr.bf16.gmra.mxu0 %v6179
  %v6852 = vpop.f32.mrf.mxu0
  %v6853 = vadd.f32 0.0, %v6852
  %v6854 = vpop.f32.mrf.mxu0
  %v6855 = vpop.f32.mrf.mxu0
  %v6856 = vadd.f32 0.0, %v6855
  %v6857 = vpop.f32.mrf.mxu0
  %6858 = vmatprep.mubr.bf16.mxu0 0
  %6859 = vmatmul.mubr.bf16.gmra.mxu0 %v6179
  %v6860 = vpop.f32.mrf.mxu0
  %v6861 = vadd.f32 0.0, %v6860
  %v6862 = vpop.f32.mrf.mxu0
  %v6863 = vpop.f32.mrf.mxu0
  %v6864 = vadd.f32 0.0, %v6863
  %v6865 = vpop.f32.mrf.mxu0
  %6866 = vmatprep.mubr.bf16.mxu0 0
  %6867 = vmatmul.mubr.bf16.gmra.mxu0 %v6182
  %v6868 = vpop.f32.mrf.mxu0
  %v6869 = vadd.f32 0.0, %v6868
  %v6870 = vpop.f32.mrf.mxu0
  %v6871 = vpop.f32.mrf.mxu0
  %v6872 = vadd.f32 0.0, %v6871
  %v6873 = vpop.f32.mrf.mxu0
  %6874 = vmatprep.mubr.bf16.mxu0 0
  %6875 = vmatmul.mubr.bf16.gmra.mxu0 %v6182
  %v6876 = vpop.f32.mrf.mxu0
  %v6877 = vadd.f32 0.0, %v6876
  %v6878 = vpop.f32.mrf.mxu0
  %v6879 = vpop.f32.mrf.mxu0
  %v6880 = vadd.f32 0.0, %v6879
  %v6881 = vpop.f32.mrf.mxu0
  %6882 = vmatprep.mubr.bf16.mxu0 0
  %6883 = vmatmul.mubr.bf16.gmra.mxu0 %v6185
  %v6884 = vpop.f32.mrf.mxu0
  %v6885 = vadd.f32 0.0, %v6884
  %v6886 = vpop.f32.mrf.mxu0
  %v6887 = vpop.f32.mrf.mxu0
  %v6888 = vadd.f32 0.0, %v6887
  %v6889 = vpop.f32.mrf.mxu0
  %6890 = vmatprep.mubr.bf16.mxu0 0
  %6891 = vmatmul.mubr.bf16.gmra.mxu0 %v6185
  %v6892 = vpop.f32.mrf.mxu0
  %v6893 = vadd.f32 0.0, %v6892
  %v6894 = vpop.f32.mrf.mxu0
  %v6895 = vpop.f32.mrf.mxu0
  %v6896 = vadd.f32 0.0, %v6895
  %v6897 = vpop.f32.mrf.mxu0
  %6898 = vmatprep.mubr.bf16.mxu0 0
  %6899 = vmatmul.mubr.bf16.gmra.mxu0 %v6188
  %v6900 = vpop.f32.mrf.mxu0
  %v6901 = vadd.f32 0.0, %v6900
  %v6902 = vpop.f32.mrf.mxu0
  %v6903 = vpop.f32.mrf.mxu0
  %v6904 = vadd.f32 0.0, %v6903
  %v6905 = vpop.f32.mrf.mxu0
  %6906 = vmatprep.mubr.bf16.mxu0 0
  %6907 = vmatmul.mubr.bf16.gmra.mxu0 %v6188
  %v6908 = vpop.f32.mrf.mxu0
  %v6909 = vadd.f32 0.0, %v6908
  %v6910 = vpop.f32.mrf.mxu0
  %v6911 = vpop.f32.mrf.mxu0
  %v6912 = vadd.f32 0.0, %v6911
  %v6913 = vpop.f32.mrf.mxu0
  %6914 = vmatprep.mubr.bf16.mxu0 0
  %6915 = vmatmul.mubr.bf16.gmra.mxu0 %v6191
  %v6916 = vpop.f32.mrf.mxu0
  %v6917 = vadd.f32 0.0, %v6916
  %v6918 = vpop.f32.mrf.mxu0
  %v6919 = vpop.f32.mrf.mxu0
  %v6920 = vadd.f32 0.0, %v6919
  %v6921 = vpop.f32.mrf.mxu0
  %6922 = vmatprep.mubr.bf16.mxu0 0
  %6923 = vmatmul.mubr.bf16.gmra.mxu0 %v6191
  %v6924 = vpop.f32.mrf.mxu0
  %v6925 = vadd.f32 0.0, %v6924
  %v6926 = vpop.f32.mrf.mxu0
  %v6927 = vpop.f32.mrf.mxu0
  %v6928 = vadd.f32 0.0, %v6927
  %v6929 = vpop.f32.mrf.mxu0
  %6930 = vmatprep.mubr.bf16.mxu0 0
  %6931 = vmatmul.mubr.bf16.gmra.mxu0 %v6194
  %v6932 = vpop.f32.mrf.mxu0
  %v6933 = vadd.f32 0.0, %v6932
  %v6934 = vpop.f32.mrf.mxu0
  %v6935 = vpop.f32.mrf.mxu0
  %v6936 = vadd.f32 0.0, %v6935
  %v6937 = vpop.f32.mrf.mxu0
  %6938 = vmatprep.mubr.bf16.mxu0 0
  %6939 = vmatmul.mubr.bf16.gmra.mxu0 %v6194
  %v6940 = vpop.f32.mrf.mxu0
  %v6941 = vadd.f32 0.0, %v6940
  %v6942 = vpop.f32.mrf.mxu0
  %v6943 = vpop.f32.mrf.mxu0
  %v6944 = vadd.f32 0.0, %v6943
  %v6945 = vpop.f32.mrf.mxu0
  %6946 = vmatprep.mubr.bf16.mxu0 0
  %6947 = vmatmul.mubr.bf16.gmra.mxu0 %v6197
  %v6948 = vpop.f32.mrf.mxu0
  %v6949 = vadd.f32 0.0, %v6948
  %v6950 = vpop.f32.mrf.mxu0
  %v6951 = vpop.f32.mrf.mxu0
  %v6952 = vadd.f32 0.0, %v6951
  %v6953 = vpop.f32.mrf.mxu0
  %6954 = vmatprep.mubr.bf16.mxu0 0
  %6955 = vmatmul.mubr.bf16.gmra.mxu0 %v6197
  %v6956 = vpop.f32.mrf.mxu0
  %v6957 = vadd.f32 0.0, %v6956
  %v6958 = vpop.f32.mrf.mxu0
  %v6959 = vpop.f32.mrf.mxu0
  %v6960 = vadd.f32 0.0, %v6959
  %v6961 = vpop.f32.mrf.mxu0
  %6962 = vmatprep.mubr.bf16.mxu0 0
  %6963 = vmatmul.mubr.bf16.gmra.mxu0 %v6513
  %v6964 = vpop.f32.mrf.mxu0
  %v6965 = vadd.f32 0.0, %v6964
  %v6966 = vpop.f32.mrf.mxu0
  %v6967 = vpop.f32.mrf.mxu0
  %v6968 = vadd.f32 0.0, %v6967
  %v6969 = vpop.f32.mrf.mxu0
  %6970 = vmatprep.mubr.bf16.mxu0 0
  %6971 = vmatmul.mubr.bf16.gmra.mxu0 %v6200
  %v6972 = vpop.f32.mrf.mxu0
  %v6973 = vadd.f32 0.0, %v6972
  %v6974 = vpop.f32.mrf.mxu0
  %v6975 = vpop.f32.mrf.mxu0
  %v6976 = vadd.f32 0.0, %v6975
  %v6977 = vpop.f32.mrf.mxu0
  %6978 = vmatprep.mubr.bf16.mxu0 0
  %6979 = vmatmul.mubr.bf16.gmra.mxu0 %v6203
  %v6980 = vpop.f32.mrf.mxu0
  %v6981 = vadd.f32 0.0, %v6980
  %v6982 = vpop.f32.mrf.mxu0
  %v6983 = vpop.f32.mrf.mxu0
  %v6984 = vadd.f32 0.0, %v6983
  %v6985 = vpop.f32.mrf.mxu0
  %6986 = vmatprep.mubr.bf16.mxu0 0
  %6987 = vmatmul.mubr.bf16.gmra.mxu0 %v6203
  %v6988 = vpop.f32.mrf.mxu0
  %v6989 = vadd.f32 0.0, %v6988
  %v6990 = vpop.f32.mrf.mxu0
  %v6991 = vpop.f32.mrf.mxu0
  %v6992 = vadd.f32 0.0, %v6991
  %v6993 = vpop.f32.mrf.mxu0
  %6994 = vmatprep.mubr.bf16.mxu0 0
  %6995 = vmatmul.mubr.bf16.gmra.mxu0 %v6206
  %v6996 = vpop.f32.mrf.mxu0
  %v6997 = vadd.f32 0.0, %v6996
  %v6998 = vpop.f32.mrf.mxu0
  %v6999 = vpop.f32.mrf.mxu0
  %v7000 = vadd.f32 0.0, %v6999
  %v7001 = vpop.f32.mrf.mxu0
  %7002 = vmatprep.mubr.bf16.mxu0 0
  %7003 = vmatmul.mubr.bf16.gmra.mxu0 %v6206
  %v7004 = vpop.f32.mrf.mxu0
  %v7005 = vadd.f32 0.0, %v7004
  %v7006 = vpop.f32.mrf.mxu0
  %v7007 = vpop.f32.mrf.mxu0
  %v7008 = vadd.f32 0.0, %v7007
  %v7009 = vpop.f32.mrf.mxu0
  %7010 = vmatprep.mubr.bf16.mxu0 0
  %7011 = vmatmul.mubr.bf16.gmra.mxu0 %v6209
  %v7012 = vpop.f32.mrf.mxu0
  %v7013 = vadd.f32 0.0, %v7012
  %v7014 = vpop.f32.mrf.mxu0
  %v7015 = vpop.f32.mrf.mxu0
  %v7016 = vadd.f32 0.0, %v7015
  %v7017 = vpop.f32.mrf.mxu0
  %7018 = vmatprep.mubr.bf16.mxu0 0
  %7019 = vmatmul.mubr.bf16.gmra.mxu0 %v6209
  %v7020 = vpop.f32.mrf.mxu0
  %v7021 = vadd.f32 0.0, %v7020
  %v7022 = vpop.f32.mrf.mxu0
  %v7023 = vpop.f32.mrf.mxu0
  %v7024 = vadd.f32 0.0, %v7023
  %v7025 = vpop.f32.mrf.mxu0
  %7026 = vmatprep.mubr.bf16.mxu0 0
  %7027 = vmatmul.mubr.bf16.gmra.mxu0 %v6212
  %v7028 = vpop.f32.mrf.mxu0
  %v7029 = vadd.f32 0.0, %v7028
  %v7030 = vpop.f32.mrf.mxu0
  %v7031 = vpop.f32.mrf.mxu0
  %v7032 = vadd.f32 0.0, %v7031
  %v7033 = vpop.f32.mrf.mxu0
  %7034 = vmatprep.mubr.bf16.mxu0 0
  %7035 = vmatmul.mubr.bf16.gmra.mxu0 %v6212
  %v7036 = vpop.f32.mrf.mxu0
  %v7037 = vadd.f32 0.0, %v7036
  %v7038 = vpop.f32.mrf.mxu0
  %v7039 = vpop.f32.mrf.mxu0
  %v7040 = vadd.f32 0.0, %v7039
  %v7041 = vpop.f32.mrf.mxu0
  %7042 = vmatprep.mubr.bf16.mxu0 0
  %7043 = vmatmul.mubr.bf16.gmra.mxu0 %v6215
  %v7044 = vpop.f32.mrf.mxu0
  %v7045 = vadd.f32 0.0, %v7044
  %v7046 = vpop.f32.mrf.mxu0
  %v7047 = vpop.f32.mrf.mxu0
  %v7048 = vadd.f32 0.0, %v7047
  %v7049 = vpop.f32.mrf.mxu0
  %7050 = vmatprep.mubr.bf16.mxu0 0
  %7051 = vmatmul.mubr.bf16.gmra.mxu0 %v6215
  %v7052 = vpop.f32.mrf.mxu0
  %v7053 = vadd.f32 0.0, %v7052
  %v7054 = vpop.f32.mrf.mxu0
  %v7055 = vpop.f32.mrf.mxu0
  %v7056 = vadd.f32 0.0, %v7055
  %v7057 = vpop.f32.mrf.mxu0
  %7058 = vmatprep.mubr.bf16.mxu0 0
  %7059 = vmatmul.mubr.bf16.gmra.mxu0 %v6218
  %v7060 = vpop.f32.mrf.mxu0
  %v7061 = vadd.f32 0.0, %v7060
  %v7062 = vpop.f32.mrf.mxu0
  %v7063 = vpop.f32.mrf.mxu0
  %v7064 = vadd.f32 0.0, %v7063
  %v7065 = vpop.f32.mrf.mxu0
  %7066 = vmatprep.mubr.bf16.mxu0 0
  %7067 = vmatmul.mubr.bf16.gmra.mxu0 %v6218
  %v7068 = vpop.f32.mrf.mxu0
  %v7069 = vadd.f32 0.0, %v7068
  %v7070 = vpop.f32.mrf.mxu0
  %v7071 = vpop.f32.mrf.mxu0
  %v7072 = vadd.f32 0.0, %v7071
  %v7073 = vpop.f32.mrf.mxu0
  %7074 = vmatprep.mubr.bf16.mxu0 0
  %7075 = vmatmul.mubr.bf16.gmra.mxu0 %v6221
  %v7076 = vpop.f32.mrf.mxu0
  %v7077 = vadd.f32 0.0, %v7076
  %v7078 = vpop.f32.mrf.mxu0
  %v7079 = vpop.f32.mrf.mxu0
  %v7080 = vadd.f32 0.0, %v7079
  %v7081 = vpop.f32.mrf.mxu0
  %7082 = vmatprep.mubr.bf16.mxu0 0
  %7083 = vmatmul.mubr.bf16.gmra.mxu0 %v6221
  %v7084 = vpop.f32.mrf.mxu0
  %v7085 = vadd.f32 0.0, %v7084
  %v7086 = vpop.f32.mrf.mxu0
  %v7087 = vpop.f32.mrf.mxu0
  %v7088 = vadd.f32 0.0, %v7087
  %v7089 = vpop.f32.mrf.mxu0
  %7090 = vmatprep.mubr.bf16.mxu0 0
  %7091 = vmatmul.mubr.bf16.gmra.mxu0 %v6513
  %v7092 = vpop.f32.mrf.mxu0
  %v7093 = vadd.f32 0.0, %v7092
  %v7094 = vpop.f32.mrf.mxu0
  %v7095 = vpop.f32.mrf.mxu0
  %v7096 = vadd.f32 0.0, %v7095
  %v7097 = vpop.f32.mrf.mxu0
  %7098 = vdwg.mxu0
  %v7099 = vadd.f32 %v6550, %v6845
  %v7100 = vadd.f32 %v6553, %v6848
  %v7101 = vadd.f32 %v6558, %v6853
  %v7102 = vadd.f32 %v6561, %v6856
  %v7103 = vadd.f32 %v6566, %v6861
  %v7104 = vadd.f32 %v6569, %v6864
  %v7105 = vadd.f32 %v6574, %v6869
  %v7106 = vadd.f32 %v6577, %v6872
  %v7107 = vadd.f32 %v6582, %v6877
  %v7108 = vadd.f32 %v6585, %v6880
  %v7109 = vadd.f32 %v6590, %v6885
  %v7110 = vadd.f32 %v6593, %v6888
  %v7111 = vadd.f32 %v6598, %v6893
  %v7112 = vadd.f32 %v6601, %v6896
  %v7113 = vadd.f32 %v6606, %v6901
  %v7114 = vadd.f32 %v6609, %v6904
  %v7115 = vadd.f32 %v6614, %v6909
  %v7116 = vadd.f32 %v6617, %v6912
  %v7117 = vadd.f32 %v6622, %v6917
  %v7118 = vadd.f32 %v6625, %v6920
  %v7119 = vadd.f32 %v6630, %v6925
  %v7120 = vadd.f32 %v6633, %v6928
  %v7121 = vadd.f32 %v6638, %v6933
  %v7122 = vadd.f32 %v6641, %v6936
  %v7123 = vadd.f32 %v6646, %v6941
  %v7124 = vadd.f32 %v6649, %v6944
  %v7125 = vadd.f32 %v6654, %v6949
  %v7126 = vadd.f32 %v6657, %v6952
  %v7127 = vadd.f32 %v6662, %v6957
  %v7128 = vadd.f32 %v6665, %v6960
  %v7129 = vadd.f32 %v6670, %v6965
  %v7130 = vadd.f32 %v6673, %v6968
  %v7131 = vadd.f32 %v6678, %v6973
  %v7132 = vadd.f32 %v6681, %v6976
  %v7133 = vadd.f32 %v6686, %v6981
  %v7134 = vadd.f32 %v6689, %v6984
  %v7135 = vadd.f32 %v6694, %v6989
  %v7136 = vadd.f32 %v6697, %v6992
  %v7137 = vadd.f32 %v6702, %v6997
  %v7138 = vadd.f32 %v6705, %v7000
  %v7139 = vadd.f32 %v6710, %v7005
  %v7140 = vadd.f32 %v6713, %v7008
  %v7141 = vadd.f32 %v6718, %v7013
  %v7142 = vadd.f32 %v6721, %v7016
  %v7143 = vadd.f32 %v6726, %v7021
  %v7144 = vadd.f32 %v6729, %v7024
  %v7145 = vadd.f32 %v6734, %v7029
  %v7146 = vadd.f32 %v6737, %v7032
  %v7147 = vadd.f32 %v6742, %v7037
  %v7148 = vadd.f32 %v6745, %v7040
  %v7149 = vadd.f32 %v6750, %v7045
  %v7150 = vadd.f32 %v6753, %v7048
  %v7151 = vadd.f32 %v6758, %v7053
  %v7152 = vadd.f32 %v6761, %v7056
  %v7153 = vadd.f32 %v6766, %v7061
  %v7154 = vadd.f32 %v6769, %v7064
  %v7155 = vadd.f32 %v6774, %v7069
  %v7156 = vadd.f32 %v6777, %v7072
  %v7157 = vadd.f32 %v6782, %v7077
  %v7158 = vadd.f32 %v6785, %v7080
  %v7159 = vadd.f32 %v6790, %v7085
  %v7160 = vadd.f32 %v6793, %v7088
  %v7161 = vadd.f32 %v6798, %v7093
  %v7162 = vadd.f32 %v6801, %v7096
  %v7164 = vlaneseq
  %v7165 = vshrl.u32 %v7164, 7
  %v7166 = vsub.s32 0, %v7165
  %v7167 = vrot.slane %v5001, %v7166
  %v7169 = vadd.f32 %v7099, %v7167
  %v7170 = vadd.f32 %v7100, %v7167
  %v7171 = vadd.f32 %v7101, %v7167
  %v7172 = vadd.f32 %v7102, %v7167
  %v7173 = vadd.f32 %v7103, %v7167
  %v7174 = vadd.f32 %v7104, %v7167
  %v7175 = vadd.f32 %v7105, %v7167
  %v7176 = vadd.f32 %v7106, %v7167
  %v7177 = vadd.f32 %v7107, %v7167
  %v7178 = vadd.f32 %v7108, %v7167
  %v7179 = vadd.f32 %v7109, %v7167
  %v7180 = vadd.f32 %v7110, %v7167
  %v7181 = vadd.f32 %v7111, %v7167
  %v7182 = vadd.f32 %v7112, %v7167
  %v7183 = vadd.f32 %v7113, %v7167
  %v7184 = vadd.f32 %v7114, %v7167
  %v7185 = vadd.f32 %v7115, %v7167
  %v7186 = vadd.f32 %v7116, %v7167
  %v7187 = vadd.f32 %v7117, %v7167
  %v7188 = vadd.f32 %v7118, %v7167
  %v7189 = vadd.f32 %v7119, %v7167
  %v7190 = vadd.f32 %v7120, %v7167
  %v7191 = vadd.f32 %v7121, %v7167
  %v7192 = vadd.f32 %v7122, %v7167
  %v7193 = vadd.f32 %v7123, %v7167
  %v7194 = vadd.f32 %v7124, %v7167
  %v7195 = vadd.f32 %v7125, %v7167
  %v7196 = vadd.f32 %v7126, %v7167
  %v7197 = vadd.f32 %v7127, %v7167
  %v7198 = vadd.f32 %v7128, %v7167
  %v7199 = vadd.f32 %v7129, %v7167
  %v7200 = vadd.f32 %v7130, %v7167
  %v7201 = vadd.f32 %v7131, %v7167
  %v7202 = vadd.f32 %v7132, %v7167
  %v7203 = vadd.f32 %v7133, %v7167
  %v7204 = vadd.f32 %v7134, %v7167
  %v7205 = vadd.f32 %v7135, %v7167
  %v7206 = vadd.f32 %v7136, %v7167
  %v7207 = vadd.f32 %v7137, %v7167
  %v7208 = vadd.f32 %v7138, %v7167
  %v7209 = vadd.f32 %v7139, %v7167
  %v7210 = vadd.f32 %v7140, %v7167
  %v7211 = vadd.f32 %v7141, %v7167
  %v7212 = vadd.f32 %v7142, %v7167
  %v7213 = vadd.f32 %v7143, %v7167
  %v7214 = vadd.f32 %v7144, %v7167
  %v7215 = vadd.f32 %v7145, %v7167
  %v7216 = vadd.f32 %v7146, %v7167
  %v7217 = vadd.f32 %v7147, %v7167
  %v7218 = vadd.f32 %v7148, %v7167
  %v7219 = vadd.f32 %v7149, %v7167
  %v7220 = vadd.f32 %v7150, %v7167
  %v7221 = vadd.f32 %v7151, %v7167
  %v7222 = vadd.f32 %v7152, %v7167
  %v7223 = vadd.f32 %v7153, %v7167
  %v7224 = vadd.f32 %v7154, %v7167
  %v7225 = vadd.f32 %v7155, %v7167
  %v7226 = vadd.f32 %v7156, %v7167
  %v7227 = vadd.f32 %v7157, %v7167
  %v7228 = vadd.f32 %v7158, %v7167
  %v7229 = vadd.f32 %v7159, %v7167
  %v7230 = vadd.f32 %v7160, %v7167
  %v7231 = vadd.f32 %v7161, %v7167
  %v7232 = vadd.f32 %v7162, %v7167
  %vm7233 = vcmp.ge.f32.partialorder %v7169, 0.0
  %vm7234 = vcmp.ge.f32.partialorder %v7170, 0.0
  %vm7235 = vcmp.ge.f32.partialorder %v7171, 0.0
  %vm7236 = vcmp.ge.f32.partialorder %v7172, 0.0
  %vm7237 = vcmp.ge.f32.partialorder %v7173, 0.0
  %vm7238 = vcmp.ge.f32.partialorder %v7174, 0.0
  %vm7239 = vcmp.ge.f32.partialorder %v7175, 0.0
  %vm7240 = vcmp.ge.f32.partialorder %v7176, 0.0
  %vm7241 = vcmp.ge.f32.partialorder %v7177, 0.0
  %vm7242 = vcmp.ge.f32.partialorder %v7178, 0.0
  %vm7243 = vcmp.ge.f32.partialorder %v7179, 0.0
  %vm7244 = vcmp.ge.f32.partialorder %v7180, 0.0
  %vm7245 = vcmp.ge.f32.partialorder %v7181, 0.0
  %vm7246 = vcmp.ge.f32.partialorder %v7182, 0.0
  %vm7247 = vcmp.ge.f32.partialorder %v7183, 0.0
  %vm7248 = vcmp.ge.f32.partialorder %v7184, 0.0
  %vm7249 = vcmp.ge.f32.partialorder %v7185, 0.0
  %vm7250 = vcmp.ge.f32.partialorder %v7186, 0.0
  %vm7251 = vcmp.ge.f32.partialorder %v7187, 0.0
  %vm7252 = vcmp.ge.f32.partialorder %v7188, 0.0
  %vm7253 = vcmp.ge.f32.partialorder %v7189, 0.0
  %vm7254 = vcmp.ge.f32.partialorder %v7190, 0.0
  %vm7255 = vcmp.ge.f32.partialorder %v7191, 0.0
  %vm7256 = vcmp.ge.f32.partialorder %v7192, 0.0
  %vm7257 = vcmp.ge.f32.partialorder %v7193, 0.0
  %vm7258 = vcmp.ge.f32.partialorder %v7194, 0.0
  %vm7259 = vcmp.ge.f32.partialorder %v7195, 0.0
  %vm7260 = vcmp.ge.f32.partialorder %v7196, 0.0
  %vm7261 = vcmp.ge.f32.partialorder %v7197, 0.0
  %vm7262 = vcmp.ge.f32.partialorder %v7198, 0.0
  %vm7263 = vcmp.ge.f32.partialorder %v7199, 0.0
  %vm7264 = vcmp.ge.f32.partialorder %v7200, 0.0
  %vm7265 = vcmp.ge.f32.partialorder %v7201, 0.0
  %vm7266 = vcmp.ge.f32.partialorder %v7202, 0.0
  %vm7267 = vcmp.ge.f32.partialorder %v7203, 0.0
  %vm7268 = vcmp.ge.f32.partialorder %v7204, 0.0
  %vm7269 = vcmp.ge.f32.partialorder %v7205, 0.0
  %vm7270 = vcmp.ge.f32.partialorder %v7206, 0.0
  %vm7271 = vcmp.ge.f32.partialorder %v7207, 0.0
  %vm7272 = vcmp.ge.f32.partialorder %v7208, 0.0
  %vm7273 = vcmp.ge.f32.partialorder %v7209, 0.0
  %vm7274 = vcmp.ge.f32.partialorder %v7210, 0.0
  %vm7275 = vcmp.ge.f32.partialorder %v7211, 0.0
  %vm7276 = vcmp.ge.f32.partialorder %v7212, 0.0
  %vm7277 = vcmp.ge.f32.partialorder %v7213, 0.0
  %vm7278 = vcmp.ge.f32.partialorder %v7214, 0.0
  %vm7279 = vcmp.ge.f32.partialorder %v7215, 0.0
  %vm7280 = vcmp.ge.f32.partialorder %v7216, 0.0
  %vm7281 = vcmp.ge.f32.partialorder %v7217, 0.0
  %vm7282 = vcmp.ge.f32.partialorder %v7218, 0.0
  %vm7283 = vcmp.ge.f32.partialorder %v7219, 0.0
  %vm7284 = vcmp.ge.f32.partialorder %v7220, 0.0
  %vm7285 = vcmp.ge.f32.partialorder %v7221, 0.0
  %vm7286 = vcmp.ge.f32.partialorder %v7222, 0.0
  %vm7287 = vcmp.ge.f32.partialorder %v7223, 0.0
  %vm7288 = vcmp.ge.f32.partialorder %v7224, 0.0
  %vm7289 = vcmp.ge.f32.partialorder %v7225, 0.0
  %vm7290 = vcmp.ge.f32.partialorder %v7226, 0.0
  %vm7291 = vcmp.ge.f32.partialorder %v7227, 0.0
  %vm7292 = vcmp.ge.f32.partialorder %v7228, 0.0
  %vm7293 = vcmp.ge.f32.partialorder %v7229, 0.0
  %vm7294 = vcmp.ge.f32.partialorder %v7230, 0.0
  %vm7295 = vcmp.ge.f32.partialorder %v7231, 0.0
  %vm7296 = vcmp.ge.f32.partialorder %v7232, 0.0
  %v7297 = vmul.f32 %v7169, 0.2
  %v7298 = vmul.f32 %v7170, 0.2
  %v7299 = vmul.f32 %v7171, 0.2
  %v7300 = vmul.f32 %v7172, 0.2
  %v7301 = vmul.f32 %v7173, 0.2
  %v7302 = vmul.f32 %v7174, 0.2
  %v7303 = vmul.f32 %v7175, 0.2
  %v7304 = vmul.f32 %v7176, 0.2
  %v7305 = vmul.f32 %v7177, 0.2
  %v7306 = vmul.f32 %v7178, 0.2
  %v7307 = vmul.f32 %v7179, 0.2
  %v7308 = vmul.f32 %v7180, 0.2
  %v7309 = vmul.f32 %v7181, 0.2
  %v7310 = vmul.f32 %v7182, 0.2
  %v7311 = vmul.f32 %v7183, 0.2
  %v7312 = vmul.f32 %v7184, 0.2
  %v7313 = vmul.f32 %v7185, 0.2
  %v7314 = vmul.f32 %v7186, 0.2
  %v7315 = vmul.f32 %v7187, 0.2
  %v7316 = vmul.f32 %v7188, 0.2
  %v7317 = vmul.f32 %v7189, 0.2
  %v7318 = vmul.f32 %v7190, 0.2
  %v7319 = vmul.f32 %v7191, 0.2
  %v7320 = vmul.f32 %v7192, 0.2
  %v7321 = vmul.f32 %v7193, 0.2
  %v7322 = vmul.f32 %v7194, 0.2
  %v7323 = vmul.f32 %v7195, 0.2
  %v7324 = vmul.f32 %v7196, 0.2
  %v7325 = vmul.f32 %v7197, 0.2
  %v7326 = vmul.f32 %v7198, 0.2
  %v7327 = vmul.f32 %v7199, 0.2
  %v7328 = vmul.f32 %v7200, 0.2
  %v7329 = vmul.f32 %v7201, 0.2
  %v7330 = vmul.f32 %v7202, 0.2
  %v7331 = vmul.f32 %v7203, 0.2
  %v7332 = vmul.f32 %v7204, 0.2
  %v7333 = vmul.f32 %v7205, 0.2
  %v7334 = vmul.f32 %v7206, 0.2
  %v7335 = vmul.f32 %v7207, 0.2
  %v7336 = vmul.f32 %v7208, 0.2
  %v7337 = vmul.f32 %v7209, 0.2
  %v7338 = vmul.f32 %v7210, 0.2
  %v7339 = vmul.f32 %v7211, 0.2
  %v7340 = vmul.f32 %v7212, 0.2
  %v7341 = vmul.f32 %v7213, 0.2
  %v7342 = vmul.f32 %v7214, 0.2
  %v7343 = vmul.f32 %v7215, 0.2
  %v7344 = vmul.f32 %v7216, 0.2
  %v7345 = vmul.f32 %v7217, 0.2
  %v7346 = vmul.f32 %v7218, 0.2
  %v7347 = vmul.f32 %v7219, 0.2
  %v7348 = vmul.f32 %v7220, 0.2
  %v7349 = vmul.f32 %v7221, 0.2
  %v7350 = vmul.f32 %v7222, 0.2
  %v7351 = vmul.f32 %v7223, 0.2
  %v7352 = vmul.f32 %v7224, 0.2
  %v7353 = vmul.f32 %v7225, 0.2
  %v7354 = vmul.f32 %v7226, 0.2
  %v7355 = vmul.f32 %v7227, 0.2
  %v7356 = vmul.f32 %v7228, 0.2
  %v7357 = vmul.f32 %v7229, 0.2
  %v7358 = vmul.f32 %v7230, 0.2
  %v7359 = vmul.f32 %v7231, 0.2
  %v7360 = vmul.f32 %v7232, 0.2
  %v7361 = vsel %vm7233, %v7169, %v7297
  %v7362 = vsel %vm7234, %v7170, %v7298
  %v7363 = vsel %vm7235, %v7171, %v7299
  %v7364 = vsel %vm7236, %v7172, %v7300
  %v7365 = vsel %vm7237, %v7173, %v7301
  %v7366 = vsel %vm7238, %v7174, %v7302
  %v7367 = vsel %vm7239, %v7175, %v7303
  %v7368 = vsel %vm7240, %v7176, %v7304
  %v7369 = vsel %vm7241, %v7177, %v7305
  %v7370 = vsel %vm7242, %v7178, %v7306
  %v7371 = vsel %vm7243, %v7179, %v7307
  %v7372 = vsel %vm7244, %v7180, %v7308
  %v7373 = vsel %vm7245, %v7181, %v7309
  %v7374 = vsel %vm7246, %v7182, %v7310
  %v7375 = vsel %vm7247, %v7183, %v7311
  %v7376 = vsel %vm7248, %v7184, %v7312
  %v7377 = vsel %vm7249, %v7185, %v7313
  %v7378 = vsel %vm7250, %v7186, %v7314
  %v7379 = vsel %vm7251, %v7187, %v7315
  %v7380 = vsel %vm7252, %v7188, %v7316
  %v7381 = vsel %vm7253, %v7189, %v7317
  %v7382 = vsel %vm7254, %v7190, %v7318
  %v7383 = vsel %vm7255, %v7191, %v7319
  %v7384 = vsel %vm7256, %v7192, %v7320
  %v7385 = vsel %vm7257, %v7193, %v7321
  %v7386 = vsel %vm7258, %v7194, %v7322
  %v7387 = vsel %vm7259, %v7195, %v7323
  %v7388 = vsel %vm7260, %v7196, %v7324
  %v7389 = vsel %vm7261, %v7197, %v7325
  %v7390 = vsel %vm7262, %v7198, %v7326
  %v7391 = vsel %vm7263, %v7199, %v7327
  %v7392 = vsel %vm7264, %v7200, %v7328
  %v7393 = vsel %vm7265, %v7201, %v7329
  %v7394 = vsel %vm7266, %v7202, %v7330
  %v7395 = vsel %vm7267, %v7203, %v7331
  %v7396 = vsel %vm7268, %v7204, %v7332
  %v7397 = vsel %vm7269, %v7205, %v7333
  %v7398 = vsel %vm7270, %v7206, %v7334
  %v7399 = vsel %vm7271, %v7207, %v7335
  %v7400 = vsel %vm7272, %v7208, %v7336
  %v7401 = vsel %vm7273, %v7209, %v7337
  %v7402 = vsel %vm7274, %v7210, %v7338
  %v7403 = vsel %vm7275, %v7211, %v7339
  %v7404 = vsel %vm7276, %v7212, %v7340
  %v7405 = vsel %vm7277, %v7213, %v7341
  %v7406 = vsel %vm7278, %v7214, %v7342
  %v7407 = vsel %vm7279, %v7215, %v7343
  %v7408 = vsel %vm7280, %v7216, %v7344
  %v7409 = vsel %vm7281, %v7217, %v7345
  %v7410 = vsel %vm7282, %v7218, %v7346
  %v7411 = vsel %vm7283, %v7219, %v7347
  %v7412 = vsel %vm7284, %v7220, %v7348
  %v7413 = vsel %vm7285, %v7221, %v7349
  %v7414 = vsel %vm7286, %v7222, %v7350
  %v7415 = vsel %vm7287, %v7223, %v7351
  %v7416 = vsel %vm7288, %v7224, %v7352
  %v7417 = vsel %vm7289, %v7225, %v7353
  %v7418 = vsel %vm7290, %v7226, %v7354
  %v7419 = vsel %vm7291, %v7227, %v7355
  %v7420 = vsel %vm7292, %v7228, %v7356
  %v7421 = vsel %vm7293, %v7229, %v7357
  %v7422 = vsel %vm7294, %v7230, %v7358
  %v7423 = vsel %vm7295, %v7231, %v7359
  %v7424 = vsel %vm7296, %v7232, %v7360
  %v7425 = vmul.f32 %v7361, %v7361
  %v7426 = vmul.f32 %v7362, %v7362
  %v7427 = vmul.f32 %v7363, %v7363
  %v7428 = vmul.f32 %v7364, %v7364
  %v7429 = vmul.f32 %v7365, %v7365
  %v7430 = vmul.f32 %v7366, %v7366
  %v7431 = vmul.f32 %v7367, %v7367
  %v7432 = vmul.f32 %v7368, %v7368
  %v7433 = vmul.f32 %v7369, %v7369
  %v7434 = vmul.f32 %v7370, %v7370
  %v7435 = vmul.f32 %v7371, %v7371
  %v7436 = vmul.f32 %v7372, %v7372
  %v7437 = vmul.f32 %v7373, %v7373
  %v7438 = vmul.f32 %v7374, %v7374
  %v7439 = vmul.f32 %v7375, %v7375
  %v7440 = vmul.f32 %v7376, %v7376
  %v7441 = vmul.f32 %v7377, %v7377
  %v7442 = vmul.f32 %v7378, %v7378
  %v7443 = vmul.f32 %v7379, %v7379
  %v7444 = vmul.f32 %v7380, %v7380
  %v7445 = vmul.f32 %v7381, %v7381
  %v7446 = vmul.f32 %v7382, %v7382
  %v7447 = vmul.f32 %v7383, %v7383
  %v7448 = vmul.f32 %v7384, %v7384
  %v7449 = vmul.f32 %v7385, %v7385
  %v7450 = vmul.f32 %v7386, %v7386
  %v7451 = vmul.f32 %v7387, %v7387
  %v7452 = vmul.f32 %v7388, %v7388
  %v7453 = vmul.f32 %v7389, %v7389
  %v7454 = vmul.f32 %v7390, %v7390
  %v7455 = vmul.f32 %v7391, %v7391
  %v7456 = vmul.f32 %v7392, %v7392
  %v7457 = vmul.f32 %v7393, %v7393
  %v7458 = vmul.f32 %v7394, %v7394
  %v7459 = vmul.f32 %v7395, %v7395
  %v7460 = vmul.f32 %v7396, %v7396
  %v7461 = vmul.f32 %v7397, %v7397
  %v7462 = vmul.f32 %v7398, %v7398
  %v7463 = vmul.f32 %v7399, %v7399
  %v7464 = vmul.f32 %v7400, %v7400
  %v7465 = vmul.f32 %v7401, %v7401
  %v7466 = vmul.f32 %v7402, %v7402
  %v7467 = vmul.f32 %v7403, %v7403
  %v7468 = vmul.f32 %v7404, %v7404
  %v7469 = vmul.f32 %v7405, %v7405
  %v7470 = vmul.f32 %v7406, %v7406
  %v7471 = vmul.f32 %v7407, %v7407
  %v7472 = vmul.f32 %v7408, %v7408
  %v7473 = vmul.f32 %v7409, %v7409
  %v7474 = vmul.f32 %v7410, %v7410
  %v7475 = vmul.f32 %v7411, %v7411
  %v7476 = vmul.f32 %v7412, %v7412
  %v7477 = vmul.f32 %v7413, %v7413
  %v7478 = vmul.f32 %v7414, %v7414
  %v7479 = vmul.f32 %v7415, %v7415
  %v7480 = vmul.f32 %v7416, %v7416
  %v7481 = vmul.f32 %v7417, %v7417
  %v7482 = vmul.f32 %v7418, %v7418
  %v7483 = vmul.f32 %v7419, %v7419
  %v7484 = vmul.f32 %v7420, %v7420
  %v7485 = vmul.f32 %v7421, %v7421
  %v7486 = vmul.f32 %v7422, %v7422
  %v7487 = vmul.f32 %v7423, %v7423
  %v7488 = vmul.f32 %v7424, %v7424
  %v7489 = vsel %vm115, %v7425, 0.0
  %7490 = vadd.xlane.f32.xlu0 %v7489
  %v7491 = vpop.xlane.xlu0 %7490
  %v7492 = vsel %vm115, %v7426, 0.0
  %7493 = vadd.xlane.f32.xlu0 %v7492
  %v7494 = vpop.xlane.xlu0 %7493
  %v7495 = vsel %vm115, %v7427, 0.0
  %7496 = vadd.xlane.f32.xlu0 %v7495
  %v7497 = vpop.xlane.xlu0 %7496
  %v7498 = vsel %vm115, %v7428, 0.0
  %7499 = vadd.xlane.f32.xlu0 %v7498
  %v7500 = vpop.xlane.xlu0 %7499
  %v7501 = vsel %vm115, %v7429, 0.0
  %7502 = vadd.xlane.f32.xlu0 %v7501
  %v7503 = vpop.xlane.xlu0 %7502
  %v7504 = vsel %vm115, %v7430, 0.0
  %7505 = vadd.xlane.f32.xlu0 %v7504
  %v7506 = vpop.xlane.xlu0 %7505
  %v7507 = vsel %vm115, %v7431, 0.0
  %7508 = vadd.xlane.f32.xlu0 %v7507
  %v7509 = vpop.xlane.xlu0 %7508
  %v7510 = vsel %vm115, %v7432, 0.0
  %7511 = vadd.xlane.f32.xlu0 %v7510
  %v7512 = vpop.xlane.xlu0 %7511
  %v7513 = vsel %vm115, %v7433, 0.0
  %7514 = vadd.xlane.f32.xlu0 %v7513
  %v7515 = vpop.xlane.xlu0 %7514
  %v7516 = vsel %vm115, %v7434, 0.0
  %7517 = vadd.xlane.f32.xlu0 %v7516
  %v7518 = vpop.xlane.xlu0 %7517
  %v7519 = vsel %vm115, %v7435, 0.0
  %7520 = vadd.xlane.f32.xlu0 %v7519
  %v7521 = vpop.xlane.xlu0 %7520
  %v7522 = vsel %vm115, %v7436, 0.0
  %7523 = vadd.xlane.f32.xlu0 %v7522
  %v7524 = vpop.xlane.xlu0 %7523
  %v7525 = vsel %vm115, %v7437, 0.0
  %7526 = vadd.xlane.f32.xlu0 %v7525
  %v7527 = vpop.xlane.xlu0 %7526
  %v7528 = vsel %vm115, %v7438, 0.0
  %7529 = vadd.xlane.f32.xlu0 %v7528
  %v7530 = vpop.xlane.xlu0 %7529
  %v7531 = vsel %vm115, %v7439, 0.0
  %7532 = vadd.xlane.f32.xlu0 %v7531
  %v7533 = vpop.xlane.xlu0 %7532
  %v7534 = vsel %vm115, %v7440, 0.0
  %7535 = vadd.xlane.f32.xlu0 %v7534
  %v7536 = vpop.xlane.xlu0 %7535
  %v7537 = vsel %vm115, %v7441, 0.0
  %7538 = vadd.xlane.f32.xlu0 %v7537
  %v7539 = vpop.xlane.xlu0 %7538
  %v7540 = vsel %vm115, %v7442, 0.0
  %7541 = vadd.xlane.f32.xlu0 %v7540
  %v7542 = vpop.xlane.xlu0 %7541
  %v7543 = vsel %vm115, %v7443, 0.0
  %7544 = vadd.xlane.f32.xlu0 %v7543
  %v7545 = vpop.xlane.xlu0 %7544
  %v7546 = vsel %vm115, %v7444, 0.0
  %7547 = vadd.xlane.f32.xlu0 %v7546
  %v7548 = vpop.xlane.xlu0 %7547
  %v7549 = vsel %vm115, %v7445, 0.0
  %7550 = vadd.xlane.f32.xlu0 %v7549
  %v7551 = vpop.xlane.xlu0 %7550
  %v7552 = vsel %vm115, %v7446, 0.0
  %7553 = vadd.xlane.f32.xlu0 %v7552
  %v7554 = vpop.xlane.xlu0 %7553
  %v7555 = vsel %vm115, %v7447, 0.0
  %7556 = vadd.xlane.f32.xlu0 %v7555
  %v7557 = vpop.xlane.xlu0 %7556
  %v7558 = vsel %vm115, %v7448, 0.0
  %7559 = vadd.xlane.f32.xlu0 %v7558
  %v7560 = vpop.xlane.xlu0 %7559
  %v7561 = vsel %vm115, %v7449, 0.0
  %7562 = vadd.xlane.f32.xlu0 %v7561
  %v7563 = vpop.xlane.xlu0 %7562
  %v7564 = vsel %vm115, %v7450, 0.0
  %7565 = vadd.xlane.f32.xlu0 %v7564
  %v7566 = vpop.xlane.xlu0 %7565
  %v7567 = vsel %vm115, %v7451, 0.0
  %7568 = vadd.xlane.f32.xlu0 %v7567
  %v7569 = vpop.xlane.xlu0 %7568
  %v7570 = vsel %vm115, %v7452, 0.0
  %7571 = vadd.xlane.f32.xlu0 %v7570
  %v7572 = vpop.xlane.xlu0 %7571
  %v7573 = vsel %vm115, %v7453, 0.0
  %7574 = vadd.xlane.f32.xlu0 %v7573
  %v7575 = vpop.xlane.xlu0 %7574
  %v7576 = vsel %vm115, %v7454, 0.0
  %7577 = vadd.xlane.f32.xlu0 %v7576
  %v7578 = vpop.xlane.xlu0 %7577
  %v7579 = vsel %vm115, %v7455, 0.0
  %7580 = vadd.xlane.f32.xlu0 %v7579
  %v7581 = vpop.xlane.xlu0 %7580
  %v7582 = vsel %vm115, %v7456, 0.0
  %7583 = vadd.xlane.f32.xlu0 %v7582
  %v7584 = vpop.xlane.xlu0 %7583
  %v7585 = vsel %vm115, %v7457, 0.0
  %7586 = vadd.xlane.f32.xlu0 %v7585
  %v7587 = vpop.xlane.xlu0 %7586
  %v7588 = vsel %vm115, %v7458, 0.0
  %7589 = vadd.xlane.f32.xlu0 %v7588
  %v7590 = vpop.xlane.xlu0 %7589
  %v7591 = vsel %vm115, %v7459, 0.0
  %7592 = vadd.xlane.f32.xlu0 %v7591
  %v7593 = vpop.xlane.xlu0 %7592
  %v7594 = vsel %vm115, %v7460, 0.0
  %7595 = vadd.xlane.f32.xlu0 %v7594
  %v7596 = vpop.xlane.xlu0 %7595
  %v7597 = vsel %vm115, %v7461, 0.0
  %7598 = vadd.xlane.f32.xlu0 %v7597
  %v7599 = vpop.xlane.xlu0 %7598
  %v7600 = vsel %vm115, %v7462, 0.0
  %7601 = vadd.xlane.f32.xlu0 %v7600
  %v7602 = vpop.xlane.xlu0 %7601
  %v7603 = vsel %vm115, %v7463, 0.0
  %7604 = vadd.xlane.f32.xlu0 %v7603
  %v7605 = vpop.xlane.xlu0 %7604
  %v7606 = vsel %vm115, %v7464, 0.0
  %7607 = vadd.xlane.f32.xlu0 %v7606
  %v7608 = vpop.xlane.xlu0 %7607
  %v7609 = vsel %vm115, %v7465, 0.0
  %7610 = vadd.xlane.f32.xlu0 %v7609
  %v7611 = vpop.xlane.xlu0 %7610
  %v7612 = vsel %vm115, %v7466, 0.0
  %7613 = vadd.xlane.f32.xlu0 %v7612
  %v7614 = vpop.xlane.xlu0 %7613
  %v7615 = vsel %vm115, %v7467, 0.0
  %7616 = vadd.xlane.f32.xlu0 %v7615
  %v7617 = vpop.xlane.xlu0 %7616
  %v7618 = vsel %vm115, %v7468, 0.0
  %7619 = vadd.xlane.f32.xlu0 %v7618
  %v7620 = vpop.xlane.xlu0 %7619
  %v7621 = vsel %vm115, %v7469, 0.0
  %7622 = vadd.xlane.f32.xlu0 %v7621
  %v7623 = vpop.xlane.xlu0 %7622
  %v7624 = vsel %vm115, %v7470, 0.0
  %7625 = vadd.xlane.f32.xlu0 %v7624
  %v7626 = vpop.xlane.xlu0 %7625
  %v7627 = vsel %vm115, %v7471, 0.0
  %7628 = vadd.xlane.f32.xlu0 %v7627
  %v7629 = vpop.xlane.xlu0 %7628
  %v7630 = vsel %vm115, %v7472, 0.0
  %7631 = vadd.xlane.f32.xlu0 %v7630
  %v7632 = vpop.xlane.xlu0 %7631
  %v7633 = vsel %vm115, %v7473, 0.0
  %7634 = vadd.xlane.f32.xlu0 %v7633
  %v7635 = vpop.xlane.xlu0 %7634
  %v7636 = vsel %vm115, %v7474, 0.0
  %7637 = vadd.xlane.f32.xlu0 %v7636
  %v7638 = vpop.xlane.xlu0 %7637
  %v7639 = vsel %vm115, %v7475, 0.0
  %7640 = vadd.xlane.f32.xlu0 %v7639
  %v7641 = vpop.xlane.xlu0 %7640
  %v7642 = vsel %vm115, %v7476, 0.0
  %7643 = vadd.xlane.f32.xlu0 %v7642
  %v7644 = vpop.xlane.xlu0 %7643
  %v7645 = vsel %vm115, %v7477, 0.0
  %7646 = vadd.xlane.f32.xlu0 %v7645
  %v7647 = vpop.xlane.xlu0 %7646
  %v7648 = vsel %vm115, %v7478, 0.0
  %7649 = vadd.xlane.f32.xlu0 %v7648
  %v7650 = vpop.xlane.xlu0 %7649
  %v7651 = vsel %vm115, %v7479, 0.0
  %7652 = vadd.xlane.f32.xlu0 %v7651
  %v7653 = vpop.xlane.xlu0 %7652
  %v7654 = vsel %vm115, %v7480, 0.0
  %7655 = vadd.xlane.f32.xlu0 %v7654
  %v7656 = vpop.xlane.xlu0 %7655
  %v7657 = vsel %vm115, %v7481, 0.0
  %7658 = vadd.xlane.f32.xlu0 %v7657
  %v7659 = vpop.xlane.xlu0 %7658
  %v7660 = vsel %vm115, %v7482, 0.0
  %7661 = vadd.xlane.f32.xlu0 %v7660
  %v7662 = vpop.xlane.xlu0 %7661
  %v7663 = vsel %vm115, %v7483, 0.0
  %7664 = vadd.xlane.f32.xlu0 %v7663
  %v7665 = vpop.xlane.xlu0 %7664
  %v7666 = vsel %vm115, %v7484, 0.0
  %7667 = vadd.xlane.f32.xlu0 %v7666
  %v7668 = vpop.xlane.xlu0 %7667
  %v7669 = vsel %vm115, %v7485, 0.0
  %7670 = vadd.xlane.f32.xlu0 %v7669
  %v7671 = vpop.xlane.xlu0 %7670
  %v7672 = vsel %vm115, %v7486, 0.0
  %7673 = vadd.xlane.f32.xlu0 %v7672
  %v7674 = vpop.xlane.xlu0 %7673
  %v7675 = vsel %vm115, %v7487, 0.0
  %7676 = vadd.xlane.f32.xlu0 %v7675
  %v7677 = vpop.xlane.xlu0 %7676
  %v7678 = vsel %vm115, %v7488, 0.0
  %7679 = vadd.xlane.f32.xlu0 %v7678
  %v7680 = vpop.xlane.xlu0 %7679
  %v7681 = vmul.f32 %v7491, %v477
  %v7682 = vmul.f32 %v7494, %v477
  %v7683 = vmul.f32 %v7497, %v477
  %v7684 = vmul.f32 %v7500, %v477
  %v7685 = vmul.f32 %v7503, %v477
  %v7686 = vmul.f32 %v7506, %v477
  %v7687 = vmul.f32 %v7509, %v477
  %v7688 = vmul.f32 %v7512, %v477
  %v7689 = vmul.f32 %v7515, %v477
  %v7690 = vmul.f32 %v7518, %v477
  %v7691 = vmul.f32 %v7521, %v477
  %v7692 = vmul.f32 %v7524, %v477
  %v7693 = vmul.f32 %v7527, %v477
  %v7694 = vmul.f32 %v7530, %v477
  %v7695 = vmul.f32 %v7533, %v477
  %v7696 = vmul.f32 %v7536, %v477
  %v7697 = vmul.f32 %v7539, %v477
  %v7698 = vmul.f32 %v7542, %v477
  %v7699 = vmul.f32 %v7545, %v477
  %v7700 = vmul.f32 %v7548, %v477
  %v7701 = vmul.f32 %v7551, %v477
  %v7702 = vmul.f32 %v7554, %v477
  %v7703 = vmul.f32 %v7557, %v477
  %v7704 = vmul.f32 %v7560, %v477
  %v7705 = vmul.f32 %v7563, %v477
  %v7706 = vmul.f32 %v7566, %v477
  %v7707 = vmul.f32 %v7569, %v477
  %v7708 = vmul.f32 %v7572, %v477
  %v7709 = vmul.f32 %v7575, %v477
  %v7710 = vmul.f32 %v7578, %v477
  %v7711 = vmul.f32 %v7581, %v477
  %v7712 = vmul.f32 %v7584, %v477
  %v7713 = vmul.f32 %v7587, %v477
  %v7714 = vmul.f32 %v7590, %v477
  %v7715 = vmul.f32 %v7593, %v477
  %v7716 = vmul.f32 %v7596, %v477
  %v7717 = vmul.f32 %v7599, %v477
  %v7718 = vmul.f32 %v7602, %v477
  %v7719 = vmul.f32 %v7605, %v477
  %v7720 = vmul.f32 %v7608, %v477
  %v7721 = vmul.f32 %v7611, %v477
  %v7722 = vmul.f32 %v7614, %v477
  %v7723 = vmul.f32 %v7617, %v477
  %v7724 = vmul.f32 %v7620, %v477
  %v7725 = vmul.f32 %v7623, %v477
  %v7726 = vmul.f32 %v7626, %v477
  %v7727 = vmul.f32 %v7629, %v477
  %v7728 = vmul.f32 %v7632, %v477
  %v7729 = vmul.f32 %v7635, %v477
  %v7730 = vmul.f32 %v7638, %v477
  %v7731 = vmul.f32 %v7641, %v477
  %v7732 = vmul.f32 %v7644, %v477
  %v7733 = vmul.f32 %v7647, %v477
  %v7734 = vmul.f32 %v7650, %v477
  %v7735 = vmul.f32 %v7653, %v477
  %v7736 = vmul.f32 %v7656, %v477
  %v7737 = vmul.f32 %v7659, %v477
  %v7738 = vmul.f32 %v7662, %v477
  %v7739 = vmul.f32 %v7665, %v477
  %v7740 = vmul.f32 %v7668, %v477
  %v7741 = vmul.f32 %v7671, %v477
  %v7742 = vmul.f32 %v7674, %v477
  %v7743 = vmul.f32 %v7677, %v477
  %v7744 = vmul.f32 %v7680, %v477
  %v7745 = vadd.f32 %v7681, 1e-08
  %v7746 = vadd.f32 %v7682, 1e-08
  %v7747 = vadd.f32 %v7683, 1e-08
  %v7748 = vadd.f32 %v7684, 1e-08
  %v7749 = vadd.f32 %v7685, 1e-08
  %v7750 = vadd.f32 %v7686, 1e-08
  %v7751 = vadd.f32 %v7687, 1e-08
  %v7752 = vadd.f32 %v7688, 1e-08
  %v7753 = vadd.f32 %v7689, 1e-08
  %v7754 = vadd.f32 %v7690, 1e-08
  %v7755 = vadd.f32 %v7691, 1e-08
  %v7756 = vadd.f32 %v7692, 1e-08
  %v7757 = vadd.f32 %v7693, 1e-08
  %v7758 = vadd.f32 %v7694, 1e-08
  %v7759 = vadd.f32 %v7695, 1e-08
  %v7760 = vadd.f32 %v7696, 1e-08
  %v7761 = vadd.f32 %v7697, 1e-08
  %v7762 = vadd.f32 %v7698, 1e-08
  %v7763 = vadd.f32 %v7699, 1e-08
  %v7764 = vadd.f32 %v7700, 1e-08
  %v7765 = vadd.f32 %v7701, 1e-08
  %v7766 = vadd.f32 %v7702, 1e-08
  %v7767 = vadd.f32 %v7703, 1e-08
  %v7768 = vadd.f32 %v7704, 1e-08
  %v7769 = vadd.f32 %v7705, 1e-08
  %v7770 = vadd.f32 %v7706, 1e-08
  %v7771 = vadd.f32 %v7707, 1e-08
  %v7772 = vadd.f32 %v7708, 1e-08
  %v7773 = vadd.f32 %v7709, 1e-08
  %v7774 = vadd.f32 %v7710, 1e-08
  %v7775 = vadd.f32 %v7711, 1e-08
  %v7776 = vadd.f32 %v7712, 1e-08
  %v7777 = vadd.f32 %v7713, 1e-08
  %v7778 = vadd.f32 %v7714, 1e-08
  %v7779 = vadd.f32 %v7715, 1e-08
  %v7780 = vadd.f32 %v7716, 1e-08
  %v7781 = vadd.f32 %v7717, 1e-08
  %v7782 = vadd.f32 %v7718, 1e-08
  %v7783 = vadd.f32 %v7719, 1e-08
  %v7784 = vadd.f32 %v7720, 1e-08
  %v7785 = vadd.f32 %v7721, 1e-08
  %v7786 = vadd.f32 %v7722, 1e-08
  %v7787 = vadd.f32 %v7723, 1e-08
  %v7788 = vadd.f32 %v7724, 1e-08
  %v7789 = vadd.f32 %v7725, 1e-08
  %v7790 = vadd.f32 %v7726, 1e-08
  %v7791 = vadd.f32 %v7727, 1e-08
  %v7792 = vadd.f32 %v7728, 1e-08
  %v7793 = vadd.f32 %v7729, 1e-08
  %v7794 = vadd.f32 %v7730, 1e-08
  %v7795 = vadd.f32 %v7731, 1e-08
  %v7796 = vadd.f32 %v7732, 1e-08
  %v7797 = vadd.f32 %v7733, 1e-08
  %v7798 = vadd.f32 %v7734, 1e-08
  %v7799 = vadd.f32 %v7735, 1e-08
  %v7800 = vadd.f32 %v7736, 1e-08
  %v7801 = vadd.f32 %v7737, 1e-08
  %v7802 = vadd.f32 %v7738, 1e-08
  %v7803 = vadd.f32 %v7739, 1e-08
  %v7804 = vadd.f32 %v7740, 1e-08
  %v7805 = vadd.f32 %v7741, 1e-08
  %v7806 = vadd.f32 %v7742, 1e-08
  %v7807 = vadd.f32 %v7743, 1e-08
  %v7808 = vadd.f32 %v7744, 1e-08
  %v7809 = vrsqrt.pop %v7745
  %v7810 = vrsqrt.pop %v7746
  %v7811 = vrsqrt.pop %v7747
  %v7812 = vrsqrt.pop %v7748
  %v7813 = vrsqrt.pop %v7749
  %v7814 = vrsqrt.pop %v7750
  %v7815 = vrsqrt.pop %v7751
  %v7816 = vrsqrt.pop %v7752
  %v7817 = vrsqrt.pop %v7753
  %v7818 = vrsqrt.pop %v7754
  %v7819 = vrsqrt.pop %v7755
  %v7820 = vrsqrt.pop %v7756
  %v7821 = vrsqrt.pop %v7757
  %v7822 = vrsqrt.pop %v7758
  %v7823 = vrsqrt.pop %v7759
  %v7824 = vrsqrt.pop %v7760
  %v7825 = vrsqrt.pop %v7761
  %v7826 = vrsqrt.pop %v7762
  %v7827 = vrsqrt.pop %v7763
  %v7828 = vrsqrt.pop %v7764
  %v7829 = vrsqrt.pop %v7765
  %v7830 = vrsqrt.pop %v7766
  %v7831 = vrsqrt.pop %v7767
  %v7832 = vrsqrt.pop %v7768
  %v7833 = vrsqrt.pop %v7769
  %v7834 = vrsqrt.pop %v7770
  %v7835 = vrsqrt.pop %v7771
  %v7836 = vrsqrt.pop %v7772
  %v7837 = vrsqrt.pop %v7773
  %v7838 = vrsqrt.pop %v7774
  %v7839 = vrsqrt.pop %v7775
  %v7840 = vrsqrt.pop %v7776
  %v7841 = vrsqrt.pop %v7777
  %v7842 = vrsqrt.pop %v7778
  %v7843 = vrsqrt.pop %v7779
  %v7844 = vrsqrt.pop %v7780
  %v7845 = vrsqrt.pop %v7781
  %v7846 = vrsqrt.pop %v7782
  %v7847 = vrsqrt.pop %v7783
  %v7848 = vrsqrt.pop %v7784
  %v7849 = vrsqrt.pop %v7785
  %v7850 = vrsqrt.pop %v7786
  %v7851 = vrsqrt.pop %v7787
  %v7852 = vrsqrt.pop %v7788
  %v7853 = vrsqrt.pop %v7789
  %v7854 = vrsqrt.pop %v7790
  %v7855 = vrsqrt.pop %v7791
  %v7856 = vrsqrt.pop %v7792
  %v7857 = vrsqrt.pop %v7793
  %v7858 = vrsqrt.pop %v7794
  %v7859 = vrsqrt.pop %v7795
  %v7860 = vrsqrt.pop %v7796
  %v7861 = vrsqrt.pop %v7797
  %v7862 = vrsqrt.pop %v7798
  %v7863 = vrsqrt.pop %v7799
  %v7864 = vrsqrt.pop %v7800
  %v7865 = vrsqrt.pop %v7801
  %v7866 = vrsqrt.pop %v7802
  %v7867 = vrsqrt.pop %v7803
  %v7868 = vrsqrt.pop %v7804
  %v7869 = vrsqrt.pop %v7805
  %v7870 = vrsqrt.pop %v7806
  %v7871 = vrsqrt.pop %v7807
  %v7872 = vrsqrt.pop %v7808
  %v7873 = vmul.f32 %v7361, %v7809
  %v7874 = vmul.f32 %v7362, %v7810
  %v7875 = vmul.f32 %v7363, %v7811
  %v7876 = vmul.f32 %v7364, %v7812
  %v7877 = vmul.f32 %v7365, %v7813
  %v7878 = vmul.f32 %v7366, %v7814
  %v7879 = vmul.f32 %v7367, %v7815
  %v7880 = vmul.f32 %v7368, %v7816
  %v7881 = vmul.f32 %v7369, %v7817
  %v7882 = vmul.f32 %v7370, %v7818
  %v7883 = vmul.f32 %v7371, %v7819
  %v7884 = vmul.f32 %v7372, %v7820
  %v7885 = vmul.f32 %v7373, %v7821
  %v7886 = vmul.f32 %v7374, %v7822
  %v7887 = vmul.f32 %v7375, %v7823
  %v7888 = vmul.f32 %v7376, %v7824
  %v7889 = vmul.f32 %v7377, %v7825
  %v7890 = vmul.f32 %v7378, %v7826
  %v7891 = vmul.f32 %v7379, %v7827
  %v7892 = vmul.f32 %v7380, %v7828
  %v7893 = vmul.f32 %v7381, %v7829
  %v7894 = vmul.f32 %v7382, %v7830
  %v7895 = vmul.f32 %v7383, %v7831
  %v7896 = vmul.f32 %v7384, %v7832
  %v7897 = vmul.f32 %v7385, %v7833
  %v7898 = vmul.f32 %v7386, %v7834
  %v7899 = vmul.f32 %v7387, %v7835
  %v7900 = vmul.f32 %v7388, %v7836
  %v7901 = vmul.f32 %v7389, %v7837
  %v7902 = vmul.f32 %v7390, %v7838
  %v7903 = vmul.f32 %v7391, %v7839
  %v7904 = vmul.f32 %v7392, %v7840
  %v7905 = vmul.f32 %v7393, %v7841
  %v7906 = vmul.f32 %v7394, %v7842
  %v7907 = vmul.f32 %v7395, %v7843
  %v7908 = vmul.f32 %v7396, %v7844
  %v7909 = vmul.f32 %v7397, %v7845
  %v7910 = vmul.f32 %v7398, %v7846
  %v7911 = vmul.f32 %v7399, %v7847
  %v7912 = vmul.f32 %v7400, %v7848
  %v7913 = vmul.f32 %v7401, %v7849
  %v7914 = vmul.f32 %v7402, %v7850
  %v7915 = vmul.f32 %v7403, %v7851
  %v7916 = vmul.f32 %v7404, %v7852
  %v7917 = vmul.f32 %v7405, %v7853
  %v7918 = vmul.f32 %v7406, %v7854
  %v7919 = vmul.f32 %v7407, %v7855
  %v7920 = vmul.f32 %v7408, %v7856
  %v7921 = vmul.f32 %v7409, %v7857
  %v7922 = vmul.f32 %v7410, %v7858
  %v7923 = vmul.f32 %v7411, %v7859
  %v7924 = vmul.f32 %v7412, %v7860
  %v7925 = vmul.f32 %v7413, %v7861
  %v7926 = vmul.f32 %v7414, %v7862
  %v7927 = vmul.f32 %v7415, %v7863
  %v7928 = vmul.f32 %v7416, %v7864
  %v7929 = vmul.f32 %v7417, %v7865
  %v7930 = vmul.f32 %v7418, %v7866
  %v7931 = vmul.f32 %v7419, %v7867
  %v7932 = vmul.f32 %v7420, %v7868
  %v7933 = vmul.f32 %v7421, %v7869
  %v7934 = vmul.f32 %v7422, %v7870
  %v7935 = vmul.f32 %v7423, %v7871
  %v7936 = vmul.f32 %v7424, %v7872
  %v7937 = vld [vmem:[%s14] sm:$0xff]
  %v7938 = vld [vmem:[%s14 + $0x8] sm:$0xff]
  %v7939 = vld [vmem:[%s14 + $0x10] sm:$0xff]
  %v7940 = vld [vmem:[%s14 + $0x18] sm:$0xff]
  %v7941 = vld [vmem:[%s14 + $0x20] sm:$0xff]
  %v7942 = vld [vmem:[%s14 + $0x28] sm:$0xff]
  %v7943 = vld [vmem:[%s14 + $0x30] sm:$0xff]
  %v7944 = vld [vmem:[%s14 + $0x38] sm:$0xff]
  %v7945 = vld [vmem:[%s14 + $0x40] sm:$0xff]
  %v7946 = vld [vmem:[%s14 + $0x48] sm:$0xff]
  %v7947 = vld [vmem:[%s14 + $0x50] sm:$0xff]
  %v7948 = vld [vmem:[%s14 + $0x58] sm:$0xff]
  %v7949 = vld [vmem:[%s14 + $0x60] sm:$0xff]
  %v7950 = vld [vmem:[%s14 + $0x68] sm:$0xff]
  %v7951 = vld [vmem:[%s14 + $0x70] sm:$0xff]
  %v7952 = vld [vmem:[%s14 + $0x78] sm:$0xff]
  %v7953 = vld [vmem:[%s14 + $0x80] sm:$0xff]
  %v7954 = vld [vmem:[%s14 + $0x88] sm:$0xff]
  %v7955 = vld [vmem:[%s14 + $0x90] sm:$0xff]
  %v7956 = vld [vmem:[%s14 + $0x98] sm:$0xff]
  %v7957 = vld [vmem:[%s14 + $0xa0] sm:$0xff]
  %v7958 = vld [vmem:[%s14 + $0xa8] sm:$0xff]
  %v7959 = vld [vmem:[%s14 + $0xb0] sm:$0xff]
  %v7960 = vld [vmem:[%s14 + $0xb8] sm:$0xff]
  %v7961 = vld [vmem:[%s14 + $0xc0] sm:$0xff]
  %v7962 = vld [vmem:[%s14 + $0xc8] sm:$0xff]
  %v7963 = vld [vmem:[%s14 + $0xd0] sm:$0xff]
  %v7964 = vld [vmem:[%s14 + $0xd8] sm:$0xff]
  %v7965 = vld [vmem:[%s14 + $0xe0] sm:$0xff]
  %v7966 = vld [vmem:[%s14 + $0xe8] sm:$0xff]
  %v7967 = vld [vmem:[%s14 + $0xf0] sm:$0xff]
  %v7968 = vld [vmem:[%s14 + $0xf8] sm:$0xff]
  %v7969 = vld [vmem:[%s14 + $0x100] sm:$0xff]
  %v7970 = vld [vmem:[%s14 + $0x108] sm:$0xff]
  %v7971 = vld [vmem:[%s14 + $0x110] sm:$0xff]
  %v7972 = vld [vmem:[%s14 + $0x118] sm:$0xff]
  %v7973 = vld [vmem:[%s15] sm:$0x1]
  %v8038 = vrot.slane %v7873, 7
  %v8039 = vrot.slane %v7874, 7
  %v8040 = vsel %vm264, %v8038, %v8039
  %v8041 = vrot.slane %v7875, 7
  %v8042 = vrot.slane %v7876, 7
  %v8043 = vsel %vm264, %v8041, %v8042
  %v8044 = vrot.slane %v7877, 7
  %v8045 = vrot.slane %v7878, 7
  %v8046 = vsel %vm264, %v8044, %v8045
  %v8047 = vrot.slane %v7879, 7
  %v8048 = vrot.slane %v7880, 7
  %v8049 = vsel %vm264, %v8047, %v8048
  %v8050 = vrot.slane %v7881, 7
  %v8051 = vrot.slane %v7882, 7
  %v8052 = vsel %vm264, %v8050, %v8051
  %v8053 = vrot.slane %v7883, 7
  %v8054 = vrot.slane %v7884, 7
  %v8055 = vsel %vm264, %v8053, %v8054
  %v8056 = vrot.slane %v7885, 7
  %v8057 = vrot.slane %v7886, 7
  %v8058 = vsel %vm264, %v8056, %v8057
  %v8059 = vrot.slane %v7887, 7
  %v8060 = vrot.slane %v7888, 7
  %v8061 = vsel %vm264, %v8059, %v8060
  %v8062 = vrot.slane %v7889, 7
  %v8063 = vrot.slane %v7890, 7
  %v8064 = vsel %vm264, %v8062, %v8063
  %v8065 = vrot.slane %v7891, 7
  %v8066 = vrot.slane %v7892, 7
  %v8067 = vsel %vm264, %v8065, %v8066
  %v8068 = vrot.slane %v7893, 7
  %v8069 = vrot.slane %v7894, 7
  %v8070 = vsel %vm264, %v8068, %v8069
  %v8071 = vrot.slane %v7895, 7
  %v8072 = vrot.slane %v7896, 7
  %v8073 = vsel %vm264, %v8071, %v8072
  %v8074 = vrot.slane %v7897, 7
  %v8075 = vrot.slane %v7898, 7
  %v8076 = vsel %vm264, %v8074, %v8075
  %v8077 = vrot.slane %v7899, 7
  %v8078 = vrot.slane %v7900, 7
  %v8079 = vsel %vm264, %v8077, %v8078
  %v8080 = vrot.slane %v7901, 7
  %v8081 = vrot.slane %v7902, 7
  %v8082 = vsel %vm264, %v8080, %v8081
  %v8083 = vrot.slane %v7903, 7
  %v8084 = vrot.slane %v7904, 7
  %v8085 = vsel %vm264, %v8083, %v8084
  %v8086 = vrot.slane %v7905, 7
  %v8087 = vrot.slane %v7906, 7
  %v8088 = vsel %vm264, %v8086, %v8087
  %v8089 = vrot.slane %v7907, 7
  %v8090 = vrot.slane %v7908, 7
  %v8091 = vsel %vm264, %v8089, %v8090
  %v8092 = vrot.slane %v7909, 7
  %v8093 = vrot.slane %v7910, 7
  %v8094 = vsel %vm264, %v8092, %v8093
  %v8095 = vrot.slane %v7911, 7
  %v8096 = vrot.slane %v7912, 7
  %v8097 = vsel %vm264, %v8095, %v8096
  %v8098 = vrot.slane %v7913, 7
  %v8099 = vrot.slane %v7914, 7
  %v8100 = vsel %vm264, %v8098, %v8099
  %v8101 = vrot.slane %v7915, 7
  %v8102 = vrot.slane %v7916, 7
  %v8103 = vsel %vm264, %v8101, %v8102
  %v8104 = vrot.slane %v7917, 7
  %v8105 = vrot.slane %v7918, 7
  %v8106 = vsel %vm264, %v8104, %v8105
  %v8107 = vrot.slane %v7919, 7
  %v8108 = vrot.slane %v7920, 7
  %v8109 = vsel %vm264, %v8107, %v8108
  %v8110 = vrot.slane %v7921, 7
  %v8111 = vrot.slane %v7922, 7
  %v8112 = vsel %vm264, %v8110, %v8111
  %v8113 = vrot.slane %v7923, 7
  %v8114 = vrot.slane %v7924, 7
  %v8115 = vsel %vm264, %v8113, %v8114
  %v8116 = vrot.slane %v7925, 7
  %v8117 = vrot.slane %v7926, 7
  %v8118 = vsel %vm264, %v8116, %v8117
  %v8119 = vrot.slane %v7927, 7
  %v8120 = vrot.slane %v7928, 7
  %v8121 = vsel %vm264, %v8119, %v8120
  %v8122 = vrot.slane %v7929, 7
  %v8123 = vrot.slane %v7930, 7
  %v8124 = vsel %vm264, %v8122, %v8123
  %v8125 = vrot.slane %v7931, 7
  %v8126 = vrot.slane %v7932, 7
  %v8127 = vsel %vm264, %v8125, %v8126
  %v8128 = vrot.slane %v7933, 7
  %v8129 = vrot.slane %v7934, 7
  %v8130 = vsel %vm264, %v8128, %v8129
  %v8131 = vrot.slane %v7935, 7
  %v8132 = vrot.slane %v7936, 7
  %v8133 = vsel %vm264, %v8131, %v8132
  %v8230 = vsel %vm264, 0.0, %v8038
  %v8231 = vsel %vm264, 0.0, %v8041
  %v8232 = vsel %vm264, 0.0, %v8044
  %v8233 = vsel %vm264, 0.0, %v8047
  %v8234 = vsel %vm264, 0.0, %v8050
  %v8235 = vsel %vm264, 0.0, %v8053
  %v8236 = vsel %vm264, 0.0, %v8056
  %v8237 = vsel %vm264, 0.0, %v8059
  %v8238 = vsel %vm264, 0.0, %v8062
  %v8239 = vsel %vm264, 0.0, %v8065
  %v8240 = vsel %vm264, 0.0, %v8068
  %v8241 = vsel %vm264, 0.0, %v8071
  %v8242 = vsel %vm264, 0.0, %v8074
  %v8243 = vsel %vm264, 0.0, %v8077
  %v8244 = vsel %vm264, 0.0, %v8080
  %v8245 = vsel %vm264, 0.0, %v8083
  %v8246 = vsel %vm264, 0.0, %v8086
  %v8247 = vsel %vm264, 0.0, %v8089
  %v8248 = vsel %vm264, 0.0, %v8092
  %v8249 = vsel %vm264, 0.0, %v8095
  %v8250 = vsel %vm264, 0.0, %v8098
  %v8251 = vsel %vm264, 0.0, %v8101
  %v8252 = vsel %vm264, 0.0, %v8104
  %v8253 = vsel %vm264, 0.0, %v8107
  %v8254 = vsel %vm264, 0.0, %v8110
  %v8255 = vsel %vm264, 0.0, %v8113
  %v8256 = vsel %vm264, 0.0, %v8116
  %v8257 = vsel %vm264, 0.0, %v8119
  %v8258 = vsel %vm264, 0.0, %v8122
  %v8259 = vsel %vm264, 0.0, %v8125
  %v8260 = vsel %vm264, 0.0, %v8128
  %v8261 = vsel %vm264, 0.0, %v8131
  %v8262 = vsel %vm264, %v8039, 0.0
  %v8263 = vsel %vm264, %v8042, 0.0
  %v8264 = vsel %vm264, %v8045, 0.0
  %v8265 = vsel %vm264, %v8048, 0.0
  %v8266 = vsel %vm264, %v8051, 0.0
  %v8267 = vsel %vm264, %v8054, 0.0
  %v8268 = vsel %vm264, %v8057, 0.0
  %v8269 = vsel %vm264, %v8060, 0.0
  %v8270 = vsel %vm264, %v8063, 0.0
  %v8271 = vsel %vm264, %v8066, 0.0
  %v8272 = vsel %vm264, %v8069, 0.0
  %v8273 = vsel %vm264, %v8072, 0.0
  %v8274 = vsel %vm264, %v8075, 0.0
  %v8275 = vsel %vm264, %v8078, 0.0
  %v8276 = vsel %vm264, %v8081, 0.0
  %v8277 = vsel %vm264, %v8084, 0.0
  %v8278 = vsel %vm264, %v8087, 0.0
  %v8279 = vsel %vm264, %v8090, 0.0
  %v8280 = vsel %vm264, %v8093, 0.0
  %v8281 = vsel %vm264, %v8096, 0.0
  %v8282 = vsel %vm264, %v8099, 0.0
  %v8283 = vsel %vm264, %v8102, 0.0
  %v8284 = vsel %vm264, %v8105, 0.0
  %v8285 = vsel %vm264, %v8108, 0.0
  %v8286 = vsel %vm264, %v8111, 0.0
  %v8287 = vsel %vm264, %v8114, 0.0
  %v8288 = vsel %vm264, %v8117, 0.0
  %v8289 = vsel %vm264, %v8120, 0.0
  %v8290 = vsel %vm264, %v8123, 0.0
  %v8291 = vsel %vm264, %v8126, 0.0
  %v8292 = vsel %vm264, %v8129, 0.0
  %v8293 = vsel %vm264, %v8132, 0.0
  %v8354 = vrot.slane %v8230, 1
  %v8355 = vrot.slane %v8040, 1
  %v8356 = vsel %vm1962, %v8354, %v8355
  %v8357 = vrot.slane %v8262, 1
  %v8358 = vsel %vm1962, %v8355, %v8357
  %v8359 = vrot.slane %v8231, 1
  %v8360 = vrot.slane %v8043, 1
  %v8361 = vsel %vm1962, %v8359, %v8360
  %v8362 = vrot.slane %v8263, 1
  %v8363 = vsel %vm1962, %v8360, %v8362
  %v8364 = vrot.slane %v8232, 1
  %v8365 = vrot.slane %v8046, 1
  %v8366 = vsel %vm1962, %v8364, %v8365
  %v8367 = vrot.slane %v8264, 1
  %v8368 = vsel %vm1962, %v8365, %v8367
  %v8369 = vrot.slane %v8233, 1
  %v8370 = vrot.slane %v8049, 1
  %v8371 = vsel %vm1962, %v8369, %v8370
  %v8372 = vrot.slane %v8265, 1
  %v8373 = vsel %vm1962, %v8370, %v8372
  %v8374 = vrot.slane %v8234, 1
  %v8375 = vrot.slane %v8052, 1
  %v8376 = vsel %vm1962, %v8374, %v8375
  %v8377 = vrot.slane %v8266, 1
  %v8378 = vsel %vm1962, %v8375, %v8377
  %v8379 = vrot.slane %v8235, 1
  %v8380 = vrot.slane %v8055, 1
  %v8381 = vsel %vm1962, %v8379, %v8380
  %v8382 = vrot.slane %v8267, 1
  %v8383 = vsel %vm1962, %v8380, %v8382
  %v8384 = vrot.slane %v8236, 1
  %v8385 = vrot.slane %v8058, 1
  %v8386 = vsel %vm1962, %v8384, %v8385
  %v8387 = vrot.slane %v8268, 1
  %v8388 = vsel %vm1962, %v8385, %v8387
  %v8389 = vrot.slane %v8237, 1
  %v8390 = vrot.slane %v8061, 1
  %v8391 = vsel %vm1962, %v8389, %v8390
  %v8392 = vrot.slane %v8269, 1
  %v8393 = vsel %vm1962, %v8390, %v8392
  %v8394 = vrot.slane %v8238, 1
  %v8395 = vrot.slane %v8064, 1
  %v8396 = vsel %vm1962, %v8394, %v8395
  %v8397 = vrot.slane %v8270, 1
  %v8398 = vsel %vm1962, %v8395, %v8397
  %v8399 = vrot.slane %v8239, 1
  %v8400 = vrot.slane %v8067, 1
  %v8401 = vsel %vm1962, %v8399, %v8400
  %v8402 = vrot.slane %v8271, 1
  %v8403 = vsel %vm1962, %v8400, %v8402
  %v8404 = vrot.slane %v8240, 1
  %v8405 = vrot.slane %v8070, 1
  %v8406 = vsel %vm1962, %v8404, %v8405
  %v8407 = vrot.slane %v8272, 1
  %v8408 = vsel %vm1962, %v8405, %v8407
  %v8409 = vrot.slane %v8241, 1
  %v8410 = vrot.slane %v8073, 1
  %v8411 = vsel %vm1962, %v8409, %v8410
  %v8412 = vrot.slane %v8273, 1
  %v8413 = vsel %vm1962, %v8410, %v8412
  %v8414 = vrot.slane %v8242, 1
  %v8415 = vrot.slane %v8076, 1
  %v8416 = vsel %vm1962, %v8414, %v8415
  %v8417 = vrot.slane %v8274, 1
  %v8418 = vsel %vm1962, %v8415, %v8417
  %v8419 = vrot.slane %v8243, 1
  %v8420 = vrot.slane %v8079, 1
  %v8421 = vsel %vm1962, %v8419, %v8420
  %v8422 = vrot.slane %v8275, 1
  %v8423 = vsel %vm1962, %v8420, %v8422
  %v8424 = vrot.slane %v8244, 1
  %v8425 = vrot.slane %v8082, 1
  %v8426 = vsel %vm1962, %v8424, %v8425
  %v8427 = vrot.slane %v8276, 1
  %v8428 = vsel %vm1962, %v8425, %v8427
  %v8429 = vrot.slane %v8246, 1
  %v8430 = vrot.slane %v8088, 1
  %v8431 = vsel %vm1962, %v8429, %v8430
  %v8432 = vrot.slane %v8278, 1
  %v8433 = vsel %vm1962, %v8430, %v8432
  %v8434 = vrot.slane %v8247, 1
  %v8435 = vrot.slane %v8091, 1
  %v8436 = vsel %vm1962, %v8434, %v8435
  %v8437 = vrot.slane %v8279, 1
  %v8438 = vsel %vm1962, %v8435, %v8437
  %v8439 = vrot.slane %v8248, 1
  %v8440 = vrot.slane %v8094, 1
  %v8441 = vsel %vm1962, %v8439, %v8440
  %v8442 = vrot.slane %v8280, 1
  %v8443 = vsel %vm1962, %v8440, %v8442
  %v8444 = vrot.slane %v8249, 1
  %v8445 = vrot.slane %v8097, 1
  %v8446 = vsel %vm1962, %v8444, %v8445
  %v8447 = vrot.slane %v8281, 1
  %v8448 = vsel %vm1962, %v8445, %v8447
  %v8449 = vrot.slane %v8250, 1
  %v8450 = vrot.slane %v8100, 1
  %v8451 = vsel %vm1962, %v8449, %v8450
  %v8452 = vrot.slane %v8282, 1
  %v8453 = vsel %vm1962, %v8450, %v8452
  %v8454 = vrot.slane %v8251, 1
  %v8455 = vrot.slane %v8103, 1
  %v8456 = vsel %vm1962, %v8454, %v8455
  %v8457 = vrot.slane %v8283, 1
  %v8458 = vsel %vm1962, %v8455, %v8457
  %v8459 = vrot.slane %v8252, 1
  %v8460 = vrot.slane %v8106, 1
  %v8461 = vsel %vm1962, %v8459, %v8460
  %v8462 = vrot.slane %v8284, 1
  %v8463 = vsel %vm1962, %v8460, %v8462
  %v8464 = vrot.slane %v8253, 1
  %v8465 = vrot.slane %v8109, 1
  %v8466 = vsel %vm1962, %v8464, %v8465
  %v8467 = vrot.slane %v8285, 1
  %v8468 = vsel %vm1962, %v8465, %v8467
  %v8469 = vrot.slane %v8254, 1
  %v8470 = vrot.slane %v8112, 1
  %v8471 = vsel %vm1962, %v8469, %v8470
  %v8472 = vrot.slane %v8286, 1
  %v8473 = vsel %vm1962, %v8470, %v8472
  %v8474 = vrot.slane %v8255, 1
  %v8475 = vrot.slane %v8115, 1
  %v8476 = vsel %vm1962, %v8474, %v8475
  %v8477 = vrot.slane %v8287, 1
  %v8478 = vsel %vm1962, %v8475, %v8477
  %v8479 = vrot.slane %v8256, 1
  %v8480 = vrot.slane %v8118, 1
  %v8481 = vsel %vm1962, %v8479, %v8480
  %v8482 = vrot.slane %v8288, 1
  %v8483 = vsel %vm1962, %v8480, %v8482
  %v8484 = vrot.slane %v8257, 1
  %v8485 = vrot.slane %v8121, 1
  %v8486 = vsel %vm1962, %v8484, %v8485
  %v8487 = vrot.slane %v8289, 1
  %v8488 = vsel %vm1962, %v8485, %v8487
  %v8489 = vrot.slane %v8258, 1
  %v8490 = vrot.slane %v8124, 1
  %v8491 = vsel %vm1962, %v8489, %v8490
  %v8492 = vrot.slane %v8290, 1
  %v8493 = vsel %vm1962, %v8490, %v8492
  %v8494 = vrot.slane %v8259, 1
  %v8495 = vrot.slane %v8127, 1
  %v8496 = vsel %vm1962, %v8494, %v8495
  %v8497 = vrot.slane %v8291, 1
  %v8498 = vsel %vm1962, %v8495, %v8497
  %v8499 = vrot.slane %v8260, 1
  %v8500 = vrot.slane %v8130, 1
  %v8501 = vsel %vm1962, %v8499, %v8500
  %v8502 = vrot.slane %v8292, 1
  %v8503 = vsel %vm1962, %v8500, %v8502
  %8504 = vrot.lane.b32.xlu0 %v8356, 32
  %v8505 = vpop.permute.xlu0 %8504
  %8506 = vrot.lane.b32.xlu0 %v8358, 32
  %v8507 = vpop.permute.xlu0 %8506
  %8508 = vrot.lane.b32.xlu0 %v8361, 32
  %v8509 = vpop.permute.xlu0 %8508
  %8510 = vrot.lane.b32.xlu0 %v8363, 32
  %v8511 = vpop.permute.xlu0 %8510
  %8512 = vrot.lane.b32.xlu0 %v8366, 32
  %v8513 = vpop.permute.xlu0 %8512
  %8514 = vrot.lane.b32.xlu0 %v8368, 32
  %v8515 = vpop.permute.xlu0 %8514
  %8516 = vrot.lane.b32.xlu0 %v8371, 32
  %v8517 = vpop.permute.xlu0 %8516
  %8518 = vrot.lane.b32.xlu0 %v8373, 32
  %v8519 = vpop.permute.xlu0 %8518
  %8520 = vrot.lane.b32.xlu0 %v8376, 32
  %v8521 = vpop.permute.xlu0 %8520
  %8522 = vrot.lane.b32.xlu0 %v8378, 32
  %v8523 = vpop.permute.xlu0 %8522
  %8524 = vrot.lane.b32.xlu0 %v8381, 32
  %v8525 = vpop.permute.xlu0 %8524
  %8526 = vrot.lane.b32.xlu0 %v8383, 32
  %v8527 = vpop.permute.xlu0 %8526
  %8528 = vrot.lane.b32.xlu0 %v8386, 32
  %v8529 = vpop.permute.xlu0 %8528
  %8530 = vrot.lane.b32.xlu0 %v8388, 32
  %v8531 = vpop.permute.xlu0 %8530
  %8532 = vrot.lane.b32.xlu0 %v8391, 32
  %v8533 = vpop.permute.xlu0 %8532
  %8534 = vrot.lane.b32.xlu0 %v8393, 32
  %v8535 = vpop.permute.xlu0 %8534
  %8536 = vrot.lane.b32.xlu0 %v8396, 32
  %v8537 = vpop.permute.xlu0 %8536
  %8538 = vrot.lane.b32.xlu0 %v8398, 32
  %v8539 = vpop.permute.xlu0 %8538
  %8540 = vrot.lane.b32.xlu0 %v8401, 32
  %v8541 = vpop.permute.xlu0 %8540
  %8542 = vrot.lane.b32.xlu0 %v8403, 32
  %v8543 = vpop.permute.xlu0 %8542
  %8544 = vrot.lane.b32.xlu0 %v8406, 32
  %v8545 = vpop.permute.xlu0 %8544
  %8546 = vrot.lane.b32.xlu0 %v8408, 32
  %v8547 = vpop.permute.xlu0 %8546
  %8548 = vrot.lane.b32.xlu0 %v8411, 32
  %v8549 = vpop.permute.xlu0 %8548
  %8550 = vrot.lane.b32.xlu0 %v8413, 32
  %v8551 = vpop.permute.xlu0 %8550
  %8552 = vrot.lane.b32.xlu0 %v8416, 32
  %v8553 = vpop.permute.xlu0 %8552
  %8554 = vrot.lane.b32.xlu0 %v8418, 32
  %v8555 = vpop.permute.xlu0 %8554
  %8556 = vrot.lane.b32.xlu0 %v8421, 32
  %v8557 = vpop.permute.xlu0 %8556
  %8558 = vrot.lane.b32.xlu0 %v8423, 32
  %v8559 = vpop.permute.xlu0 %8558
  %8560 = vrot.lane.b32.xlu0 %v8426, 32
  %v8561 = vpop.permute.xlu0 %8560
  %8562 = vrot.lane.b32.xlu0 %v8428, 32
  %v8563 = vpop.permute.xlu0 %8562
  %8564 = vrot.lane.b32.xlu0 %v8431, 32
  %v8565 = vpop.permute.xlu0 %8564
  %8566 = vrot.lane.b32.xlu0 %v8433, 32
  %v8567 = vpop.permute.xlu0 %8566
  %8568 = vrot.lane.b32.xlu0 %v8436, 32
  %v8569 = vpop.permute.xlu0 %8568
  %8570 = vrot.lane.b32.xlu0 %v8438, 32
  %v8571 = vpop.permute.xlu0 %8570
  %8572 = vrot.lane.b32.xlu0 %v8441, 32
  %v8573 = vpop.permute.xlu0 %8572
  %8574 = vrot.lane.b32.xlu0 %v8443, 32
  %v8575 = vpop.permute.xlu0 %8574
  %8576 = vrot.lane.b32.xlu0 %v8446, 32
  %v8577 = vpop.permute.xlu0 %8576
  %8578 = vrot.lane.b32.xlu0 %v8448, 32
  %v8579 = vpop.permute.xlu0 %8578
  %8580 = vrot.lane.b32.xlu0 %v8451, 32
  %v8581 = vpop.permute.xlu0 %8580
  %8582 = vrot.lane.b32.xlu0 %v8453, 32
  %v8583 = vpop.permute.xlu0 %8582
  %8584 = vrot.lane.b32.xlu0 %v8456, 32
  %v8585 = vpop.permute.xlu0 %8584
  %8586 = vrot.lane.b32.xlu0 %v8458, 32
  %v8587 = vpop.permute.xlu0 %8586
  %8588 = vrot.lane.b32.xlu0 %v8461, 32
  %v8589 = vpop.permute.xlu0 %8588
  %8590 = vrot.lane.b32.xlu0 %v8463, 32
  %v8591 = vpop.permute.xlu0 %8590
  %8592 = vrot.lane.b32.xlu0 %v8466, 32
  %v8593 = vpop.permute.xlu0 %8592
  %8594 = vrot.lane.b32.xlu0 %v8468, 32
  %v8595 = vpop.permute.xlu0 %8594
  %8596 = vrot.lane.b32.xlu0 %v8471, 32
  %v8597 = vpop.permute.xlu0 %8596
  %8598 = vrot.lane.b32.xlu0 %v8473, 32
  %v8599 = vpop.permute.xlu0 %8598
  %8600 = vrot.lane.b32.xlu0 %v8476, 32
  %v8601 = vpop.permute.xlu0 %8600
  %8602 = vrot.lane.b32.xlu0 %v8478, 32
  %v8603 = vpop.permute.xlu0 %8602
  %8604 = vrot.lane.b32.xlu0 %v8481, 32
  %v8605 = vpop.permute.xlu0 %8604
  %8606 = vrot.lane.b32.xlu0 %v8483, 32
  %v8607 = vpop.permute.xlu0 %8606
  %8608 = vrot.lane.b32.xlu0 %v8486, 32
  %v8609 = vpop.permute.xlu0 %8608
  %8610 = vrot.lane.b32.xlu0 %v8488, 32
  %v8611 = vpop.permute.xlu0 %8610
  %8612 = vrot.lane.b32.xlu0 %v8491, 32
  %v8613 = vpop.permute.xlu0 %8612
  %8614 = vrot.lane.b32.xlu0 %v8493, 32
  %v8615 = vpop.permute.xlu0 %8614
  %8616 = vrot.lane.b32.xlu0 %v8496, 32
  %v8617 = vpop.permute.xlu0 %8616
  %8618 = vrot.lane.b32.xlu0 %v8498, 32
  %v8619 = vpop.permute.xlu0 %8618
  %8620 = vrot.lane.b32.xlu0 %v8501, 32
  %v8621 = vpop.permute.xlu0 %8620
  %8622 = vrot.lane.b32.xlu0 %v8503, 32
  %v8623 = vpop.permute.xlu0 %8622
  %v8684 = vrot.slane %v8230, 2
  %v8685 = vrot.slane %v8040, 2
  %v8686 = vsel %vm2017, %v8684, %v8685
  %v8687 = vrot.slane %v8262, 2
  %v8688 = vsel %vm2017, %v8685, %v8687
  %v8689 = vrot.slane %v8231, 2
  %v8690 = vrot.slane %v8043, 2
  %v8691 = vsel %vm2017, %v8689, %v8690
  %v8692 = vrot.slane %v8263, 2
  %v8693 = vsel %vm2017, %v8690, %v8692
  %v8694 = vrot.slane %v8232, 2
  %v8695 = vrot.slane %v8046, 2
  %v8696 = vsel %vm2017, %v8694, %v8695
  %v8697 = vrot.slane %v8264, 2
  %v8698 = vsel %vm2017, %v8695, %v8697
  %v8699 = vrot.slane %v8233, 2
  %v8700 = vrot.slane %v8049, 2
  %v8701 = vsel %vm2017, %v8699, %v8700
  %v8702 = vrot.slane %v8265, 2
  %v8703 = vsel %vm2017, %v8700, %v8702
  %v8704 = vrot.slane %v8234, 2
  %v8705 = vrot.slane %v8052, 2
  %v8706 = vsel %vm2017, %v8704, %v8705
  %v8707 = vrot.slane %v8266, 2
  %v8708 = vsel %vm2017, %v8705, %v8707
  %v8709 = vrot.slane %v8235, 2
  %v8710 = vrot.slane %v8055, 2
  %v8711 = vsel %vm2017, %v8709, %v8710
  %v8712 = vrot.slane %v8267, 2
  %v8713 = vsel %vm2017, %v8710, %v8712
  %v8714 = vrot.slane %v8236, 2
  %v8715 = vrot.slane %v8058, 2
  %v8716 = vsel %vm2017, %v8714, %v8715
  %v8717 = vrot.slane %v8268, 2
  %v8718 = vsel %vm2017, %v8715, %v8717
  %v8719 = vrot.slane %v8237, 2
  %v8720 = vrot.slane %v8061, 2
  %v8721 = vsel %vm2017, %v8719, %v8720
  %v8722 = vrot.slane %v8269, 2
  %v8723 = vsel %vm2017, %v8720, %v8722
  %v8724 = vrot.slane %v8238, 2
  %v8725 = vrot.slane %v8064, 2
  %v8726 = vsel %vm2017, %v8724, %v8725
  %v8727 = vrot.slane %v8270, 2
  %v8728 = vsel %vm2017, %v8725, %v8727
  %v8729 = vrot.slane %v8239, 2
  %v8730 = vrot.slane %v8067, 2
  %v8731 = vsel %vm2017, %v8729, %v8730
  %v8732 = vrot.slane %v8271, 2
  %v8733 = vsel %vm2017, %v8730, %v8732
  %v8734 = vrot.slane %v8240, 2
  %v8735 = vrot.slane %v8070, 2
  %v8736 = vsel %vm2017, %v8734, %v8735
  %v8737 = vrot.slane %v8272, 2
  %v8738 = vsel %vm2017, %v8735, %v8737
  %v8739 = vrot.slane %v8241, 2
  %v8740 = vrot.slane %v8073, 2
  %v8741 = vsel %vm2017, %v8739, %v8740
  %v8742 = vrot.slane %v8273, 2
  %v8743 = vsel %vm2017, %v8740, %v8742
  %v8744 = vrot.slane %v8242, 2
  %v8745 = vrot.slane %v8076, 2
  %v8746 = vsel %vm2017, %v8744, %v8745
  %v8747 = vrot.slane %v8274, 2
  %v8748 = vsel %vm2017, %v8745, %v8747
  %v8749 = vrot.slane %v8243, 2
  %v8750 = vrot.slane %v8079, 2
  %v8751 = vsel %vm2017, %v8749, %v8750
  %v8752 = vrot.slane %v8275, 2
  %v8753 = vsel %vm2017, %v8750, %v8752
  %v8754 = vrot.slane %v8244, 2
  %v8755 = vrot.slane %v8082, 2
  %v8756 = vsel %vm2017, %v8754, %v8755
  %v8757 = vrot.slane %v8276, 2
  %v8758 = vsel %vm2017, %v8755, %v8757
  %v8759 = vrot.slane %v8246, 2
  %v8760 = vrot.slane %v8088, 2
  %v8761 = vsel %vm2017, %v8759, %v8760
  %v8762 = vrot.slane %v8278, 2
  %v8763 = vsel %vm2017, %v8760, %v8762
  %v8764 = vrot.slane %v8247, 2
  %v8765 = vrot.slane %v8091, 2
  %v8766 = vsel %vm2017, %v8764, %v8765
  %v8767 = vrot.slane %v8279, 2
  %v8768 = vsel %vm2017, %v8765, %v8767
  %v8769 = vrot.slane %v8248, 2
  %v8770 = vrot.slane %v8094, 2
  %v8771 = vsel %vm2017, %v8769, %v8770
  %v8772 = vrot.slane %v8280, 2
  %v8773 = vsel %vm2017, %v8770, %v8772
  %v8774 = vrot.slane %v8249, 2
  %v8775 = vrot.slane %v8097, 2
  %v8776 = vsel %vm2017, %v8774, %v8775
  %v8777 = vrot.slane %v8281, 2
  %v8778 = vsel %vm2017, %v8775, %v8777
  %v8779 = vrot.slane %v8250, 2
  %v8780 = vrot.slane %v8100, 2
  %v8781 = vsel %vm2017, %v8779, %v8780
  %v8782 = vrot.slane %v8282, 2
  %v8783 = vsel %vm2017, %v8780, %v8782
  %v8784 = vrot.slane %v8251, 2
  %v8785 = vrot.slane %v8103, 2
  %v8786 = vsel %vm2017, %v8784, %v8785
  %v8787 = vrot.slane %v8283, 2
  %v8788 = vsel %vm2017, %v8785, %v8787
  %v8789 = vrot.slane %v8252, 2
  %v8790 = vrot.slane %v8106, 2
  %v8791 = vsel %vm2017, %v8789, %v8790
  %v8792 = vrot.slane %v8284, 2
  %v8793 = vsel %vm2017, %v8790, %v8792
  %v8794 = vrot.slane %v8253, 2
  %v8795 = vrot.slane %v8109, 2
  %v8796 = vsel %vm2017, %v8794, %v8795
  %v8797 = vrot.slane %v8285, 2
  %v8798 = vsel %vm2017, %v8795, %v8797
  %v8799 = vrot.slane %v8254, 2
  %v8800 = vrot.slane %v8112, 2
  %v8801 = vsel %vm2017, %v8799, %v8800
  %v8802 = vrot.slane %v8286, 2
  %v8803 = vsel %vm2017, %v8800, %v8802
  %v8804 = vrot.slane %v8255, 2
  %v8805 = vrot.slane %v8115, 2
  %v8806 = vsel %vm2017, %v8804, %v8805
  %v8807 = vrot.slane %v8287, 2
  %v8808 = vsel %vm2017, %v8805, %v8807
  %v8809 = vrot.slane %v8256, 2
  %v8810 = vrot.slane %v8118, 2
  %v8811 = vsel %vm2017, %v8809, %v8810
  %v8812 = vrot.slane %v8288, 2
  %v8813 = vsel %vm2017, %v8810, %v8812
  %v8814 = vrot.slane %v8257, 2
  %v8815 = vrot.slane %v8121, 2
  %v8816 = vsel %vm2017, %v8814, %v8815
  %v8817 = vrot.slane %v8289, 2
  %v8818 = vsel %vm2017, %v8815, %v8817
  %v8819 = vrot.slane %v8258, 2
  %v8820 = vrot.slane %v8124, 2
  %v8821 = vsel %vm2017, %v8819, %v8820
  %v8822 = vrot.slane %v8290, 2
  %v8823 = vsel %vm2017, %v8820, %v8822
  %v8824 = vrot.slane %v8259, 2
  %v8825 = vrot.slane %v8127, 2
  %v8826 = vsel %vm2017, %v8824, %v8825
  %v8827 = vrot.slane %v8291, 2
  %v8828 = vsel %vm2017, %v8825, %v8827
  %v8829 = vrot.slane %v8260, 2
  %v8830 = vrot.slane %v8130, 2
  %v8831 = vsel %vm2017, %v8829, %v8830
  %v8832 = vrot.slane %v8292, 2
  %v8833 = vsel %vm2017, %v8830, %v8832
  %8834 = vrot.lane.b32.xlu0 %v8686, 64
  %v8835 = vpop.permute.xlu0 %8834
  %8836 = vrot.lane.b32.xlu0 %v8688, 64
  %v8837 = vpop.permute.xlu0 %8836
  %8838 = vrot.lane.b32.xlu0 %v8691, 64
  %v8839 = vpop.permute.xlu0 %8838
  %8840 = vrot.lane.b32.xlu0 %v8693, 64
  %v8841 = vpop.permute.xlu0 %8840
  %8842 = vrot.lane.b32.xlu0 %v8696, 64
  %v8843 = vpop.permute.xlu0 %8842
  %8844 = vrot.lane.b32.xlu0 %v8698, 64
  %v8845 = vpop.permute.xlu0 %8844
  %8846 = vrot.lane.b32.xlu0 %v8701, 64
  %v8847 = vpop.permute.xlu0 %8846
  %8848 = vrot.lane.b32.xlu0 %v8703, 64
  %v8849 = vpop.permute.xlu0 %8848
  %8850 = vrot.lane.b32.xlu0 %v8706, 64
  %v8851 = vpop.permute.xlu0 %8850
  %8852 = vrot.lane.b32.xlu0 %v8708, 64
  %v8853 = vpop.permute.xlu0 %8852
  %8854 = vrot.lane.b32.xlu0 %v8711, 64
  %v8855 = vpop.permute.xlu0 %8854
  %8856 = vrot.lane.b32.xlu0 %v8713, 64
  %v8857 = vpop.permute.xlu0 %8856
  %8858 = vrot.lane.b32.xlu0 %v8716, 64
  %v8859 = vpop.permute.xlu0 %8858
  %8860 = vrot.lane.b32.xlu0 %v8718, 64
  %v8861 = vpop.permute.xlu0 %8860
  %8862 = vrot.lane.b32.xlu0 %v8721, 64
  %v8863 = vpop.permute.xlu0 %8862
  %8864 = vrot.lane.b32.xlu0 %v8723, 64
  %v8865 = vpop.permute.xlu0 %8864
  %8866 = vrot.lane.b32.xlu0 %v8726, 64
  %v8867 = vpop.permute.xlu0 %8866
  %8868 = vrot.lane.b32.xlu0 %v8728, 64
  %v8869 = vpop.permute.xlu0 %8868
  %8870 = vrot.lane.b32.xlu0 %v8731, 64
  %v8871 = vpop.permute.xlu0 %8870
  %8872 = vrot.lane.b32.xlu0 %v8733, 64
  %v8873 = vpop.permute.xlu0 %8872
  %8874 = vrot.lane.b32.xlu0 %v8736, 64
  %v8875 = vpop.permute.xlu0 %8874
  %8876 = vrot.lane.b32.xlu0 %v8738, 64
  %v8877 = vpop.permute.xlu0 %8876
  %8878 = vrot.lane.b32.xlu0 %v8741, 64
  %v8879 = vpop.permute.xlu0 %8878
  %8880 = vrot.lane.b32.xlu0 %v8743, 64
  %v8881 = vpop.permute.xlu0 %8880
  %8882 = vrot.lane.b32.xlu0 %v8746, 64
  %v8883 = vpop.permute.xlu0 %8882
  %8884 = vrot.lane.b32.xlu0 %v8748, 64
  %v8885 = vpop.permute.xlu0 %8884
  %8886 = vrot.lane.b32.xlu0 %v8751, 64
  %v8887 = vpop.permute.xlu0 %8886
  %8888 = vrot.lane.b32.xlu0 %v8753, 64
  %v8889 = vpop.permute.xlu0 %8888
  %8890 = vrot.lane.b32.xlu0 %v8756, 64
  %v8891 = vpop.permute.xlu0 %8890
  %8892 = vrot.lane.b32.xlu0 %v8758, 64
  %v8893 = vpop.permute.xlu0 %8892
  %8894 = vrot.lane.b32.xlu0 %v8761, 64
  %v8895 = vpop.permute.xlu0 %8894
  %8896 = vrot.lane.b32.xlu0 %v8763, 64
  %v8897 = vpop.permute.xlu0 %8896
  %8898 = vrot.lane.b32.xlu0 %v8766, 64
  %v8899 = vpop.permute.xlu0 %8898
  %8900 = vrot.lane.b32.xlu0 %v8768, 64
  %v8901 = vpop.permute.xlu0 %8900
  %8902 = vrot.lane.b32.xlu0 %v8771, 64
  %v8903 = vpop.permute.xlu0 %8902
  %8904 = vrot.lane.b32.xlu0 %v8773, 64
  %v8905 = vpop.permute.xlu0 %8904
  %8906 = vrot.lane.b32.xlu0 %v8776, 64
  %v8907 = vpop.permute.xlu0 %8906
  %8908 = vrot.lane.b32.xlu0 %v8778, 64
  %v8909 = vpop.permute.xlu0 %8908
  %8910 = vrot.lane.b32.xlu0 %v8781, 64
  %v8911 = vpop.permute.xlu0 %8910
  %8912 = vrot.lane.b32.xlu0 %v8783, 64
  %v8913 = vpop.permute.xlu0 %8912
  %8914 = vrot.lane.b32.xlu0 %v8786, 64
  %v8915 = vpop.permute.xlu0 %8914
  %8916 = vrot.lane.b32.xlu0 %v8788, 64
  %v8917 = vpop.permute.xlu0 %8916
  %8918 = vrot.lane.b32.xlu0 %v8791, 64
  %v8919 = vpop.permute.xlu0 %8918
  %8920 = vrot.lane.b32.xlu0 %v8793, 64
  %v8921 = vpop.permute.xlu0 %8920
  %8922 = vrot.lane.b32.xlu0 %v8796, 64
  %v8923 = vpop.permute.xlu0 %8922
  %8924 = vrot.lane.b32.xlu0 %v8798, 64
  %v8925 = vpop.permute.xlu0 %8924
  %8926 = vrot.lane.b32.xlu0 %v8801, 64
  %v8927 = vpop.permute.xlu0 %8926
  %8928 = vrot.lane.b32.xlu0 %v8803, 64
  %v8929 = vpop.permute.xlu0 %8928
  %8930 = vrot.lane.b32.xlu0 %v8806, 64
  %v8931 = vpop.permute.xlu0 %8930
  %8932 = vrot.lane.b32.xlu0 %v8808, 64
  %v8933 = vpop.permute.xlu0 %8932
  %8934 = vrot.lane.b32.xlu0 %v8811, 64
  %v8935 = vpop.permute.xlu0 %8934
  %8936 = vrot.lane.b32.xlu0 %v8813, 64
  %v8937 = vpop.permute.xlu0 %8936
  %8938 = vrot.lane.b32.xlu0 %v8816, 64
  %v8939 = vpop.permute.xlu0 %8938
  %8940 = vrot.lane.b32.xlu0 %v8818, 64
  %v8941 = vpop.permute.xlu0 %8940
  %8942 = vrot.lane.b32.xlu0 %v8821, 64
  %v8943 = vpop.permute.xlu0 %8942
  %8944 = vrot.lane.b32.xlu0 %v8823, 64
  %v8945 = vpop.permute.xlu0 %8944
  %8946 = vrot.lane.b32.xlu0 %v8826, 64
  %v8947 = vpop.permute.xlu0 %8946
  %8948 = vrot.lane.b32.xlu0 %v8828, 64
  %v8949 = vpop.permute.xlu0 %8948
  %8950 = vrot.lane.b32.xlu0 %v8831, 64
  %v8951 = vpop.permute.xlu0 %8950
  %8952 = vrot.lane.b32.xlu0 %v8833, 64
  %v8953 = vpop.permute.xlu0 %8952
  %v9014 = vsel %vm115, %v8230, %v8505
  %v9015 = vsel %vm115, %v8040, %v8507
  %v9016 = vsel %vm115, %v8231, %v8509
  %v9017 = vsel %vm115, %v8043, %v8511
  %v9018 = vsel %vm115, %v8232, %v8513
  %v9019 = vsel %vm115, %v8046, %v8515
  %v9020 = vsel %vm115, %v8233, %v8517
  %v9021 = vsel %vm115, %v8049, %v8519
  %v9022 = vsel %vm115, %v8234, %v8521
  %v9023 = vsel %vm115, %v8052, %v8523
  %v9024 = vsel %vm115, %v8235, %v8525
  %v9025 = vsel %vm115, %v8055, %v8527
  %v9026 = vsel %vm115, %v8236, %v8529
  %v9027 = vsel %vm115, %v8058, %v8531
  %v9028 = vsel %vm115, %v8237, %v8533
  %v9029 = vsel %vm115, %v8061, %v8535
  %v9030 = vsel %vm115, %v8238, %v8537
  %v9031 = vsel %vm115, %v8064, %v8539
  %v9032 = vsel %vm115, %v8239, %v8541
  %v9033 = vsel %vm115, %v8067, %v8543
  %v9034 = vsel %vm115, %v8240, %v8545
  %v9035 = vsel %vm115, %v8070, %v8547
  %v9036 = vsel %vm115, %v8241, %v8549
  %v9037 = vsel %vm115, %v8073, %v8551
  %v9038 = vsel %vm115, %v8242, %v8553
  %v9039 = vsel %vm115, %v8076, %v8555
  %v9040 = vsel %vm115, %v8243, %v8557
  %v9041 = vsel %vm115, %v8079, %v8559
  %v9042 = vsel %vm115, %v8244, %v8561
  %v9043 = vsel %vm115, %v8082, %v8563
  %v9044 = vsel %vm115, %v8246, %v8565
  %v9045 = vsel %vm115, %v8088, %v8567
  %v9046 = vsel %vm115, %v8247, %v8569
  %v9047 = vsel %vm115, %v8091, %v8571
  %v9048 = vsel %vm115, %v8248, %v8573
  %v9049 = vsel %vm115, %v8094, %v8575
  %v9050 = vsel %vm115, %v8249, %v8577
  %v9051 = vsel %vm115, %v8097, %v8579
  %v9052 = vsel %vm115, %v8250, %v8581
  %v9053 = vsel %vm115, %v8100, %v8583
  %v9054 = vsel %vm115, %v8251, %v8585
  %v9055 = vsel %vm115, %v8103, %v8587
  %v9056 = vsel %vm115, %v8252, %v8589
  %v9057 = vsel %vm115, %v8106, %v8591
  %v9058 = vsel %vm115, %v8253, %v8593
  %v9059 = vsel %vm115, %v8109, %v8595
  %v9060 = vsel %vm115, %v8254, %v8597
  %v9061 = vsel %vm115, %v8112, %v8599
  %v9062 = vsel %vm115, %v8255, %v8601
  %v9063 = vsel %vm115, %v8115, %v8603
  %v9064 = vsel %vm115, %v8256, %v8605
  %v9065 = vsel %vm115, %v8118, %v8607
  %v9066 = vsel %vm115, %v8257, %v8609
  %v9067 = vsel %vm115, %v8121, %v8611
  %v9068 = vsel %vm115, %v8258, %v8613
  %v9069 = vsel %vm115, %v8124, %v8615
  %v9070 = vsel %vm115, %v8259, %v8617
  %v9071 = vsel %vm115, %v8127, %v8619
  %v9072 = vsel %vm115, %v8260, %v8621
  %v9073 = vsel %vm115, %v8130, %v8623
  %v9074 = vsel %vm663, %v9014, %v8835
  %v9075 = vsel %vm663, %v9015, %v8837
  %v9076 = vsel %vm663, %v9016, %v8839
  %v9077 = vsel %vm663, %v9017, %v8841
  %v9078 = vsel %vm663, %v9018, %v8843
  %v9079 = vsel %vm663, %v9019, %v8845
  %v9080 = vsel %vm663, %v9020, %v8847
  %v9081 = vsel %vm663, %v9021, %v8849
  %v9082 = vsel %vm663, %v9022, %v8851
  %v9083 = vsel %vm663, %v9023, %v8853
  %v9084 = vsel %vm663, %v9024, %v8855
  %v9085 = vsel %vm663, %v9025, %v8857
  %v9086 = vsel %vm663, %v9026, %v8859
  %v9087 = vsel %vm663, %v9027, %v8861
  %v9088 = vsel %vm663, %v9028, %v8863
  %v9089 = vsel %vm663, %v9029, %v8865
  %v9090 = vsel %vm663, %v9030, %v8867
  %v9091 = vsel %vm663, %v9031, %v8869
  %v9092 = vsel %vm663, %v9032, %v8871
  %v9093 = vsel %vm663, %v9033, %v8873
  %v9094 = vsel %vm663, %v9034, %v8875
  %v9095 = vsel %vm663, %v9035, %v8877
  %v9096 = vsel %vm663, %v9036, %v8879
  %v9097 = vsel %vm663, %v9037, %v8881
  %v9098 = vsel %vm663, %v9038, %v8883
  %v9099 = vsel %vm663, %v9039, %v8885
  %v9100 = vsel %vm663, %v9040, %v8887
  %v9101 = vsel %vm663, %v9041, %v8889
  %v9102 = vsel %vm663, %v9042, %v8891
  %v9103 = vsel %vm663, %v9043, %v8893
  %v9104 = vsel %vm663, %v9044, %v8895
  %v9105 = vsel %vm663, %v9045, %v8897
  %v9106 = vsel %vm663, %v9046, %v8899
  %v9107 = vsel %vm663, %v9047, %v8901
  %v9108 = vsel %vm663, %v9048, %v8903
  %v9109 = vsel %vm663, %v9049, %v8905
  %v9110 = vsel %vm663, %v9050, %v8907
  %v9111 = vsel %vm663, %v9051, %v8909
  %v9112 = vsel %vm663, %v9052, %v8911
  %v9113 = vsel %vm663, %v9053, %v8913
  %v9114 = vsel %vm663, %v9054, %v8915
  %v9115 = vsel %vm663, %v9055, %v8917
  %v9116 = vsel %vm663, %v9056, %v8919
  %v9117 = vsel %vm663, %v9057, %v8921
  %v9118 = vsel %vm663, %v9058, %v8923
  %v9119 = vsel %vm663, %v9059, %v8925
  %v9120 = vsel %vm663, %v9060, %v8927
  %v9121 = vsel %vm663, %v9061, %v8929
  %v9122 = vsel %vm663, %v9062, %v8931
  %v9123 = vsel %vm663, %v9063, %v8933
  %v9124 = vsel %vm663, %v9064, %v8935
  %v9125 = vsel %vm663, %v9065, %v8937
  %v9126 = vsel %vm663, %v9066, %v8939
  %v9127 = vsel %vm663, %v9067, %v8941
  %v9128 = vsel %vm663, %v9068, %v8943
  %v9129 = vsel %vm663, %v9069, %v8945
  %v9130 = vsel %vm663, %v9070, %v8947
  %v9131 = vsel %vm663, %v9071, %v8949
  %v9132 = vsel %vm663, %v9072, %v8951
  %v9133 = vsel %vm663, %v9073, %v8953
  %v9134 = vpack.c.bf16 %v9075, %v9074
  %v9135 = vpack.c.bf16 %v9077, %v9076
  %v9136 = vpack.c.bf16 %v9079, %v9078
  %v9137 = vpack.c.bf16 %v9081, %v9080
  %v9138 = vpack.c.bf16 %v9083, %v9082
  %v9139 = vpack.c.bf16 %v9085, %v9084
  %v9140 = vpack.c.bf16 %v9087, %v9086
  %v9141 = vpack.c.bf16 %v9089, %v9088
  %v9142 = vpack.c.bf16 %v9091, %v9090
  %v9143 = vpack.c.bf16 %v9093, %v9092
  %v9144 = vpack.c.bf16 %v9095, %v9094
  %v9145 = vpack.c.bf16 %v9097, %v9096
  %v9146 = vpack.c.bf16 %v9099, %v9098
  %v9147 = vpack.c.bf16 %v9101, %v9100
  %v9148 = vpack.c.bf16 %v9103, %v9102
  %v9149 = vpack.c.bf16 %v9105, %v9104
  %v9150 = vpack.c.bf16 %v9107, %v9106
  %v9151 = vpack.c.bf16 %v9109, %v9108
  %v9152 = vpack.c.bf16 %v9111, %v9110
  %v9153 = vpack.c.bf16 %v9113, %v9112
  %v9154 = vpack.c.bf16 %v9115, %v9114
  %v9155 = vpack.c.bf16 %v9117, %v9116
  %v9156 = vpack.c.bf16 %v9119, %v9118
  %v9157 = vpack.c.bf16 %v9121, %v9120
  %v9158 = vpack.c.bf16 %v9123, %v9122
  %v9159 = vpack.c.bf16 %v9125, %v9124
  %v9160 = vpack.c.bf16 %v9127, %v9126
  %v9161 = vpack.c.bf16 %v9129, %v9128
  %v9162 = vpack.c.bf16 %v9131, %v9130
  %v9163 = vpack.c.bf16 %v9133, %v9132
  %v9164 = vpack.c.bf16 %v7938, %v7937
  %v9165 = vpack.c.bf16 %v7940, %v7939
  %v9166 = vpack.c.bf16 %v7942, %v7941
  %v9167 = vpack.c.bf16 %v7944, %v7943
  %v9168 = vpack.c.bf16 %v7946, %v7945
  %v9169 = vpack.c.bf16 %v7948, %v7947
  %v9174 = vrot.slane %v8245, 1
  %v9175 = vrot.slane %v8085, 1
  %v9176 = vsel %vm1962, %v9174, %v9175
  %v9177 = vrot.slane %v8277, 1
  %v9178 = vsel %vm1962, %v9175, %v9177
  %v9179 = vrot.slane %v8261, 1
  %v9180 = vrot.slane %v8133, 1
  %v9181 = vsel %vm1962, %v9179, %v9180
  %v9182 = vrot.slane %v8293, 1
  %v9183 = vsel %vm1962, %v9180, %v9182
  %9184 = vrot.lane.b32.xlu0 %v9176, 32
  %v9185 = vpop.permute.xlu0 %9184
  %9186 = vrot.lane.b32.xlu0 %v9178, 32
  %v9187 = vpop.permute.xlu0 %9186
  %9188 = vrot.lane.b32.xlu0 %v9181, 32
  %v9189 = vpop.permute.xlu0 %9188
  %9190 = vrot.lane.b32.xlu0 %v9183, 32
  %v9191 = vpop.permute.xlu0 %9190
  %v9196 = vrot.slane %v8245, 2
  %v9197 = vrot.slane %v8085, 2
  %v9198 = vsel %vm2017, %v9196, %v9197
  %v9199 = vrot.slane %v8277, 2
  %v9200 = vsel %vm2017, %v9197, %v9199
  %v9201 = vrot.slane %v8261, 2
  %v9202 = vrot.slane %v8133, 2
  %v9203 = vsel %vm2017, %v9201, %v9202
  %v9204 = vrot.slane %v8293, 2
  %v9205 = vsel %vm2017, %v9202, %v9204
  %9206 = vrot.lane.b32.xlu0 %v9198, 64
  %v9207 = vpop.permute.xlu0 %9206
  %9208 = vrot.lane.b32.xlu0 %v9200, 64
  %v9209 = vpop.permute.xlu0 %9208
  %9210 = vrot.lane.b32.xlu0 %v9203, 64
  %v9211 = vpop.permute.xlu0 %9210
  %9212 = vrot.lane.b32.xlu0 %v9205, 64
  %v9213 = vpop.permute.xlu0 %9212
  %v9218 = vsel %vm115, %v8245, %v9185
  %v9219 = vsel %vm115, %v8085, %v9187
  %v9220 = vsel %vm115, %v8261, %v9189
  %v9221 = vsel %vm115, %v8133, %v9191
  %v9222 = vsel %vm663, %v9218, %v9207
  %v9223 = vsel %vm663, %v9219, %v9209
  %v9224 = vsel %vm663, %v9220, %v9211
  %v9225 = vsel %vm663, %v9221, %v9213
  %v9226 = vpack.c.bf16 %v9223, %v9222
  %v9227 = vpack.c.bf16 %v9225, %v9224
  %v9228 = vpack.c.bf16 %v7950, %v7949
  %v9229 = vpack.c.bf16 %v7952, %v7951
  %v9230 = vpack.c.bf16 %v7954, %v7953
  %v9231 = vpack.c.bf16 %v7956, %v7955
  %v9232 = vpack.c.bf16 %v7958, %v7957
  %v9233 = vpack.c.bf16 %v7960, %v7959
  %v9235 = vsel %vm734, %v9134, 0
  %v9238 = vsel %vm734, %v9135, 0
  %v9241 = vsel %vm734, %v9136, 0
  %v9244 = vsel %vm734, %v9137, 0
  %v9247 = vsel %vm734, %v9138, 0
  %v9250 = vsel %vm734, %v9139, 0
  %v9253 = vsel %vm734, %v9140, 0
  %v9256 = vsel %vm734, %v9141, 0
  %v9259 = vsel %vm734, %v9142, 0
  %v9262 = vsel %vm734, %v9143, 0
  %v9265 = vsel %vm734, %v9144, 0
  %v9268 = vsel %vm734, %v9145, 0
  %v9271 = vsel %vm734, %v9146, 0
  %v9274 = vsel %vm734, %v9147, 0
  %v9277 = vsel %vm734, %v9148, 0
  %v9280 = vsel %vm734, %v9226, 0
  %v9283 = vsel %vm734, %v9149, 0
  %v9286 = vsel %vm734, %v9150, 0
  %v9289 = vsel %vm734, %v9151, 0
  %v9292 = vsel %vm734, %v9152, 0
  %v9295 = vsel %vm734, %v9153, 0
  %v9298 = vsel %vm734, %v9154, 0
  %v9301 = vsel %vm734, %v9155, 0
  %v9304 = vsel %vm734, %v9156, 0
  %v9307 = vsel %vm734, %v9157, 0
  %v9310 = vsel %vm734, %v9158, 0
  %v9313 = vsel %vm734, %v9159, 0
  %v9316 = vsel %vm734, %v9160, 0
  %v9319 = vsel %vm734, %v9161, 0
  %v9322 = vsel %vm734, %v9162, 0
  %v9325 = vsel %vm734, %v9163, 0
  %v9328 = vsel %vm734, %v9227, 0
  %9330 = vmatprep.subr.bf16.mxu0 0
  %9331 = vmatpush1.bf16.msra.mxu0 0
  %9332 = vmatprep.subr.bf16.mxu0 0
  %9333 = vmatpush1.bf16.msra.mxu0 0
  %9334 = vmatprep.subr.bf16.mxu0 0
  %9335 = vmatpush1.bf16.msra.mxu0 %v9233
  %9336 = vmatprep.subr.bf16.mxu0 0
  %9337 = vmatpush1.bf16.msra.mxu0 %v9232
  %9338 = vmatprep.subr.bf16.mxu0 0
  %9339 = vmatpush1.bf16.msra.mxu0 %v9231
  %9340 = vmatprep.subr.bf16.mxu0 0
  %9341 = vmatpush1.bf16.msra.mxu0 %v9230
  %9342 = vmatprep.subr.bf16.mxu0 0
  %9343 = vmatpush1.bf16.msra.mxu0 %v9229
  %9344 = vmatprep.subr.bf16.mxu0 0
  %9345 = vmatpush1.bf16.msra.mxu0 %v9228
  %9346 = vmatprep.subr.bf16.mxu0 0
  %9347 = vmatpush2.bf16.msra.mxu0 0
  %9348 = vmatprep.subr.bf16.mxu0 0
  %9349 = vmatpush2.bf16.msra.mxu0 0
  %9350 = vmatprep.subr.bf16.mxu0 0
  %9351 = vmatpush2.bf16.msra.mxu0 0
  %9352 = vmatprep.subr.bf16.mxu0 0
  %9353 = vmatpush2.bf16.msra.mxu0 0
  %9354 = vmatprep.subr.bf16.mxu0 0
  %9355 = vmatpush2.bf16.msra.mxu0 0
  %9356 = vmatprep.subr.bf16.mxu0 0
  %9357 = vmatpush2.bf16.msra.mxu0 0
  %9358 = vmatprep.subr.bf16.mxu0 0
  %9359 = vmatpush2.bf16.msra.mxu0 0
  %9360 = vmatprep.subr.bf16.mxu0 0
  %9361 = vmatpush2.bf16.msra.mxu0 0
  %9362 = vmatprep.mubr.bf16.mxu0 0
  %9363 = vmatmul.mubr.bf16.gmra.mxu0 %v9235
  %v9364 = vpop.f32.mrf.mxu0
  %v9365 = vadd.f32 0.0, %v9364
  %v9366 = vpop.f32.mrf.mxu0
  %v9367 = vpop.f32.mrf.mxu0
  %v9368 = vadd.f32 0.0, %v9367
  %v9369 = vpop.f32.mrf.mxu0
  %9370 = vmatprep.mubr.bf16.mxu0 0
  %9371 = vmatmul.mubr.bf16.gmra.mxu0 %v9238
  %v9372 = vpop.f32.mrf.mxu0
  %v9373 = vadd.f32 0.0, %v9372
  %v9374 = vpop.f32.mrf.mxu0
  %v9375 = vpop.f32.mrf.mxu0
  %v9376 = vadd.f32 0.0, %v9375
  %v9377 = vpop.f32.mrf.mxu0
  %9378 = vmatprep.mubr.bf16.mxu0 0
  %9379 = vmatmul.mubr.bf16.gmra.mxu0 %v9241
  %v9380 = vpop.f32.mrf.mxu0
  %v9381 = vadd.f32 0.0, %v9380
  %v9382 = vpop.f32.mrf.mxu0
  %v9383 = vpop.f32.mrf.mxu0
  %v9384 = vadd.f32 0.0, %v9383
  %v9385 = vpop.f32.mrf.mxu0
  %9386 = vmatprep.mubr.bf16.mxu0 0
  %9387 = vmatmul.mubr.bf16.gmra.mxu0 %v9244
  %v9388 = vpop.f32.mrf.mxu0
  %v9389 = vadd.f32 0.0, %v9388
  %v9390 = vpop.f32.mrf.mxu0
  %v9391 = vpop.f32.mrf.mxu0
  %v9392 = vadd.f32 0.0, %v9391
  %v9393 = vpop.f32.mrf.mxu0
  %9394 = vmatprep.mubr.bf16.mxu0 0
  %9395 = vmatmul.mubr.bf16.gmra.mxu0 %v9247
  %v9396 = vpop.f32.mrf.mxu0
  %v9397 = vadd.f32 0.0, %v9396
  %v9398 = vpop.f32.mrf.mxu0
  %v9399 = vpop.f32.mrf.mxu0
  %v9400 = vadd.f32 0.0, %v9399
  %v9401 = vpop.f32.mrf.mxu0
  %9402 = vmatprep.mubr.bf16.mxu0 0
  %9403 = vmatmul.mubr.bf16.gmra.mxu0 %v9250
  %v9404 = vpop.f32.mrf.mxu0
  %v9405 = vadd.f32 0.0, %v9404
  %v9406 = vpop.f32.mrf.mxu0
  %v9407 = vpop.f32.mrf.mxu0
  %v9408 = vadd.f32 0.0, %v9407
  %v9409 = vpop.f32.mrf.mxu0
  %9410 = vmatprep.mubr.bf16.mxu0 0
  %9411 = vmatmul.mubr.bf16.gmra.mxu0 %v9253
  %v9412 = vpop.f32.mrf.mxu0
  %v9413 = vadd.f32 0.0, %v9412
  %v9414 = vpop.f32.mrf.mxu0
  %v9415 = vpop.f32.mrf.mxu0
  %v9416 = vadd.f32 0.0, %v9415
  %v9417 = vpop.f32.mrf.mxu0
  %9418 = vmatprep.mubr.bf16.mxu0 0
  %9419 = vmatmul.mubr.bf16.gmra.mxu0 %v9256
  %v9420 = vpop.f32.mrf.mxu0
  %v9421 = vadd.f32 0.0, %v9420
  %v9422 = vpop.f32.mrf.mxu0
  %v9423 = vpop.f32.mrf.mxu0
  %v9424 = vadd.f32 0.0, %v9423
  %v9425 = vpop.f32.mrf.mxu0
  %9426 = vmatprep.mubr.bf16.mxu0 0
  %9427 = vmatmul.mubr.bf16.gmra.mxu0 %v9259
  %v9428 = vpop.f32.mrf.mxu0
  %v9429 = vadd.f32 0.0, %v9428
  %v9430 = vpop.f32.mrf.mxu0
  %v9431 = vpop.f32.mrf.mxu0
  %v9432 = vadd.f32 0.0, %v9431
  %v9433 = vpop.f32.mrf.mxu0
  %9434 = vmatprep.mubr.bf16.mxu0 0
  %9435 = vmatmul.mubr.bf16.gmra.mxu0 %v9262
  %v9436 = vpop.f32.mrf.mxu0
  %v9437 = vadd.f32 0.0, %v9436
  %v9438 = vpop.f32.mrf.mxu0
  %v9439 = vpop.f32.mrf.mxu0
  %v9440 = vadd.f32 0.0, %v9439
  %v9441 = vpop.f32.mrf.mxu0
  %9442 = vmatprep.mubr.bf16.mxu0 0
  %9443 = vmatmul.mubr.bf16.gmra.mxu0 %v9265
  %v9444 = vpop.f32.mrf.mxu0
  %v9445 = vadd.f32 0.0, %v9444
  %v9446 = vpop.f32.mrf.mxu0
  %v9447 = vpop.f32.mrf.mxu0
  %v9448 = vadd.f32 0.0, %v9447
  %v9449 = vpop.f32.mrf.mxu0
  %9450 = vmatprep.mubr.bf16.mxu0 0
  %9451 = vmatmul.mubr.bf16.gmra.mxu0 %v9268
  %v9452 = vpop.f32.mrf.mxu0
  %v9453 = vadd.f32 0.0, %v9452
  %v9454 = vpop.f32.mrf.mxu0
  %v9455 = vpop.f32.mrf.mxu0
  %v9456 = vadd.f32 0.0, %v9455
  %v9457 = vpop.f32.mrf.mxu0
  %9458 = vmatprep.mubr.bf16.mxu0 0
  %9459 = vmatmul.mubr.bf16.gmra.mxu0 %v9271
  %v9460 = vpop.f32.mrf.mxu0
  %v9461 = vadd.f32 0.0, %v9460
  %v9462 = vpop.f32.mrf.mxu0
  %v9463 = vpop.f32.mrf.mxu0
  %v9464 = vadd.f32 0.0, %v9463
  %v9465 = vpop.f32.mrf.mxu0
  %9466 = vmatprep.mubr.bf16.mxu0 0
  %9467 = vmatmul.mubr.bf16.gmra.mxu0 %v9274
  %v9468 = vpop.f32.mrf.mxu0
  %v9469 = vadd.f32 0.0, %v9468
  %v9470 = vpop.f32.mrf.mxu0
  %v9471 = vpop.f32.mrf.mxu0
  %v9472 = vadd.f32 0.0, %v9471
  %v9473 = vpop.f32.mrf.mxu0
  %9474 = vmatprep.mubr.bf16.mxu0 0
  %9475 = vmatmul.mubr.bf16.gmra.mxu0 %v9277
  %v9476 = vpop.f32.mrf.mxu0
  %v9477 = vadd.f32 0.0, %v9476
  %v9478 = vpop.f32.mrf.mxu0
  %v9479 = vpop.f32.mrf.mxu0
  %v9480 = vadd.f32 0.0, %v9479
  %v9481 = vpop.f32.mrf.mxu0
  %9482 = vmatprep.mubr.bf16.mxu0 0
  %9483 = vmatmul.mubr.bf16.gmra.mxu0 %v9280
  %v9484 = vpop.f32.mrf.mxu0
  %v9485 = vadd.f32 0.0, %v9484
  %v9486 = vpop.f32.mrf.mxu0
  %v9487 = vpop.f32.mrf.mxu0
  %v9488 = vadd.f32 0.0, %v9487
  %v9489 = vpop.f32.mrf.mxu0
  %9490 = vmatprep.mubr.bf16.mxu0 0
  %9491 = vmatmul.mubr.bf16.gmra.mxu0 %v9283
  %v9492 = vpop.f32.mrf.mxu0
  %v9493 = vadd.f32 0.0, %v9492
  %v9494 = vpop.f32.mrf.mxu0
  %v9495 = vpop.f32.mrf.mxu0
  %v9496 = vadd.f32 0.0, %v9495
  %v9497 = vpop.f32.mrf.mxu0
  %9498 = vmatprep.mubr.bf16.mxu0 0
  %9499 = vmatmul.mubr.bf16.gmra.mxu0 %v9286
  %v9500 = vpop.f32.mrf.mxu0
  %v9501 = vadd.f32 0.0, %v9500
  %v9502 = vpop.f32.mrf.mxu0
  %v9503 = vpop.f32.mrf.mxu0
  %v9504 = vadd.f32 0.0, %v9503
  %v9505 = vpop.f32.mrf.mxu0
  %9506 = vmatprep.mubr.bf16.mxu0 0
  %9507 = vmatmul.mubr.bf16.gmra.mxu0 %v9289
  %v9508 = vpop.f32.mrf.mxu0
  %v9509 = vadd.f32 0.0, %v9508
  %v9510 = vpop.f32.mrf.mxu0
  %v9511 = vpop.f32.mrf.mxu0
  %v9512 = vadd.f32 0.0, %v9511
  %v9513 = vpop.f32.mrf.mxu0
  %9514 = vmatprep.mubr.bf16.mxu0 0
  %9515 = vmatmul.mubr.bf16.gmra.mxu0 %v9292
  %v9516 = vpop.f32.mrf.mxu0
  %v9517 = vadd.f32 0.0, %v9516
  %v9518 = vpop.f32.mrf.mxu0
  %v9519 = vpop.f32.mrf.mxu0
  %v9520 = vadd.f32 0.0, %v9519
  %v9521 = vpop.f32.mrf.mxu0
  %9522 = vmatprep.mubr.bf16.mxu0 0
  %9523 = vmatmul.mubr.bf16.gmra.mxu0 %v9295
  %v9524 = vpop.f32.mrf.mxu0
  %v9525 = vadd.f32 0.0, %v9524
  %v9526 = vpop.f32.mrf.mxu0
  %v9527 = vpop.f32.mrf.mxu0
  %v9528 = vadd.f32 0.0, %v9527
  %v9529 = vpop.f32.mrf.mxu0
  %9530 = vmatprep.mubr.bf16.mxu0 0
  %9531 = vmatmul.mubr.bf16.gmra.mxu0 %v9298
  %v9532 = vpop.f32.mrf.mxu0
  %v9533 = vadd.f32 0.0, %v9532
  %v9534 = vpop.f32.mrf.mxu0
  %v9535 = vpop.f32.mrf.mxu0
  %v9536 = vadd.f32 0.0, %v9535
  %v9537 = vpop.f32.mrf.mxu0
  %9538 = vmatprep.mubr.bf16.mxu0 0
  %9539 = vmatmul.mubr.bf16.gmra.mxu0 %v9301
  %v9540 = vpop.f32.mrf.mxu0
  %v9541 = vadd.f32 0.0, %v9540
  %v9542 = vpop.f32.mrf.mxu0
  %v9543 = vpop.f32.mrf.mxu0
  %v9544 = vadd.f32 0.0, %v9543
  %v9545 = vpop.f32.mrf.mxu0
  %9546 = vmatprep.mubr.bf16.mxu0 0
  %9547 = vmatmul.mubr.bf16.gmra.mxu0 %v9304
  %v9548 = vpop.f32.mrf.mxu0
  %v9549 = vadd.f32 0.0, %v9548
  %v9550 = vpop.f32.mrf.mxu0
  %v9551 = vpop.f32.mrf.mxu0
  %v9552 = vadd.f32 0.0, %v9551
  %v9553 = vpop.f32.mrf.mxu0
  %9554 = vmatprep.mubr.bf16.mxu0 0
  %9555 = vmatmul.mubr.bf16.gmra.mxu0 %v9307
  %v9556 = vpop.f32.mrf.mxu0
  %v9557 = vadd.f32 0.0, %v9556
  %v9558 = vpop.f32.mrf.mxu0
  %v9559 = vpop.f32.mrf.mxu0
  %v9560 = vadd.f32 0.0, %v9559
  %v9561 = vpop.f32.mrf.mxu0
  %9562 = vmatprep.mubr.bf16.mxu0 0
  %9563 = vmatmul.mubr.bf16.gmra.mxu0 %v9310
  %v9564 = vpop.f32.mrf.mxu0
  %v9565 = vadd.f32 0.0, %v9564
  %v9566 = vpop.f32.mrf.mxu0
  %v9567 = vpop.f32.mrf.mxu0
  %v9568 = vadd.f32 0.0, %v9567
  %v9569 = vpop.f32.mrf.mxu0
  %9570 = vmatprep.mubr.bf16.mxu0 0
  %9571 = vmatmul.mubr.bf16.gmra.mxu0 %v9313
  %v9572 = vpop.f32.mrf.mxu0
  %v9573 = vadd.f32 0.0, %v9572
  %v9574 = vpop.f32.mrf.mxu0
  %v9575 = vpop.f32.mrf.mxu0
  %v9576 = vadd.f32 0.0, %v9575
  %v9577 = vpop.f32.mrf.mxu0
  %9578 = vmatprep.mubr.bf16.mxu0 0
  %9579 = vmatmul.mubr.bf16.gmra.mxu0 %v9316
  %v9580 = vpop.f32.mrf.mxu0
  %v9581 = vadd.f32 0.0, %v9580
  %v9582 = vpop.f32.mrf.mxu0
  %v9583 = vpop.f32.mrf.mxu0
  %v9584 = vadd.f32 0.0, %v9583
  %v9585 = vpop.f32.mrf.mxu0
  %9586 = vmatprep.mubr.bf16.mxu0 0
  %9587 = vmatmul.mubr.bf16.gmra.mxu0 %v9319
  %v9588 = vpop.f32.mrf.mxu0
  %v9589 = vadd.f32 0.0, %v9588
  %v9590 = vpop.f32.mrf.mxu0
  %v9591 = vpop.f32.mrf.mxu0
  %v9592 = vadd.f32 0.0, %v9591
  %v9593 = vpop.f32.mrf.mxu0
  %9594 = vmatprep.mubr.bf16.mxu0 0
  %9595 = vmatmul.mubr.bf16.gmra.mxu0 %v9322
  %v9596 = vpop.f32.mrf.mxu0
  %v9597 = vadd.f32 0.0, %v9596
  %v9598 = vpop.f32.mrf.mxu0
  %v9599 = vpop.f32.mrf.mxu0
  %v9600 = vadd.f32 0.0, %v9599
  %v9601 = vpop.f32.mrf.mxu0
  %9602 = vmatprep.mubr.bf16.mxu0 0
  %9603 = vmatmul.mubr.bf16.gmra.mxu0 %v9325
  %v9604 = vpop.f32.mrf.mxu0
  %v9605 = vadd.f32 0.0, %v9604
  %v9606 = vpop.f32.mrf.mxu0
  %v9607 = vpop.f32.mrf.mxu0
  %v9608 = vadd.f32 0.0, %v9607
  %v9609 = vpop.f32.mrf.mxu0
  %9610 = vmatprep.mubr.bf16.mxu0 0
  %9611 = vmatmul.mubr.bf16.gmra.mxu0 %v9328
  %v9612 = vpop.f32.mrf.mxu0
  %v9613 = vadd.f32 0.0, %v9612
  %v9614 = vpop.f32.mrf.mxu0
  %v9615 = vpop.f32.mrf.mxu0
  %v9616 = vadd.f32 0.0, %v9615
  %v9617 = vpop.f32.mrf.mxu0
  %9618 = vdwg.mxu0
  %9619 = vmatprep.subr.bf16.mxu0 0
  %9620 = vmatpush1.bf16.msra.mxu0 0
  %9621 = vmatprep.subr.bf16.mxu0 0
  %9622 = vmatpush1.bf16.msra.mxu0 0
  %9623 = vmatprep.subr.bf16.mxu0 0
  %9624 = vmatpush1.bf16.msra.mxu0 %v9169
  %9625 = vmatprep.subr.bf16.mxu0 0
  %9626 = vmatpush1.bf16.msra.mxu0 %v9168
  %9627 = vmatprep.subr.bf16.mxu0 0
  %9628 = vmatpush1.bf16.msra.mxu0 %v9167
  %9629 = vmatprep.subr.bf16.mxu0 0
  %9630 = vmatpush1.bf16.msra.mxu0 %v9166
  %9631 = vmatprep.subr.bf16.mxu0 0
  %9632 = vmatpush1.bf16.msra.mxu0 %v9165
  %9633 = vmatprep.subr.bf16.mxu0 0
  %9634 = vmatpush1.bf16.msra.mxu0 %v9164
  %9635 = vmatprep.subr.bf16.mxu0 0
  %9636 = vmatpush2.bf16.msra.mxu0 0
  %9637 = vmatprep.subr.bf16.mxu0 0
  %9638 = vmatpush2.bf16.msra.mxu0 0
  %9639 = vmatprep.subr.bf16.mxu0 0
  %9640 = vmatpush2.bf16.msra.mxu0 0
  %9641 = vmatprep.subr.bf16.mxu0 0
  %9642 = vmatpush2.bf16.msra.mxu0 0
  %9643 = vmatprep.subr.bf16.mxu0 0
  %9644 = vmatpush2.bf16.msra.mxu0 0
  %9645 = vmatprep.subr.bf16.mxu0 0
  %9646 = vmatpush2.bf16.msra.mxu0 0
  %9647 = vmatprep.subr.bf16.mxu0 0
  %9648 = vmatpush2.bf16.msra.mxu0 0
  %9649 = vmatprep.subr.bf16.mxu0 0
  %9650 = vmatpush2.bf16.msra.mxu0 0
  %9651 = vmatprep.mubr.bf16.mxu0 0
  %9652 = vmatmul.mubr.bf16.gmra.mxu0 %v6513
  %v9653 = vpop.f32.mrf.mxu0
  %v9654 = vadd.f32 %v9365, %v9653
  %v9655 = vpop.f32.mrf.mxu0
  %v9656 = vpop.f32.mrf.mxu0
  %v9657 = vadd.f32 %v9368, %v9656
  %v9658 = vpop.f32.mrf.mxu0
  %9659 = vmatprep.mubr.bf16.mxu0 0
  %9660 = vmatmul.mubr.bf16.gmra.mxu0 %v9235
  %v9661 = vpop.f32.mrf.mxu0
  %v9662 = vadd.f32 %v9373, %v9661
  %v9663 = vpop.f32.mrf.mxu0
  %v9664 = vpop.f32.mrf.mxu0
  %v9665 = vadd.f32 %v9376, %v9664
  %v9666 = vpop.f32.mrf.mxu0
  %9667 = vmatprep.mubr.bf16.mxu0 0
  %9668 = vmatmul.mubr.bf16.gmra.mxu0 %v9238
  %v9669 = vpop.f32.mrf.mxu0
  %v9670 = vadd.f32 %v9381, %v9669
  %v9671 = vpop.f32.mrf.mxu0
  %v9672 = vpop.f32.mrf.mxu0
  %v9673 = vadd.f32 %v9384, %v9672
  %v9674 = vpop.f32.mrf.mxu0
  %9675 = vmatprep.mubr.bf16.mxu0 0
  %9676 = vmatmul.mubr.bf16.gmra.mxu0 %v9241
  %v9677 = vpop.f32.mrf.mxu0
  %v9678 = vadd.f32 %v9389, %v9677
  %v9679 = vpop.f32.mrf.mxu0
  %v9680 = vpop.f32.mrf.mxu0
  %v9681 = vadd.f32 %v9392, %v9680
  %v9682 = vpop.f32.mrf.mxu0
  %9683 = vmatprep.mubr.bf16.mxu0 0
  %9684 = vmatmul.mubr.bf16.gmra.mxu0 %v9244
  %v9685 = vpop.f32.mrf.mxu0
  %v9686 = vadd.f32 %v9397, %v9685
  %v9687 = vpop.f32.mrf.mxu0
  %v9688 = vpop.f32.mrf.mxu0
  %v9689 = vadd.f32 %v9400, %v9688
  %v9690 = vpop.f32.mrf.mxu0
  %9691 = vmatprep.mubr.bf16.mxu0 0
  %9692 = vmatmul.mubr.bf16.gmra.mxu0 %v9247
  %v9693 = vpop.f32.mrf.mxu0
  %v9694 = vadd.f32 %v9405, %v9693
  %v9695 = vpop.f32.mrf.mxu0
  %v9696 = vpop.f32.mrf.mxu0
  %v9697 = vadd.f32 %v9408, %v9696
  %v9698 = vpop.f32.mrf.mxu0
  %9699 = vmatprep.mubr.bf16.mxu0 0
  %9700 = vmatmul.mubr.bf16.gmra.mxu0 %v9250
  %v9701 = vpop.f32.mrf.mxu0
  %v9702 = vadd.f32 %v9413, %v9701
  %v9703 = vpop.f32.mrf.mxu0
  %v9704 = vpop.f32.mrf.mxu0
  %v9705 = vadd.f32 %v9416, %v9704
  %v9706 = vpop.f32.mrf.mxu0
  %9707 = vmatprep.mubr.bf16.mxu0 0
  %9708 = vmatmul.mubr.bf16.gmra.mxu0 %v9253
  %v9709 = vpop.f32.mrf.mxu0
  %v9710 = vadd.f32 %v9421, %v9709
  %v9711 = vpop.f32.mrf.mxu0
  %v9712 = vpop.f32.mrf.mxu0
  %v9713 = vadd.f32 %v9424, %v9712
  %v9714 = vpop.f32.mrf.mxu0
  %9715 = vmatprep.mubr.bf16.mxu0 0
  %9716 = vmatmul.mubr.bf16.gmra.mxu0 %v9256
  %v9717 = vpop.f32.mrf.mxu0
  %v9718 = vadd.f32 %v9429, %v9717
  %v9719 = vpop.f32.mrf.mxu0
  %v9720 = vpop.f32.mrf.mxu0
  %v9721 = vadd.f32 %v9432, %v9720
  %v9722 = vpop.f32.mrf.mxu0
  %9723 = vmatprep.mubr.bf16.mxu0 0
  %9724 = vmatmul.mubr.bf16.gmra.mxu0 %v9259
  %v9725 = vpop.f32.mrf.mxu0
  %v9726 = vadd.f32 %v9437, %v9725
  %v9727 = vpop.f32.mrf.mxu0
  %v9728 = vpop.f32.mrf.mxu0
  %v9729 = vadd.f32 %v9440, %v9728
  %v9730 = vpop.f32.mrf.mxu0
  %9731 = vmatprep.mubr.bf16.mxu0 0
  %9732 = vmatmul.mubr.bf16.gmra.mxu0 %v9262
  %v9733 = vpop.f32.mrf.mxu0
  %v9734 = vadd.f32 %v9445, %v9733
  %v9735 = vpop.f32.mrf.mxu0
  %v9736 = vpop.f32.mrf.mxu0
  %v9737 = vadd.f32 %v9448, %v9736
  %v9738 = vpop.f32.mrf.mxu0
  %9739 = vmatprep.mubr.bf16.mxu0 0
  %9740 = vmatmul.mubr.bf16.gmra.mxu0 %v9265
  %v9741 = vpop.f32.mrf.mxu0
  %v9742 = vadd.f32 %v9453, %v9741
  %v9743 = vpop.f32.mrf.mxu0
  %v9744 = vpop.f32.mrf.mxu0
  %v9745 = vadd.f32 %v9456, %v9744
  %v9746 = vpop.f32.mrf.mxu0
  %9747 = vmatprep.mubr.bf16.mxu0 0
  %9748 = vmatmul.mubr.bf16.gmra.mxu0 %v9268
  %v9749 = vpop.f32.mrf.mxu0
  %v9750 = vadd.f32 %v9461, %v9749
  %v9751 = vpop.f32.mrf.mxu0
  %v9752 = vpop.f32.mrf.mxu0
  %v9753 = vadd.f32 %v9464, %v9752
  %v9754 = vpop.f32.mrf.mxu0
  %9755 = vmatprep.mubr.bf16.mxu0 0
  %9756 = vmatmul.mubr.bf16.gmra.mxu0 %v9271
  %v9757 = vpop.f32.mrf.mxu0
  %v9758 = vadd.f32 %v9469, %v9757
  %v9759 = vpop.f32.mrf.mxu0
  %v9760 = vpop.f32.mrf.mxu0
  %v9761 = vadd.f32 %v9472, %v9760
  %v9762 = vpop.f32.mrf.mxu0
  %9763 = vmatprep.mubr.bf16.mxu0 0
  %9764 = vmatmul.mubr.bf16.gmra.mxu0 %v9274
  %v9765 = vpop.f32.mrf.mxu0
  %v9766 = vadd.f32 %v9477, %v9765
  %v9767 = vpop.f32.mrf.mxu0
  %v9768 = vpop.f32.mrf.mxu0
  %v9769 = vadd.f32 %v9480, %v9768
  %v9770 = vpop.f32.mrf.mxu0
  %9771 = vmatprep.mubr.bf16.mxu0 0
  %9772 = vmatmul.mubr.bf16.gmra.mxu0 %v9277
  %v9773 = vpop.f32.mrf.mxu0
  %v9774 = vadd.f32 %v9485, %v9773
  %v9775 = vpop.f32.mrf.mxu0
  %v9776 = vpop.f32.mrf.mxu0
  %v9777 = vadd.f32 %v9488, %v9776
  %v9778 = vpop.f32.mrf.mxu0
  %9779 = vmatprep.mubr.bf16.mxu0 0
  %9780 = vmatmul.mubr.bf16.gmra.mxu0 %v6513
  %v9781 = vpop.f32.mrf.mxu0
  %v9782 = vadd.f32 %v9493, %v9781
  %v9783 = vpop.f32.mrf.mxu0
  %v9784 = vpop.f32.mrf.mxu0
  %v9785 = vadd.f32 %v9496, %v9784
  %v9786 = vpop.f32.mrf.mxu0
  %9787 = vmatprep.mubr.bf16.mxu0 0
  %9788 = vmatmul.mubr.bf16.gmra.mxu0 %v9283
  %v9789 = vpop.f32.mrf.mxu0
  %v9790 = vadd.f32 %v9501, %v9789
  %v9791 = vpop.f32.mrf.mxu0
  %v9792 = vpop.f32.mrf.mxu0
  %v9793 = vadd.f32 %v9504, %v9792
  %v9794 = vpop.f32.mrf.mxu0
  %9795 = vmatprep.mubr.bf16.mxu0 0
  %9796 = vmatmul.mubr.bf16.gmra.mxu0 %v9286
  %v9797 = vpop.f32.mrf.mxu0
  %v9798 = vadd.f32 %v9509, %v9797
  %v9799 = vpop.f32.mrf.mxu0
  %v9800 = vpop.f32.mrf.mxu0
  %v9801 = vadd.f32 %v9512, %v9800
  %v9802 = vpop.f32.mrf.mxu0
  %9803 = vmatprep.mubr.bf16.mxu0 0
  %9804 = vmatmul.mubr.bf16.gmra.mxu0 %v9289
  %v9805 = vpop.f32.mrf.mxu0
  %v9806 = vadd.f32 %v9517, %v9805
  %v9807 = vpop.f32.mrf.mxu0
  %v9808 = vpop.f32.mrf.mxu0
  %v9809 = vadd.f32 %v9520, %v9808
  %v9810 = vpop.f32.mrf.mxu0
  %9811 = vmatprep.mubr.bf16.mxu0 0
  %9812 = vmatmul.mubr.bf16.gmra.mxu0 %v9292
  %v9813 = vpop.f32.mrf.mxu0
  %v9814 = vadd.f32 %v9525, %v9813
  %v9815 = vpop.f32.mrf.mxu0
  %v9816 = vpop.f32.mrf.mxu0
  %v9817 = vadd.f32 %v9528, %v9816
  %v9818 = vpop.f32.mrf.mxu0
  %9819 = vmatprep.mubr.bf16.mxu0 0
  %9820 = vmatmul.mubr.bf16.gmra.mxu0 %v9295
  %v9821 = vpop.f32.mrf.mxu0
  %v9822 = vadd.f32 %v9533, %v9821
  %v9823 = vpop.f32.mrf.mxu0
  %v9824 = vpop.f32.mrf.mxu0
  %v9825 = vadd.f32 %v9536, %v9824
  %v9826 = vpop.f32.mrf.mxu0
  %9827 = vmatprep.mubr.bf16.mxu0 0
  %9828 = vmatmul.mubr.bf16.gmra.mxu0 %v9298
  %v9829 = vpop.f32.mrf.mxu0
  %v9830 = vadd.f32 %v9541, %v9829
  %v9831 = vpop.f32.mrf.mxu0
  %v9832 = vpop.f32.mrf.mxu0
  %v9833 = vadd.f32 %v9544, %v9832
  %v9834 = vpop.f32.mrf.mxu0
  %9835 = vmatprep.mubr.bf16.mxu0 0
  %9836 = vmatmul.mubr.bf16.gmra.mxu0 %v9301
  %v9837 = vpop.f32.mrf.mxu0
  %v9838 = vadd.f32 %v9549, %v9837
  %v9839 = vpop.f32.mrf.mxu0
  %v9840 = vpop.f32.mrf.mxu0
  %v9841 = vadd.f32 %v9552, %v9840
  %v9842 = vpop.f32.mrf.mxu0
  %9843 = vmatprep.mubr.bf16.mxu0 0
  %9844 = vmatmul.mubr.bf16.gmra.mxu0 %v9304
  %v9845 = vpop.f32.mrf.mxu0
  %v9846 = vadd.f32 %v9557, %v9845
  %v9847 = vpop.f32.mrf.mxu0
  %v9848 = vpop.f32.mrf.mxu0
  %v9849 = vadd.f32 %v9560, %v9848
  %v9850 = vpop.f32.mrf.mxu0
  %9851 = vmatprep.mubr.bf16.mxu0 0
  %9852 = vmatmul.mubr.bf16.gmra.mxu0 %v9307
  %v9853 = vpop.f32.mrf.mxu0
  %v9854 = vadd.f32 %v9565, %v9853
  %v9855 = vpop.f32.mrf.mxu0
  %v9856 = vpop.f32.mrf.mxu0
  %v9857 = vadd.f32 %v9568, %v9856
  %v9858 = vpop.f32.mrf.mxu0
  %9859 = vmatprep.mubr.bf16.mxu0 0
  %9860 = vmatmul.mubr.bf16.gmra.mxu0 %v9310
  %v9861 = vpop.f32.mrf.mxu0
  %v9862 = vadd.f32 %v9573, %v9861
  %v9863 = vpop.f32.mrf.mxu0
  %v9864 = vpop.f32.mrf.mxu0
  %v9865 = vadd.f32 %v9576, %v9864
  %v9866 = vpop.f32.mrf.mxu0
  %9867 = vmatprep.mubr.bf16.mxu0 0
  %9868 = vmatmul.mubr.bf16.gmra.mxu0 %v9313
  %v9869 = vpop.f32.mrf.mxu0
  %v9870 = vadd.f32 %v9581, %v9869
  %v9871 = vpop.f32.mrf.mxu0
  %v9872 = vpop.f32.mrf.mxu0
  %v9873 = vadd.f32 %v9584, %v9872
  %v9874 = vpop.f32.mrf.mxu0
  %9875 = vmatprep.mubr.bf16.mxu0 0
  %9876 = vmatmul.mubr.bf16.gmra.mxu0 %v9316
  %v9877 = vpop.f32.mrf.mxu0
  %v9878 = vadd.f32 %v9589, %v9877
  %v9879 = vpop.f32.mrf.mxu0
  %v9880 = vpop.f32.mrf.mxu0
  %v9881 = vadd.f32 %v9592, %v9880
  %v9882 = vpop.f32.mrf.mxu0
  %9883 = vmatprep.mubr.bf16.mxu0 0
  %9884 = vmatmul.mubr.bf16.gmra.mxu0 %v9319
  %v9885 = vpop.f32.mrf.mxu0
  %v9886 = vadd.f32 %v9597, %v9885
  %v9887 = vpop.f32.mrf.mxu0
  %v9888 = vpop.f32.mrf.mxu0
  %v9889 = vadd.f32 %v9600, %v9888
  %v9890 = vpop.f32.mrf.mxu0
  %9891 = vmatprep.mubr.bf16.mxu0 0
  %9892 = vmatmul.mubr.bf16.gmra.mxu0 %v9322
  %v9893 = vpop.f32.mrf.mxu0
  %v9894 = vadd.f32 %v9605, %v9893
  %v9895 = vpop.f32.mrf.mxu0
  %v9896 = vpop.f32.mrf.mxu0
  %v9897 = vadd.f32 %v9608, %v9896
  %v9898 = vpop.f32.mrf.mxu0
  %9899 = vmatprep.mubr.bf16.mxu0 0
  %9900 = vmatmul.mubr.bf16.gmra.mxu0 %v9325
  %v9901 = vpop.f32.mrf.mxu0
  %v9902 = vadd.f32 %v9613, %v9901
  %v9903 = vpop.f32.mrf.mxu0
  %v9904 = vpop.f32.mrf.mxu0
  %v9905 = vadd.f32 %v9616, %v9904
  %v9906 = vpop.f32.mrf.mxu0
  %9907 = vdwg.mxu0
  %v9908 = vpack.c.bf16 %v7962, %v7961
  %v9909 = vpack.c.bf16 %v7964, %v7963
  %v9910 = vpack.c.bf16 %v7966, %v7965
  %v9911 = vpack.c.bf16 %v7968, %v7967
  %v9912 = vpack.c.bf16 %v7970, %v7969
  %v9913 = vpack.c.bf16 %v7972, %v7971
  %9914 = vmatprep.subr.bf16.mxu0 0
  %9915 = vmatpush1.bf16.msra.mxu0 0
  %9916 = vmatprep.subr.bf16.mxu0 0
  %9917 = vmatpush1.bf16.msra.mxu0 0
  %9918 = vmatprep.subr.bf16.mxu0 0
  %9919 = vmatpush1.bf16.msra.mxu0 %v9913
  %9920 = vmatprep.subr.bf16.mxu0 0
  %9921 = vmatpush1.bf16.msra.mxu0 %v9912
  %9922 = vmatprep.subr.bf16.mxu0 0
  %9923 = vmatpush1.bf16.msra.mxu0 %v9911
  %9924 = vmatprep.subr.bf16.mxu0 0
  %9925 = vmatpush1.bf16.msra.mxu0 %v9910
  %9926 = vmatprep.subr.bf16.mxu0 0
  %9927 = vmatpush1.bf16.msra.mxu0 %v9909
  %9928 = vmatprep.subr.bf16.mxu0 0
  %9929 = vmatpush1.bf16.msra.mxu0 %v9908
  %9930 = vmatprep.subr.bf16.mxu0 0
  %9931 = vmatpush2.bf16.msra.mxu0 0
  %9932 = vmatprep.subr.bf16.mxu0 0
  %9933 = vmatpush2.bf16.msra.mxu0 0
  %9934 = vmatprep.subr.bf16.mxu0 0
  %9935 = vmatpush2.bf16.msra.mxu0 0
  %9936 = vmatprep.subr.bf16.mxu0 0
  %9937 = vmatpush2.bf16.msra.mxu0 0
  %9938 = vmatprep.subr.bf16.mxu0 0
  %9939 = vmatpush2.bf16.msra.mxu0 0
  %9940 = vmatprep.subr.bf16.mxu0 0
  %9941 = vmatpush2.bf16.msra.mxu0 0
  %9942 = vmatprep.subr.bf16.mxu0 0
  %9943 = vmatpush2.bf16.msra.mxu0 0
  %9944 = vmatprep.subr.bf16.mxu0 0
  %9945 = vmatpush2.bf16.msra.mxu0 0
  %9946 = vmatprep.mubr.bf16.mxu0 0
  %9947 = vmatmul.mubr.bf16.gmra.mxu0 %v9238
  %v9948 = vpop.f32.mrf.mxu0
  %v9949 = vadd.f32 0.0, %v9948
  %v9950 = vpop.f32.mrf.mxu0
  %v9951 = vpop.f32.mrf.mxu0
  %v9952 = vadd.f32 0.0, %v9951
  %v9953 = vpop.f32.mrf.mxu0
  %9954 = vmatprep.mubr.bf16.mxu0 0
  %9955 = vmatmul.mubr.bf16.gmra.mxu0 %v9241
  %v9956 = vpop.f32.mrf.mxu0
  %v9957 = vadd.f32 0.0, %v9956
  %v9958 = vpop.f32.mrf.mxu0
  %v9959 = vpop.f32.mrf.mxu0
  %v9960 = vadd.f32 0.0, %v9959
  %v9961 = vpop.f32.mrf.mxu0
  %9962 = vmatprep.mubr.bf16.mxu0 0
  %9963 = vmatmul.mubr.bf16.gmra.mxu0 %v9244
  %v9964 = vpop.f32.mrf.mxu0
  %v9965 = vadd.f32 0.0, %v9964
  %v9966 = vpop.f32.mrf.mxu0
  %v9967 = vpop.f32.mrf.mxu0
  %v9968 = vadd.f32 0.0, %v9967
  %v9969 = vpop.f32.mrf.mxu0
  %9970 = vmatprep.mubr.bf16.mxu0 0
  %9971 = vmatmul.mubr.bf16.gmra.mxu0 %v9247
  %v9972 = vpop.f32.mrf.mxu0
  %v9973 = vadd.f32 0.0, %v9972
  %v9974 = vpop.f32.mrf.mxu0
  %v9975 = vpop.f32.mrf.mxu0
  %v9976 = vadd.f32 0.0, %v9975
  %v9977 = vpop.f32.mrf.mxu0
  %9978 = vmatprep.mubr.bf16.mxu0 0
  %9979 = vmatmul.mubr.bf16.gmra.mxu0 %v9250
  %v9980 = vpop.f32.mrf.mxu0
  %v9981 = vadd.f32 0.0, %v9980
  %v9982 = vpop.f32.mrf.mxu0
  %v9983 = vpop.f32.mrf.mxu0
  %v9984 = vadd.f32 0.0, %v9983
  %v9985 = vpop.f32.mrf.mxu0
  %9986 = vmatprep.mubr.bf16.mxu0 0
  %9987 = vmatmul.mubr.bf16.gmra.mxu0 %v9253
  %v9988 = vpop.f32.mrf.mxu0
  %v9989 = vadd.f32 0.0, %v9988
  %v9990 = vpop.f32.mrf.mxu0
  %v9991 = vpop.f32.mrf.mxu0
  %v9992 = vadd.f32 0.0, %v9991
  %v9993 = vpop.f32.mrf.mxu0
  %9994 = vmatprep.mubr.bf16.mxu0 0
  %9995 = vmatmul.mubr.bf16.gmra.mxu0 %v9256
  %v9996 = vpop.f32.mrf.mxu0
  %v9997 = vadd.f32 0.0, %v9996
  %v9998 = vpop.f32.mrf.mxu0
  %v9999 = vpop.f32.mrf.mxu0
  %v10000 = vadd.f32 0.0, %v9999
  %v10001 = vpop.f32.mrf.mxu0
  %10002 = vmatprep.mubr.bf16.mxu0 0
  %10003 = vmatmul.mubr.bf16.gmra.mxu0 %v9259
  %v10004 = vpop.f32.mrf.mxu0
  %v10005 = vadd.f32 0.0, %v10004
  %v10006 = vpop.f32.mrf.mxu0
  %v10007 = vpop.f32.mrf.mxu0
  %v10008 = vadd.f32 0.0, %v10007
  %v10009 = vpop.f32.mrf.mxu0
  %10010 = vmatprep.mubr.bf16.mxu0 0
  %10011 = vmatmul.mubr.bf16.gmra.mxu0 %v9262
  %v10012 = vpop.f32.mrf.mxu0
  %v10013 = vadd.f32 0.0, %v10012
  %v10014 = vpop.f32.mrf.mxu0
  %v10015 = vpop.f32.mrf.mxu0
  %v10016 = vadd.f32 0.0, %v10015
  %v10017 = vpop.f32.mrf.mxu0
  %10018 = vmatprep.mubr.bf16.mxu0 0
  %10019 = vmatmul.mubr.bf16.gmra.mxu0 %v9265
  %v10020 = vpop.f32.mrf.mxu0
  %v10021 = vadd.f32 0.0, %v10020
  %v10022 = vpop.f32.mrf.mxu0
  %v10023 = vpop.f32.mrf.mxu0
  %v10024 = vadd.f32 0.0, %v10023
  %v10025 = vpop.f32.mrf.mxu0
  %10026 = vmatprep.mubr.bf16.mxu0 0
  %10027 = vmatmul.mubr.bf16.gmra.mxu0 %v9268
  %v10028 = vpop.f32.mrf.mxu0
  %v10029 = vadd.f32 0.0, %v10028
  %v10030 = vpop.f32.mrf.mxu0
  %v10031 = vpop.f32.mrf.mxu0
  %v10032 = vadd.f32 0.0, %v10031
  %v10033 = vpop.f32.mrf.mxu0
  %10034 = vmatprep.mubr.bf16.mxu0 0
  %10035 = vmatmul.mubr.bf16.gmra.mxu0 %v9271
  %v10036 = vpop.f32.mrf.mxu0
  %v10037 = vadd.f32 0.0, %v10036
  %v10038 = vpop.f32.mrf.mxu0
  %v10039 = vpop.f32.mrf.mxu0
  %v10040 = vadd.f32 0.0, %v10039
  %v10041 = vpop.f32.mrf.mxu0
  %10042 = vmatprep.mubr.bf16.mxu0 0
  %10043 = vmatmul.mubr.bf16.gmra.mxu0 %v9274
  %v10044 = vpop.f32.mrf.mxu0
  %v10045 = vadd.f32 0.0, %v10044
  %v10046 = vpop.f32.mrf.mxu0
  %v10047 = vpop.f32.mrf.mxu0
  %v10048 = vadd.f32 0.0, %v10047
  %v10049 = vpop.f32.mrf.mxu0
  %10050 = vmatprep.mubr.bf16.mxu0 0
  %10051 = vmatmul.mubr.bf16.gmra.mxu0 %v9277
  %v10052 = vpop.f32.mrf.mxu0
  %v10053 = vadd.f32 0.0, %v10052
  %v10054 = vpop.f32.mrf.mxu0
  %v10055 = vpop.f32.mrf.mxu0
  %v10056 = vadd.f32 0.0, %v10055
  %v10057 = vpop.f32.mrf.mxu0
  %10058 = vmatprep.mubr.bf16.mxu0 0
  %10059 = vmatmul.mubr.bf16.gmra.mxu0 %v9280
  %v10060 = vpop.f32.mrf.mxu0
  %v10061 = vadd.f32 0.0, %v10060
  %v10062 = vpop.f32.mrf.mxu0
  %v10063 = vpop.f32.mrf.mxu0
  %v10064 = vadd.f32 0.0, %v10063
  %v10065 = vpop.f32.mrf.mxu0
  %10066 = vmatprep.mubr.bf16.mxu0 0
  %10067 = vmatmul.mubr.bf16.gmra.mxu0 %v6513
  %v10068 = vpop.f32.mrf.mxu0
  %v10069 = vadd.f32 0.0, %v10068
  %v10070 = vpop.f32.mrf.mxu0
  %v10071 = vpop.f32.mrf.mxu0
  %v10072 = vadd.f32 0.0, %v10071
  %v10073 = vpop.f32.mrf.mxu0
  %10074 = vmatprep.mubr.bf16.mxu0 0
  %10075 = vmatmul.mubr.bf16.gmra.mxu0 %v9286
  %v10076 = vpop.f32.mrf.mxu0
  %v10077 = vadd.f32 0.0, %v10076
  %v10078 = vpop.f32.mrf.mxu0
  %v10079 = vpop.f32.mrf.mxu0
  %v10080 = vadd.f32 0.0, %v10079
  %v10081 = vpop.f32.mrf.mxu0
  %10082 = vmatprep.mubr.bf16.mxu0 0
  %10083 = vmatmul.mubr.bf16.gmra.mxu0 %v9289
  %v10084 = vpop.f32.mrf.mxu0
  %v10085 = vadd.f32 0.0, %v10084
  %v10086 = vpop.f32.mrf.mxu0
  %v10087 = vpop.f32.mrf.mxu0
  %v10088 = vadd.f32 0.0, %v10087
  %v10089 = vpop.f32.mrf.mxu0
  %10090 = vmatprep.mubr.bf16.mxu0 0
  %10091 = vmatmul.mubr.bf16.gmra.mxu0 %v9292
  %v10092 = vpop.f32.mrf.mxu0
  %v10093 = vadd.f32 0.0, %v10092
  %v10094 = vpop.f32.mrf.mxu0
  %v10095 = vpop.f32.mrf.mxu0
  %v10096 = vadd.f32 0.0, %v10095
  %v10097 = vpop.f32.mrf.mxu0
  %10098 = vmatprep.mubr.bf16.mxu0 0
  %10099 = vmatmul.mubr.bf16.gmra.mxu0 %v9295
  %v10100 = vpop.f32.mrf.mxu0
  %v10101 = vadd.f32 0.0, %v10100
  %v10102 = vpop.f32.mrf.mxu0
  %v10103 = vpop.f32.mrf.mxu0
  %v10104 = vadd.f32 0.0, %v10103
  %v10105 = vpop.f32.mrf.mxu0
  %10106 = vmatprep.mubr.bf16.mxu0 0
  %10107 = vmatmul.mubr.bf16.gmra.mxu0 %v9298
  %v10108 = vpop.f32.mrf.mxu0
  %v10109 = vadd.f32 0.0, %v10108
  %v10110 = vpop.f32.mrf.mxu0
  %v10111 = vpop.f32.mrf.mxu0
  %v10112 = vadd.f32 0.0, %v10111
  %v10113 = vpop.f32.mrf.mxu0
  %10114 = vmatprep.mubr.bf16.mxu0 0
  %10115 = vmatmul.mubr.bf16.gmra.mxu0 %v9301
  %v10116 = vpop.f32.mrf.mxu0
  %v10117 = vadd.f32 0.0, %v10116
  %v10118 = vpop.f32.mrf.mxu0
  %v10119 = vpop.f32.mrf.mxu0
  %v10120 = vadd.f32 0.0, %v10119
  %v10121 = vpop.f32.mrf.mxu0
  %10122 = vmatprep.mubr.bf16.mxu0 0
  %10123 = vmatmul.mubr.bf16.gmra.mxu0 %v9304
  %v10124 = vpop.f32.mrf.mxu0
  %v10125 = vadd.f32 0.0, %v10124
  %v10126 = vpop.f32.mrf.mxu0
  %v10127 = vpop.f32.mrf.mxu0
  %v10128 = vadd.f32 0.0, %v10127
  %v10129 = vpop.f32.mrf.mxu0
  %10130 = vmatprep.mubr.bf16.mxu0 0
  %10131 = vmatmul.mubr.bf16.gmra.mxu0 %v9307
  %v10132 = vpop.f32.mrf.mxu0
  %v10133 = vadd.f32 0.0, %v10132
  %v10134 = vpop.f32.mrf.mxu0
  %v10135 = vpop.f32.mrf.mxu0
  %v10136 = vadd.f32 0.0, %v10135
  %v10137 = vpop.f32.mrf.mxu0
  %10138 = vmatprep.mubr.bf16.mxu0 0
  %10139 = vmatmul.mubr.bf16.gmra.mxu0 %v9310
  %v10140 = vpop.f32.mrf.mxu0
  %v10141 = vadd.f32 0.0, %v10140
  %v10142 = vpop.f32.mrf.mxu0
  %v10143 = vpop.f32.mrf.mxu0
  %v10144 = vadd.f32 0.0, %v10143
  %v10145 = vpop.f32.mrf.mxu0
  %10146 = vmatprep.mubr.bf16.mxu0 0
  %10147 = vmatmul.mubr.bf16.gmra.mxu0 %v9313
  %v10148 = vpop.f32.mrf.mxu0
  %v10149 = vadd.f32 0.0, %v10148
  %v10150 = vpop.f32.mrf.mxu0
  %v10151 = vpop.f32.mrf.mxu0
  %v10152 = vadd.f32 0.0, %v10151
  %v10153 = vpop.f32.mrf.mxu0
  %10154 = vmatprep.mubr.bf16.mxu0 0
  %10155 = vmatmul.mubr.bf16.gmra.mxu0 %v9316
  %v10156 = vpop.f32.mrf.mxu0
  %v10157 = vadd.f32 0.0, %v10156
  %v10158 = vpop.f32.mrf.mxu0
  %v10159 = vpop.f32.mrf.mxu0
  %v10160 = vadd.f32 0.0, %v10159
  %v10161 = vpop.f32.mrf.mxu0
  %10162 = vmatprep.mubr.bf16.mxu0 0
  %10163 = vmatmul.mubr.bf16.gmra.mxu0 %v9319
  %v10164 = vpop.f32.mrf.mxu0
  %v10165 = vadd.f32 0.0, %v10164
  %v10166 = vpop.f32.mrf.mxu0
  %v10167 = vpop.f32.mrf.mxu0
  %v10168 = vadd.f32 0.0, %v10167
  %v10169 = vpop.f32.mrf.mxu0
  %10170 = vmatprep.mubr.bf16.mxu0 0
  %10171 = vmatmul.mubr.bf16.gmra.mxu0 %v9322
  %v10172 = vpop.f32.mrf.mxu0
  %v10173 = vadd.f32 0.0, %v10172
  %v10174 = vpop.f32.mrf.mxu0
  %v10175 = vpop.f32.mrf.mxu0
  %v10176 = vadd.f32 0.0, %v10175
  %v10177 = vpop.f32.mrf.mxu0
  %10178 = vmatprep.mubr.bf16.mxu0 0
  %10179 = vmatmul.mubr.bf16.gmra.mxu0 %v9325
  %v10180 = vpop.f32.mrf.mxu0
  %v10181 = vadd.f32 0.0, %v10180
  %v10182 = vpop.f32.mrf.mxu0
  %v10183 = vpop.f32.mrf.mxu0
  %v10184 = vadd.f32 0.0, %v10183
  %v10185 = vpop.f32.mrf.mxu0
  %10186 = vmatprep.mubr.bf16.mxu0 0
  %10187 = vmatmul.mubr.bf16.gmra.mxu0 %v9328
  %v10188 = vpop.f32.mrf.mxu0
  %v10189 = vadd.f32 0.0, %v10188
  %v10190 = vpop.f32.mrf.mxu0
  %v10191 = vpop.f32.mrf.mxu0
  %v10192 = vadd.f32 0.0, %v10191
  %v10193 = vpop.f32.mrf.mxu0
  %10194 = vmatprep.mubr.bf16.mxu0 0
  %10195 = vmatmul.mubr.bf16.gmra.mxu0 %v6513
  %v10196 = vpop.f32.mrf.mxu0
  %v10197 = vadd.f32 0.0, %v10196
  %v10198 = vpop.f32.mrf.mxu0
  %v10199 = vpop.f32.mrf.mxu0
  %v10200 = vadd.f32 0.0, %v10199
  %v10201 = vpop.f32.mrf.mxu0
  %10202 = vdwg.mxu0
  %v10203 = vadd.f32 %v9654, %v9949
  %v10204 = vadd.f32 %v9657, %v9952
  %v10205 = vadd.f32 %v9662, %v9957
  %v10206 = vadd.f32 %v9665, %v9960
  %v10207 = vadd.f32 %v9670, %v9965
  %v10208 = vadd.f32 %v9673, %v9968
  %v10209 = vadd.f32 %v9678, %v9973
  %v10210 = vadd.f32 %v9681, %v9976
  %v10211 = vadd.f32 %v9686, %v9981
  %v10212 = vadd.f32 %v9689, %v9984
  %v10213 = vadd.f32 %v9694, %v9989
  %v10214 = vadd.f32 %v9697, %v9992
  %v10215 = vadd.f32 %v9702, %v9997
  %v10216 = vadd.f32 %v9705, %v10000
  %v10217 = vadd.f32 %v9710, %v10005
  %v10218 = vadd.f32 %v9713, %v10008
  %v10219 = vadd.f32 %v9718, %v10013
  %v10220 = vadd.f32 %v9721, %v10016
  %v10221 = vadd.f32 %v9726, %v10021
  %v10222 = vadd.f32 %v9729, %v10024
  %v10223 = vadd.f32 %v9734, %v10029
  %v10224 = vadd.f32 %v9737, %v10032
  %v10225 = vadd.f32 %v9742, %v10037
  %v10226 = vadd.f32 %v9745, %v10040
  %v10227 = vadd.f32 %v9750, %v10045
  %v10228 = vadd.f32 %v9753, %v10048
  %v10229 = vadd.f32 %v9758, %v10053
  %v10230 = vadd.f32 %v9761, %v10056
  %v10231 = vadd.f32 %v9766, %v10061
  %v10232 = vadd.f32 %v9769, %v10064
  %v10233 = vadd.f32 %v9774, %v10069
  %v10234 = vadd.f32 %v9777, %v10072
  %v10235 = vadd.f32 %v9782, %v10077
  %v10236 = vadd.f32 %v9785, %v10080
  %v10237 = vadd.f32 %v9790, %v10085
  %v10238 = vadd.f32 %v9793, %v10088
  %v10239 = vadd.f32 %v9798, %v10093
  %v10240 = vadd.f32 %v9801, %v10096
  %v10241 = vadd.f32 %v9806, %v10101
  %v10242 = vadd.f32 %v9809, %v10104
  %v10243 = vadd.f32 %v9814, %v10109
  %v10244 = vadd.f32 %v9817, %v10112
  %v10245 = vadd.f32 %v9822, %v10117
  %v10246 = vadd.f32 %v9825, %v10120
  %v10247 = vadd.f32 %v9830, %v10125
  %v10248 = vadd.f32 %v9833, %v10128
  %v10249 = vadd.f32 %v9838, %v10133
  %v10250 = vadd.f32 %v9841, %v10136
  %v10251 = vadd.f32 %v9846, %v10141
  %v10252 = vadd.f32 %v9849, %v10144
  %v10253 = vadd.f32 %v9854, %v10149
  %v10254 = vadd.f32 %v9857, %v10152
  %v10255 = vadd.f32 %v9862, %v10157
  %v10256 = vadd.f32 %v9865, %v10160
  %v10257 = vadd.f32 %v9870, %v10165
  %v10258 = vadd.f32 %v9873, %v10168
  %v10259 = vadd.f32 %v9878, %v10173
  %v10260 = vadd.f32 %v9881, %v10176
  %v10261 = vadd.f32 %v9886, %v10181
  %v10262 = vadd.f32 %v9889, %v10184
  %v10263 = vadd.f32 %v9894, %v10189
  %v10264 = vadd.f32 %v9897, %v10192
  %v10265 = vadd.f32 %v9902, %v10197
  %v10266 = vadd.f32 %v9905, %v10200
  %v10268 = vlaneseq
  %v10269 = vshrl.u32 %v10268, 7
  %v10270 = vsub.s32 0, %v10269
  %v10271 = vrot.slane %v7973, %v10270
  %v10273 = vadd.f32 %v10203, %v10271
  %v10274 = vadd.f32 %v10204, %v10271
  %v10275 = vadd.f32 %v10205, %v10271
  %v10276 = vadd.f32 %v10206, %v10271
  %v10277 = vadd.f32 %v10207, %v10271
  %v10278 = vadd.f32 %v10208, %v10271
  %v10279 = vadd.f32 %v10209, %v10271
  %v10280 = vadd.f32 %v10210, %v10271
  %v10281 = vadd.f32 %v10211, %v10271
  %v10282 = vadd.f32 %v10212, %v10271
  %v10283 = vadd.f32 %v10213, %v10271
  %v10284 = vadd.f32 %v10214, %v10271
  %v10285 = vadd.f32 %v10215, %v10271
  %v10286 = vadd.f32 %v10216, %v10271
  %v10287 = vadd.f32 %v10217, %v10271
  %v10288 = vadd.f32 %v10218, %v10271
  %v10289 = vadd.f32 %v10219, %v10271
  %v10290 = vadd.f32 %v10220, %v10271
  %v10291 = vadd.f32 %v10221, %v10271
  %v10292 = vadd.f32 %v10222, %v10271
  %v10293 = vadd.f32 %v10223, %v10271
  %v10294 = vadd.f32 %v10224, %v10271
  %v10295 = vadd.f32 %v10225, %v10271
  %v10296 = vadd.f32 %v10226, %v10271
  %v10297 = vadd.f32 %v10227, %v10271
  %v10298 = vadd.f32 %v10228, %v10271
  %v10299 = vadd.f32 %v10229, %v10271
  %v10300 = vadd.f32 %v10230, %v10271
  %v10301 = vadd.f32 %v10231, %v10271
  %v10302 = vadd.f32 %v10232, %v10271
  %v10303 = vadd.f32 %v10233, %v10271
  %v10304 = vadd.f32 %v10234, %v10271
  %v10305 = vadd.f32 %v10235, %v10271
  %v10306 = vadd.f32 %v10236, %v10271
  %v10307 = vadd.f32 %v10237, %v10271
  %v10308 = vadd.f32 %v10238, %v10271
  %v10309 = vadd.f32 %v10239, %v10271
  %v10310 = vadd.f32 %v10240, %v10271
  %v10311 = vadd.f32 %v10241, %v10271
  %v10312 = vadd.f32 %v10242, %v10271
  %v10313 = vadd.f32 %v10243, %v10271
  %v10314 = vadd.f32 %v10244, %v10271
  %v10315 = vadd.f32 %v10245, %v10271
  %v10316 = vadd.f32 %v10246, %v10271
  %v10317 = vadd.f32 %v10247, %v10271
  %v10318 = vadd.f32 %v10248, %v10271
  %v10319 = vadd.f32 %v10249, %v10271
  %v10320 = vadd.f32 %v10250, %v10271
  %v10321 = vadd.f32 %v10251, %v10271
  %v10322 = vadd.f32 %v10252, %v10271
  %v10323 = vadd.f32 %v10253, %v10271
  %v10324 = vadd.f32 %v10254, %v10271
  %v10325 = vadd.f32 %v10255, %v10271
  %v10326 = vadd.f32 %v10256, %v10271
  %v10327 = vadd.f32 %v10257, %v10271
  %v10328 = vadd.f32 %v10258, %v10271
  %v10329 = vadd.f32 %v10259, %v10271
  %v10330 = vadd.f32 %v10260, %v10271
  %v10331 = vadd.f32 %v10261, %v10271
  %v10332 = vadd.f32 %v10262, %v10271
  %v10333 = vadd.f32 %v10263, %v10271
  %v10334 = vadd.f32 %v10264, %v10271
  %v10335 = vadd.f32 %v10265, %v10271
  %v10336 = vadd.f32 %v10266, %v10271
  %vm10337 = vcmp.ge.f32.partialorder %v10273, 0.0
  %vm10338 = vcmp.ge.f32.partialorder %v10274, 0.0
  %vm10339 = vcmp.ge.f32.partialorder %v10275, 0.0
  %vm10340 = vcmp.ge.f32.partialorder %v10276, 0.0
  %vm10341 = vcmp.ge.f32.partialorder %v10277, 0.0
  %vm10342 = vcmp.ge.f32.partialorder %v10278, 0.0
  %vm10343 = vcmp.ge.f32.partialorder %v10279, 0.0
  %vm10344 = vcmp.ge.f32.partialorder %v10280, 0.0
  %vm10345 = vcmp.ge.f32.partialorder %v10281, 0.0
  %vm10346 = vcmp.ge.f32.partialorder %v10282, 0.0
  %vm10347 = vcmp.ge.f32.partialorder %v10283, 0.0
  %vm10348 = vcmp.ge.f32.partialorder %v10284, 0.0
  %vm10349 = vcmp.ge.f32.partialorder %v10285, 0.0
  %vm10350 = vcmp.ge.f32.partialorder %v10286, 0.0
  %vm10351 = vcmp.ge.f32.partialorder %v10287, 0.0
  %vm10352 = vcmp.ge.f32.partialorder %v10288, 0.0
  %vm10353 = vcmp.ge.f32.partialorder %v10289, 0.0
  %vm10354 = vcmp.ge.f32.partialorder %v10290, 0.0
  %vm10355 = vcmp.ge.f32.partialorder %v10291, 0.0
  %vm10356 = vcmp.ge.f32.partialorder %v10292, 0.0
  %vm10357 = vcmp.ge.f32.partialorder %v10293, 0.0
  %vm10358 = vcmp.ge.f32.partialorder %v10294, 0.0
  %vm10359 = vcmp.ge.f32.partialorder %v10295, 0.0
  %vm10360 = vcmp.ge.f32.partialorder %v10296, 0.0
  %vm10361 = vcmp.ge.f32.partialorder %v10297, 0.0
  %vm10362 = vcmp.ge.f32.partialorder %v10298, 0.0
  %vm10363 = vcmp.ge.f32.partialorder %v10299, 0.0
  %vm10364 = vcmp.ge.f32.partialorder %v10300, 0.0
  %vm10365 = vcmp.ge.f32.partialorder %v10301, 0.0
  %vm10366 = vcmp.ge.f32.partialorder %v10302, 0.0
  %vm10367 = vcmp.ge.f32.partialorder %v10303, 0.0
  %vm10368 = vcmp.ge.f32.partialorder %v10304, 0.0
  %vm10369 = vcmp.ge.f32.partialorder %v10305, 0.0
  %vm10370 = vcmp.ge.f32.partialorder %v10306, 0.0
  %vm10371 = vcmp.ge.f32.partialorder %v10307, 0.0
  %vm10372 = vcmp.ge.f32.partialorder %v10308, 0.0
  %vm10373 = vcmp.ge.f32.partialorder %v10309, 0.0
  %vm10374 = vcmp.ge.f32.partialorder %v10310, 0.0
  %vm10375 = vcmp.ge.f32.partialorder %v10311, 0.0
  %vm10376 = vcmp.ge.f32.partialorder %v10312, 0.0
  %vm10377 = vcmp.ge.f32.partialorder %v10313, 0.0
  %vm10378 = vcmp.ge.f32.partialorder %v10314, 0.0
  %vm10379 = vcmp.ge.f32.partialorder %v10315, 0.0
  %vm10380 = vcmp.ge.f32.partialorder %v10316, 0.0
  %vm10381 = vcmp.ge.f32.partialorder %v10317, 0.0
  %vm10382 = vcmp.ge.f32.partialorder %v10318, 0.0
  %vm10383 = vcmp.ge.f32.partialorder %v10319, 0.0
  %vm10384 = vcmp.ge.f32.partialorder %v10320, 0.0
  %vm10385 = vcmp.ge.f32.partialorder %v10321, 0.0
  %vm10386 = vcmp.ge.f32.partialorder %v10322, 0.0
  %vm10387 = vcmp.ge.f32.partialorder %v10323, 0.0
  %vm10388 = vcmp.ge.f32.partialorder %v10324, 0.0
  %vm10389 = vcmp.ge.f32.partialorder %v10325, 0.0
  %vm10390 = vcmp.ge.f32.partialorder %v10326, 0.0
  %vm10391 = vcmp.ge.f32.partialorder %v10327, 0.0
  %vm10392 = vcmp.ge.f32.partialorder %v10328, 0.0
  %vm10393 = vcmp.ge.f32.partialorder %v10329, 0.0
  %vm10394 = vcmp.ge.f32.partialorder %v10330, 0.0
  %vm10395 = vcmp.ge.f32.partialorder %v10331, 0.0
  %vm10396 = vcmp.ge.f32.partialorder %v10332, 0.0
  %vm10397 = vcmp.ge.f32.partialorder %v10333, 0.0
  %vm10398 = vcmp.ge.f32.partialorder %v10334, 0.0
  %vm10399 = vcmp.ge.f32.partialorder %v10335, 0.0
  %vm10400 = vcmp.ge.f32.partialorder %v10336, 0.0
  %v10401 = vmul.f32 %v10273, 0.2
  %v10402 = vmul.f32 %v10274, 0.2
  %v10403 = vmul.f32 %v10275, 0.2
  %v10404 = vmul.f32 %v10276, 0.2
  %v10405 = vmul.f32 %v10277, 0.2
  %v10406 = vmul.f32 %v10278, 0.2
  %v10407 = vmul.f32 %v10279, 0.2
  %v10408 = vmul.f32 %v10280, 0.2
  %v10409 = vmul.f32 %v10281, 0.2
  %v10410 = vmul.f32 %v10282, 0.2
  %v10411 = vmul.f32 %v10283, 0.2
  %v10412 = vmul.f32 %v10284, 0.2
  %v10413 = vmul.f32 %v10285, 0.2
  %v10414 = vmul.f32 %v10286, 0.2
  %v10415 = vmul.f32 %v10287, 0.2
  %v10416 = vmul.f32 %v10288, 0.2
  %v10417 = vmul.f32 %v10289, 0.2
  %v10418 = vmul.f32 %v10290, 0.2
  %v10419 = vmul.f32 %v10291, 0.2
  %v10420 = vmul.f32 %v10292, 0.2
  %v10421 = vmul.f32 %v10293, 0.2
  %v10422 = vmul.f32 %v10294, 0.2
  %v10423 = vmul.f32 %v10295, 0.2
  %v10424 = vmul.f32 %v10296, 0.2
  %v10425 = vmul.f32 %v10297, 0.2
  %v10426 = vmul.f32 %v10298, 0.2
  %v10427 = vmul.f32 %v10299, 0.2
  %v10428 = vmul.f32 %v10300, 0.2
  %v10429 = vmul.f32 %v10301, 0.2
  %v10430 = vmul.f32 %v10302, 0.2
  %v10431 = vmul.f32 %v10303, 0.2
  %v10432 = vmul.f32 %v10304, 0.2
  %v10433 = vmul.f32 %v10305, 0.2
  %v10434 = vmul.f32 %v10306, 0.2
  %v10435 = vmul.f32 %v10307, 0.2
  %v10436 = vmul.f32 %v10308, 0.2
  %v10437 = vmul.f32 %v10309, 0.2
  %v10438 = vmul.f32 %v10310, 0.2
  %v10439 = vmul.f32 %v10311, 0.2
  %v10440 = vmul.f32 %v10312, 0.2
  %v10441 = vmul.f32 %v10313, 0.2
  %v10442 = vmul.f32 %v10314, 0.2
  %v10443 = vmul.f32 %v10315, 0.2
  %v10444 = vmul.f32 %v10316, 0.2
  %v10445 = vmul.f32 %v10317, 0.2
  %v10446 = vmul.f32 %v10318, 0.2
  %v10447 = vmul.f32 %v10319, 0.2
  %v10448 = vmul.f32 %v10320, 0.2
  %v10449 = vmul.f32 %v10321, 0.2
  %v10450 = vmul.f32 %v10322, 0.2
  %v10451 = vmul.f32 %v10323, 0.2
  %v10452 = vmul.f32 %v10324, 0.2
  %v10453 = vmul.f32 %v10325, 0.2
  %v10454 = vmul.f32 %v10326, 0.2
  %v10455 = vmul.f32 %v10327, 0.2
  %v10456 = vmul.f32 %v10328, 0.2
  %v10457 = vmul.f32 %v10329, 0.2
  %v10458 = vmul.f32 %v10330, 0.2
  %v10459 = vmul.f32 %v10331, 0.2
  %v10460 = vmul.f32 %v10332, 0.2
  %v10461 = vmul.f32 %v10333, 0.2
  %v10462 = vmul.f32 %v10334, 0.2
  %v10463 = vmul.f32 %v10335, 0.2
  %v10464 = vmul.f32 %v10336, 0.2
  %v10465 = vsel %vm10337, %v10273, %v10401
  %v10466 = vsel %vm10338, %v10274, %v10402
  %v10467 = vsel %vm10339, %v10275, %v10403
  %v10468 = vsel %vm10340, %v10276, %v10404
  %v10469 = vsel %vm10341, %v10277, %v10405
  %v10470 = vsel %vm10342, %v10278, %v10406
  %v10471 = vsel %vm10343, %v10279, %v10407
  %v10472 = vsel %vm10344, %v10280, %v10408
  %v10473 = vsel %vm10345, %v10281, %v10409
  %v10474 = vsel %vm10346, %v10282, %v10410
  %v10475 = vsel %vm10347, %v10283, %v10411
  %v10476 = vsel %vm10348, %v10284, %v10412
  %v10477 = vsel %vm10349, %v10285, %v10413
  %v10478 = vsel %vm10350, %v10286, %v10414
  %v10479 = vsel %vm10351, %v10287, %v10415
  %v10480 = vsel %vm10352, %v10288, %v10416
  %v10481 = vsel %vm10353, %v10289, %v10417
  %v10482 = vsel %vm10354, %v10290, %v10418
  %v10483 = vsel %vm10355, %v10291, %v10419
  %v10484 = vsel %vm10356, %v10292, %v10420
  %v10485 = vsel %vm10357, %v10293, %v10421
  %v10486 = vsel %vm10358, %v10294, %v10422
  %v10487 = vsel %vm10359, %v10295, %v10423
  %v10488 = vsel %vm10360, %v10296, %v10424
  %v10489 = vsel %vm10361, %v10297, %v10425
  %v10490 = vsel %vm10362, %v10298, %v10426
  %v10491 = vsel %vm10363, %v10299, %v10427
  %v10492 = vsel %vm10364, %v10300, %v10428
  %v10493 = vsel %vm10365, %v10301, %v10429
  %v10494 = vsel %vm10366, %v10302, %v10430
  %v10495 = vsel %vm10367, %v10303, %v10431
  %v10496 = vsel %vm10368, %v10304, %v10432
  %v10497 = vsel %vm10369, %v10305, %v10433
  %v10498 = vsel %vm10370, %v10306, %v10434
  %v10499 = vsel %vm10371, %v10307, %v10435
  %v10500 = vsel %vm10372, %v10308, %v10436
  %v10501 = vsel %vm10373, %v10309, %v10437
  %v10502 = vsel %vm10374, %v10310, %v10438
  %v10503 = vsel %vm10375, %v10311, %v10439
  %v10504 = vsel %vm10376, %v10312, %v10440
  %v10505 = vsel %vm10377, %v10313, %v10441
  %v10506 = vsel %vm10378, %v10314, %v10442
  %v10507 = vsel %vm10379, %v10315, %v10443
  %v10508 = vsel %vm10380, %v10316, %v10444
  %v10509 = vsel %vm10381, %v10317, %v10445
  %v10510 = vsel %vm10382, %v10318, %v10446
  %v10511 = vsel %vm10383, %v10319, %v10447
  %v10512 = vsel %vm10384, %v10320, %v10448
  %v10513 = vsel %vm10385, %v10321, %v10449
  %v10514 = vsel %vm10386, %v10322, %v10450
  %v10515 = vsel %vm10387, %v10323, %v10451
  %v10516 = vsel %vm10388, %v10324, %v10452
  %v10517 = vsel %vm10389, %v10325, %v10453
  %v10518 = vsel %vm10390, %v10326, %v10454
  %v10519 = vsel %vm10391, %v10327, %v10455
  %v10520 = vsel %vm10392, %v10328, %v10456
  %v10521 = vsel %vm10393, %v10329, %v10457
  %v10522 = vsel %vm10394, %v10330, %v10458
  %v10523 = vsel %vm10395, %v10331, %v10459
  %v10524 = vsel %vm10396, %v10332, %v10460
  %v10525 = vsel %vm10397, %v10333, %v10461
  %v10526 = vsel %vm10398, %v10334, %v10462
  %v10527 = vsel %vm10399, %v10335, %v10463
  %v10528 = vsel %vm10400, %v10336, %v10464
  %v10529 = vmul.f32 %v10465, %v10465
  %v10530 = vmul.f32 %v10466, %v10466
  %v10531 = vmul.f32 %v10467, %v10467
  %v10532 = vmul.f32 %v10468, %v10468
  %v10533 = vmul.f32 %v10469, %v10469
  %v10534 = vmul.f32 %v10470, %v10470
  %v10535 = vmul.f32 %v10471, %v10471
  %v10536 = vmul.f32 %v10472, %v10472
  %v10537 = vmul.f32 %v10473, %v10473
  %v10538 = vmul.f32 %v10474, %v10474
  %v10539 = vmul.f32 %v10475, %v10475
  %v10540 = vmul.f32 %v10476, %v10476
  %v10541 = vmul.f32 %v10477, %v10477
  %v10542 = vmul.f32 %v10478, %v10478
  %v10543 = vmul.f32 %v10479, %v10479
  %v10544 = vmul.f32 %v10480, %v10480
  %v10545 = vmul.f32 %v10481, %v10481
  %v10546 = vmul.f32 %v10482, %v10482
  %v10547 = vmul.f32 %v10483, %v10483
  %v10548 = vmul.f32 %v10484, %v10484
  %v10549 = vmul.f32 %v10485, %v10485
  %v10550 = vmul.f32 %v10486, %v10486
  %v10551 = vmul.f32 %v10487, %v10487
  %v10552 = vmul.f32 %v10488, %v10488
  %v10553 = vmul.f32 %v10489, %v10489
  %v10554 = vmul.f32 %v10490, %v10490
  %v10555 = vmul.f32 %v10491, %v10491
  %v10556 = vmul.f32 %v10492, %v10492
  %v10557 = vmul.f32 %v10493, %v10493
  %v10558 = vmul.f32 %v10494, %v10494
  %v10559 = vmul.f32 %v10495, %v10495
  %v10560 = vmul.f32 %v10496, %v10496
  %v10561 = vmul.f32 %v10497, %v10497
  %v10562 = vmul.f32 %v10498, %v10498
  %v10563 = vmul.f32 %v10499, %v10499
  %v10564 = vmul.f32 %v10500, %v10500
  %v10565 = vmul.f32 %v10501, %v10501
  %v10566 = vmul.f32 %v10502, %v10502
  %v10567 = vmul.f32 %v10503, %v10503
  %v10568 = vmul.f32 %v10504, %v10504
  %v10569 = vmul.f32 %v10505, %v10505
  %v10570 = vmul.f32 %v10506, %v10506
  %v10571 = vmul.f32 %v10507, %v10507
  %v10572 = vmul.f32 %v10508, %v10508
  %v10573 = vmul.f32 %v10509, %v10509
  %v10574 = vmul.f32 %v10510, %v10510
  %v10575 = vmul.f32 %v10511, %v10511
  %v10576 = vmul.f32 %v10512, %v10512
  %v10577 = vmul.f32 %v10513, %v10513
  %v10578 = vmul.f32 %v10514, %v10514
  %v10579 = vmul.f32 %v10515, %v10515
  %v10580 = vmul.f32 %v10516, %v10516
  %v10581 = vmul.f32 %v10517, %v10517
  %v10582 = vmul.f32 %v10518, %v10518
  %v10583 = vmul.f32 %v10519, %v10519
  %v10584 = vmul.f32 %v10520, %v10520
  %v10585 = vmul.f32 %v10521, %v10521
  %v10586 = vmul.f32 %v10522, %v10522
  %v10587 = vmul.f32 %v10523, %v10523
  %v10588 = vmul.f32 %v10524, %v10524
  %v10589 = vmul.f32 %v10525, %v10525
  %v10590 = vmul.f32 %v10526, %v10526
  %v10591 = vmul.f32 %v10527, %v10527
  %v10592 = vmul.f32 %v10528, %v10528
  %v10593 = vsel %vm115, %v10529, 0.0
  %10594 = vadd.xlane.f32.xlu0 %v10593
  %v10595 = vpop.xlane.xlu0 %10594
  %v10596 = vsel %vm115, %v10530, 0.0
  %10597 = vadd.xlane.f32.xlu0 %v10596
  %v10598 = vpop.xlane.xlu0 %10597
  %v10599 = vsel %vm115, %v10531, 0.0
  %10600 = vadd.xlane.f32.xlu0 %v10599
  %v10601 = vpop.xlane.xlu0 %10600
  %v10602 = vsel %vm115, %v10532, 0.0
  %10603 = vadd.xlane.f32.xlu0 %v10602
  %v10604 = vpop.xlane.xlu0 %10603
  %v10605 = vsel %vm115, %v10533, 0.0
  %10606 = vadd.xlane.f32.xlu0 %v10605
  %v10607 = vpop.xlane.xlu0 %10606
  %v10608 = vsel %vm115, %v10534, 0.0
  %10609 = vadd.xlane.f32.xlu0 %v10608
  %v10610 = vpop.xlane.xlu0 %10609
  %v10611 = vsel %vm115, %v10535, 0.0
  %10612 = vadd.xlane.f32.xlu0 %v10611
  %v10613 = vpop.xlane.xlu0 %10612
  %v10614 = vsel %vm115, %v10536, 0.0
  %10615 = vadd.xlane.f32.xlu0 %v10614
  %v10616 = vpop.xlane.xlu0 %10615
  %v10617 = vsel %vm115, %v10537, 0.0
  %10618 = vadd.xlane.f32.xlu0 %v10617
  %v10619 = vpop.xlane.xlu0 %10618
  %v10620 = vsel %vm115, %v10538, 0.0
  %10621 = vadd.xlane.f32.xlu0 %v10620
  %v10622 = vpop.xlane.xlu0 %10621
  %v10623 = vsel %vm115, %v10539, 0.0
  %10624 = vadd.xlane.f32.xlu0 %v10623
  %v10625 = vpop.xlane.xlu0 %10624
  %v10626 = vsel %vm115, %v10540, 0.0
  %10627 = vadd.xlane.f32.xlu0 %v10626
  %v10628 = vpop.xlane.xlu0 %10627
  %v10629 = vsel %vm115, %v10541, 0.0
  %10630 = vadd.xlane.f32.xlu0 %v10629
  %v10631 = vpop.xlane.xlu0 %10630
  %v10632 = vsel %vm115, %v10542, 0.0
  %10633 = vadd.xlane.f32.xlu0 %v10632
  %v10634 = vpop.xlane.xlu0 %10633
  %v10635 = vsel %vm115, %v10543, 0.0
  %10636 = vadd.xlane.f32.xlu0 %v10635
  %v10637 = vpop.xlane.xlu0 %10636
  %v10638 = vsel %vm115, %v10544, 0.0
  %10639 = vadd.xlane.f32.xlu0 %v10638
  %v10640 = vpop.xlane.xlu0 %10639
  %v10641 = vsel %vm115, %v10545, 0.0
  %10642 = vadd.xlane.f32.xlu0 %v10641
  %v10643 = vpop.xlane.xlu0 %10642
  %v10644 = vsel %vm115, %v10546, 0.0
  %10645 = vadd.xlane.f32.xlu0 %v10644
  %v10646 = vpop.xlane.xlu0 %10645
  %v10647 = vsel %vm115, %v10547, 0.0
  %10648 = vadd.xlane.f32.xlu0 %v10647
  %v10649 = vpop.xlane.xlu0 %10648
  %v10650 = vsel %vm115, %v10548, 0.0
  %10651 = vadd.xlane.f32.xlu0 %v10650
  %v10652 = vpop.xlane.xlu0 %10651
  %v10653 = vsel %vm115, %v10549, 0.0
  %10654 = vadd.xlane.f32.xlu0 %v10653
  %v10655 = vpop.xlane.xlu0 %10654
  %v10656 = vsel %vm115, %v10550, 0.0
  %10657 = vadd.xlane.f32.xlu0 %v10656
  %v10658 = vpop.xlane.xlu0 %10657
  %v10659 = vsel %vm115, %v10551, 0.0
  %10660 = vadd.xlane.f32.xlu0 %v10659
  %v10661 = vpop.xlane.xlu0 %10660
  %v10662 = vsel %vm115, %v10552, 0.0
  %10663 = vadd.xlane.f32.xlu0 %v10662
  %v10664 = vpop.xlane.xlu0 %10663
  %v10665 = vsel %vm115, %v10553, 0.0
  %10666 = vadd.xlane.f32.xlu0 %v10665
  %v10667 = vpop.xlane.xlu0 %10666
  %v10668 = vsel %vm115, %v10554, 0.0
  %10669 = vadd.xlane.f32.xlu0 %v10668
  %v10670 = vpop.xlane.xlu0 %10669
  %v10671 = vsel %vm115, %v10555, 0.0
  %10672 = vadd.xlane.f32.xlu0 %v10671
  %v10673 = vpop.xlane.xlu0 %10672
  %v10674 = vsel %vm115, %v10556, 0.0
  %10675 = vadd.xlane.f32.xlu0 %v10674
  %v10676 = vpop.xlane.xlu0 %10675
  %v10677 = vsel %vm115, %v10557, 0.0
  %10678 = vadd.xlane.f32.xlu0 %v10677
  %v10679 = vpop.xlane.xlu0 %10678
  %v10680 = vsel %vm115, %v10558, 0.0
  %10681 = vadd.xlane.f32.xlu0 %v10680
  %v10682 = vpop.xlane.xlu0 %10681
  %v10683 = vsel %vm115, %v10559, 0.0
  %10684 = vadd.xlane.f32.xlu0 %v10683
  %v10685 = vpop.xlane.xlu0 %10684
  %v10686 = vsel %vm115, %v10560, 0.0
  %10687 = vadd.xlane.f32.xlu0 %v10686
  %v10688 = vpop.xlane.xlu0 %10687
  %v10689 = vsel %vm115, %v10561, 0.0
  %10690 = vadd.xlane.f32.xlu0 %v10689
  %v10691 = vpop.xlane.xlu0 %10690
  %v10692 = vsel %vm115, %v10562, 0.0
  %10693 = vadd.xlane.f32.xlu0 %v10692
  %v10694 = vpop.xlane.xlu0 %10693
  %v10695 = vsel %vm115, %v10563, 0.0
  %10696 = vadd.xlane.f32.xlu0 %v10695
  %v10697 = vpop.xlane.xlu0 %10696
  %v10698 = vsel %vm115, %v10564, 0.0
  %10699 = vadd.xlane.f32.xlu0 %v10698
  %v10700 = vpop.xlane.xlu0 %10699
  %v10701 = vsel %vm115, %v10565, 0.0
  %10702 = vadd.xlane.f32.xlu0 %v10701
  %v10703 = vpop.xlane.xlu0 %10702
  %v10704 = vsel %vm115, %v10566, 0.0
  %10705 = vadd.xlane.f32.xlu0 %v10704
  %v10706 = vpop.xlane.xlu0 %10705
  %v10707 = vsel %vm115, %v10567, 0.0
  %10708 = vadd.xlane.f32.xlu0 %v10707
  %v10709 = vpop.xlane.xlu0 %10708
  %v10710 = vsel %vm115, %v10568, 0.0
  %10711 = vadd.xlane.f32.xlu0 %v10710
  %v10712 = vpop.xlane.xlu0 %10711
  %v10713 = vsel %vm115, %v10569, 0.0
  %10714 = vadd.xlane.f32.xlu0 %v10713
  %v10715 = vpop.xlane.xlu0 %10714
  %v10716 = vsel %vm115, %v10570, 0.0
  %10717 = vadd.xlane.f32.xlu0 %v10716
  %v10718 = vpop.xlane.xlu0 %10717
  %v10719 = vsel %vm115, %v10571, 0.0
  %10720 = vadd.xlane.f32.xlu0 %v10719
  %v10721 = vpop.xlane.xlu0 %10720
  %v10722 = vsel %vm115, %v10572, 0.0
  %10723 = vadd.xlane.f32.xlu0 %v10722
  %v10724 = vpop.xlane.xlu0 %10723
  %v10725 = vsel %vm115, %v10573, 0.0
  %10726 = vadd.xlane.f32.xlu0 %v10725
  %v10727 = vpop.xlane.xlu0 %10726
  %v10728 = vsel %vm115, %v10574, 0.0
  %10729 = vadd.xlane.f32.xlu0 %v10728
  %v10730 = vpop.xlane.xlu0 %10729
  %v10731 = vsel %vm115, %v10575, 0.0
  %10732 = vadd.xlane.f32.xlu0 %v10731
  %v10733 = vpop.xlane.xlu0 %10732
  %v10734 = vsel %vm115, %v10576, 0.0
  %10735 = vadd.xlane.f32.xlu0 %v10734
  %v10736 = vpop.xlane.xlu0 %10735
  %v10737 = vsel %vm115, %v10577, 0.0
  %10738 = vadd.xlane.f32.xlu0 %v10737
  %v10739 = vpop.xlane.xlu0 %10738
  %v10740 = vsel %vm115, %v10578, 0.0
  %10741 = vadd.xlane.f32.xlu0 %v10740
  %v10742 = vpop.xlane.xlu0 %10741
  %v10743 = vsel %vm115, %v10579, 0.0
  %10744 = vadd.xlane.f32.xlu0 %v10743
  %v10745 = vpop.xlane.xlu0 %10744
  %v10746 = vsel %vm115, %v10580, 0.0
  %10747 = vadd.xlane.f32.xlu0 %v10746
  %v10748 = vpop.xlane.xlu0 %10747
  %v10749 = vsel %vm115, %v10581, 0.0
  %10750 = vadd.xlane.f32.xlu0 %v10749
  %v10751 = vpop.xlane.xlu0 %10750
  %v10752 = vsel %vm115, %v10582, 0.0
  %10753 = vadd.xlane.f32.xlu0 %v10752
  %v10754 = vpop.xlane.xlu0 %10753
  %v10755 = vsel %vm115, %v10583, 0.0
  %10756 = vadd.xlane.f32.xlu0 %v10755
  %v10757 = vpop.xlane.xlu0 %10756
  %v10758 = vsel %vm115, %v10584, 0.0
  %10759 = vadd.xlane.f32.xlu0 %v10758
  %v10760 = vpop.xlane.xlu0 %10759
  %v10761 = vsel %vm115, %v10585, 0.0
  %10762 = vadd.xlane.f32.xlu0 %v10761
  %v10763 = vpop.xlane.xlu0 %10762
  %v10764 = vsel %vm115, %v10586, 0.0
  %10765 = vadd.xlane.f32.xlu0 %v10764
  %v10766 = vpop.xlane.xlu0 %10765
  %v10767 = vsel %vm115, %v10587, 0.0
  %10768 = vadd.xlane.f32.xlu0 %v10767
  %v10769 = vpop.xlane.xlu0 %10768
  %v10770 = vsel %vm115, %v10588, 0.0
  %10771 = vadd.xlane.f32.xlu0 %v10770
  %v10772 = vpop.xlane.xlu0 %10771
  %v10773 = vsel %vm115, %v10589, 0.0
  %10774 = vadd.xlane.f32.xlu0 %v10773
  %v10775 = vpop.xlane.xlu0 %10774
  %v10776 = vsel %vm115, %v10590, 0.0
  %10777 = vadd.xlane.f32.xlu0 %v10776
  %v10778 = vpop.xlane.xlu0 %10777
  %v10779 = vsel %vm115, %v10591, 0.0
  %10780 = vadd.xlane.f32.xlu0 %v10779
  %v10781 = vpop.xlane.xlu0 %10780
  %v10782 = vsel %vm115, %v10592, 0.0
  %10783 = vadd.xlane.f32.xlu0 %v10782
  %v10784 = vpop.xlane.xlu0 %10783
  %v10785 = vmul.f32 %v10595, %v477
  %v10786 = vmul.f32 %v10598, %v477
  %v10787 = vmul.f32 %v10601, %v477
  %v10788 = vmul.f32 %v10604, %v477
  %v10789 = vmul.f32 %v10607, %v477
  %v10790 = vmul.f32 %v10610, %v477
  %v10791 = vmul.f32 %v10613, %v477
  %v10792 = vmul.f32 %v10616, %v477
  %v10793 = vmul.f32 %v10619, %v477
  %v10794 = vmul.f32 %v10622, %v477
  %v10795 = vmul.f32 %v10625, %v477
  %v10796 = vmul.f32 %v10628, %v477
  %v10797 = vmul.f32 %v10631, %v477
  %v10798 = vmul.f32 %v10634, %v477
  %v10799 = vmul.f32 %v10637, %v477
  %v10800 = vmul.f32 %v10640, %v477
  %v10801 = vmul.f32 %v10643, %v477
  %v10802 = vmul.f32 %v10646, %v477
  %v10803 = vmul.f32 %v10649, %v477
  %v10804 = vmul.f32 %v10652, %v477
  %v10805 = vmul.f32 %v10655, %v477
  %v10806 = vmul.f32 %v10658, %v477
  %v10807 = vmul.f32 %v10661, %v477
  %v10808 = vmul.f32 %v10664, %v477
  %v10809 = vmul.f32 %v10667, %v477
  %v10810 = vmul.f32 %v10670, %v477
  %v10811 = vmul.f32 %v10673, %v477
  %v10812 = vmul.f32 %v10676, %v477
  %v10813 = vmul.f32 %v10679, %v477
  %v10814 = vmul.f32 %v10682, %v477
  %v10815 = vmul.f32 %v10685, %v477
  %v10816 = vmul.f32 %v10688, %v477
  %v10817 = vmul.f32 %v10691, %v477
  %v10818 = vmul.f32 %v10694, %v477
  %v10819 = vmul.f32 %v10697, %v477
  %v10820 = vmul.f32 %v10700, %v477
  %v10821 = vmul.f32 %v10703, %v477
  %v10822 = vmul.f32 %v10706, %v477
  %v10823 = vmul.f32 %v10709, %v477
  %v10824 = vmul.f32 %v10712, %v477
  %v10825 = vmul.f32 %v10715, %v477
  %v10826 = vmul.f32 %v10718, %v477
  %v10827 = vmul.f32 %v10721, %v477
  %v10828 = vmul.f32 %v10724, %v477
  %v10829 = vmul.f32 %v10727, %v477
  %v10830 = vmul.f32 %v10730, %v477
  %v10831 = vmul.f32 %v10733, %v477
  %v10832 = vmul.f32 %v10736, %v477
  %v10833 = vmul.f32 %v10739, %v477
  %v10834 = vmul.f32 %v10742, %v477
  %v10835 = vmul.f32 %v10745, %v477
  %v10836 = vmul.f32 %v10748, %v477
  %v10837 = vmul.f32 %v10751, %v477
  %v10838 = vmul.f32 %v10754, %v477
  %v10839 = vmul.f32 %v10757, %v477
  %v10840 = vmul.f32 %v10760, %v477
  %v10841 = vmul.f32 %v10763, %v477
  %v10842 = vmul.f32 %v10766, %v477
  %v10843 = vmul.f32 %v10769, %v477
  %v10844 = vmul.f32 %v10772, %v477
  %v10845 = vmul.f32 %v10775, %v477
  %v10846 = vmul.f32 %v10778, %v477
  %v10847 = vmul.f32 %v10781, %v477
  %v10848 = vmul.f32 %v10784, %v477
  %v10849 = vadd.f32 %v10785, 1e-08
  %v10850 = vadd.f32 %v10786, 1e-08
  %v10851 = vadd.f32 %v10787, 1e-08
  %v10852 = vadd.f32 %v10788, 1e-08
  %v10853 = vadd.f32 %v10789, 1e-08
  %v10854 = vadd.f32 %v10790, 1e-08
  %v10855 = vadd.f32 %v10791, 1e-08
  %v10856 = vadd.f32 %v10792, 1e-08
  %v10857 = vadd.f32 %v10793, 1e-08
  %v10858 = vadd.f32 %v10794, 1e-08
  %v10859 = vadd.f32 %v10795, 1e-08
  %v10860 = vadd.f32 %v10796, 1e-08
  %v10861 = vadd.f32 %v10797, 1e-08
  %v10862 = vadd.f32 %v10798, 1e-08
  %v10863 = vadd.f32 %v10799, 1e-08
  %v10864 = vadd.f32 %v10800, 1e-08
  %v10865 = vadd.f32 %v10801, 1e-08
  %v10866 = vadd.f32 %v10802, 1e-08
  %v10867 = vadd.f32 %v10803, 1e-08
  %v10868 = vadd.f32 %v10804, 1e-08
  %v10869 = vadd.f32 %v10805, 1e-08
  %v10870 = vadd.f32 %v10806, 1e-08
  %v10871 = vadd.f32 %v10807, 1e-08
  %v10872 = vadd.f32 %v10808, 1e-08
  %v10873 = vadd.f32 %v10809, 1e-08
  %v10874 = vadd.f32 %v10810, 1e-08
  %v10875 = vadd.f32 %v10811, 1e-08
  %v10876 = vadd.f32 %v10812, 1e-08
  %v10877 = vadd.f32 %v10813, 1e-08
  %v10878 = vadd.f32 %v10814, 1e-08
  %v10879 = vadd.f32 %v10815, 1e-08
  %v10880 = vadd.f32 %v10816, 1e-08
  %v10881 = vadd.f32 %v10817, 1e-08
  %v10882 = vadd.f32 %v10818, 1e-08
  %v10883 = vadd.f32 %v10819, 1e-08
  %v10884 = vadd.f32 %v10820, 1e-08
  %v10885 = vadd.f32 %v10821, 1e-08
  %v10886 = vadd.f32 %v10822, 1e-08
  %v10887 = vadd.f32 %v10823, 1e-08
  %v10888 = vadd.f32 %v10824, 1e-08
  %v10889 = vadd.f32 %v10825, 1e-08
  %v10890 = vadd.f32 %v10826, 1e-08
  %v10891 = vadd.f32 %v10827, 1e-08
  %v10892 = vadd.f32 %v10828, 1e-08
  %v10893 = vadd.f32 %v10829, 1e-08
  %v10894 = vadd.f32 %v10830, 1e-08
  %v10895 = vadd.f32 %v10831, 1e-08
  %v10896 = vadd.f32 %v10832, 1e-08
  %v10897 = vadd.f32 %v10833, 1e-08
  %v10898 = vadd.f32 %v10834, 1e-08
  %v10899 = vadd.f32 %v10835, 1e-08
  %v10900 = vadd.f32 %v10836, 1e-08
  %v10901 = vadd.f32 %v10837, 1e-08
  %v10902 = vadd.f32 %v10838, 1e-08
  %v10903 = vadd.f32 %v10839, 1e-08
  %v10904 = vadd.f32 %v10840, 1e-08
  %v10905 = vadd.f32 %v10841, 1e-08
  %v10906 = vadd.f32 %v10842, 1e-08
  %v10907 = vadd.f32 %v10843, 1e-08
  %v10908 = vadd.f32 %v10844, 1e-08
  %v10909 = vadd.f32 %v10845, 1e-08
  %v10910 = vadd.f32 %v10846, 1e-08
  %v10911 = vadd.f32 %v10847, 1e-08
  %v10912 = vadd.f32 %v10848, 1e-08
  %v10913 = vrsqrt.pop %v10849
  %v10914 = vrsqrt.pop %v10850
  %v10915 = vrsqrt.pop %v10851
  %v10916 = vrsqrt.pop %v10852
  %v10917 = vrsqrt.pop %v10853
  %v10918 = vrsqrt.pop %v10854
  %v10919 = vrsqrt.pop %v10855
  %v10920 = vrsqrt.pop %v10856
  %v10921 = vrsqrt.pop %v10857
  %v10922 = vrsqrt.pop %v10858
  %v10923 = vrsqrt.pop %v10859
  %v10924 = vrsqrt.pop %v10860
  %v10925 = vrsqrt.pop %v10861
  %v10926 = vrsqrt.pop %v10862
  %v10927 = vrsqrt.pop %v10863
  %v10928 = vrsqrt.pop %v10864
  %v10929 = vrsqrt.pop %v10865
  %v10930 = vrsqrt.pop %v10866
  %v10931 = vrsqrt.pop %v10867
  %v10932 = vrsqrt.pop %v10868
  %v10933 = vrsqrt.pop %v10869
  %v10934 = vrsqrt.pop %v10870
  %v10935 = vrsqrt.pop %v10871
  %v10936 = vrsqrt.pop %v10872
  %v10937 = vrsqrt.pop %v10873
  %v10938 = vrsqrt.pop %v10874
  %v10939 = vrsqrt.pop %v10875
  %v10940 = vrsqrt.pop %v10876
  %v10941 = vrsqrt.pop %v10877
  %v10942 = vrsqrt.pop %v10878
  %v10943 = vrsqrt.pop %v10879
  %v10944 = vrsqrt.pop %v10880
  %v10945 = vrsqrt.pop %v10881
  %v10946 = vrsqrt.pop %v10882
  %v10947 = vrsqrt.pop %v10883
  %v10948 = vrsqrt.pop %v10884
  %v10949 = vrsqrt.pop %v10885
  %v10950 = vrsqrt.pop %v10886
  %v10951 = vrsqrt.pop %v10887
  %v10952 = vrsqrt.pop %v10888
  %v10953 = vrsqrt.pop %v10889
  %v10954 = vrsqrt.pop %v10890
  %v10955 = vrsqrt.pop %v10891
  %v10956 = vrsqrt.pop %v10892
  %v10957 = vrsqrt.pop %v10893
  %v10958 = vrsqrt.pop %v10894
  %v10959 = vrsqrt.pop %v10895
  %v10960 = vrsqrt.pop %v10896
  %v10961 = vrsqrt.pop %v10897
  %v10962 = vrsqrt.pop %v10898
  %v10963 = vrsqrt.pop %v10899
  %v10964 = vrsqrt.pop %v10900
  %v10965 = vrsqrt.pop %v10901
  %v10966 = vrsqrt.pop %v10902
  %v10967 = vrsqrt.pop %v10903
  %v10968 = vrsqrt.pop %v10904
  %v10969 = vrsqrt.pop %v10905
  %v10970 = vrsqrt.pop %v10906
  %v10971 = vrsqrt.pop %v10907
  %v10972 = vrsqrt.pop %v10908
  %v10973 = vrsqrt.pop %v10909
  %v10974 = vrsqrt.pop %v10910
  %v10975 = vrsqrt.pop %v10911
  %v10976 = vrsqrt.pop %v10912
  %v10977 = vmul.f32 %v10465, %v10913
  %v10978 = vmul.f32 %v10466, %v10914
  %v10979 = vmul.f32 %v10467, %v10915
  %v10980 = vmul.f32 %v10468, %v10916
  %v10981 = vmul.f32 %v10469, %v10917
  %v10982 = vmul.f32 %v10470, %v10918
  %v10983 = vmul.f32 %v10471, %v10919
  %v10984 = vmul.f32 %v10472, %v10920
  %v10985 = vmul.f32 %v10473, %v10921
  %v10986 = vmul.f32 %v10474, %v10922
  %v10987 = vmul.f32 %v10475, %v10923
  %v10988 = vmul.f32 %v10476, %v10924
  %v10989 = vmul.f32 %v10477, %v10925
  %v10990 = vmul.f32 %v10478, %v10926
  %v10991 = vmul.f32 %v10479, %v10927
  %v10992 = vmul.f32 %v10480, %v10928
  %v10993 = vmul.f32 %v10481, %v10929
  %v10994 = vmul.f32 %v10482, %v10930
  %v10995 = vmul.f32 %v10483, %v10931
  %v10996 = vmul.f32 %v10484, %v10932
  %v10997 = vmul.f32 %v10485, %v10933
  %v10998 = vmul.f32 %v10486, %v10934
  %v10999 = vmul.f32 %v10487, %v10935
  %v11000 = vmul.f32 %v10488, %v10936
  %v11001 = vmul.f32 %v10489, %v10937
  %v11002 = vmul.f32 %v10490, %v10938
  %v11003 = vmul.f32 %v10491, %v10939
  %v11004 = vmul.f32 %v10492, %v10940
  %v11005 = vmul.f32 %v10493, %v10941
  %v11006 = vmul.f32 %v10494, %v10942
  %v11007 = vmul.f32 %v10495, %v10943
  %v11008 = vmul.f32 %v10496, %v10944
  %v11009 = vmul.f32 %v10497, %v10945
  %v11010 = vmul.f32 %v10498, %v10946
  %v11011 = vmul.f32 %v10499, %v10947
  %v11012 = vmul.f32 %v10500, %v10948
  %v11013 = vmul.f32 %v10501, %v10949
  %v11014 = vmul.f32 %v10502, %v10950
  %v11015 = vmul.f32 %v10503, %v10951
  %v11016 = vmul.f32 %v10504, %v10952
  %v11017 = vmul.f32 %v10505, %v10953
  %v11018 = vmul.f32 %v10506, %v10954
  %v11019 = vmul.f32 %v10507, %v10955
  %v11020 = vmul.f32 %v10508, %v10956
  %v11021 = vmul.f32 %v10509, %v10957
  %v11022 = vmul.f32 %v10510, %v10958
  %v11023 = vmul.f32 %v10511, %v10959
  %v11024 = vmul.f32 %v10512, %v10960
  %v11025 = vmul.f32 %v10513, %v10961
  %v11026 = vmul.f32 %v10514, %v10962
  %v11027 = vmul.f32 %v10515, %v10963
  %v11028 = vmul.f32 %v10516, %v10964
  %v11029 = vmul.f32 %v10517, %v10965
  %v11030 = vmul.f32 %v10518, %v10966
  %v11031 = vmul.f32 %v10519, %v10967
  %v11032 = vmul.f32 %v10520, %v10968
  %v11033 = vmul.f32 %v10521, %v10969
  %v11034 = vmul.f32 %v10522, %v10970
  %v11035 = vmul.f32 %v10523, %v10971
  %v11036 = vmul.f32 %v10524, %v10972
  %v11037 = vmul.f32 %v10525, %v10973
  %v11038 = vmul.f32 %v10526, %v10974
  %v11039 = vmul.f32 %v10527, %v10975
  %v11040 = vmul.f32 %v10528, %v10976
  %v11041 = vld [vmem:[%s16] sm:$0xff]
  %v11042 = vld [vmem:[%s16 + $0x8] sm:$0xff]
  %v11043 = vld [vmem:[%s16 + $0x10] sm:$0xff]
  %v11044 = vld [vmem:[%s16 + $0x18] sm:$0xff]
  %v11077 = vpack.c.bf16 %v5035, %v5018
  %v11078 = vpack.c.bf16 %v5069, %v5052
  %v11079 = vpack.c.bf16 %v5103, %v5086
  %v11080 = vpack.c.bf16 %v5137, %v5120
  %v11081 = vpack.c.bf16 %v5171, %v5154
  %v11082 = vpack.c.bf16 %v5205, %v5188
  %v11083 = vpack.c.bf16 %v5239, %v5222
  %v11084 = vpack.c.bf16 %v5273, %v5256
  %v11085 = vpack.c.bf16 %v5307, %v5290
  %v11086 = vpack.c.bf16 %v5341, %v5324
  %v11087 = vpack.c.bf16 %v5375, %v5358
  %v11088 = vpack.c.bf16 %v5409, %v5392
  %v11089 = vpack.c.bf16 %v5443, %v5426
  %v11090 = vpack.c.bf16 %v5477, %v5460
  %v11091 = vpack.c.bf16 %v5511, %v5494
  %v11092 = vpack.c.bf16 %v5545, %v5528
  %v11093 = vpack.c.bf16 %v11042, %v11041
  %v11094 = vpack.c.bf16 %v11044, %v11043
  %v11095 = vld [vmem:[%s17] sm:$0x1]
  %v11097 = vlaneseq
  %v11098 = vshrl.u32 %v11097, 7
  %v11099 = vsub.s32 0, %v11098
  %v11100 = vrot.slane %v11095, %v11099
  %v11103 = vsel %vm115, %v11077, 0
  %v11106 = vsel %vm115, %v11078, 0
  %v11109 = vsel %vm115, %v11079, 0
  %v11112 = vsel %vm115, %v11080, 0
  %v11115 = vsel %vm115, %v11081, 0
  %v11118 = vsel %vm115, %v11082, 0
  %v11121 = vsel %vm115, %v11083, 0
  %v11124 = vsel %vm115, %v11084, 0
  %v11127 = vsel %vm115, %v11085, 0
  %v11130 = vsel %vm115, %v11086, 0
  %v11133 = vsel %vm115, %v11087, 0
  %v11136 = vsel %vm115, %v11088, 0
  %v11139 = vsel %vm115, %v11089, 0
  %v11142 = vsel %vm115, %v11090, 0
  %v11145 = vsel %vm115, %v11091, 0
  %v11148 = vsel %vm115, %v11092, 0
  %11150 = vmatprep.subr.bf16.mxu0 0
  %11151 = vmatpush1.bf16.msra.mxu0 0
  %11152 = vmatprep.subr.bf16.mxu0 0
  %11153 = vmatpush1.bf16.msra.mxu0 0
  %11154 = vmatprep.subr.bf16.mxu0 0
  %11155 = vmatpush1.bf16.msra.mxu0 0
  %11156 = vmatprep.subr.bf16.mxu0 0
  %11157 = vmatpush1.bf16.msra.mxu0 0
  %11158 = vmatprep.subr.bf16.mxu0 0
  %11159 = vmatpush1.bf16.msra.mxu0 0
  %11160 = vmatprep.subr.bf16.mxu0 0
  %11161 = vmatpush1.bf16.msra.mxu0 0
  %11162 = vmatprep.subr.bf16.mxu0 0
  %11163 = vmatpush1.bf16.msra.mxu0 %v11094
  %11164 = vmatprep.subr.bf16.mxu0 0
  %11165 = vmatpush1.bf16.msra.mxu0 %v11093
  %11166 = vmatprep.subr.bf16.mxu0 0
  %11167 = vmatpush2.bf16.msra.mxu0 0
  %11168 = vmatprep.subr.bf16.mxu0 0
  %11169 = vmatpush2.bf16.msra.mxu0 0
  %11170 = vmatprep.subr.bf16.mxu0 0
  %11171 = vmatpush2.bf16.msra.mxu0 0
  %11172 = vmatprep.subr.bf16.mxu0 0
  %11173 = vmatpush2.bf16.msra.mxu0 0
  %11174 = vmatprep.subr.bf16.mxu0 0
  %11175 = vmatpush2.bf16.msra.mxu0 0
  %11176 = vmatprep.subr.bf16.mxu0 0
  %11177 = vmatpush2.bf16.msra.mxu0 0
  %11178 = vmatprep.subr.bf16.mxu0 0
  %11179 = vmatpush2.bf16.msra.mxu0 0
  %11180 = vmatprep.subr.bf16.mxu0 0
  %11181 = vmatpush2.bf16.msra.mxu0 0
  %11182 = vmatprep.mubr.bf16.mxu0 0
  %11183 = vmatmul.mubr.bf16.gmra.mxu0 %v11103
  %v11184 = vpop.f32.mrf.mxu0
  %v11185 = vadd.f32 %v11100, %v11184
  %v11186 = vpop.f32.mrf.mxu0
  %v11187 = vpop.f32.mrf.mxu0
  %v11188 = vadd.f32 %v11100, %v11187
  %v11189 = vpop.f32.mrf.mxu0
  %11190 = vmatprep.mubr.bf16.mxu0 0
  %11191 = vmatmul.mubr.bf16.gmra.mxu0 %v11103
  %v11192 = vpop.f32.mrf.mxu0
  %v11193 = vadd.f32 %v11100, %v11192
  %v11194 = vpop.f32.mrf.mxu0
  %v11195 = vpop.f32.mrf.mxu0
  %v11196 = vadd.f32 %v11100, %v11195
  %v11197 = vpop.f32.mrf.mxu0
  %11198 = vmatprep.mubr.bf16.mxu0 0
  %11199 = vmatmul.mubr.bf16.gmra.mxu0 %v11106
  %v11200 = vpop.f32.mrf.mxu0
  %v11201 = vadd.f32 %v11100, %v11200
  %v11202 = vpop.f32.mrf.mxu0
  %v11203 = vpop.f32.mrf.mxu0
  %v11204 = vadd.f32 %v11100, %v11203
  %v11205 = vpop.f32.mrf.mxu0
  %11206 = vmatprep.mubr.bf16.mxu0 0
  %11207 = vmatmul.mubr.bf16.gmra.mxu0 %v11106
  %v11208 = vpop.f32.mrf.mxu0
  %v11209 = vadd.f32 %v11100, %v11208
  %v11210 = vpop.f32.mrf.mxu0
  %v11211 = vpop.f32.mrf.mxu0
  %v11212 = vadd.f32 %v11100, %v11211
  %v11213 = vpop.f32.mrf.mxu0
  %11214 = vmatprep.mubr.bf16.mxu0 0
  %11215 = vmatmul.mubr.bf16.gmra.mxu0 %v11109
  %v11216 = vpop.f32.mrf.mxu0
  %v11217 = vadd.f32 %v11100, %v11216
  %v11218 = vpop.f32.mrf.mxu0
  %v11219 = vpop.f32.mrf.mxu0
  %v11220 = vadd.f32 %v11100, %v11219
  %v11221 = vpop.f32.mrf.mxu0
  %11222 = vmatprep.mubr.bf16.mxu0 0
  %11223 = vmatmul.mubr.bf16.gmra.mxu0 %v11109
  %v11224 = vpop.f32.mrf.mxu0
  %v11225 = vadd.f32 %v11100, %v11224
  %v11226 = vpop.f32.mrf.mxu0
  %v11227 = vpop.f32.mrf.mxu0
  %v11228 = vadd.f32 %v11100, %v11227
  %v11229 = vpop.f32.mrf.mxu0
  %11230 = vmatprep.mubr.bf16.mxu0 0
  %11231 = vmatmul.mubr.bf16.gmra.mxu0 %v11112
  %v11232 = vpop.f32.mrf.mxu0
  %v11233 = vadd.f32 %v11100, %v11232
  %v11234 = vpop.f32.mrf.mxu0
  %v11235 = vpop.f32.mrf.mxu0
  %v11236 = vadd.f32 %v11100, %v11235
  %v11237 = vpop.f32.mrf.mxu0
  %11238 = vmatprep.mubr.bf16.mxu0 0
  %11239 = vmatmul.mubr.bf16.gmra.mxu0 %v11112
  %v11240 = vpop.f32.mrf.mxu0
  %v11241 = vadd.f32 %v11100, %v11240
  %v11242 = vpop.f32.mrf.mxu0
  %v11243 = vpop.f32.mrf.mxu0
  %v11244 = vadd.f32 %v11100, %v11243
  %v11245 = vpop.f32.mrf.mxu0
  %11246 = vmatprep.mubr.bf16.mxu0 0
  %11247 = vmatmul.mubr.bf16.gmra.mxu0 %v11115
  %v11248 = vpop.f32.mrf.mxu0
  %v11249 = vadd.f32 %v11100, %v11248
  %v11250 = vpop.f32.mrf.mxu0
  %v11251 = vpop.f32.mrf.mxu0
  %v11252 = vadd.f32 %v11100, %v11251
  %v11253 = vpop.f32.mrf.mxu0
  %11254 = vmatprep.mubr.bf16.mxu0 0
  %11255 = vmatmul.mubr.bf16.gmra.mxu0 %v11115
  %v11256 = vpop.f32.mrf.mxu0
  %v11257 = vadd.f32 %v11100, %v11256
  %v11258 = vpop.f32.mrf.mxu0
  %v11259 = vpop.f32.mrf.mxu0
  %v11260 = vadd.f32 %v11100, %v11259
  %v11261 = vpop.f32.mrf.mxu0
  %11262 = vmatprep.mubr.bf16.mxu0 0
  %11263 = vmatmul.mubr.bf16.gmra.mxu0 %v11118
  %v11264 = vpop.f32.mrf.mxu0
  %v11265 = vadd.f32 %v11100, %v11264
  %v11266 = vpop.f32.mrf.mxu0
  %v11267 = vpop.f32.mrf.mxu0
  %v11268 = vadd.f32 %v11100, %v11267
  %v11269 = vpop.f32.mrf.mxu0
  %11270 = vmatprep.mubr.bf16.mxu0 0
  %11271 = vmatmul.mubr.bf16.gmra.mxu0 %v11118
  %v11272 = vpop.f32.mrf.mxu0
  %v11273 = vadd.f32 %v11100, %v11272
  %v11274 = vpop.f32.mrf.mxu0
  %v11275 = vpop.f32.mrf.mxu0
  %v11276 = vadd.f32 %v11100, %v11275
  %v11277 = vpop.f32.mrf.mxu0
  %11278 = vmatprep.mubr.bf16.mxu0 0
  %11279 = vmatmul.mubr.bf16.gmra.mxu0 %v11121
  %v11280 = vpop.f32.mrf.mxu0
  %v11281 = vadd.f32 %v11100, %v11280
  %v11282 = vpop.f32.mrf.mxu0
  %v11283 = vpop.f32.mrf.mxu0
  %v11284 = vadd.f32 %v11100, %v11283
  %v11285 = vpop.f32.mrf.mxu0
  %11286 = vmatprep.mubr.bf16.mxu0 0
  %11287 = vmatmul.mubr.bf16.gmra.mxu0 %v11121
  %v11288 = vpop.f32.mrf.mxu0
  %v11289 = vadd.f32 %v11100, %v11288
  %v11290 = vpop.f32.mrf.mxu0
  %v11291 = vpop.f32.mrf.mxu0
  %v11292 = vadd.f32 %v11100, %v11291
  %v11293 = vpop.f32.mrf.mxu0
  %11294 = vmatprep.mubr.bf16.mxu0 0
  %11295 = vmatmul.mubr.bf16.gmra.mxu0 %v11124
  %v11296 = vpop.f32.mrf.mxu0
  %v11297 = vadd.f32 %v11100, %v11296
  %v11298 = vpop.f32.mrf.mxu0
  %v11299 = vpop.f32.mrf.mxu0
  %v11300 = vadd.f32 %v11100, %v11299
  %v11301 = vpop.f32.mrf.mxu0
  %11302 = vmatprep.mubr.bf16.mxu0 0
  %11303 = vmatmul.mubr.bf16.gmra.mxu0 %v11124
  %v11304 = vpop.f32.mrf.mxu0
  %v11305 = vadd.f32 %v11100, %v11304
  %v11306 = vpop.f32.mrf.mxu0
  %v11307 = vpop.f32.mrf.mxu0
  %v11308 = vadd.f32 %v11100, %v11307
  %v11309 = vpop.f32.mrf.mxu0
  %11310 = vmatprep.mubr.bf16.mxu0 0
  %11311 = vmatmul.mubr.bf16.gmra.mxu0 %v11127
  %v11312 = vpop.f32.mrf.mxu0
  %v11313 = vadd.f32 %v11100, %v11312
  %v11314 = vpop.f32.mrf.mxu0
  %v11315 = vpop.f32.mrf.mxu0
  %v11316 = vadd.f32 %v11100, %v11315
  %v11317 = vpop.f32.mrf.mxu0
  %11318 = vmatprep.mubr.bf16.mxu0 0
  %11319 = vmatmul.mubr.bf16.gmra.mxu0 %v11127
  %v11320 = vpop.f32.mrf.mxu0
  %v11321 = vadd.f32 %v11100, %v11320
  %v11322 = vpop.f32.mrf.mxu0
  %v11323 = vpop.f32.mrf.mxu0
  %v11324 = vadd.f32 %v11100, %v11323
  %v11325 = vpop.f32.mrf.mxu0
  %11326 = vmatprep.mubr.bf16.mxu0 0
  %11327 = vmatmul.mubr.bf16.gmra.mxu0 %v11130
  %v11328 = vpop.f32.mrf.mxu0
  %v11329 = vadd.f32 %v11100, %v11328
  %v11330 = vpop.f32.mrf.mxu0
  %v11331 = vpop.f32.mrf.mxu0
  %v11332 = vadd.f32 %v11100, %v11331
  %v11333 = vpop.f32.mrf.mxu0
  %11334 = vmatprep.mubr.bf16.mxu0 0
  %11335 = vmatmul.mubr.bf16.gmra.mxu0 %v11130
  %v11336 = vpop.f32.mrf.mxu0
  %v11337 = vadd.f32 %v11100, %v11336
  %v11338 = vpop.f32.mrf.mxu0
  %v11339 = vpop.f32.mrf.mxu0
  %v11340 = vadd.f32 %v11100, %v11339
  %v11341 = vpop.f32.mrf.mxu0
  %11342 = vmatprep.mubr.bf16.mxu0 0
  %11343 = vmatmul.mubr.bf16.gmra.mxu0 %v11133
  %v11344 = vpop.f32.mrf.mxu0
  %v11345 = vadd.f32 %v11100, %v11344
  %v11346 = vpop.f32.mrf.mxu0
  %v11347 = vpop.f32.mrf.mxu0
  %v11348 = vadd.f32 %v11100, %v11347
  %v11349 = vpop.f32.mrf.mxu0
  %11350 = vmatprep.mubr.bf16.mxu0 0
  %11351 = vmatmul.mubr.bf16.gmra.mxu0 %v11133
  %v11352 = vpop.f32.mrf.mxu0
  %v11353 = vadd.f32 %v11100, %v11352
  %v11354 = vpop.f32.mrf.mxu0
  %v11355 = vpop.f32.mrf.mxu0
  %v11356 = vadd.f32 %v11100, %v11355
  %v11357 = vpop.f32.mrf.mxu0
  %11358 = vmatprep.mubr.bf16.mxu0 0
  %11359 = vmatmul.mubr.bf16.gmra.mxu0 %v11136
  %v11360 = vpop.f32.mrf.mxu0
  %v11361 = vadd.f32 %v11100, %v11360
  %v11362 = vpop.f32.mrf.mxu0
  %v11363 = vpop.f32.mrf.mxu0
  %v11364 = vadd.f32 %v11100, %v11363
  %v11365 = vpop.f32.mrf.mxu0
  %11366 = vmatprep.mubr.bf16.mxu0 0
  %11367 = vmatmul.mubr.bf16.gmra.mxu0 %v11136
  %v11368 = vpop.f32.mrf.mxu0
  %v11369 = vadd.f32 %v11100, %v11368
  %v11370 = vpop.f32.mrf.mxu0
  %v11371 = vpop.f32.mrf.mxu0
  %v11372 = vadd.f32 %v11100, %v11371
  %v11373 = vpop.f32.mrf.mxu0
  %11374 = vmatprep.mubr.bf16.mxu0 0
  %11375 = vmatmul.mubr.bf16.gmra.mxu0 %v11139
  %v11376 = vpop.f32.mrf.mxu0
  %v11377 = vadd.f32 %v11100, %v11376
  %v11378 = vpop.f32.mrf.mxu0
  %v11379 = vpop.f32.mrf.mxu0
  %v11380 = vadd.f32 %v11100, %v11379
  %v11381 = vpop.f32.mrf.mxu0
  %11382 = vmatprep.mubr.bf16.mxu0 0
  %11383 = vmatmul.mubr.bf16.gmra.mxu0 %v11139
  %v11384 = vpop.f32.mrf.mxu0
  %v11385 = vadd.f32 %v11100, %v11384
  %v11386 = vpop.f32.mrf.mxu0
  %v11387 = vpop.f32.mrf.mxu0
  %v11388 = vadd.f32 %v11100, %v11387
  %v11389 = vpop.f32.mrf.mxu0
  %11390 = vmatprep.mubr.bf16.mxu0 0
  %11391 = vmatmul.mubr.bf16.gmra.mxu0 %v11142
  %v11392 = vpop.f32.mrf.mxu0
  %v11393 = vadd.f32 %v11100, %v11392
  %v11394 = vpop.f32.mrf.mxu0
  %v11395 = vpop.f32.mrf.mxu0
  %v11396 = vadd.f32 %v11100, %v11395
  %v11397 = vpop.f32.mrf.mxu0
  %11398 = vmatprep.mubr.bf16.mxu0 0
  %11399 = vmatmul.mubr.bf16.gmra.mxu0 %v11142
  %v11400 = vpop.f32.mrf.mxu0
  %v11401 = vadd.f32 %v11100, %v11400
  %v11402 = vpop.f32.mrf.mxu0
  %v11403 = vpop.f32.mrf.mxu0
  %v11404 = vadd.f32 %v11100, %v11403
  %v11405 = vpop.f32.mrf.mxu0
  %11406 = vmatprep.mubr.bf16.mxu0 0
  %11407 = vmatmul.mubr.bf16.gmra.mxu0 %v11145
  %v11408 = vpop.f32.mrf.mxu0
  %v11409 = vadd.f32 %v11100, %v11408
  %v11410 = vpop.f32.mrf.mxu0
  %v11411 = vpop.f32.mrf.mxu0
  %v11412 = vadd.f32 %v11100, %v11411
  %v11413 = vpop.f32.mrf.mxu0
  %11414 = vmatprep.mubr.bf16.mxu0 0
  %11415 = vmatmul.mubr.bf16.gmra.mxu0 %v11145
  %v11416 = vpop.f32.mrf.mxu0
  %v11417 = vadd.f32 %v11100, %v11416
  %v11418 = vpop.f32.mrf.mxu0
  %v11419 = vpop.f32.mrf.mxu0
  %v11420 = vadd.f32 %v11100, %v11419
  %v11421 = vpop.f32.mrf.mxu0
  %11422 = vmatprep.mubr.bf16.mxu0 0
  %11423 = vmatmul.mubr.bf16.gmra.mxu0 %v11148
  %v11424 = vpop.f32.mrf.mxu0
  %v11425 = vadd.f32 %v11100, %v11424
  %v11426 = vpop.f32.mrf.mxu0
  %v11427 = vpop.f32.mrf.mxu0
  %v11428 = vadd.f32 %v11100, %v11427
  %v11429 = vpop.f32.mrf.mxu0
  %11430 = vmatprep.mubr.bf16.mxu0 0
  %11431 = vmatmul.mubr.bf16.gmra.mxu0 %v11148
  %v11432 = vpop.f32.mrf.mxu0
  %v11433 = vadd.f32 %v11100, %v11432
  %v11434 = vpop.f32.mrf.mxu0
  %v11435 = vpop.f32.mrf.mxu0
  %v11436 = vadd.f32 %v11100, %v11435
  %v11437 = vpop.f32.mrf.mxu0
  %11438 = vdwg.mxu0
  %v11439 = vld [vmem:[%s18] sm:$0xff]
  %v11440 = vld [vmem:[%s18 + $0x8] sm:$0xff]
  %v11441 = vld [vmem:[%s18 + $0x10] sm:$0xff]
  %v11442 = vld [vmem:[%s18 + $0x18] sm:$0xff]
  %v11443 = vpack.c.bf16 %v10978, %v10977
  %v11444 = vpack.c.bf16 %v10980, %v10979
  %v11445 = vpack.c.bf16 %v10982, %v10981
  %v11446 = vpack.c.bf16 %v10984, %v10983
  %v11447 = vpack.c.bf16 %v10986, %v10985
  %v11448 = vpack.c.bf16 %v10988, %v10987
  %v11449 = vpack.c.bf16 %v10990, %v10989
  %v11450 = vpack.c.bf16 %v10992, %v10991
  %v11451 = vpack.c.bf16 %v10994, %v10993
  %v11452 = vpack.c.bf16 %v10996, %v10995
  %v11453 = vpack.c.bf16 %v10998, %v10997
  %v11454 = vpack.c.bf16 %v11000, %v10999
  %v11455 = vpack.c.bf16 %v11002, %v11001
  %v11456 = vpack.c.bf16 %v11004, %v11003
  %v11457 = vpack.c.bf16 %v11006, %v11005
  %v11458 = vpack.c.bf16 %v11008, %v11007
  %v11459 = vpack.c.bf16 %v11010, %v11009
  %v11460 = vpack.c.bf16 %v11012, %v11011
  %v11461 = vpack.c.bf16 %v11014, %v11013
  %v11462 = vpack.c.bf16 %v11016, %v11015
  %v11463 = vpack.c.bf16 %v11018, %v11017
  %v11464 = vpack.c.bf16 %v11020, %v11019
  %v11465 = vpack.c.bf16 %v11022, %v11021
  %v11466 = vpack.c.bf16 %v11024, %v11023
  %v11467 = vpack.c.bf16 %v11026, %v11025
  %v11468 = vpack.c.bf16 %v11028, %v11027
  %v11469 = vpack.c.bf16 %v11030, %v11029
  %v11470 = vpack.c.bf16 %v11032, %v11031
  %v11471 = vpack.c.bf16 %v11034, %v11033
  %v11472 = vpack.c.bf16 %v11036, %v11035
  %v11473 = vpack.c.bf16 %v11038, %v11037
  %v11474 = vpack.c.bf16 %v11040, %v11039
  %v11475 = vpack.c.bf16 %v11440, %v11439
  %v11476 = vpack.c.bf16 %v11442, %v11441
  %v11477 = vld [vmem:[%s19] sm:$0x1]
  %v11479 = vlaneseq
  %v11480 = vshrl.u32 %v11479, 7
  %v11481 = vsub.s32 0, %v11480
  %v11482 = vrot.slane %v11477, %v11481
  %v11485 = vsel %vm115, %v11443, 0
  %v11488 = vsel %vm115, %v11444, 0
  %v11491 = vsel %vm115, %v11445, 0
  %v11494 = vsel %vm115, %v11446, 0
  %v11497 = vsel %vm115, %v11447, 0
  %v11500 = vsel %vm115, %v11448, 0
  %v11503 = vsel %vm115, %v11449, 0
  %v11506 = vsel %vm115, %v11450, 0
  %v11509 = vsel %vm115, %v11451, 0
  %v11512 = vsel %vm115, %v11452, 0
  %v11515 = vsel %vm115, %v11453, 0
  %v11518 = vsel %vm115, %v11454, 0
  %v11521 = vsel %vm115, %v11455, 0
  %v11524 = vsel %vm115, %v11456, 0
  %v11527 = vsel %vm115, %v11457, 0
  %v11530 = vsel %vm115, %v11458, 0
  %v11533 = vsel %vm115, %v11459, 0
  %v11536 = vsel %vm115, %v11460, 0
  %v11539 = vsel %vm115, %v11461, 0
  %v11542 = vsel %vm115, %v11462, 0
  %v11545 = vsel %vm115, %v11463, 0
  %v11548 = vsel %vm115, %v11464, 0
  %v11551 = vsel %vm115, %v11465, 0
  %v11554 = vsel %vm115, %v11466, 0
  %v11557 = vsel %vm115, %v11467, 0
  %v11560 = vsel %vm115, %v11468, 0
  %v11563 = vsel %vm115, %v11469, 0
  %v11566 = vsel %vm115, %v11470, 0
  %v11569 = vsel %vm115, %v11471, 0
  %v11572 = vsel %vm115, %v11472, 0
  %v11575 = vsel %vm115, %v11473, 0
  %v11578 = vsel %vm115, %v11474, 0
  %11580 = vmatprep.subr.bf16.mxu0 0
  %11581 = vmatpush1.bf16.msra.mxu0 0
  %11582 = vmatprep.subr.bf16.mxu0 0
  %11583 = vmatpush1.bf16.msra.mxu0 0
  %11584 = vmatprep.subr.bf16.mxu0 0
  %11585 = vmatpush1.bf16.msra.mxu0 0
  %11586 = vmatprep.subr.bf16.mxu0 0
  %11587 = vmatpush1.bf16.msra.mxu0 0
  %11588 = vmatprep.subr.bf16.mxu0 0
  %11589 = vmatpush1.bf16.msra.mxu0 0
  %11590 = vmatprep.subr.bf16.mxu0 0
  %11591 = vmatpush1.bf16.msra.mxu0 0
  %11592 = vmatprep.subr.bf16.mxu0 0
  %11593 = vmatpush1.bf16.msra.mxu0 %v11476
  %11594 = vmatprep.subr.bf16.mxu0 0
  %11595 = vmatpush1.bf16.msra.mxu0 %v11475
  %11596 = vmatprep.subr.bf16.mxu0 0
  %11597 = vmatpush2.bf16.msra.mxu0 0
  %11598 = vmatprep.subr.bf16.mxu0 0
  %11599 = vmatpush2.bf16.msra.mxu0 0
  %11600 = vmatprep.subr.bf16.mxu0 0
  %11601 = vmatpush2.bf16.msra.mxu0 0
  %11602 = vmatprep.subr.bf16.mxu0 0
  %11603 = vmatpush2.bf16.msra.mxu0 0
  %11604 = vmatprep.subr.bf16.mxu0 0
  %11605 = vmatpush2.bf16.msra.mxu0 0
  %11606 = vmatprep.subr.bf16.mxu0 0
  %11607 = vmatpush2.bf16.msra.mxu0 0
  %11608 = vmatprep.subr.bf16.mxu0 0
  %11609 = vmatpush2.bf16.msra.mxu0 0
  %11610 = vmatprep.subr.bf16.mxu0 0
  %11611 = vmatpush2.bf16.msra.mxu0 0
  %11612 = vmatprep.mubr.bf16.mxu0 0
  %11613 = vmatmul.mubr.bf16.gmra.mxu0 %v11485
  %v11614 = vpop.f32.mrf.mxu0
  %v11615 = vadd.f32 %v11482, %v11614
  %v11616 = vpop.f32.mrf.mxu0
  %v11617 = vpop.f32.mrf.mxu0
  %v11618 = vadd.f32 %v11482, %v11617
  %v11619 = vpop.f32.mrf.mxu0
  %11620 = vmatprep.mubr.bf16.mxu0 0
  %11621 = vmatmul.mubr.bf16.gmra.mxu0 %v11488
  %v11622 = vpop.f32.mrf.mxu0
  %v11623 = vadd.f32 %v11482, %v11622
  %v11624 = vpop.f32.mrf.mxu0
  %v11625 = vpop.f32.mrf.mxu0
  %v11626 = vadd.f32 %v11482, %v11625
  %v11627 = vpop.f32.mrf.mxu0
  %11628 = vmatprep.mubr.bf16.mxu0 0
  %11629 = vmatmul.mubr.bf16.gmra.mxu0 %v11491
  %v11630 = vpop.f32.mrf.mxu0
  %v11631 = vadd.f32 %v11482, %v11630
  %v11632 = vpop.f32.mrf.mxu0
  %v11633 = vpop.f32.mrf.mxu0
  %v11634 = vadd.f32 %v11482, %v11633
  %v11635 = vpop.f32.mrf.mxu0
  %11636 = vmatprep.mubr.bf16.mxu0 0
  %11637 = vmatmul.mubr.bf16.gmra.mxu0 %v11494
  %v11638 = vpop.f32.mrf.mxu0
  %v11639 = vadd.f32 %v11482, %v11638
  %v11640 = vpop.f32.mrf.mxu0
  %v11641 = vpop.f32.mrf.mxu0
  %v11642 = vadd.f32 %v11482, %v11641
  %v11643 = vpop.f32.mrf.mxu0
  %11644 = vmatprep.mubr.bf16.mxu0 0
  %11645 = vmatmul.mubr.bf16.gmra.mxu0 %v11497
  %v11646 = vpop.f32.mrf.mxu0
  %v11647 = vadd.f32 %v11482, %v11646
  %v11648 = vpop.f32.mrf.mxu0
  %v11649 = vpop.f32.mrf.mxu0
  %v11650 = vadd.f32 %v11482, %v11649
  %v11651 = vpop.f32.mrf.mxu0
  %11652 = vmatprep.mubr.bf16.mxu0 0
  %11653 = vmatmul.mubr.bf16.gmra.mxu0 %v11500
  %v11654 = vpop.f32.mrf.mxu0
  %v11655 = vadd.f32 %v11482, %v11654
  %v11656 = vpop.f32.mrf.mxu0
  %v11657 = vpop.f32.mrf.mxu0
  %v11658 = vadd.f32 %v11482, %v11657
  %v11659 = vpop.f32.mrf.mxu0
  %11660 = vmatprep.mubr.bf16.mxu0 0
  %11661 = vmatmul.mubr.bf16.gmra.mxu0 %v11503
  %v11662 = vpop.f32.mrf.mxu0
  %v11663 = vadd.f32 %v11482, %v11662
  %v11664 = vpop.f32.mrf.mxu0
  %v11665 = vpop.f32.mrf.mxu0
  %v11666 = vadd.f32 %v11482, %v11665
  %v11667 = vpop.f32.mrf.mxu0
  %11668 = vmatprep.mubr.bf16.mxu0 0
  %11669 = vmatmul.mubr.bf16.gmra.mxu0 %v11506
  %v11670 = vpop.f32.mrf.mxu0
  %v11671 = vadd.f32 %v11482, %v11670
  %v11672 = vpop.f32.mrf.mxu0
  %v11673 = vpop.f32.mrf.mxu0
  %v11674 = vadd.f32 %v11482, %v11673
  %v11675 = vpop.f32.mrf.mxu0
  %11676 = vmatprep.mubr.bf16.mxu0 0
  %11677 = vmatmul.mubr.bf16.gmra.mxu0 %v11509
  %v11678 = vpop.f32.mrf.mxu0
  %v11679 = vadd.f32 %v11482, %v11678
  %v11680 = vpop.f32.mrf.mxu0
  %v11681 = vpop.f32.mrf.mxu0
  %v11682 = vadd.f32 %v11482, %v11681
  %v11683 = vpop.f32.mrf.mxu0
  %11684 = vmatprep.mubr.bf16.mxu0 0
  %11685 = vmatmul.mubr.bf16.gmra.mxu0 %v11512
  %v11686 = vpop.f32.mrf.mxu0
  %v11687 = vadd.f32 %v11482, %v11686
  %v11688 = vpop.f32.mrf.mxu0
  %v11689 = vpop.f32.mrf.mxu0
  %v11690 = vadd.f32 %v11482, %v11689
  %v11691 = vpop.f32.mrf.mxu0
  %11692 = vmatprep.mubr.bf16.mxu0 0
  %11693 = vmatmul.mubr.bf16.gmra.mxu0 %v11515
  %v11694 = vpop.f32.mrf.mxu0
  %v11695 = vadd.f32 %v11482, %v11694
  %v11696 = vpop.f32.mrf.mxu0
  %v11697 = vpop.f32.mrf.mxu0
  %v11698 = vadd.f32 %v11482, %v11697
  %v11699 = vpop.f32.mrf.mxu0
  %11700 = vmatprep.mubr.bf16.mxu0 0
  %11701 = vmatmul.mubr.bf16.gmra.mxu0 %v11518
  %v11702 = vpop.f32.mrf.mxu0
  %v11703 = vadd.f32 %v11482, %v11702
  %v11704 = vpop.f32.mrf.mxu0
  %v11705 = vpop.f32.mrf.mxu0
  %v11706 = vadd.f32 %v11482, %v11705
  %v11707 = vpop.f32.mrf.mxu0
  %11708 = vmatprep.mubr.bf16.mxu0 0
  %11709 = vmatmul.mubr.bf16.gmra.mxu0 %v11521
  %v11710 = vpop.f32.mrf.mxu0
  %v11711 = vadd.f32 %v11482, %v11710
  %v11712 = vpop.f32.mrf.mxu0
  %v11713 = vpop.f32.mrf.mxu0
  %v11714 = vadd.f32 %v11482, %v11713
  %v11715 = vpop.f32.mrf.mxu0
  %11716 = vmatprep.mubr.bf16.mxu0 0
  %11717 = vmatmul.mubr.bf16.gmra.mxu0 %v11524
  %v11718 = vpop.f32.mrf.mxu0
  %v11719 = vadd.f32 %v11482, %v11718
  %v11720 = vpop.f32.mrf.mxu0
  %v11721 = vpop.f32.mrf.mxu0
  %v11722 = vadd.f32 %v11482, %v11721
  %v11723 = vpop.f32.mrf.mxu0
  %11724 = vmatprep.mubr.bf16.mxu0 0
  %11725 = vmatmul.mubr.bf16.gmra.mxu0 %v11527
  %v11726 = vpop.f32.mrf.mxu0
  %v11727 = vadd.f32 %v11482, %v11726
  %v11728 = vpop.f32.mrf.mxu0
  %v11729 = vpop.f32.mrf.mxu0
  %v11730 = vadd.f32 %v11482, %v11729
  %v11731 = vpop.f32.mrf.mxu0
  %11732 = vmatprep.mubr.bf16.mxu0 0
  %11733 = vmatmul.mubr.bf16.gmra.mxu0 %v11530
  %v11734 = vpop.f32.mrf.mxu0
  %v11735 = vadd.f32 %v11482, %v11734
  %v11736 = vpop.f32.mrf.mxu0
  %v11737 = vpop.f32.mrf.mxu0
  %v11738 = vadd.f32 %v11482, %v11737
  %v11739 = vpop.f32.mrf.mxu0
  %11740 = vmatprep.mubr.bf16.mxu0 0
  %11741 = vmatmul.mubr.bf16.gmra.mxu0 %v11533
  %v11742 = vpop.f32.mrf.mxu0
  %v11743 = vadd.f32 %v11482, %v11742
  %v11744 = vpop.f32.mrf.mxu0
  %v11745 = vpop.f32.mrf.mxu0
  %v11746 = vadd.f32 %v11482, %v11745
  %v11747 = vpop.f32.mrf.mxu0
  %11748 = vmatprep.mubr.bf16.mxu0 0
  %11749 = vmatmul.mubr.bf16.gmra.mxu0 %v11536
  %v11750 = vpop.f32.mrf.mxu0
  %v11751 = vadd.f32 %v11482, %v11750
  %v11752 = vpop.f32.mrf.mxu0
  %v11753 = vpop.f32.mrf.mxu0
  %v11754 = vadd.f32 %v11482, %v11753
  %v11755 = vpop.f32.mrf.mxu0
  %11756 = vmatprep.mubr.bf16.mxu0 0
  %11757 = vmatmul.mubr.bf16.gmra.mxu0 %v11539
  %v11758 = vpop.f32.mrf.mxu0
  %v11759 = vadd.f32 %v11482, %v11758
  %v11760 = vpop.f32.mrf.mxu0
  %v11761 = vpop.f32.mrf.mxu0
  %v11762 = vadd.f32 %v11482, %v11761
  %v11763 = vpop.f32.mrf.mxu0
  %11764 = vmatprep.mubr.bf16.mxu0 0
  %11765 = vmatmul.mubr.bf16.gmra.mxu0 %v11542
  %v11766 = vpop.f32.mrf.mxu0
  %v11767 = vadd.f32 %v11482, %v11766
  %v11768 = vpop.f32.mrf.mxu0
  %v11769 = vpop.f32.mrf.mxu0
  %v11770 = vadd.f32 %v11482, %v11769
  %v11771 = vpop.f32.mrf.mxu0
  %11772 = vmatprep.mubr.bf16.mxu0 0
  %11773 = vmatmul.mubr.bf16.gmra.mxu0 %v11545
  %v11774 = vpop.f32.mrf.mxu0
  %v11775 = vadd.f32 %v11482, %v11774
  %v11776 = vpop.f32.mrf.mxu0
  %v11777 = vpop.f32.mrf.mxu0
  %v11778 = vadd.f32 %v11482, %v11777
  %v11779 = vpop.f32.mrf.mxu0
  %11780 = vmatprep.mubr.bf16.mxu0 0
  %11781 = vmatmul.mubr.bf16.gmra.mxu0 %v11548
  %v11782 = vpop.f32.mrf.mxu0
  %v11783 = vadd.f32 %v11482, %v11782
  %v11784 = vpop.f32.mrf.mxu0
  %v11785 = vpop.f32.mrf.mxu0
  %v11786 = vadd.f32 %v11482, %v11785
  %v11787 = vpop.f32.mrf.mxu0
  %11788 = vmatprep.mubr.bf16.mxu0 0
  %11789 = vmatmul.mubr.bf16.gmra.mxu0 %v11551
  %v11790 = vpop.f32.mrf.mxu0
  %v11791 = vadd.f32 %v11482, %v11790
  %v11792 = vpop.f32.mrf.mxu0
  %v11793 = vpop.f32.mrf.mxu0
  %v11794 = vadd.f32 %v11482, %v11793
  %v11795 = vpop.f32.mrf.mxu0
  %11796 = vmatprep.mubr.bf16.mxu0 0
  %11797 = vmatmul.mubr.bf16.gmra.mxu0 %v11554
  %v11798 = vpop.f32.mrf.mxu0
  %v11799 = vadd.f32 %v11482, %v11798
  %v11800 = vpop.f32.mrf.mxu0
  %v11801 = vpop.f32.mrf.mxu0
  %v11802 = vadd.f32 %v11482, %v11801
  %v11803 = vpop.f32.mrf.mxu0
  %11804 = vmatprep.mubr.bf16.mxu0 0
  %11805 = vmatmul.mubr.bf16.gmra.mxu0 %v11557
  %v11806 = vpop.f32.mrf.mxu0
  %v11807 = vadd.f32 %v11482, %v11806
  %v11808 = vpop.f32.mrf.mxu0
  %v11809 = vpop.f32.mrf.mxu0
  %v11810 = vadd.f32 %v11482, %v11809
  %v11811 = vpop.f32.mrf.mxu0
  %11812 = vmatprep.mubr.bf16.mxu0 0
  %11813 = vmatmul.mubr.bf16.gmra.mxu0 %v11560
  %v11814 = vpop.f32.mrf.mxu0
  %v11815 = vadd.f32 %v11482, %v11814
  %v11816 = vpop.f32.mrf.mxu0
  %v11817 = vpop.f32.mrf.mxu0
  %v11818 = vadd.f32 %v11482, %v11817
  %v11819 = vpop.f32.mrf.mxu0
  %11820 = vmatprep.mubr.bf16.mxu0 0
  %11821 = vmatmul.mubr.bf16.gmra.mxu0 %v11563
  %v11822 = vpop.f32.mrf.mxu0
  %v11823 = vadd.f32 %v11482, %v11822
  %v11824 = vpop.f32.mrf.mxu0
  %v11825 = vpop.f32.mrf.mxu0
  %v11826 = vadd.f32 %v11482, %v11825
  %v11827 = vpop.f32.mrf.mxu0
  %11828 = vmatprep.mubr.bf16.mxu0 0
  %11829 = vmatmul.mubr.bf16.gmra.mxu0 %v11566
  %v11830 = vpop.f32.mrf.mxu0
  %v11831 = vadd.f32 %v11482, %v11830
  %v11832 = vpop.f32.mrf.mxu0
  %v11833 = vpop.f32.mrf.mxu0
  %v11834 = vadd.f32 %v11482, %v11833
  %v11835 = vpop.f32.mrf.mxu0
  %11836 = vmatprep.mubr.bf16.mxu0 0
  %11837 = vmatmul.mubr.bf16.gmra.mxu0 %v11569
  %v11838 = vpop.f32.mrf.mxu0
  %v11839 = vadd.f32 %v11482, %v11838
  %v11840 = vpop.f32.mrf.mxu0
  %v11841 = vpop.f32.mrf.mxu0
  %v11842 = vadd.f32 %v11482, %v11841
  %v11843 = vpop.f32.mrf.mxu0
  %11844 = vmatprep.mubr.bf16.mxu0 0
  %11845 = vmatmul.mubr.bf16.gmra.mxu0 %v11572
  %v11846 = vpop.f32.mrf.mxu0
  %v11847 = vadd.f32 %v11482, %v11846
  %v11848 = vpop.f32.mrf.mxu0
  %v11849 = vpop.f32.mrf.mxu0
  %v11850 = vadd.f32 %v11482, %v11849
  %v11851 = vpop.f32.mrf.mxu0
  %11852 = vmatprep.mubr.bf16.mxu0 0
  %11853 = vmatmul.mubr.bf16.gmra.mxu0 %v11575
  %v11854 = vpop.f32.mrf.mxu0
  %v11855 = vadd.f32 %v11482, %v11854
  %v11856 = vpop.f32.mrf.mxu0
  %v11857 = vpop.f32.mrf.mxu0
  %v11858 = vadd.f32 %v11482, %v11857
  %v11859 = vpop.f32.mrf.mxu0
  %11860 = vmatprep.mubr.bf16.mxu0 0
  %11861 = vmatmul.mubr.bf16.gmra.mxu0 %v11578
  %v11862 = vpop.f32.mrf.mxu0
  %v11863 = vadd.f32 %v11482, %v11862
  %v11864 = vpop.f32.mrf.mxu0
  %v11865 = vpop.f32.mrf.mxu0
  %v11866 = vadd.f32 %v11482, %v11865
  %v11867 = vpop.f32.mrf.mxu0
  %11868 = vdwg.mxu0
  %s11869 = sld [smem:[#allocation2]]
  %v11870 = vstv %s11869
  %v11871 = vmul.f32 %v11870, %v11615
  %v11872 = vmul.f32 %v11870, %v11618
  %v11873 = vmul.f32 %v11870, %v11623
  %v11874 = vmul.f32 %v11870, %v11626
  %v11875 = vmul.f32 %v11870, %v11631
  %v11876 = vmul.f32 %v11870, %v11634
  %v11877 = vmul.f32 %v11870, %v11639
  %v11878 = vmul.f32 %v11870, %v11642
  %v11879 = vmul.f32 %v11870, %v11647
  %v11880 = vmul.f32 %v11870, %v11650
  %v11881 = vmul.f32 %v11870, %v11655
  %v11882 = vmul.f32 %v11870, %v11658
  %v11883 = vmul.f32 %v11870, %v11663
  %v11884 = vmul.f32 %v11870, %v11666
  %v11885 = vmul.f32 %v11870, %v11671
  %v11886 = vmul.f32 %v11870, %v11674
  %v11887 = vmul.f32 %v11870, %v11679
  %v11888 = vmul.f32 %v11870, %v11682
  %v11889 = vmul.f32 %v11870, %v11687
  %v11890 = vmul.f32 %v11870, %v11690
  %v11891 = vmul.f32 %v11870, %v11695
  %v11892 = vmul.f32 %v11870, %v11698
  %v11893 = vmul.f32 %v11870, %v11703
  %v11894 = vmul.f32 %v11870, %v11706
  %v11895 = vmul.f32 %v11870, %v11711
  %v11896 = vmul.f32 %v11870, %v11714
  %v11897 = vmul.f32 %v11870, %v11719
  %v11898 = vmul.f32 %v11870, %v11722
  %v11899 = vmul.f32 %v11870, %v11727
  %v11900 = vmul.f32 %v11870, %v11730
  %v11901 = vmul.f32 %v11870, %v11735
  %v11902 = vmul.f32 %v11870, %v11738
  %v11903 = vmul.f32 %v11870, %v11743
  %v11904 = vmul.f32 %v11870, %v11746
  %v11905 = vmul.f32 %v11870, %v11751
  %v11906 = vmul.f32 %v11870, %v11754
  %v11907 = vmul.f32 %v11870, %v11759
  %v11908 = vmul.f32 %v11870, %v11762
  %v11909 = vmul.f32 %v11870, %v11767
  %v11910 = vmul.f32 %v11870, %v11770
  %v11911 = vmul.f32 %v11870, %v11775
  %v11912 = vmul.f32 %v11870, %v11778
  %v11913 = vmul.f32 %v11870, %v11783
  %v11914 = vmul.f32 %v11870, %v11786
  %v11915 = vmul.f32 %v11870, %v11791
  %v11916 = vmul.f32 %v11870, %v11794
  %v11917 = vmul.f32 %v11870, %v11799
  %v11918 = vmul.f32 %v11870, %v11802
  %v11919 = vmul.f32 %v11870, %v11807
  %v11920 = vmul.f32 %v11870, %v11810
  %v11921 = vmul.f32 %v11870, %v11815
  %v11922 = vmul.f32 %v11870, %v11818
  %v11923 = vmul.f32 %v11870, %v11823
  %v11924 = vmul.f32 %v11870, %v11826
  %v11925 = vmul.f32 %v11870, %v11831
  %v11926 = vmul.f32 %v11870, %v11834
  %v11927 = vmul.f32 %v11870, %v11839
  %v11928 = vmul.f32 %v11870, %v11842
  %v11929 = vmul.f32 %v11870, %v11847
  %v11930 = vmul.f32 %v11870, %v11850
  %v11931 = vmul.f32 %v11870, %v11855
  %v11932 = vmul.f32 %v11870, %v11858
  %v11933 = vmul.f32 %v11870, %v11863
  %v11934 = vmul.f32 %v11870, %v11866
  %s11935 = ssub.f32 1.0, %s11869
  %v11936 = vstv %s11935
  %v11937 = vmul.f32 %v11936, %v11185
  %v11938 = vmul.f32 %v11936, %v11188
  %v11939 = vmul.f32 %v11936, %v11193
  %v11940 = vmul.f32 %v11936, %v11196
  %v11941 = vmul.f32 %v11936, %v11201
  %v11942 = vmul.f32 %v11936, %v11204
  %v11943 = vmul.f32 %v11936, %v11209
  %v11944 = vmul.f32 %v11936, %v11212
  %v11945 = vmul.f32 %v11936, %v11217
  %v11946 = vmul.f32 %v11936, %v11220
  %v11947 = vmul.f32 %v11936, %v11225
  %v11948 = vmul.f32 %v11936, %v11228
  %v11949 = vmul.f32 %v11936, %v11233
  %v11950 = vmul.f32 %v11936, %v11236
  %v11951 = vmul.f32 %v11936, %v11241
  %v11952 = vmul.f32 %v11936, %v11244
  %v11953 = vmul.f32 %v11936, %v11249
  %v11954 = vmul.f32 %v11936, %v11252
  %v11955 = vmul.f32 %v11936, %v11257
  %v11956 = vmul.f32 %v11936, %v11260
  %v11957 = vmul.f32 %v11936, %v11265
  %v11958 = vmul.f32 %v11936, %v11268
  %v11959 = vmul.f32 %v11936, %v11273
  %v11960 = vmul.f32 %v11936, %v11276
  %v11961 = vmul.f32 %v11936, %v11281
  %v11962 = vmul.f32 %v11936, %v11284
  %v11963 = vmul.f32 %v11936, %v11289
  %v11964 = vmul.f32 %v11936, %v11292
  %v11965 = vmul.f32 %v11936, %v11297
  %v11966 = vmul.f32 %v11936, %v11300
  %v11967 = vmul.f32 %v11936, %v11305
  %v11968 = vmul.f32 %v11936, %v11308
  %v11969 = vmul.f32 %v11936, %v11313
  %v11970 = vmul.f32 %v11936, %v11316
  %v11971 = vmul.f32 %v11936, %v11321
  %v11972 = vmul.f32 %v11936, %v11324
  %v11973 = vmul.f32 %v11936, %v11329
  %v11974 = vmul.f32 %v11936, %v11332
  %v11975 = vmul.f32 %v11936, %v11337
  %v11976 = vmul.f32 %v11936, %v11340
  %v11977 = vmul.f32 %v11936, %v11345
  %v11978 = vmul.f32 %v11936, %v11348
  %v11979 = vmul.f32 %v11936, %v11353
  %v11980 = vmul.f32 %v11936, %v11356
  %v11981 = vmul.f32 %v11936, %v11361
  %v11982 = vmul.f32 %v11936, %v11364
  %v11983 = vmul.f32 %v11936, %v11369
  %v11984 = vmul.f32 %v11936, %v11372
  %v11985 = vmul.f32 %v11936, %v11377
  %v11986 = vmul.f32 %v11936, %v11380
  %v11987 = vmul.f32 %v11936, %v11385
  %v11988 = vmul.f32 %v11936, %v11388
  %v11989 = vmul.f32 %v11936, %v11393
  %v11990 = vmul.f32 %v11936, %v11396
  %v11991 = vmul.f32 %v11936, %v11401
  %v11992 = vmul.f32 %v11936, %v11404
  %v11993 = vmul.f32 %v11936, %v11409
  %v11994 = vmul.f32 %v11936, %v11412
  %v11995 = vmul.f32 %v11936, %v11417
  %v11996 = vmul.f32 %v11936, %v11420
  %v11997 = vmul.f32 %v11936, %v11425
  %v11998 = vmul.f32 %v11936, %v11428
  %v11999 = vmul.f32 %v11936, %v11433
  %v12000 = vmul.f32 %v11936, %v11436
  %v12001 = vadd.f32 %v11871, %v11937
  %v12002 = vadd.f32 %v11872, %v11938
  %v12003 = vadd.f32 %v11873, %v11939
  %v12004 = vadd.f32 %v11874, %v11940
  %v12005 = vadd.f32 %v11875, %v11941
  %v12006 = vadd.f32 %v11876, %v11942
  %v12007 = vadd.f32 %v11877, %v11943
  %v12008 = vadd.f32 %v11878, %v11944
  %v12009 = vadd.f32 %v11879, %v11945
  %v12010 = vadd.f32 %v11880, %v11946
  %v12011 = vadd.f32 %v11881, %v11947
  %v12012 = vadd.f32 %v11882, %v11948
  %v12013 = vadd.f32 %v11883, %v11949
  %v12014 = vadd.f32 %v11884, %v11950
  %v12015 = vadd.f32 %v11885, %v11951
  %v12016 = vadd.f32 %v11886, %v11952
  %v12017 = vadd.f32 %v11887, %v11953
  %v12018 = vadd.f32 %v11888, %v11954
  %v12019 = vadd.f32 %v11889, %v11955
  %v12020 = vadd.f32 %v11890, %v11956
  %v12021 = vadd.f32 %v11891, %v11957
  %v12022 = vadd.f32 %v11892, %v11958
  %v12023 = vadd.f32 %v11893, %v11959
  %v12024 = vadd.f32 %v11894, %v11960
  %v12025 = vadd.f32 %v11895, %v11961
  %v12026 = vadd.f32 %v11896, %v11962
  %v12027 = vadd.f32 %v11897, %v11963
  %v12028 = vadd.f32 %v11898, %v11964
  %v12029 = vadd.f32 %v11899, %v11965
  %v12030 = vadd.f32 %v11900, %v11966
  %v12031 = vadd.f32 %v11901, %v11967
  %v12032 = vadd.f32 %v11902, %v11968
  %v12033 = vadd.f32 %v11903, %v11969
  %v12034 = vadd.f32 %v11904, %v11970
  %v12035 = vadd.f32 %v11905, %v11971
  %v12036 = vadd.f32 %v11906, %v11972
  %v12037 = vadd.f32 %v11907, %v11973
  %v12038 = vadd.f32 %v11908, %v11974
  %v12039 = vadd.f32 %v11909, %v11975
  %v12040 = vadd.f32 %v11910, %v11976
  %v12041 = vadd.f32 %v11911, %v11977
  %v12042 = vadd.f32 %v11912, %v11978
  %v12043 = vadd.f32 %v11913, %v11979
  %v12044 = vadd.f32 %v11914, %v11980
  %v12045 = vadd.f32 %v11915, %v11981
  %v12046 = vadd.f32 %v11916, %v11982
  %v12047 = vadd.f32 %v11917, %v11983
  %v12048 = vadd.f32 %v11918, %v11984
  %v12049 = vadd.f32 %v11919, %v11985
  %v12050 = vadd.f32 %v11920, %v11986
  %v12051 = vadd.f32 %v11921, %v11987
  %v12052 = vadd.f32 %v11922, %v11988
  %v12053 = vadd.f32 %v11923, %v11989
  %v12054 = vadd.f32 %v11924, %v11990
  %v12055 = vadd.f32 %v11925, %v11991
  %v12056 = vadd.f32 %v11926, %v11992
  %v12057 = vadd.f32 %v11927, %v11993
  %v12058 = vadd.f32 %v11928, %v11994
  %v12059 = vadd.f32 %v11929, %v11995
  %v12060 = vadd.f32 %v11930, %v11996
  %v12061 = vadd.f32 %v11931, %v11997
  %v12062 = vadd.f32 %v11932, %v11998
  %v12063 = vadd.f32 %v11933, %v11999
  %v12064 = vadd.f32 %v11934, %v12000
  %v12065 = vtanh.pop %v12001
  %v12066 = vtanh.pop %v12002
  %v12067 = vtanh.pop %v12003
  %v12068 = vtanh.pop %v12004
  %v12069 = vtanh.pop %v12005
  %v12070 = vtanh.pop %v12006
  %v12071 = vtanh.pop %v12007
  %v12072 = vtanh.pop %v12008
  %v12073 = vtanh.pop %v12009
  %v12074 = vtanh.pop %v12010
  %v12075 = vtanh.pop %v12011
  %v12076 = vtanh.pop %v12012
  %v12077 = vtanh.pop %v12013
  %v12078 = vtanh.pop %v12014
  %v12079 = vtanh.pop %v12015
  %v12080 = vtanh.pop %v12016
  %v12081 = vtanh.pop %v12017
  %v12082 = vtanh.pop %v12018
  %v12083 = vtanh.pop %v12019
  %v12084 = vtanh.pop %v12020
  %v12085 = vtanh.pop %v12021
  %v12086 = vtanh.pop %v12022
  %v12087 = vtanh.pop %v12023
  %v12088 = vtanh.pop %v12024
  %v12089 = vtanh.pop %v12025
  %v12090 = vtanh.pop %v12026
  %v12091 = vtanh.pop %v12027
  %v12092 = vtanh.pop %v12028
  %v12093 = vtanh.pop %v12029
  %v12094 = vtanh.pop %v12030
  %v12095 = vtanh.pop %v12031
  %v12096 = vtanh.pop %v12032
  %v12097 = vtanh.pop %v12033
  %v12098 = vtanh.pop %v12034
  %v12099 = vtanh.pop %v12035
  %v12100 = vtanh.pop %v12036
  %v12101 = vtanh.pop %v12037
  %v12102 = vtanh.pop %v12038
  %v12103 = vtanh.pop %v12039
  %v12104 = vtanh.pop %v12040
  %v12105 = vtanh.pop %v12041
  %v12106 = vtanh.pop %v12042
  %v12107 = vtanh.pop %v12043
  %v12108 = vtanh.pop %v12044
  %v12109 = vtanh.pop %v12045
  %v12110 = vtanh.pop %v12046
  %v12111 = vtanh.pop %v12047
  %v12112 = vtanh.pop %v12048
  %v12113 = vtanh.pop %v12049
  %v12114 = vtanh.pop %v12050
  %v12115 = vtanh.pop %v12051
  %v12116 = vtanh.pop %v12052
  %v12117 = vtanh.pop %v12053
  %v12118 = vtanh.pop %v12054
  %v12119 = vtanh.pop %v12055
  %v12120 = vtanh.pop %v12056
  %v12121 = vtanh.pop %v12057
  %v12122 = vtanh.pop %v12058
  %v12123 = vtanh.pop %v12059
  %v12124 = vtanh.pop %v12060
  %v12125 = vtanh.pop %v12061
  %v12126 = vtanh.pop %v12062
  %v12127 = vtanh.pop %v12063
  %v12128 = vtanh.pop %v12064
  %12129 = vxpose.xlu0.b32.start [1/16] %v12065, 128
  %12130 = vxpose.xlu0.b32.cont [2/16] %v12066, 128
  %12131 = vxpose.xlu0.b32.cont [3/16] %v12067, 128
  %12132 = vxpose.xlu0.b32.cont [4/16] %v12068, 128
  %12133 = vxpose.xlu0.b32.cont [5/16] %v12069, 128
  %12134 = vxpose.xlu0.b32.cont [6/16] %v12070, 128
  %12135 = vxpose.xlu0.b32.cont [7/16] %v12071, 128
  %12136 = vxpose.xlu0.b32.cont [8/16] %v12072, 128
  %12137 = vxpose.xlu0.b32.cont [9/16] %v12073, 128
  %12138 = vxpose.xlu0.b32.cont [10/16] %v12074, 128
  %12139 = vxpose.xlu0.b32.cont [11/16] %v12075, 128
  %12140 = vxpose.xlu0.b32.cont [12/16] %v12076, 128
  %12141 = vxpose.xlu0.b32.cont [13/16] %v12077, 128
  %12142 = vxpose.xlu0.b32.cont [14/16] %v12078, 128
  %12143 = vxpose.xlu0.b32.cont [15/16] %v12079, 128
  %12144 = vxpose.xlu0.b32.end [16/16] %v12080, 128
  %v12145 = vpop.trf.xlu0
  %v12146 = vpop.trf.xlu0
  %v12147 = vpop.trf.xlu0
  %v12148 = vpop.trf.xlu0
  %v12149 = vpop.trf.xlu0
  %v12150 = vpop.trf.xlu0
  %v12151 = vpop.trf.xlu0
  %v12152 = vpop.trf.xlu0
  %v12153 = vpop.trf.xlu0
  %v12154 = vpop.trf.xlu0
  %v12155 = vpop.trf.xlu0
  %v12156 = vpop.trf.xlu0
  %v12157 = vpop.trf.xlu0
  %v12158 = vpop.trf.xlu0
  %v12159 = vpop.trf.xlu0
  %v12160 = vpop.trf.xlu0
  %12161 = vxpose.xlu0.b32.start [1/16] %v12081, 128
  %12162 = vxpose.xlu0.b32.cont [2/16] %v12082, 128
  %12163 = vxpose.xlu0.b32.cont [3/16] %v12083, 128
  %12164 = vxpose.xlu0.b32.cont [4/16] %v12084, 128
  %12165 = vxpose.xlu0.b32.cont [5/16] %v12085, 128
  %12166 = vxpose.xlu0.b32.cont [6/16] %v12086, 128
  %12167 = vxpose.xlu0.b32.cont [7/16] %v12087, 128
  %12168 = vxpose.xlu0.b32.cont [8/16] %v12088, 128
  %12169 = vxpose.xlu0.b32.cont [9/16] %v12089, 128
  %12170 = vxpose.xlu0.b32.cont [10/16] %v12090, 128
  %12171 = vxpose.xlu0.b32.cont [11/16] %v12091, 128
  %12172 = vxpose.xlu0.b32.cont [12/16] %v12092, 128
  %12173 = vxpose.xlu0.b32.cont [13/16] %v12093, 128
  %12174 = vxpose.xlu0.b32.cont [14/16] %v12094, 128
  %12175 = vxpose.xlu0.b32.cont [15/16] %v12095, 128
  %12176 = vxpose.xlu0.b32.end [16/16] %v12096, 128
  %v12177 = vpop.trf.xlu0
  %v12178 = vpop.trf.xlu0
  %v12179 = vpop.trf.xlu0
  %v12180 = vpop.trf.xlu0
  %v12181 = vpop.trf.xlu0
  %v12182 = vpop.trf.xlu0
  %v12183 = vpop.trf.xlu0
  %v12184 = vpop.trf.xlu0
  %v12185 = vpop.trf.xlu0
  %v12186 = vpop.trf.xlu0
  %v12187 = vpop.trf.xlu0
  %v12188 = vpop.trf.xlu0
  %v12189 = vpop.trf.xlu0
  %v12190 = vpop.trf.xlu0
  %v12191 = vpop.trf.xlu0
  %v12192 = vpop.trf.xlu0
  %12193 = vxpose.xlu0.b32.start [1/16] %v12097, 128
  %12194 = vxpose.xlu0.b32.cont [2/16] %v12098, 128
  %12195 = vxpose.xlu0.b32.cont [3/16] %v12099, 128
  %12196 = vxpose.xlu0.b32.cont [4/16] %v12100, 128
  %12197 = vxpose.xlu0.b32.cont [5/16] %v12101, 128
  %12198 = vxpose.xlu0.b32.cont [6/16] %v12102, 128
  %12199 = vxpose.xlu0.b32.cont [7/16] %v12103, 128
  %12200 = vxpose.xlu0.b32.cont [8/16] %v12104, 128
  %12201 = vxpose.xlu0.b32.cont [9/16] %v12105, 128
  %12202 = vxpose.xlu0.b32.cont [10/16] %v12106, 128
  %12203 = vxpose.xlu0.b32.cont [11/16] %v12107, 128
  %12204 = vxpose.xlu0.b32.cont [12/16] %v12108, 128
  %12205 = vxpose.xlu0.b32.cont [13/16] %v12109, 128
  %12206 = vxpose.xlu0.b32.cont [14/16] %v12110, 128
  %12207 = vxpose.xlu0.b32.cont [15/16] %v12111, 128
  %12208 = vxpose.xlu0.b32.end [16/16] %v12112, 128
  %v12209 = vpop.trf.xlu0
  %v12210 = vpop.trf.xlu0
  %v12211 = vpop.trf.xlu0
  %v12212 = vpop.trf.xlu0
  %v12213 = vpop.trf.xlu0
  %v12214 = vpop.trf.xlu0
  %v12215 = vpop.trf.xlu0
  %v12216 = vpop.trf.xlu0
  %v12217 = vpop.trf.xlu0
  %v12218 = vpop.trf.xlu0
  %v12219 = vpop.trf.xlu0
  %v12220 = vpop.trf.xlu0
  %v12221 = vpop.trf.xlu0
  %v12222 = vpop.trf.xlu0
  %v12223 = vpop.trf.xlu0
  %v12224 = vpop.trf.xlu0
  %12225 = vxpose.xlu0.b32.start [1/16] %v12113, 128
  %12226 = vxpose.xlu0.b32.cont [2/16] %v12114, 128
  %12227 = vxpose.xlu0.b32.cont [3/16] %v12115, 128
  %12228 = vxpose.xlu0.b32.cont [4/16] %v12116, 128
  %12229 = vxpose.xlu0.b32.cont [5/16] %v12117, 128
  %12230 = vxpose.xlu0.b32.cont [6/16] %v12118, 128
  %12231 = vxpose.xlu0.b32.cont [7/16] %v12119, 128
  %12232 = vxpose.xlu0.b32.cont [8/16] %v12120, 128
  %12233 = vxpose.xlu0.b32.cont [9/16] %v12121, 128
  %12234 = vxpose.xlu0.b32.cont [10/16] %v12122, 128
  %12235 = vxpose.xlu0.b32.cont [11/16] %v12123, 128
  %12236 = vxpose.xlu0.b32.cont [12/16] %v12124, 128
  %12237 = vxpose.xlu0.b32.cont [13/16] %v12125, 128
  %12238 = vxpose.xlu0.b32.cont [14/16] %v12126, 128
  %12239 = vxpose.xlu0.b32.cont [15/16] %v12127, 128
  %12240 = vxpose.xlu0.b32.end [16/16] %v12128, 128
  %v12241 = vpop.trf.xlu0
  %v12242 = vpop.trf.xlu0
  %v12243 = vpop.trf.xlu0
  %v12244 = vpop.trf.xlu0
  %v12245 = vpop.trf.xlu0
  %v12246 = vpop.trf.xlu0
  %v12247 = vpop.trf.xlu0
  %v12248 = vpop.trf.xlu0
  %v12249 = vpop.trf.xlu0
  %v12250 = vpop.trf.xlu0
  %v12251 = vpop.trf.xlu0
  %v12252 = vpop.trf.xlu0
  %v12253 = vpop.trf.xlu0
  %v12254 = vpop.trf.xlu0
  %v12255 = vpop.trf.xlu0
  %v12256 = vpop.trf.xlu0
  %v12261 = vcombine.low %v12145, %v12177
  %v12262 = vcombine.low %v12209, %v12241
  %12265 = vst [vmem:[%s20] sm:$0x77] %v12261
  %12266 = vst [vmem:[%s20 + $0x8] sm:$0x77] %v12262
  // Predicated region
  $region82: #{tpu_custom_call.1} parent=0 // pred_check
    _
  $region83: #{tpu_custom_call.1} parent=0 // pred_check_branch
    %12268 = sbr.rel (0) target = $region85
  $region84: #{tpu_custom_call.1} parent=0 // pred_region
    _
  $region85: #{tpu_custom_call.1} parent=0 // pred_fallthru
    _
  // Predicated region
  $region86: #{tpu_custom_call.1} parent=0 // pred_check
    _
  $region87: #{tpu_custom_call.1} parent=0 // pred_check_branch
    %12270 = sbr.rel (0) target = $region89
  $region88: #{tpu_custom_call.1} parent=0 // pred_region
    _
  $region89: #{tpu_custom_call.1} parent=0 // pred_fallthru
    _

</llo_original>
